<compile_context>
chip_gen: v5e
topology: v5e:2x2
jax: 0.10.0
libtpu: 0.0.40
codegen_flags: <defaults>
</compile_context>

<pallas_src>
import functools

import jax
import jax.numpy as jnp
from jax.experimental import pallas as pl
from jax.experimental.pallas import tpu as pltpu


# ----------------------------------------------------------------------------
# In-kernel "same" conv helper: K relayouts + K MXU dots (per-ky im2col).
# ----------------------------------------------------------------------------
def _conv_same(x, w_ref, K, P, H, W):
    """x: (H, W, Cin) bf16 value. w_ref: Ref (K, K*Cin, Cout) bf16.
    Returns (H*W, Cout) f32 accumulation of the stride-1, padding-P conv."""
    Cin = x.shape[-1]
    Cout = w_ref.shape[-1]
    if P > 0:
        zw = jnp.zeros((H, P, Cin), x.dtype)
        x = jnp.concatenate([zw, x, zw], axis=1)            # (H, W+2P, Cin)
    # One sublane-shifted copy per kx, concatenated along the channel (lane) axis.
    x_cat = jnp.concatenate([x[:, kx:kx + W, :] for kx in range(K)], axis=-1)
    if P > 0:
        zh = jnp.zeros((P, W, K * Cin), x_cat.dtype)
        x_cat = jnp.concatenate([zh, x_cat, zh], axis=0)    # (H+2P, W, K*Cin)
    acc = jnp.zeros((H * W, Cout), jnp.float32)
    for ky in range(K):
        acc = acc + jnp.dot(x_cat[ky:ky + H].reshape(H * W, K * Cin),
                            w_ref[ky], preferred_element_type=jnp.float32)
    return acc


def _leaky(a):
    return jnp.where(a >= 0.0, a, 0.1 * a)


# ----------------------------------------------------------------------------
# Fused moduleMain kernel: 3x3(->128) -> 3x3(->64) -> 3x3(->32) -> KxK(->2pad128)
# All intermediates stay in VMEM / vregs; bf16 MXU matmuls, f32 accumulation.
# ----------------------------------------------------------------------------
def _fused_main_kernel(feat_ref, flow_ref,
                       w1f_ref, w1l_ref, b1_ref,
                       w2_ref, b2_ref,
                       w3_ref, b3_ref,
                       w4_ref, b4_ref,
                       o_ref, *, H, W, K4, P4):
    bf16 = jnp.bfloat16

    feat = feat_ref[0]        # (H, W, Cfeat)  bf16, Cfeat = 128/192/256/384
    flow = flow_ref[0]        # (H, W, 8)      bf16 (2 real + 6 zero channels)

    # layer 1: 3x3 / pad 1, Cin = Cfeat + 2; flow tail contracted separately so
    # the main MXU contraction depth is exactly 3*Cfeat.
    a = _conv_same(feat, w1f_ref, 3, 1, H, W)
    a = a + _conv_same(flow, w1l_ref, 3, 1, H, W)
    a = _leaky(a + b1_ref[...])
    a = a.reshape(H, W, 128).astype(bf16)

    # layer 2: 3x3 / pad 1, 128 -> 64
    a = _leaky(_conv_same(a, w2_ref, 3, 1, H, W) + b2_ref[...])
    a = a.reshape(H, W, 64).astype(bf16)

    # layer 3: 3x3 / pad 1, 64 -> 32
    a = _leaky(_conv_same(a, w3_ref, 3, 1, H, W) + b3_ref[...])
    a = a.reshape(H, W, 32).astype(bf16)

    # layer 4: K4xK4 / pad P4, 32 -> 2 (zero-padded to 128 lanes), no activation
    a = _conv_same(a, w4_ref, K4, P4, H, W) + b4_ref[...]
    o_ref[...] = a.reshape(1, H, W, 128).astype(o_ref.dtype)


def _prep_w(w):
    """(K, K, Cin, Cout) -> (K, K*Cin, Cout) bf16, row order = kx-major then ci."""
    K, _, Cin, Cout = w.shape
    return w.astype(jnp.bfloat16).reshape(K, K * Cin, Cout)


def fused_main(feat, flow, main_params, *, K4, P4):
    """feat: (B,H,W,Cfeat) bf16, flow: (B,H,W,2) f32. Returns (B,H,W,2) f32."""
    B, H, W, Cfeat = feat.shape
    (w1, b1), (w2, b2), (w3, b3), (w4, b4) = main_params

    # Split layer-1 weights into feature / flow parts (concat order [f1, f2, flow]).
    w1f = _prep_w(w1[:, :, :Cfeat, :])
    w1l = _prep_w(jnp.pad(w1[:, :, Cfeat:, :], ((0, 0), (0, 0), (0, 6), (0, 0))))
    w2r = _prep_w(w2)
    w3r = _prep_w(w3)
    # Pad final Cout 2 -> 128 so the output store is lane-dense / MXU full width.
    w4r = _prep_w(jnp.pad(w4, ((0, 0), (0, 0), (0, 0), (0, 128 - w4.shape[-1]))))
    b4p = jnp.pad(b4, ((0, 128 - b4.shape[0]),))

    flow8 = jnp.pad(flow, ((0, 0), (0, 0), (0, 0), (0, 6))).astype(jnp.bfloat16)

    kernel = functools.partial(_fused_main_kernel, H=H, W=W, K4=K4, P4=P4)
    out = pl.pallas_call(
        kernel,
        out_shape=jax.ShapeDtypeStruct((B, H, W, 128), jnp.float32),
        grid=(B,),
        in_specs=[
            pl.BlockSpec((1, H, W, Cfeat), lambda b: (b, 0, 0, 0)),
            pl.BlockSpec((1, H, W, 8), lambda b: (b, 0, 0, 0)),
            pl.BlockSpec(w1f.shape, lambda b: (0, 0, 0)),
            pl.BlockSpec(w1l.shape, lambda b: (0, 0, 0)),
            pl.BlockSpec((1, 128), lambda b: (0, 0)),
            pl.BlockSpec(w2r.shape, lambda b: (0, 0, 0)),
            pl.BlockSpec((1, 64), lambda b: (0, 0)),
            pl.BlockSpec(w3r.shape, lambda b: (0, 0, 0)),
            pl.BlockSpec((1, 32), lambda b: (0, 0)),
            pl.BlockSpec(w4r.shape, lambda b: (0, 0, 0)),
            pl.BlockSpec((1, 128), lambda b: (0, 0)),
        ],
        out_specs=pl.BlockSpec((1, H, W, 128), lambda b: (b, 0, 0, 0)),
        compiler_params=pltpu.CompilerParams(
            dimension_semantics=("parallel",),
            vmem_limit_bytes=32 * 1024 * 1024),
    )(feat, flow8,
      w1f, w1l, b1.reshape(1, 128).astype(jnp.float32),
      w2r, b2.reshape(1, 64).astype(jnp.float32),
      w3r, b3.reshape(1, 32).astype(jnp.float32),
      w4r, b4p.reshape(1, 128).astype(jnp.float32))
    return out[..., :2]


# ----------------------------------------------------------------------------
# moduleFeat (level 2 only): 1x1 conv + LeakyReLU = per-pixel matmul on the MXU.
# ----------------------------------------------------------------------------
def _feat1x1_kernel(x_ref, w_ref, b_ref, o_ref, *, H, W):
    Cin = x_ref.shape[-1]
    Cout = w_ref.shape[-1]
    y = jnp.dot(x_ref[0].reshape(H * W, Cin), w_ref[...],
                preferred_element_type=jnp.float32) + b_ref[...]
    y = _leaky(y)
    o_ref[...] = y.reshape(1, H, W, Cout).astype(o_ref.dtype)


def feat_conv1x1(x, w, b):
    """x: (N,H,W,Cin) f32; w: (1,1,Cin,Cout); b: (Cout,). Returns f32 NHWC."""
    N, H, W, Cin = x.shape
    Cout = w.shape[-1]
    wk = w.reshape(Cin, Cout).astype(jnp.bfloat16)
    kernel = functools.partial(_feat1x1_kernel, H=H, W=W)
    return pl.pallas_call(
        kernel,
        out_shape=jax.ShapeDtypeStruct((N, H, W, Cout), jnp.float32),
        grid=(N,),
        in_specs=[
            pl.BlockSpec((1, H, W, Cin), lambda n: (n, 0, 0, 0)),
            pl.BlockSpec((Cin, Cout), lambda n: (0, 0)),
            pl.BlockSpec((1, Cout), lambda n: (0, 0)),
        ],
        out_specs=pl.BlockSpec((1, H, W, Cout), lambda n: (n, 0, 0, 0)),
        compiler_params=pltpu.CompilerParams(dimension_semantics=("parallel",)),
    )(x.astype(jnp.bfloat16), wk, b.reshape(1, Cout).astype(jnp.float32))


# ----------------------------------------------------------------------------
# Backward warp (bilinear grid_sample, zeros padding, align_corners=True, +mask)
# TODO(synk): data-dependent bilinear gather kept in plain JAX (no clean
#             rectangular-tile Pallas equivalent without a manual DMA gather).
# ----------------------------------------------------------------------------
def backward_warp_nhwc(inp, flow):
    B, H, W, C = inp.shape
    inp1 = jnp.concatenate([inp, jnp.ones((B, H, W, 1), inp.dtype)], axis=-1)
    xs = jnp.arange(W, dtype=jnp.float32)
    ys = jnp.arange(H, dtype=jnp.float32)
    px = xs[None, None, :] + flow[..., 0]
    py = ys[None, :, None] + flow[..., 1]
    x0 = jnp.floor(px)
    y0 = jnp.floor(py)
    x1 = x0 + 1.0
    y1 = y0 + 1.0
    wx1 = px - x0
    wx0 = 1.0 - wx1
    wy1 = py - y0
    wy0 = 1.0 - wy1
    flat = inp1.reshape(B, H * W, C + 1)

    def gather(yi, xi):
        valid = ((xi >= 0) & (xi <= W - 1) & (yi >= 0) & (yi <= H - 1))
        xi_c = jnp.clip(xi, 0, W - 1).astype(jnp.int32)
        yi_c = jnp.clip(yi, 0, H - 1).astype(jnp.int32)
        idx = (yi_c * W + xi_c).reshape(B, H * W, 1)
        g = jnp.take_along_axis(flat, idx, axis=1).reshape(B, H, W, C + 1)
        return g * valid[..., None].astype(inp.dtype)

    out = (gather(y0, x0) * (wy0 * wx0)[..., None]
           + gather(y0, x1) * (wy0 * wx1)[..., None]
           + gather(y1, x0) * (wy1 * wx0)[..., None]
           + gather(y1, x1) * (wy1 * wx1)[..., None])
    mask = (out[..., -1:] > 0.999).astype(inp.dtype)
    return out[..., :-1] * mask


# ----------------------------------------------------------------------------
# Subpixel module
# ----------------------------------------------------------------------------
_DBL_BACKWARD = [0.0, 0.0, 10.0, 5.0, 2.5, 1.25, 0.625]
_MAIN_IN = [0, 0, 130, 130, 194, 258, 386]
_LAST_K = [0, 0, 7, 5, 5, 3, 3]
_LAST_P = [0, 0, 3, 2, 2, 1, 1]


def init_params(key, intLevel):
    params = {"feat": None, "main": []}
    if intLevel == 2:
        key, kw, kb = jax.random.split(key, 3)
        wf = jax.random.normal(kw, (1, 1, 32, 64), jnp.float32) * 0.05
        bf = jax.random.normal(kb, (64,), jnp.float32) * 0.05
        params["feat"] = (wf, bf)
    defs = [
        (3, _MAIN_IN[intLevel], 128),
        (3, 128, 64),
        (3, 64, 32),
        (_LAST_K[intLevel], 32, 2),
    ]
    for (k, cin, cout) in defs:
        key, kw, kb = jax.random.split(key, 3)
        w = jax.random.normal(kw, (k, k, cin, cout), jnp.float32) * 0.05
        b = jax.random.normal(kb, (cout,), jnp.float32) * 0.05
        params["main"].append((w, b))
    return params


def subpixel_forward(params, tensorFirst, tensorSecond,
                     tensorFeaturesFirst, tensorFeaturesSecond, tensorFlow,
                     *, intLevel):
    # tensorFirst / tensorSecond are unused by the PyTorch forward; kept for parity.
    del tensorFirst, tensorSecond
    to_nhwc = lambda t: jnp.transpose(t, (0, 2, 3, 1))
    to_nchw = lambda t: jnp.transpose(t, (0, 3, 1, 2))

    f1 = to_nhwc(tensorFeaturesFirst)
    f2 = to_nhwc(tensorFeaturesSecond)
    fl = to_nhwc(tensorFlow)
    B = f1.shape[0]

    # moduleFeat (one pallas_call over both feature maps stacked on batch)
    if params["feat"] is not None:
        wf, bf = params["feat"]
        both = feat_conv1x1(jnp.concatenate([f1, f2], axis=0), wf, bf)
        f1, f2 = both[:B], both[B:]

    # Backward warp of the second feature map (flow always valid at these levels).
    f2 = backward_warp_nhwc(f2, fl * _DBL_BACKWARD[intLevel])

    # moduleMain, fused into a single Pallas kernel.
    feat = jnp.concatenate([f1, f2], axis=-1).astype(jnp.bfloat16)
    res = fused_main(feat, fl, params["main"],
                     K4=_LAST_K[intLevel], P4=_LAST_P[intLevel])
    return to_nchw(fl + res)


# ----------------------------------------------------------------------------
# Pure-JAX f32 reference (sanity check of the Pallas kernels)
# ----------------------------------------------------------------------------
def _conv_ref(x, w, b, *, padding, leaky):
    out = jax.lax.conv_general_dilated(
        x, w, window_strides=(1, 1),
        padding=[(padding, padding), (padding, padding)],
        dimension_numbers=("NHWC", "HWIO", "NHWC"),
        precision=jax.lax.Precision.HIGHEST)
    out = out + b
    if leaky:
        out = jnp.where(out >= 0.0, out, 0.1 * out)
    return out


def subpixel_forward_ref(params, tFirst, tSecond, featFirst, featSecond, flow,
                         *, intLevel):
    del tFirst, tSecond
    to_nhwc = lambda t: jnp.transpose(t, (0, 2, 3, 1))
    to_nchw = lambda t: jnp.transpose(t, (0, 3, 1, 2))
    f1, f2, fl = to_nhwc(featFirst), to_nhwc(featSecond), to_nhwc(flow)
    if params["feat"] is not None:
        wf, bf = params["feat"]
        f1 = _conv_ref(f1, wf, bf, padding=0, leaky=True)
        f2 = _conv_ref(f2, wf, bf, padding=0, leaky=True)
    f2 = backward_warp_nhwc(f2, fl * _DBL_BACKWARD[intLevel])
    x = jnp.concatenate([f1, f2, fl], axis=-1)
    (w1, b1), (w2, b2), (w3, b3), (w4, b4) = params["main"]
    x = _conv_ref(x, w1, b1, padding=1, leaky=True)
    x = _conv_ref(x, w2, b2, padding=1, leaky=True)
    x = _conv_ref(x, w3, b3, padding=1, leaky=True)
    x = _conv_ref(x, w4, b4, padding=_LAST_P[intLevel], leaky=False)
    return to_nchw(fl + x)


if __name__ == "__main__":
    intLevel = 2            # moduleFeat = 1x1 conv, moduleMain ends with 7x7 conv
    B, H, W = 2, 16, 16

    key = jax.random.PRNGKey(0)
    k1, k2, k3, k4, k5, kp = jax.random.split(key, 6)
    tensorFirst = jax.random.normal(k1, (B, 3, H, W), jnp.float32)
    tensorSecond = jax.random.normal(k2, (B, 3, H, W), jnp.float32)
    featFirst = jax.random.normal(k3, (B, 32, H, W), jnp.float32)
    featSecond = jax.random.normal(k4, (B, 32, H, W), jnp.float32)
    flow = jax.random.normal(k5, (B, 2, H, W), jnp.float32) * 0.5

    params = init_params(kp, intLevel)

    fwd = jax.jit(functools.partial(subpixel_forward, intLevel=intLevel))
    out = fwd(params, tensorFirst, tensorSecond, featFirst, featSecond, flow)
    out = jax.block_until_ready(out)
    assert out.shape == (B, 2, H, W), out.shape

    ref = subpixel_forward_ref(params, tensorFirst, tensorSecond,
                               featFirst, featSecond, flow, intLevel=intLevel)
    ref = jax.block_until_ready(ref)
    err = float(jnp.max(jnp.abs(out - ref)))
    scale = float(jnp.max(jnp.abs(ref))) + 1.0
    # bf16 MXU inputs (f32 accumulation) => small, bounded deviation from the
    # pure-f32 reference.
    assert err <= 2e-2 * scale, f"mismatch vs reference: max abs err {err}"

    print("KERNEL_OK")
</pallas_src>

<mosaic_0001>
module attributes {stable_mosaic.version = 11 : i64} {
  func.func @_feat1x1_kernel(%arg0: i32, %arg1: memref<1x16x16x32xbf16, #tpu.memory_space<vmem>>, %arg2: memref<32x64xbf16, #tpu.memory_space<vmem>>, %arg3: memref<1x64xf32, #tpu.memory_space<vmem>>, %arg4: memref<1x16x16x64xf32, #tpu.memory_space<vmem>>) attributes {dimension_semantics = [#tpu.dimension_semantics<parallel>], iteration_bounds = array<i64: 4>, scalar_prefetch = 0 : i64, scratch_operands = 0 : i64, tpu.core_type = #tpu.core_type<tc>, window_params = [{transform_indices = @transform_0, window_bounds = array<i64: 1, 16, 16, 32>}, {pipeline_mode = #tpu.pipeline_mode<synchronous>, transform_indices = @transform_1, window_bounds = array<i64: 32, 64>}, {pipeline_mode = #tpu.pipeline_mode<synchronous>, transform_indices = @transform_2, window_bounds = array<i64: 1, 64>}, {transform_indices = @transform_3, window_bounds = array<i64: 1, 16, 16, 64>}]} {
    %c0 = arith.constant 0 : index
    %c0_0 = arith.constant 0 : index
    %c0_1 = arith.constant 0 : index
    %c0_2 = arith.constant 0 : index
    %0 = vector.load %arg1[%c0, %c0_0, %c0_1, %c0_2] : memref<1x16x16x32xbf16, #tpu.memory_space<vmem>>, vector<1x16x16x32xbf16>
    %1 = vector.shape_cast %0 : vector<1x16x16x32xbf16> to vector<16x16x32xbf16>
    %2 = vector.shape_cast %1 : vector<16x16x32xbf16> to vector<256x32xbf16>
    %c0_3 = arith.constant 0 : index
    %c0_4 = arith.constant 0 : index
    %3 = vector.load %arg2[%c0_3, %c0_4] : memref<32x64xbf16, #tpu.memory_space<vmem>>, vector<32x64xbf16>
    %cst = arith.constant dense<0.000000e+00> : vector<256x64xf32>
    %4 = tpu.matmul %2, %3, %cst {dimension_numbers = #tpu.dot_dimension_numbers<[1], [0], [0], [1], [0, 0, 1, 1], [], []>} : vector<256x32xbf16>, vector<32x64xbf16>, vector<256x64xf32> -> vector<256x64xf32>
    %c0_5 = arith.constant 0 : index
    %c0_6 = arith.constant 0 : index
    %5 = vector.load %arg3[%c0_5, %c0_6] : memref<1x64xf32, #tpu.memory_space<vmem>>, vector<1x64xf32>
    %6 = vector.broadcast %5 : vector<1x64xf32> to vector<256x64xf32>
    %7 = arith.addf %4, %6 : vector<256x64xf32>
    %cst_7 = arith.constant 0.000000e+00 : f32
    %8 = vector.broadcast %cst_7 : f32 to vector<256x64xf32>
    %9 = arith.cmpf oge, %7, %8 : vector<256x64xf32>
    %cst_8 = arith.constant 1.000000e-01 : f32
    %10 = vector.broadcast %cst_8 : f32 to vector<256x64xf32>
    %11 = arith.mulf %10, %7 : vector<256x64xf32>
    %12 = arith.select %9, %7, %11 : vector<256x64xi1>, vector<256x64xf32>
    %13 = vector.shape_cast %12 : vector<256x64xf32> to vector<1x16x16x64xf32>
    %c0_9 = arith.constant 0 : index
    %c0_10 = arith.constant 0 : index
    %c0_11 = arith.constant 0 : index
    %c0_12 = arith.constant 0 : index
    %14 = vector.load %arg4[%c0_9, %c0_10, %c0_11, %c0_12] : memref<1x16x16x64xf32, #tpu.memory_space<vmem>>, vector<1x16x16x64xf32>
    tpu.vector_store %arg4[%c0_9, %c0_10, %c0_11, %c0_12], %13 {strides = array<i32>} : memref<1x16x16x64xf32, #tpu.memory_space<vmem>>, vector<1x16x16x64xf32>,
    return
  }
  func.func @transform_0(%arg0: i32) -> (i32, i32, i32, i32) {
    %c0_i32 = arith.constant 0 : i32
    %c0_i32_0 = arith.constant 0 : i32
    %c0_i32_1 = arith.constant 0 : i32
    %c0_i32_2 = arith.constant 0 : i32
    return %arg0, %c0_i32, %c0_i32_0, %c0_i32_1 : i32, i32, i32, i32
  }
  func.func @transform_1(%arg0: i32) -> (i32, i32) {
    %c0_i32 = arith.constant 0 : i32
    %c0_i32_0 = arith.constant 0 : i32
    %c0_i32_1 = arith.constant 0 : i32
    return %c0_i32, %c0_i32_0 : i32, i32
  }
  func.func @transform_2(%arg0: i32) -> (i32, i32) {
    %c0_i32 = arith.constant 0 : i32
    %c0_i32_0 = arith.constant 0 : i32
    %c0_i32_1 = arith.constant 0 : i32
    return %c0_i32, %c0_i32_0 : i32, i32
  }
  func.func @transform_3(%arg0: i32) -> (i32, i32, i32, i32) {
    %c0_i32 = arith.constant 0 : i32
    %c0_i32_0 = arith.constant 0 : i32
    %c0_i32_1 = arith.constant 0 : i32
    %c0_i32_2 = arith.constant 0 : i32
    return %arg0, %c0_i32, %c0_i32_0, %c0_i32_1 : i32, i32, i32, i32
  }
}

module attributes {stable_mosaic.version = 11 : i64} {
  func.func @_fused_main_kernel(%arg0: i32, %arg1: memref<1x16x16x128xbf16, #tpu.memory_space<vmem>>, %arg2: memref<1x16x16x8xbf16, #tpu.memory_space<vmem>>, %arg3: memref<3x384x128xbf16, #tpu.memory_space<vmem>>, %arg4: memref<3x24x128xbf16, #tpu.memory_space<vmem>>, %arg5: memref<1x128xf32, #tpu.memory_space<vmem>>, %arg6: memref<3x384x64xbf16, #tpu.memory_space<vmem>>, %arg7: memref<1x64xf32, #tpu.memory_space<vmem>>, %arg8: memref<3x192x32xbf16, #tpu.memory_space<vmem>>, %arg9: memref<1x32xf32, #tpu.memory_space<vmem>>, %arg10: memref<7x224x128xbf16, #tpu.memory_space<vmem>>, %arg11: memref<1x128xf32, #tpu.memory_space<vmem>>, %arg12: memref<1x16x16x128xf32, #tpu.memory_space<vmem>>) attributes {dimension_semantics = [#tpu.dimension_semantics<parallel>], iteration_bounds = array<i64: 2>, scalar_prefetch = 0 : i64, scratch_operands = 0 : i64, tpu.core_type = #tpu.core_type<tc>, window_params = [{transform_indices = @transform_0, window_bounds = array<i64: 1, 16, 16, 128>}, {transform_indices = @transform_1, window_bounds = array<i64: 1, 16, 16, 8>}, {pipeline_mode = #tpu.pipeline_mode<synchronous>, transform_indices = @transform_2, window_bounds = array<i64: 3, 384, 128>}, {pipeline_mode = #tpu.pipeline_mode<synchronous>, transform_indices = @transform_3, window_bounds = array<i64: 3, 24, 128>}, {pipeline_mode = #tpu.pipeline_mode<synchronous>, transform_indices = @transform_4, window_bounds = array<i64: 1, 128>}, {pipeline_mode = #tpu.pipeline_mode<synchronous>, transform_indices = @transform_5, window_bounds = array<i64: 3, 384, 64>}, {pipeline_mode = #tpu.pipeline_mode<synchronous>, transform_indices = @transform_6, window_bounds = array<i64: 1, 64>}, {pipeline_mode = #tpu.pipeline_mode<synchronous>, transform_indices = @transform_7, window_bounds = array<i64: 3, 192, 32>}, {pipeline_mode = #tpu.pipeline_mode<synchronous>, transform_indices = @transform_8, window_bounds = array<i64: 1, 32>}, {pipeline_mode = #tpu.pipeline_mode<synchronous>, transform_indices = @transform_9, window_bounds = array<i64: 7, 224, 128>}, {pipeline_mode = #tpu.pipeline_mode<synchronous>, transform_indices = @transform_10, window_bounds = array<i64: 1, 128>}, {transform_indices = @transform_11, window_bounds = array<i64: 1, 16, 16, 128>}]} {
    %c0 = arith.constant 0 : index
    %c0_0 = arith.constant 0 : index
    %c0_1 = arith.constant 0 : index
    %c0_2 = arith.constant 0 : index
    %0 = vector.load %arg1[%c0, %c0_0, %c0_1, %c0_2] : memref<1x16x16x128xbf16, #tpu.memory_space<vmem>>, vector<1x16x16x128xbf16>
    %1 = vector.shape_cast %0 : vector<1x16x16x128xbf16> to vector<16x16x128xbf16>
    %c0_3 = arith.constant 0 : index
    %c0_4 = arith.constant 0 : index
    %c0_5 = arith.constant 0 : index
    %c0_6 = arith.constant 0 : index
    %2 = vector.load %arg2[%c0_3, %c0_4, %c0_5, %c0_6] : memref<1x16x16x8xbf16, #tpu.memory_space<vmem>>, vector<1x16x16x8xbf16>
    %3 = vector.shape_cast %2 : vector<1x16x16x8xbf16> to vector<16x16x8xbf16>
    %cst = arith.constant 0.000000e+00 : bf16
    %4 = vector.broadcast %cst : bf16 to vector<16x1x128xbf16>
    %5 = tpu.concatenate %4, %1, %4 in 1 : vector<16x1x128xbf16>, vector<16x16x128xbf16>, vector<16x1x128xbf16> -> vector<16x18x128xbf16>
    %6 = vector.extract_strided_slice %5 {offsets = [0, 0, 0], sizes = [16, 16, 128], strides = [1, 1, 1]} : vector<16x18x128xbf16> to vector<16x16x128xbf16>
    %7 = vector.extract_strided_slice %5 {offsets = [0, 1, 0], sizes = [16, 16, 128], strides = [1, 1, 1]} : vector<16x18x128xbf16> to vector<16x16x128xbf16>
    %8 = vector.extract_strided_slice %5 {offsets = [0, 2, 0], sizes = [16, 16, 128], strides = [1, 1, 1]} : vector<16x18x128xbf16> to vector<16x16x128xbf16>
    %9 = tpu.concatenate %6, %7, %8 in 2 : vector<16x16x128xbf16>, vector<16x16x128xbf16>, vector<16x16x128xbf16> -> vector<16x16x384xbf16>
    %cst_7 = arith.constant 0.000000e+00 : bf16
    %10 = vector.broadcast %cst_7 : bf16 to vector<1x16x384xbf16>
    %11 = tpu.concatenate %10, %9, %10 in 0 : vector<1x16x384xbf16>, vector<16x16x384xbf16>, vector<1x16x384xbf16> -> vector<18x16x384xbf16>
    %cst_8 = arith.constant 0.000000e+00 : f32
    %12 = vector.broadcast %cst_8 : f32 to vector<256x128xf32>
    %13 = vector.extract_strided_slice %11 {offsets = [0, 0, 0], sizes = [16, 16, 384], strides = [1, 1, 1]} : vector<18x16x384xbf16> to vector<16x16x384xbf16>
    %14 = vector.shape_cast %13 : vector<16x16x384xbf16> to vector<256x384xbf16>
    %c0_9 = arith.constant 0 : index
    %c0_10 = arith.constant 0 : index
    %c0_11 = arith.constant 0 : index
    %15 = vector.load %arg3[%c0_9, %c0_10, %c0_11] : memref<3x384x128xbf16, #tpu.memory_space<vmem>>, vector<1x384x128xbf16>
    %16 = vector.shape_cast %15 : vector<1x384x128xbf16> to vector<384x128xbf16>
    %cst_12 = arith.constant dense<0.000000e+00> : vector<256x128xf32>
    %17 = tpu.matmul %14, %16, %cst_12 {dimension_numbers = #tpu.dot_dimension_numbers<[1], [0], [0], [1], [0, 0, 1, 1], [], []>} : vector<256x384xbf16>, vector<384x128xbf16>, vector<256x128xf32> -> vector<256x128xf32>
    %18 = arith.addf %12, %17 : vector<256x128xf32>
    %19 = vector.extract_strided_slice %11 {offsets = [1, 0, 0], sizes = [16, 16, 384], strides = [1, 1, 1]} : vector<18x16x384xbf16> to vector<16x16x384xbf16>
    %20 = vector.shape_cast %19 : vector<16x16x384xbf16> to vector<256x384xbf16>
    %c1 = arith.constant 1 : index
    %c0_13 = arith.constant 0 : index
    %c0_14 = arith.constant 0 : index
    %21 = vector.load %arg3[%c1, %c0_13, %c0_14] : memref<3x384x128xbf16, #tpu.memory_space<vmem>>, vector<1x384x128xbf16>
    %22 = vector.shape_cast %21 : vector<1x384x128xbf16> to vector<384x128xbf16>
    %cst_15 = arith.constant dense<0.000000e+00> : vector<256x128xf32>
    %23 = tpu.matmul %20, %22, %cst_15 {dimension_numbers = #tpu.dot_dimension_numbers<[1], [0], [0], [1], [0, 0, 1, 1], [], []>} : vector<256x384xbf16>, vector<384x128xbf16>, vector<256x128xf32> -> vector<256x128xf32>
    %24 = arith.addf %18, %23 : vector<256x128xf32>
    %25 = vector.extract_strided_slice %11 {offsets = [2, 0, 0], sizes = [16, 16, 384], strides = [1, 1, 1]} : vector<18x16x384xbf16> to vector<16x16x384xbf16>
    %26 = vector.shape_cast %25 : vector<16x16x384xbf16> to vector<256x384xbf16>
    %c2 = arith.constant 2 : index
    %c0_16 = arith.constant 0 : index
    %c0_17 = arith.constant 0 : index
    %27 = vector.load %arg3[%c2, %c0_16, %c0_17] : memref<3x384x128xbf16, #tpu.memory_space<vmem>>, vector<1x384x128xbf16>
    %28 = vector.shape_cast %27 : vector<1x384x128xbf16> to vector<384x128xbf16>
    %cst_18 = arith.constant dense<0.000000e+00> : vector<256x128xf32>
    %29 = tpu.matmul %26, %28, %cst_18 {dimension_numbers = #tpu.dot_dimension_numbers<[1], [0], [0], [1], [0, 0, 1, 1], [], []>} : vector<256x384xbf16>, vector<384x128xbf16>, vector<256x128xf32> -> vector<256x128xf32>
    %30 = arith.addf %24, %29 : vector<256x128xf32>
    %cst_19 = arith.constant 0.000000e+00 : bf16
    %31 = vector.broadcast %cst_19 : bf16 to vector<16x1x8xbf16>
    %32 = tpu.concatenate %31, %3, %31 in 1 : vector<16x1x8xbf16>, vector<16x16x8xbf16>, vector<16x1x8xbf16> -> vector<16x18x8xbf16>
    %33 = vector.extract_strided_slice %32 {offsets = [0, 0, 0], sizes = [16, 16, 8], strides = [1, 1, 1]} : vector<16x18x8xbf16> to vector<16x16x8xbf16>
    %34 = vector.extract_strided_slice %32 {offsets = [0, 1, 0], sizes = [16, 16, 8], strides = [1, 1, 1]} : vector<16x18x8xbf16> to vector<16x16x8xbf16>
    %35 = vector.extract_strided_slice %32 {offsets = [0, 2, 0], sizes = [16, 16, 8], strides = [1, 1, 1]} : vector<16x18x8xbf16> to vector<16x16x8xbf16>
    %36 = tpu.concatenate %33, %34, %35 in 2 : vector<16x16x8xbf16>, vector<16x16x8xbf16>, vector<16x16x8xbf16> -> vector<16x16x24xbf16>
    %cst_20 = arith.constant 0.000000e+00 : bf16
    %37 = vector.broadcast %cst_20 : bf16 to vector<1x16x24xbf16>
    %38 = tpu.concatenate %37, %36, %37 in 0 : vector<1x16x24xbf16>, vector<16x16x24xbf16>, vector<1x16x24xbf16> -> vector<18x16x24xbf16>
    %cst_21 = arith.constant 0.000000e+00 : f32
    %39 = vector.broadcast %cst_21 : f32 to vector<256x128xf32>
    %40 = vector.extract_strided_slice %38 {offsets = [0, 0, 0], sizes = [16, 16, 24], strides = [1, 1, 1]} : vector<18x16x24xbf16> to vector<16x16x24xbf16>
    %41 = vector.shape_cast %40 : vector<16x16x24xbf16> to vector<256x24xbf16>
    %c0_22 = arith.constant 0 : index
    %c0_23 = arith.constant 0 : index
    %c0_24 = arith.constant 0 : index
    %42 = vector.load %arg4[%c0_22, %c0_23, %c0_24] : memref<3x24x128xbf16, #tpu.memory_space<vmem>>, vector<1x24x128xbf16>
    %43 = vector.shape_cast %42 : vector<1x24x128xbf16> to vector<24x128xbf16>
    %cst_25 = arith.constant dense<0.000000e+00> : vector<256x128xf32>
    %44 = tpu.matmul %41, %43, %cst_25 {dimension_numbers = #tpu.dot_dimension_numbers<[1], [0], [0], [1], [0, 0, 1, 1], [], []>} : vector<256x24xbf16>, vector<24x128xbf16>, vector<256x128xf32> -> vector<256x128xf32>
    %45 = arith.addf %39, %44 : vector<256x128xf32>
    %46 = vector.extract_strided_slice %38 {offsets = [1, 0, 0], sizes = [16, 16, 24], strides = [1, 1, 1]} : vector<18x16x24xbf16> to vector<16x16x24xbf16>
    %47 = vector.shape_cast %46 : vector<16x16x24xbf16> to vector<256x24xbf16>
    %c1_26 = arith.constant 1 : index
    %c0_27 = arith.constant 0 : index
    %c0_28 = arith.constant 0 : index
    %48 = vector.load %arg4[%c1_26, %c0_27, %c0_28] : memref<3x24x128xbf16, #tpu.memory_space<vmem>>, vector<1x24x128xbf16>
    %49 = vector.shape_cast %48 : vector<1x24x128xbf16> to vector<24x128xbf16>
    %cst_29 = arith.constant dense<0.000000e+00> : vector<256x128xf32>
    %50 = tpu.matmul %47, %49, %cst_29 {dimension_numbers = #tpu.dot_dimension_numbers<[1], [0], [0], [1], [0, 0, 1, 1], [], []>} : vector<256x24xbf16>, vector<24x128xbf16>, vector<256x128xf32> -> vector<256x128xf32>
    %51 = arith.addf %45, %50 : vector<256x128xf32>
    %52 = vector.extract_strided_slice %38 {offsets = [2, 0, 0], sizes = [16, 16, 24], strides = [1, 1, 1]} : vector<18x16x24xbf16> to vector<16x16x24xbf16>
    %53 = vector.shape_cast %52 : vector<16x16x24xbf16> to vector<256x24xbf16>
    %c2_30 = arith.constant 2 : index
    %c0_31 = arith.constant 0 : index
    %c0_32 = arith.constant 0 : index
    %54 = vector.load %arg4[%c2_30, %c0_31, %c0_32] : memref<3x24x128xbf16, #tpu.memory_space<vmem>>, vector<1x24x128xbf16>
    %55 = vector.shape_cast %54 : vector<1x24x128xbf16> to vector<24x128xbf16>
    %cst_33 = arith.constant dense<0.000000e+00> : vector<256x128xf32>
    %56 = tpu.matmul %53, %55, %cst_33 {dimension_numbers = #tpu.dot_dimension_numbers<[1], [0], [0], [1], [0, 0, 1, 1], [], []>} : vector<256x24xbf16>, vector<24x128xbf16>, vector<256x128xf32> -> vector<256x128xf32>
    %57 = arith.addf %51, %56 : vector<256x128xf32>
    %58 = arith.addf %30, %57 : vector<256x128xf32>
    %c0_34 = arith.constant 0 : index
    %c0_35 = arith.constant 0 : index
    %59 = vector.load %arg5[%c0_34, %c0_35] : memref<1x128xf32, #tpu.memory_space<vmem>>, vector<1x128xf32>
    %60 = vector.broadcast %59 : vector<1x128xf32> to vector<256x128xf32>
    %61 = arith.addf %58, %60 : vector<256x128xf32>
    %cst_36 = arith.constant 0.000000e+00 : f32
    %62 = vector.broadcast %cst_36 : f32 to vector<256x128xf32>
    %63 = arith.cmpf oge, %61, %62 : vector<256x128xf32>
    %cst_37 = arith.constant 1.000000e-01 : f32
    %64 = vector.broadcast %cst_37 : f32 to vector<256x128xf32>
    %65 = arith.mulf %64, %61 : vector<256x128xf32>
    %66 = arith.select %63, %61, %65 : vector<256x128xi1>, vector<256x128xf32>
    %67 = vector.shape_cast %66 : vector<256x128xf32> to vector<16x16x128xf32>
    %68 = arith.truncf %67 : vector<16x16x128xf32> to vector<16x16x128xbf16>
    %cst_38 = arith.constant 0.000000e+00 : bf16
    %69 = vector.broadcast %cst_38 : bf16 to vector<16x1x128xbf16>
    %70 = tpu.concatenate %69, %68, %69 in 1 : vector<16x1x128xbf16>, vector<16x16x128xbf16>, vector<16x1x128xbf16> -> vector<16x18x128xbf16>
    %71 = vector.extract_strided_slice %70 {offsets = [0, 0, 0], sizes = [16, 16, 128], strides = [1, 1, 1]} : vector<16x18x128xbf16> to vector<16x16x128xbf16>
    %72 = vector.extract_strided_slice %70 {offsets = [0, 1, 0], sizes = [16, 16, 128], strides = [1, 1, 1]} : vector<16x18x128xbf16> to vector<16x16x128xbf16>
    %73 = vector.extract_strided_slice %70 {offsets = [0, 2, 0], sizes = [16, 16, 128], strides = [1, 1, 1]} : vector<16x18x128xbf16> to vector<16x16x128xbf16>
    %74 = tpu.concatenate %71, %72, %73 in 2 : vector<16x16x128xbf16>, vector<16x16x128xbf16>, vector<16x16x128xbf16> -> vector<16x16x384xbf16>
    %cst_39 = arith.constant 0.000000e+00 : bf16
    %75 = vector.broadcast %cst_39 : bf16 to vector<1x16x384xbf16>
    %76 = tpu.concatenate %75, %74, %75 in 0 : vector<1x16x384xbf16>, vector<16x16x384xbf16>, vector<1x16x384xbf16> -> vector<18x16x384xbf16>
    %cst_40 = arith.constant 0.000000e+00 : f32
    %77 = vector.broadcast %cst_40 : f32 to vector<256x64xf32>
    %78 = vector.extract_strided_slice %76 {offsets = [0, 0, 0], sizes = [16, 16, 384], strides = [1, 1, 1]} : vector<18x16x384xbf16> to vector<16x16x384xbf16>
    %79 = vector.shape_cast %78 : vector<16x16x384xbf16> to vector<256x384xbf16>
    %c0_41 = arith.constant 0 : index
    %c0_42 = arith.constant 0 : index
    %c0_43 = arith.constant 0 : index
    %80 = vector.load %arg6[%c0_41, %c0_42, %c0_43] : memref<3x384x64xbf16, #tpu.memory_space<vmem>>, vector<1x384x64xbf16>
    %81 = vector.shape_cast %80 : vector<1x384x64xbf16> to vector<384x64xbf16>
    %cst_44 = arith.constant dense<0.000000e+00> : vector<256x64xf32>
    %82 = tpu.matmul %79, %81, %cst_44 {dimension_numbers = #tpu.dot_dimension_numbers<[1], [0], [0], [1], [0, 0, 1, 1], [], []>} : vector<256x384xbf16>, vector<384x64xbf16>, vector<256x64xf32> -> vector<256x64xf32>
    %83 = arith.addf %77, %82 : vector<256x64xf32>
    %84 = vector.extract_strided_slice %76 {offsets = [1, 0, 0], sizes = [16, 16, 384], strides = [1, 1, 1]} : vector<18x16x384xbf16> to vector<16x16x384xbf16>
    %85 = vector.shape_cast %84 : vector<16x16x384xbf16> to vector<256x384xbf16>
    %c1_45 = arith.constant 1 : index
    %c0_46 = arith.constant 0 : index
    %c0_47 = arith.constant 0 : index
    %86 = vector.load %arg6[%c1_45, %c0_46, %c0_47] : memref<3x384x64xbf16, #tpu.memory_space<vmem>>, vector<1x384x64xbf16>
    %87 = vector.shape_cast %86 : vector<1x384x64xbf16> to vector<384x64xbf16>
    %cst_48 = arith.constant dense<0.000000e+00> : vector<256x64xf32>
    %88 = tpu.matmul %85, %87, %cst_48 {dimension_numbers = #tpu.dot_dimension_numbers<[1], [0], [0], [1], [0, 0, 1, 1], [], []>} : vector<256x384xbf16>, vector<384x64xbf16>, vector<256x64xf32> -> vector<256x64xf32>
    %89 = arith.addf %83, %88 : vector<256x64xf32>
    %90 = vector.extract_strided_slice %76 {offsets = [2, 0, 0], sizes = [16, 16, 384], strides = [1, 1, 1]} : vector<18x16x384xbf16> to vector<16x16x384xbf16>
    %91 = vector.shape_cast %90 : vector<16x16x384xbf16> to vector<256x384xbf16>
    %c2_49 = arith.constant 2 : index
    %c0_50 = arith.constant 0 : index
    %c0_51 = arith.constant 0 : index
    %92 = vector.load %arg6[%c2_49, %c0_50, %c0_51] : memref<3x384x64xbf16, #tpu.memory_space<vmem>>, vector<1x384x64xbf16>
    %93 = vector.shape_cast %92 : vector<1x384x64xbf16> to vector<384x64xbf16>
    %cst_52 = arith.constant dense<0.000000e+00> : vector<256x64xf32>
    %94 = tpu.matmul %91, %93, %cst_52 {dimension_numbers = #tpu.dot_dimension_numbers<[1], [0], [0], [1], [0, 0, 1, 1], [], []>} : vector<256x384xbf16>, vector<384x64xbf16>, vector<256x64xf32> -> vector<256x64xf32>
    %95 = arith.addf %89, %94 : vector<256x64xf32>
    %c0_53 = arith.constant 0 : index
    %c0_54 = arith.constant 0 : index
    %96 = vector.load %arg7[%c0_53, %c0_54] : memref<1x64xf32, #tpu.memory_space<vmem>>, vector<1x64xf32>
    %97 = vector.broadcast %96 : vector<1x64xf32> to vector<256x64xf32>
    %98 = arith.addf %95, %97 : vector<256x64xf32>
    %cst_55 = arith.constant 0.000000e+00 : f32
    %99 = vector.broadcast %cst_55 : f32 to vector<256x64xf32>
    %100 = arith.cmpf oge, %98, %99 : vector<256x64xf32>
    %cst_56 = arith.constant 1.000000e-01 : f32
    %101 = vector.broadcast %cst_56 : f32 to vector<256x64xf32>
    %102 = arith.mulf %101, %98 : vector<256x64xf32>
    %103 = arith.select %100, %98, %102 : vector<256x64xi1>, vector<256x64xf32>
    %104 = vector.shape_cast %103 : vector<256x64xf32> to vector<16x16x64xf32>
    %105 = arith.truncf %104 : vector<16x16x64xf32> to vector<16x16x64xbf16>
    %cst_57 = arith.constant 0.000000e+00 : bf16
    %106 = vector.broadcast %cst_57 : bf16 to vector<16x1x64xbf16>
    %107 = tpu.concatenate %106, %105, %106 in 1 : vector<16x1x64xbf16>, vector<16x16x64xbf16>, vector<16x1x64xbf16> -> vector<16x18x64xbf16>
    %108 = vector.extract_strided_slice %107 {offsets = [0, 0, 0], sizes = [16, 16, 64], strides = [1, 1, 1]} : vector<16x18x64xbf16> to vector<16x16x64xbf16>
    %109 = vector.extract_strided_slice %107 {offsets = [0, 1, 0], sizes = [16, 16, 64], strides = [1, 1, 1]} : vector<16x18x64xbf16> to vector<16x16x64xbf16>
    %110 = vector.extract_strided_slice %107 {offsets = [0, 2, 0], sizes = [16, 16, 64], strides = [1, 1, 1]} : vector<16x18x64xbf16> to vector<16x16x64xbf16>
    %111 = tpu.concatenate %108, %109, %110 in 2 : vector<16x16x64xbf16>, vector<16x16x64xbf16>, vector<16x16x64xbf16> -> vector<16x16x192xbf16>
    %cst_58 = arith.constant 0.000000e+00 : bf16
    %112 = vector.broadcast %cst_58 : bf16 to vector<1x16x192xbf16>
    %113 = tpu.concatenate %112, %111, %112 in 0 : vector<1x16x192xbf16>, vector<16x16x192xbf16>, vector<1x16x192xbf16> -> vector<18x16x192xbf16>
    %cst_59 = arith.constant 0.000000e+00 : f32
    %114 = vector.broadcast %cst_59 : f32 to vector<256x32xf32>
    %115 = vector.extract_strided_slice %113 {offsets = [0, 0, 0], sizes = [16, 16, 192], strides = [1, 1, 1]} : vector<18x16x192xbf16> to vector<16x16x192xbf16>
    %116 = vector.shape_cast %115 : vector<16x16x192xbf16> to vector<256x192xbf16>
    %c0_60 = arith.constant 0 : index
    %c0_61 = arith.constant 0 : index
    %c0_62 = arith.constant 0 : index
    %117 = vector.load %arg8[%c0_60, %c0_61, %c0_62] : memref<3x192x32xbf16, #tpu.memory_space<vmem>>, vector<1x192x32xbf16>
    %118 = vector.shape_cast %117 : vector<1x192x32xbf16> to vector<192x32xbf16>
    %cst_63 = arith.constant dense<0.000000e+00> : vector<256x32xf32>
    %119 = tpu.matmul %116, %118, %cst_63 {dimension_numbers = #tpu.dot_dimension_numbers<[1], [0], [0], [1], [0, 0, 1, 1], [], []>} : vector<256x192xbf16>, vector<192x32xbf16>, vector<256x32xf32> -> vector<256x32xf32>
    %120 = arith.addf %114, %119 : vector<256x32xf32>
    %121 = vector.extract_strided_slice %113 {offsets = [1, 0, 0], sizes = [16, 16, 192], strides = [1, 1, 1]} : vector<18x16x192xbf16> to vector<16x16x192xbf16>
    %122 = vector.shape_cast %121 : vector<16x16x192xbf16> to vector<256x192xbf16>
    %c1_64 = arith.constant 1 : index
    %c0_65 = arith.constant 0 : index
    %c0_66 = arith.constant 0 : index
    %123 = vector.load %arg8[%c1_64, %c0_65, %c0_66] : memref<3x192x32xbf16, #tpu.memory_space<vmem>>, vector<1x192x32xbf16>
    %124 = vector.shape_cast %123 : vector<1x192x32xbf16> to vector<192x32xbf16>
    %cst_67 = arith.constant dense<0.000000e+00> : vector<256x32xf32>
    %125 = tpu.matmul %122, %124, %cst_67 {dimension_numbers = #tpu.dot_dimension_numbers<[1], [0], [0], [1], [0, 0, 1, 1], [], []>} : vector<256x192xbf16>, vector<192x32xbf16>, vector<256x32xf32> -> vector<256x32xf32>
    %126 = arith.addf %120, %125 : vector<256x32xf32>
    %127 = vector.extract_strided_slice %113 {offsets = [2, 0, 0], sizes = [16, 16, 192], strides = [1, 1, 1]} : vector<18x16x192xbf16> to vector<16x16x192xbf16>
    %128 = vector.shape_cast %127 : vector<16x16x192xbf16> to vector<256x192xbf16>
    %c2_68 = arith.constant 2 : index
    %c0_69 = arith.constant 0 : index
    %c0_70 = arith.constant 0 : index
    %129 = vector.load %arg8[%c2_68, %c0_69, %c0_70] : memref<3x192x32xbf16, #tpu.memory_space<vmem>>, vector<1x192x32xbf16>
    %130 = vector.shape_cast %129 : vector<1x192x32xbf16> to vector<192x32xbf16>
    %cst_71 = arith.constant dense<0.000000e+00> : vector<256x32xf32>
    %131 = tpu.matmul %128, %130, %cst_71 {dimension_numbers = #tpu.dot_dimension_numbers<[1], [0], [0], [1], [0, 0, 1, 1], [], []>} : vector<256x192xbf16>, vector<192x32xbf16>, vector<256x32xf32> -> vector<256x32xf32>
    %132 = arith.addf %126, %131 : vector<256x32xf32>
    %c0_72 = arith.constant 0 : index
    %c0_73 = arith.constant 0 : index
    %133 = vector.load %arg9[%c0_72, %c0_73] : memref<1x32xf32, #tpu.memory_space<vmem>>, vector<1x32xf32>
    %134 = vector.broadcast %133 : vector<1x32xf32> to vector<256x32xf32>
    %135 = arith.addf %132, %134 : vector<256x32xf32>
    %cst_74 = arith.constant 0.000000e+00 : f32
    %136 = vector.broadcast %cst_74 : f32 to vector<256x32xf32>
    %137 = arith.cmpf oge, %135, %136 : vector<256x32xf32>
    %cst_75 = arith.constant 1.000000e-01 : f32
    %138 = vector.broadcast %cst_75 : f32 to vector<256x32xf32>
    %139 = arith.mulf %138, %135 : vector<256x32xf32>
    %140 = arith.select %137, %135, %139 : vector<256x32xi1>, vector<256x32xf32>
    %141 = vector.shape_cast %140 : vector<256x32xf32> to vector<16x16x32xf32>
    %142 = arith.truncf %141 : vector<16x16x32xf32> to vector<16x16x32xbf16>
    %cst_76 = arith.constant 0.000000e+00 : bf16
    %143 = vector.broadcast %cst_76 : bf16 to vector<16x3x32xbf16>
    %144 = tpu.concatenate %143, %142, %143 in 1 : vector<16x3x32xbf16>, vector<16x16x32xbf16>, vector<16x3x32xbf16> -> vector<16x22x32xbf16>
    %145 = vector.extract_strided_slice %144 {offsets = [0, 0, 0], sizes = [16, 16, 32], strides = [1, 1, 1]} : vector<16x22x32xbf16> to vector<16x16x32xbf16>
    %146 = vector.extract_strided_slice %144 {offsets = [0, 1, 0], sizes = [16, 16, 32], strides = [1, 1, 1]} : vector<16x22x32xbf16> to vector<16x16x32xbf16>
    %147 = vector.extract_strided_slice %144 {offsets = [0, 2, 0], sizes = [16, 16, 32], strides = [1, 1, 1]} : vector<16x22x32xbf16> to vector<16x16x32xbf16>
    %148 = vector.extract_strided_slice %144 {offsets = [0, 3, 0], sizes = [16, 16, 32], strides = [1, 1, 1]} : vector<16x22x32xbf16> to vector<16x16x32xbf16>
    %149 = vector.extract_strided_slice %144 {offsets = [0, 4, 0], sizes = [16, 16, 32], strides = [1, 1, 1]} : vector<16x22x32xbf16> to vector<16x16x32xbf16>
    %150 = vector.extract_strided_slice %144 {offsets = [0, 5, 0], sizes = [16, 16, 32], strides = [1, 1, 1]} : vector<16x22x32xbf16> to vector<16x16x32xbf16>
    %151 = vector.extract_strided_slice %144 {offsets = [0, 6, 0], sizes = [16, 16, 32], strides = [1, 1, 1]} : vector<16x22x32xbf16> to vector<16x16x32xbf16>
    %152 = tpu.concatenate %145, %146, %147, %148, %149, %150, %151 in 2 : vector<16x16x32xbf16>, vector<16x16x32xbf16>, vector<16x16x32xbf16>, vector<16x16x32xbf16>, vector<16x16x32xbf16>, vector<16x16x32xbf16>, vector<16x16x32xbf16> -> vector<16x16x224xbf16>
    %cst_77 = arith.constant 0.000000e+00 : bf16
    %153 = vector.broadcast %cst_77 : bf16 to vector<3x16x224xbf16>
    %154 = tpu.concatenate %153, %152, %153 in 0 : vector<3x16x224xbf16>, vector<16x16x224xbf16>, vector<3x16x224xbf16> -> vector<22x16x224xbf16>
    %cst_78 = arith.constant 0.000000e+00 : f32
    %155 = vector.broadcast %cst_78 : f32 to vector<256x128xf32>
    %156 = vector.extract_strided_slice %154 {offsets = [0, 0, 0], sizes = [16, 16, 224], strides = [1, 1, 1]} : vector<22x16x224xbf16> to vector<16x16x224xbf16>
    %157 = vector.shape_cast %156 : vector<16x16x224xbf16> to vector<256x224xbf16>
    %c0_79 = arith.constant 0 : index
    %c0_80 = arith.constant 0 : index
    %c0_81 = arith.constant 0 : index
    %158 = vector.load %arg10[%c0_79, %c0_80, %c0_81] : memref<7x224x128xbf16, #tpu.memory_space<vmem>>, vector<1x224x128xbf16>
    %159 = vector.shape_cast %158 : vector<1x224x128xbf16> to vector<224x128xbf16>
    %cst_82 = arith.constant dense<0.000000e+00> : vector<256x128xf32>
    %160 = tpu.matmul %157, %159, %cst_82 {dimension_numbers = #tpu.dot_dimension_numbers<[1], [0], [0], [1], [0, 0, 1, 1], [], []>} : vector<256x224xbf16>, vector<224x128xbf16>, vector<256x128xf32> -> vector<256x128xf32>
    %161 = arith.addf %155, %160 : vector<256x128xf32>
    %162 = vector.extract_strided_slice %154 {offsets = [1, 0, 0], sizes = [16, 16, 224], strides = [1, 1, 1]} : vector<22x16x224xbf16> to vector<16x16x224xbf16>
    %163 = vector.shape_cast %162 : vector<16x16x224xbf16> to vector<256x224xbf16>
    %c1_83 = arith.constant 1 : index
    %c0_84 = arith.constant 0 : index
    %c0_85 = arith.constant 0 : index
    %164 = vector.load %arg10[%c1_83, %c0_84, %c0_85] : memref<7x224x128xbf16, #tpu.memory_space<vmem>>, vector<1x224x128xbf16>
    %165 = vector.shape_cast %164 : vector<1x224x128xbf16> to vector<224x128xbf16>
    %cst_86 = arith.constant dense<0.000000e+00> : vector<256x128xf32>
    %166 = tpu.matmul %163, %165, %cst_86 {dimension_numbers = #tpu.dot_dimension_numbers<[1], [0], [0], [1], [0, 0, 1, 1], [], []>} : vector<256x224xbf16>, vector<224x128xbf16>, vector<256x128xf32> -> vector<256x128xf32>
    %167 = arith.addf %161, %166 : vector<256x128xf32>
    %168 = vector.extract_strided_slice %154 {offsets = [2, 0, 0], sizes = [16, 16, 224], strides = [1, 1, 1]} : vector<22x16x224xbf16> to vector<16x16x224xbf16>
    %169 = vector.shape_cast %168 : vector<16x16x224xbf16> to vector<256x224xbf16>
    %c2_87 = arith.constant 2 : index
    %c0_88 = arith.constant 0 : index
    %c0_89 = arith.constant 0 : index
    %170 = vector.load %arg10[%c2_87, %c0_88, %c0_89] : memref<7x224x128xbf16, #tpu.memory_space<vmem>>, vector<1x224x128xbf16>
    %171 = vector.shape_cast %170 : vector<1x224x128xbf16> to vector<224x128xbf16>
    %cst_90 = arith.constant dense<0.000000e+00> : vector<256x128xf32>
    %172 = tpu.matmul %169, %171, %cst_90 {dimension_numbers = #tpu.dot_dimension_numbers<[1], [0], [0], [1], [0, 0, 1, 1], [], []>} : vector<256x224xbf16>, vector<224x128xbf16>, vector<256x128xf32> -> vector<256x128xf32>
    %173 = arith.addf %167, %172 : vector<256x128xf32>
    %174 = vector.extract_strided_slice %154 {offsets = [3, 0, 0], sizes = [16, 16, 224], strides = [1, 1, 1]} : vector<22x16x224xbf16> to vector<16x16x224xbf16>
    %175 = vector.shape_cast %174 : vector<16x16x224xbf16> to vector<256x224xbf16>
    %c3 = arith.constant 3 : index
    %c0_91 = arith.constant 0 : index
    %c0_92 = arith.constant 0 : index
    %176 = vector.load %arg10[%c3, %c0_91, %c0_92] : memref<7x224x128xbf16, #tpu.memory_space<vmem>>, vector<1x224x128xbf16>
    %177 = vector.shape_cast %176 : vector<1x224x128xbf16> to vector<224x128xbf16>
    %cst_93 = arith.constant dense<0.000000e+00> : vector<256x128xf32>
    %178 = tpu.matmul %175, %177, %cst_93 {dimension_numbers = #tpu.dot_dimension_numbers<[1], [0], [0], [1], [0, 0, 1, 1], [], []>} : vector<256x224xbf16>, vector<224x128xbf16>, vector<256x128xf32> -> vector<256x128xf32>
    %179 = arith.addf %173, %178 : vector<256x128xf32>
    %180 = vector.extract_strided_slice %154 {offsets = [4, 0, 0], sizes = [16, 16, 224], strides = [1, 1, 1]} : vector<22x16x224xbf16> to vector<16x16x224xbf16>
    %181 = vector.shape_cast %180 : vector<16x16x224xbf16> to vector<256x224xbf16>
    %c4 = arith.constant 4 : index
    %c0_94 = arith.constant 0 : index
    %c0_95 = arith.constant 0 : index
    %182 = vector.load %arg10[%c4, %c0_94, %c0_95] : memref<7x224x128xbf16, #tpu.memory_space<vmem>>, vector<1x224x128xbf16>
    %183 = vector.shape_cast %182 : vector<1x224x128xbf16> to vector<224x128xbf16>
    %cst_96 = arith.constant dense<0.000000e+00> : vector<256x128xf32>
    %184 = tpu.matmul %181, %183, %cst_96 {dimension_numbers = #tpu.dot_dimension_numbers<[1], [0], [0], [1], [0, 0, 1, 1], [], []>} : vector<256x224xbf16>, vector<224x128xbf16>, vector<256x128xf32> -> vector<256x128xf32>
    %185 = arith.addf %179, %184 : vector<256x128xf32>
    %186 = vector.extract_strided_slice %154 {offsets = [5, 0, 0], sizes = [16, 16, 224], strides = [1, 1, 1]} : vector<22x16x224xbf16> to vector<16x16x224xbf16>
    %187 = vector.shape_cast %186 : vector<16x16x224xbf16> to vector<256x224xbf16>
    %c5 = arith.constant 5 : index
    %c0_97 = arith.constant 0 : index
    %c0_98 = arith.constant 0 : index
    %188 = vector.load %arg10[%c5, %c0_97, %c0_98] : memref<7x224x128xbf16, #tpu.memory_space<vmem>>, vector<1x224x128xbf16>
    %189 = vector.shape_cast %188 : vector<1x224x128xbf16> to vector<224x128xbf16>
    %cst_99 = arith.constant dense<0.000000e+00> : vector<256x128xf32>
    %190 = tpu.matmul %187, %189, %cst_99 {dimension_numbers = #tpu.dot_dimension_numbers<[1], [0], [0], [1], [0, 0, 1, 1], [], []>} : vector<256x224xbf16>, vector<224x128xbf16>, vector<256x128xf32> -> vector<256x128xf32>
    %191 = arith.addf %185, %190 : vector<256x128xf32>
    %192 = vector.extract_strided_slice %154 {offsets = [6, 0, 0], sizes = [16, 16, 224], strides = [1, 1, 1]} : vector<22x16x224xbf16> to vector<16x16x224xbf16>
    %193 = vector.shape_cast %192 : vector<16x16x224xbf16> to vector<256x224xbf16>
    %c6 = arith.constant 6 : index
    %c0_100 = arith.constant 0 : index
    %c0_101 = arith.constant 0 : index
    %194 = vector.load %arg10[%c6, %c0_100, %c0_101] : memref<7x224x128xbf16, #tpu.memory_space<vmem>>, vector<1x224x128xbf16>
    %195 = vector.shape_cast %194 : vector<1x224x128xbf16> to vector<224x128xbf16>
    %cst_102 = arith.constant dense<0.000000e+00> : vector<256x128xf32>
    %196 = tpu.matmul %193, %195, %cst_102 {dimension_numbers = #tpu.dot_dimension_numbers<[1], [0], [0], [1], [0, 0, 1, 1], [], []>} : vector<256x224xbf16>, vector<224x128xbf16>, vector<256x128xf32> -> vector<256x128xf32>
    %197 = arith.addf %191, %196 : vector<256x128xf32>
    %c0_103 = arith.constant 0 : index
    %c0_104 = arith.constant 0 : index
    %198 = vector.load %arg11[%c0_103, %c0_104] : memref<1x128xf32, #tpu.memory_space<vmem>>, vector<1x128xf32>
    %199 = vector.broadcast %198 : vector<1x128xf32> to vector<256x128xf32>
    %200 = arith.addf %197, %199 : vector<256x128xf32>
    %201 = vector.shape_cast %200 : vector<256x128xf32> to vector<1x16x16x128xf32>
    %c0_105 = arith.constant 0 : index
    %c0_106 = arith.constant 0 : index
    %c0_107 = arith.constant 0 : index
    %c0_108 = arith.constant 0 : index
    %202 = vector.load %arg12[%c0_105, %c0_106, %c0_107, %c0_108] : memref<1x16x16x128xf32, #tpu.memory_space<vmem>>, vector<1x16x16x128xf32>
    tpu.vector_store %arg12[%c0_105, %c0_106, %c0_107, %c0_108], %201 {strides = array<i32>} : memref<1x16x16x128xf32, #tpu.memory_space<vmem>>, vector<1x16x16x128xf32>,
    return
  }
  func.func @transform_0(%arg0: i32) -> (i32, i32, i32, i32) {
    %c0_i32 = arith.constant 0 : i32
    %c0_i32_0 = arith.constant 0 : i32
    %c0_i32_1 = arith.constant 0 : i32
    %c0_i32_2 = arith.constant 0 : i32
    return %arg0, %c0_i32, %c0_i32_0, %c0_i32_1 : i32, i32, i32, i32
  }
  func.func @transform_1(%arg0: i32) -> (i32, i32, i32, i32) {
    %c0_i32 = arith.constant 0 : i32
    %c0_i32_0 = arith.constant 0 : i32
    %c0_i32_1 = arith.constant 0 : i32
    %c0_i32_2 = arith.constant 0 : i32
    return %arg0, %c0_i32, %c0_i32_0, %c0_i32_1 : i32, i32, i32, i32
  }
  func.func @transform_2(%arg0: i32) -> (i32, i32, i32) {
    %c0_i32 = arith.constant 0 : i32
    %c0_i32_0 = arith.constant 0 : i32
    %c0_i32_1 = arith.constant 0 : i32
    %c0_i32_2 = arith.constant 0 : i32
    return %c0_i32, %c0_i32_0, %c0_i32_1 : i32, i32, i32
  }
  func.func @transform_3(%arg0: i32) -> (i32, i32, i32) {
    %c0_i32 = arith.constant 0 : i32
    %c0_i32_0 = arith.constant 0 : i32
    %c0_i32_1 = arith.constant 0 : i32
    %c0_i32_2 = arith.constant 0 : i32
    return %c0_i32, %c0_i32_0, %c0_i32_1 : i32, i32, i32
  }
  func.func @transform_4(%arg0: i32) -> (i32, i32) {
    %c0_i32 = arith.constant 0 : i32
    %c0_i32_0 = arith.constant 0 : i32
    %c0_i32_1 = arith.constant 0 : i32
    return %c0_i32, %c0_i32_0 : i32, i32
  }
  func.func @transform_5(%arg0: i32) -> (i32, i32, i32) {
    %c0_i32 = arith.constant 0 : i32
    %c0_i32_0 = arith.constant 0 : i32
    %c0_i32_1 = arith.constant 0 : i32
    %c0_i32_2 = arith.constant 0 : i32
    return %c0_i32, %c0_i32_0, %c0_i32_1 : i32, i32, i32
  }
  func.func @transform_6(%arg0: i32) -> (i32, i32) {
    %c0_i32 = arith.constant 0 : i32
    %c0_i32_0 = arith.constant 0 : i32
    %c0_i32_1 = arith.constant 0 : i32
    return %c0_i32, %c0_i32_0 : i32, i32
  }
  func.func @transform_7(%arg0: i32) -> (i32, i32, i32) {
    %c0_i32 = arith.constant 0 : i32
    %c0_i32_0 = arith.constant 0 : i32
    %c0_i32_1 = arith.constant 0 : i32
    %c0_i32_2 = arith.constant 0 : i32
    return %c0_i32, %c0_i32_0, %c0_i32_1 : i32, i32, i32
  }
  func.func @transform_8(%arg0: i32) -> (i32, i32) {
    %c0_i32 = arith.constant 0 : i32
    %c0_i32_0 = arith.constant 0 : i32
    %c0_i32_1 = arith.constant 0 : i32
    return %c0_i32, %c0_i32_0 : i32, i32
  }
  func.func @transform_9(%arg0: i32) -> (i32, i32, i32) {
    %c0_i32 = arith.constant 0 : i32
    %c0_i32_0 = arith.constant 0 : i32
    %c0_i32_1 = arith.constant 0 : i32
    %c0_i32_2 = arith.constant 0 : i32
    return %c0_i32, %c0_i32_0, %c0_i32_1 : i32, i32, i32
  }
  func.func @transform_10(%arg0: i32) -> (i32, i32) {
    %c0_i32 = arith.constant 0 : i32
    %c0_i32_0 = arith.constant 0 : i32
    %c0_i32_1 = arith.constant 0 : i32
    return %c0_i32, %c0_i32_0 : i32, i32
  }
  func.func @transform_11(%arg0: i32) -> (i32, i32, i32, i32) {
    %c0_i32 = arith.constant 0 : i32
    %c0_i32_0 = arith.constant 0 : i32
    %c0_i32_1 = arith.constant 0 : i32
    %c0_i32_2 = arith.constant 0 : i32
    return %arg0, %c0_i32, %c0_i32_0, %c0_i32_1 : i32, i32, i32, i32
  }
}

</mosaic_0001>

<llo_original>
// kernel: subpixel_forward.2
$region0: #{subpixel_forward.2}
  #allocation0 [shape = 'u32[]', space=smem, size = 0x4, offset = 0x4, fixed_abs, tag = 'smem constant byte address 0x4 - core index']
  #allocation1 [shape = 'u32[72,128]{1,0:T(1,128)}', space=vmem, size = 0x9000, scoped, tag = 'internal scratch']
  %s0 = inlined_call_operand.vmem [shape: bf16[4,16,16,32], index: 0, kind: input, shape index: {}]
  %s1 = inlined_call_operand.vmem [shape: bf16[32,64], index: 1, kind: input, shape index: {}]
  %s2 = inlined_call_operand.vmem [shape: f32[1,64], index: 2, kind: input, shape index: {}]
  %s3 = inlined_call_operand.vmem [shape: f32[4,16,16,64], index: 3, kind: output, shape index: {}]
  %s4 = sld [smem:[#allocation0]]
  $region45: #{subpixel_forward.2} parent=0
    _
  %s6 = ssub.s32 1, %s4
  %s7 = scalar_select 0, %s6, %s4
  loop: start=0, step=1, limit=6
  $region2: #{subpixel_forward.2} parent=0 // loop_pre_header
    _
  $region3: #{subpixel_forward.2} parent=0 // loop_header
    %s9 = sphi 0, %s13
    %p10 = scmp.ge.s32.totalorder %s9, 6
    %s19 = sphi 0, %s21
    %s22 = sphi 0, %s19
    %s23 = sphi 0, %s22
    %s39 = sphi 0, %s23
    %s43 = sphi 0, %s43
    %s45 = sphi 0, %s43
    %s46 = sphi 0, %s45
    %s60 = sphi 0, %s46
    %s64 = sphi 0, %s64
    %s66 = sphi 0, %s64
    %s67 = sphi 0, %s66
    %s81 = sphi 0, %s67
    %s87 = sphi 0, %s89
    %s90 = sphi 0, %s87
    %s91 = sphi 0, %s90
    %s107 = sphi 0, %s91
  $region4: #{subpixel_forward.2} parent=0 // loop_header_branch
    %12 = sbr.rel (%p10) target = $region8
  $region5: #{subpixel_forward.2} parent=0 // loop_body
    %s14 = ssub.s32 %s9, 1
    %s15 = ssub.s32 %s9, 2
    %s16 = sadd.s32 %s9, 1
    %s17 = ssub.s32 %s9, %s16
    %p18 = scmp.eq.s32.totalorder %s17, 0
    %s20 = sadd.s32 %s19, 1
    %s21 = scalar_select %p18, %s19, %s20
    %p24 = pneg %p18
    %p25 = scmp.eq.s32.totalorder %s9, 3
    %p26 = por %p24, %p25
    %p27 = scmp.ne.s32.totalorder %s19, %s22
    %p28 = scmp.eq.s32.totalorder %s9, 0
    %p29 = por %p27, %p28
    %p30 = scmp.ne.s32.totalorder %s19, %s22
    %p31 = scmp.eq.s32.totalorder %s14, 3
    %p32 = por %p30, %p31
    %p33 = scmp.ne.s32.totalorder %s22, %s23
    %p34 = scmp.eq.s32.totalorder %s14, 0
    %p35 = por %p33, %p34
    %p36 = scmp.ne.s32.totalorder %s22, %s23
    %p37 = scmp.eq.s32.totalorder %s15, 3
    %p38 = por %p36, %p37
    %p40 = scmp.ne.s32.totalorder %s23, %s39
    %p41 = scmp.eq.s32.totalorder %s15, 0
    %p42 = por %p40, %p41
    %s44 = sadd.s32 %s43, 1
    %p47 = scmp.eq.s32.totalorder %s9, 3
    %p48 = scmp.ne.s32.totalorder %s43, %s45
    %p49 = scmp.eq.s32.totalorder %s9, 0
    %p50 = por %p48, %p49
    %p51 = scmp.ne.s32.totalorder %s43, %s45
    %p52 = scmp.eq.s32.totalorder %s14, 3
    %p53 = por %p51, %p52
    %p54 = scmp.ne.s32.totalorder %s45, %s46
    %p55 = scmp.eq.s32.totalorder %s14, 0
    %p56 = por %p54, %p55
    %p57 = scmp.ne.s32.totalorder %s45, %s46
    %p58 = scmp.eq.s32.totalorder %s15, 3
    %p59 = por %p57, %p58
    %p61 = scmp.ne.s32.totalorder %s46, %s60
    %p62 = scmp.eq.s32.totalorder %s15, 0
    %p63 = por %p61, %p62
    %s65 = sadd.s32 %s64, 1
    %p68 = scmp.eq.s32.totalorder %s9, 3
    %p69 = scmp.ne.s32.totalorder %s64, %s66
    %p70 = scmp.eq.s32.totalorder %s9, 0
    %p71 = por %p69, %p70
    %p72 = scmp.ne.s32.totalorder %s64, %s66
    %p73 = scmp.eq.s32.totalorder %s14, 3
    %p74 = por %p72, %p73
    %p75 = scmp.ne.s32.totalorder %s66, %s67
    %p76 = scmp.eq.s32.totalorder %s14, 0
    %p77 = por %p75, %p76
    %p78 = scmp.ne.s32.totalorder %s66, %s67
    %p79 = scmp.eq.s32.totalorder %s15, 3
    %p80 = por %p78, %p79
    %p82 = scmp.ne.s32.totalorder %s67, %s81
    %p83 = scmp.eq.s32.totalorder %s15, 0
    %p84 = por %p82, %p83
    %s85 = ssub.s32 %s9, %s16
    %p86 = scmp.eq.s32.totalorder %s85, 0
    %s88 = sadd.s32 %s87, 1
    %s89 = scalar_select %p86, %s87, %s88
    %p92 = pneg %p86
    %p93 = scmp.eq.s32.totalorder %s9, 3
    %p94 = por %p92, %p93
    %p95 = scmp.ne.s32.totalorder %s87, %s90
    %p96 = scmp.eq.s32.totalorder %s9, 0
    %p97 = por %p95, %p96
    %p98 = scmp.ne.s32.totalorder %s87, %s90
    %p99 = scmp.eq.s32.totalorder %s14, 3
    %p100 = por %p98, %p99
    %p101 = scmp.ne.s32.totalorder %s90, %s91
    %p102 = scmp.eq.s32.totalorder %s14, 0
    %p103 = por %p101, %p102
    %p104 = scmp.ne.s32.totalorder %s90, %s91
    %p105 = scmp.eq.s32.totalorder %s15, 3
    %p106 = por %p104, %p105
    %p108 = scmp.ne.s32.totalorder %s91, %s107
    %p109 = scmp.eq.s32.totalorder %s15, 0
    %p110 = por %p108, %p109
    %p111 = scmp.le.s32.totalorder 1, %s9
    %p112 = scmp.lt.s32.totalorder %s9, 5
    %p113 = pnand %p111, %p112
    %p114 = pneg %p113
    // Predicated region
    $region9: #{subpixel_forward.2} parent=5 // pred_check
      _
    $region10: #{subpixel_forward.2} parent=5 // pred_check_branch
      %116 = sbr.rel (%p113) target = $region12
    $region11: #{subpixel_forward.2} parent=5 // pred_region
      %s117 = ssub.s32 %s9, 1
      // Predicated region
      $region13: #{subpixel_forward.2} parent=11 // pred_check
        %p118 = pneg %p56
      $region14: #{subpixel_forward.2} parent=11 // pred_check_branch
        %120 = sbr.rel (%p118) target = $region16
      $region15: #{subpixel_forward.2} parent=11 // pred_region
        _
      $region16: #{subpixel_forward.2} parent=11 // pred_fallthru
        _
      // Predicated region
      $region17: #{subpixel_forward.2} parent=11 // pred_check
        %p121 = pneg %p77
      $region18: #{subpixel_forward.2} parent=11 // pred_check_branch
        %123 = sbr.rel (%p121) target = $region20
      $region19: #{subpixel_forward.2} parent=11 // pred_region
        _
      $region20: #{subpixel_forward.2} parent=11 // pred_fallthru
        _
    $region12: #{subpixel_forward.2} parent=5 // pred_fallthru
      _
    %p124 = scmp.lt.s32.totalorder %s9, 4
    // Predicated region
    $region21: #{subpixel_forward.2} parent=5 // pred_check
      %p125 = pneg %p124
    $region22: #{subpixel_forward.2} parent=5 // pred_check_branch
      %127 = sbr.rel (%p125) target = $region24
    $region23: #{subpixel_forward.2} parent=5 // pred_region
      // Predicated region
      $region25: #{subpixel_forward.2} parent=23 // pred_check
        %p128 = pneg %p29
      $region26: #{subpixel_forward.2} parent=23 // pred_check_branch
        %130 = sbr.rel (%p128) target = $region28
      $region27: #{subpixel_forward.2} parent=23 // pred_region
        %p131 = scmp.lt.s32.totalorder %s9, 3
        %s132 = scalar_select %p131, %s9, 3
        %s133 = smul.addr %s132, 32
        %s134 = smul.addr %s133, 4
        %s135 = scalar_lea.vmem %s0, %s134
      $region28: #{subpixel_forward.2} parent=23 // pred_fallthru
        _
    $region24: #{subpixel_forward.2} parent=5 // pred_fallthru
      _
    %p136 = scmp.le.s32.totalorder 1, %s9
    %p137 = scmp.lt.s32.totalorder %s9, 5
    %p138 = pnand %p136, %p137
    %p139 = pneg %p138
    // Predicated region
    $region29: #{subpixel_forward.2} parent=5 // pred_check
      _
    $region30: #{subpixel_forward.2} parent=5 // pred_check_branch
      %141 = sbr.rel (%p138) target = $region32
    $region31: #{subpixel_forward.2} parent=5 // pred_region
      %s142 = ssub.s32 %s9, 1
      %p143 = scmp.lt.s32.totalorder %s14, 3
      %s144 = scalar_select %p143, %s14, 3
      %s145 = smul.addr %s144, 32
      %s146 = smul.addr %s145, 4
      %s147 = scalar_lea.vmem %s0, %s146
      %p148 = pneg %p35
      %p149 = pneg %p32
      %p150 = pneg %p56
      %p151 = pneg %p53
      %p152 = pneg %p77
      %p153 = pneg %p74
      %p154 = pneg %p103
      %p155 = pneg %p100
      %p156 = scmp.lt.s32.totalorder %s14, 3
      %s157 = scalar_select %p156, %s14, 3
      %s158 = smul.addr %s157, 32
      %s159 = smul.addr %s158, 8
      %s160 = scalar_lea.vmem %s3, %s159
      %p161 = scmp.lt.s32.totalorder %s14, 3
      %s162 = scalar_select %p161, %s14, 3
      %s163 = smul.addr %s162, 32
      %s164 = smul.addr %s163, 4
      %s165 = scalar_lea.vmem %s0, %s164
      %p166 = scmp.lt.s32.totalorder %s14, 3
      %s167 = scalar_select %p166, %s14, 3
      %s168 = smul.addr %s167, 32
      %s169 = smul.addr %s168, 8
      %s170 = scalar_lea.vmem %s3, %s169
      %v172 = vld [vmem:[%s165] sm:$0xf]
      %v173 = vld [vmem:[%s165 + $0x4] sm:$0xf]
      %v174 = vld [vmem:[%s165 + $0x8] sm:$0xf]
      %v175 = vld [vmem:[%s165 + $0xc] sm:$0xf]
      %v176 = vld [vmem:[%s165 + $0x10] sm:$0xf]
      %v177 = vld [vmem:[%s165 + $0x14] sm:$0xf]
      %v178 = vld [vmem:[%s165 + $0x18] sm:$0xf]
      %v179 = vld [vmem:[%s165 + $0x1c] sm:$0xf]
      %v180 = vld [vmem:[%s165 + $0x20] sm:$0xf]
      %v181 = vld [vmem:[%s165 + $0x24] sm:$0xf]
      %v182 = vld [vmem:[%s165 + $0x28] sm:$0xf]
      %v183 = vld [vmem:[%s165 + $0x2c] sm:$0xf]
      %v184 = vld [vmem:[%s165 + $0x30] sm:$0xf]
      %v185 = vld [vmem:[%s165 + $0x34] sm:$0xf]
      %v186 = vld [vmem:[%s165 + $0x38] sm:$0xf]
      %v187 = vld [vmem:[%s165 + $0x3c] sm:$0xf]
      %v188 = vld [vmem:[%s165 + $0x40] sm:$0xf]
      %v189 = vld [vmem:[%s165 + $0x44] sm:$0xf]
      %v190 = vld [vmem:[%s165 + $0x48] sm:$0xf]
      %v191 = vld [vmem:[%s165 + $0x4c] sm:$0xf]
      %v192 = vld [vmem:[%s165 + $0x50] sm:$0xf]
      %v193 = vld [vmem:[%s165 + $0x54] sm:$0xf]
      %v194 = vld [vmem:[%s165 + $0x58] sm:$0xf]
      %v195 = vld [vmem:[%s165 + $0x5c] sm:$0xf]
      %v196 = vld [vmem:[%s165 + $0x60] sm:$0xf]
      %v197 = vld [vmem:[%s165 + $0x64] sm:$0xf]
      %v198 = vld [vmem:[%s165 + $0x68] sm:$0xf]
      %v199 = vld [vmem:[%s165 + $0x6c] sm:$0xf]
      %v200 = vld [vmem:[%s165 + $0x70] sm:$0xf]
      %v201 = vld [vmem:[%s165 + $0x74] sm:$0xf]
      %v202 = vld [vmem:[%s165 + $0x78] sm:$0xf]
      %v203 = vld [vmem:[%s165 + $0x7c] sm:$0xf]
      %v204 = vld [vmem:[%s1] sm:$0xf]
      %v205 = vld [vmem:[%s1 + $0x4] sm:$0xf]
      %v206 = vld [vmem:[%s1 + $0x8] sm:$0xf]
      %v207 = vld [vmem:[%s1 + $0xc] sm:$0xf]
      %v208 = vld [vmem:[%s2] sm:$0x1]
      %v210 = vperm.slane %v208, 0
      %v244 = vunpack.c.l.b16 %v172
      %v245 = vunpack.c.l.b16 %v173
      %v246 = vunpack.c.l.b16 %v174
      %v247 = vunpack.c.l.b16 %v175
      %v248 = vunpack.c.l.b16 %v176
      %v249 = vunpack.c.l.b16 %v177
      %v250 = vunpack.c.l.b16 %v178
      %v251 = vunpack.c.l.b16 %v179
      %v252 = vunpack.c.l.b16 %v180
      %v253 = vunpack.c.l.b16 %v181
      %v254 = vunpack.c.l.b16 %v182
      %v255 = vunpack.c.l.b16 %v183
      %v256 = vunpack.c.l.b16 %v184
      %v257 = vunpack.c.l.b16 %v185
      %v258 = vunpack.c.l.b16 %v186
      %v259 = vunpack.c.l.b16 %v187
      %v260 = vunpack.c.l.b16 %v188
      %v261 = vunpack.c.l.b16 %v189
      %v262 = vunpack.c.l.b16 %v190
      %v263 = vunpack.c.l.b16 %v191
      %v264 = vunpack.c.l.b16 %v192
      %v265 = vunpack.c.l.b16 %v193
      %v266 = vunpack.c.l.b16 %v194
      %v267 = vunpack.c.l.b16 %v195
      %v268 = vunpack.c.l.b16 %v196
      %v269 = vunpack.c.l.b16 %v197
      %v270 = vunpack.c.l.b16 %v198
      %v271 = vunpack.c.l.b16 %v199
      %v272 = vunpack.c.l.b16 %v200
      %v273 = vunpack.c.l.b16 %v201
      %v274 = vunpack.c.l.b16 %v202
      %v275 = vunpack.c.l.b16 %v203
      %v276 = vpack.c.b16 %v245, %v244
      %v277 = vpack.c.b16 %v247, %v246
      %v278 = vpack.c.b16 %v249, %v248
      %v279 = vpack.c.b16 %v251, %v250
      %v280 = vpack.c.b16 %v253, %v252
      %v281 = vpack.c.b16 %v255, %v254
      %v282 = vpack.c.b16 %v257, %v256
      %v283 = vpack.c.b16 %v259, %v258
      %v284 = vpack.c.b16 %v261, %v260
      %v285 = vpack.c.b16 %v263, %v262
      %v286 = vpack.c.b16 %v265, %v264
      %v287 = vpack.c.b16 %v267, %v266
      %v288 = vpack.c.b16 %v269, %v268
      %v289 = vpack.c.b16 %v271, %v270
      %v290 = vpack.c.b16 %v273, %v272
      %v291 = vpack.c.b16 %v275, %v274
      %v296 = vunpack.c.l.b16 %v204
      %v297 = vunpack.c.l.b16 %v205
      %v298 = vunpack.c.l.b16 %v206
      %v299 = vunpack.c.l.b16 %v207
      %v300 = vpack.c.b16 %v297, %v296
      %v301 = vpack.c.b16 %v299, %v298
      %vm304 = vcmask 261120
      %v306 = vsel %vm304, %v276, 0
      %v309 = vsel %vm304, %v277, 0
      %v312 = vsel %vm304, %v278, 0
      %v315 = vsel %vm304, %v279, 0
      %v318 = vsel %vm304, %v280, 0
      %v321 = vsel %vm304, %v281, 0
      %v324 = vsel %vm304, %v282, 0
      %v327 = vsel %vm304, %v283, 0
      %v330 = vsel %vm304, %v284, 0
      %v333 = vsel %vm304, %v285, 0
      %v336 = vsel %vm304, %v286, 0
      %v339 = vsel %vm304, %v287, 0
      %v342 = vsel %vm304, %v288, 0
      %v345 = vsel %vm304, %v289, 0
      %v348 = vsel %vm304, %v290, 0
      %v351 = vsel %vm304, %v291, 0
      %353 = vmatpush.bf16.msra.mxu0 0
      %354 = vmatpush.bf16.msra.mxu0 0
      %355 = vmatpush.bf16.msra.mxu0 0
      %356 = vmatpush.bf16.msra.mxu0 0
      %357 = vmatpush.bf16.msra.mxu0 0
      %358 = vmatpush.bf16.msra.mxu0 0
      %359 = vmatpush.bf16.msra.mxu0 %v301
      %360 = vmatpush.bf16.msra.mxu0 %v300
      %361 = vmatmul.bf16.gmra.mxu0 %v306
      %v362 = vpop.f32.mrf.mxu0
      %v363 = vadd.f32 %v210, %v362
      %v364 = vpop.f32.mrf.mxu0
      %v365 = vadd.f32 %v210, %v364
      %366 = vmatmul.bf16.gmra.mxu0 %v309
      %v367 = vpop.f32.mrf.mxu0
      %v368 = vadd.f32 %v210, %v367
      %v369 = vpop.f32.mrf.mxu0
      %v370 = vadd.f32 %v210, %v369
      %371 = vmatmul.bf16.gmra.mxu0 %v312
      %v372 = vpop.f32.mrf.mxu0
      %v373 = vadd.f32 %v210, %v372
      %v374 = vpop.f32.mrf.mxu0
      %v375 = vadd.f32 %v210, %v374
      %376 = vmatmul.bf16.gmra.mxu0 %v315
      %v377 = vpop.f32.mrf.mxu0
      %v378 = vadd.f32 %v210, %v377
      %v379 = vpop.f32.mrf.mxu0
      %v380 = vadd.f32 %v210, %v379
      %381 = vmatmul.bf16.gmra.mxu0 %v318
      %v382 = vpop.f32.mrf.mxu0
      %v383 = vadd.f32 %v210, %v382
      %v384 = vpop.f32.mrf.mxu0
      %v385 = vadd.f32 %v210, %v384
      %386 = vmatmul.bf16.gmra.mxu0 %v321
      %v387 = vpop.f32.mrf.mxu0
      %v388 = vadd.f32 %v210, %v387
      %v389 = vpop.f32.mrf.mxu0
      %v390 = vadd.f32 %v210, %v389
      %391 = vmatmul.bf16.gmra.mxu0 %v324
      %v392 = vpop.f32.mrf.mxu0
      %v393 = vadd.f32 %v210, %v392
      %v394 = vpop.f32.mrf.mxu0
      %v395 = vadd.f32 %v210, %v394
      %396 = vmatmul.bf16.gmra.mxu0 %v327
      %v397 = vpop.f32.mrf.mxu0
      %v398 = vadd.f32 %v210, %v397
      %v399 = vpop.f32.mrf.mxu0
      %v400 = vadd.f32 %v210, %v399
      %401 = vmatmul.bf16.gmra.mxu0 %v330
      %v402 = vpop.f32.mrf.mxu0
      %v403 = vadd.f32 %v210, %v402
      %v404 = vpop.f32.mrf.mxu0
      %v405 = vadd.f32 %v210, %v404
      %406 = vmatmul.bf16.gmra.mxu0 %v333
      %v407 = vpop.f32.mrf.mxu0
      %v408 = vadd.f32 %v210, %v407
      %v409 = vpop.f32.mrf.mxu0
      %v410 = vadd.f32 %v210, %v409
      %411 = vmatmul.bf16.gmra.mxu0 %v336
      %v412 = vpop.f32.mrf.mxu0
      %v413 = vadd.f32 %v210, %v412
      %v414 = vpop.f32.mrf.mxu0
      %v415 = vadd.f32 %v210, %v414
      %416 = vmatmul.bf16.gmra.mxu0 %v339
      %v417 = vpop.f32.mrf.mxu0
      %v418 = vadd.f32 %v210, %v417
      %v419 = vpop.f32.mrf.mxu0
      %v420 = vadd.f32 %v210, %v419
      %421 = vmatmul.bf16.gmra.mxu0 %v342
      %v422 = vpop.f32.mrf.mxu0
      %v423 = vadd.f32 %v210, %v422
      %v424 = vpop.f32.mrf.mxu0
      %v425 = vadd.f32 %v210, %v424
      %426 = vmatmul.bf16.gmra.mxu0 %v345
      %v427 = vpop.f32.mrf.mxu0
      %v428 = vadd.f32 %v210, %v427
      %v429 = vpop.f32.mrf.mxu0
      %v430 = vadd.f32 %v210, %v429
      %431 = vmatmul.bf16.gmra.mxu0 %v348
      %v432 = vpop.f32.mrf.mxu0
      %v433 = vadd.f32 %v210, %v432
      %v434 = vpop.f32.mrf.mxu0
      %v435 = vadd.f32 %v210, %v434
      %436 = vmatmul.bf16.gmra.mxu0 %v351
      %v437 = vpop.f32.mrf.mxu0
      %v438 = vadd.f32 %v210, %v437
      %v439 = vpop.f32.mrf.mxu0
      %v440 = vadd.f32 %v210, %v439
      %441 = vdwg.mxu0
      %vm442 = vcmp.ge.f32.partialorder %v363, 0.0
      %vm443 = vcmp.ge.f32.partialorder %v365, 0.0
      %vm444 = vcmp.ge.f32.partialorder %v368, 0.0
      %vm445 = vcmp.ge.f32.partialorder %v370, 0.0
      %vm446 = vcmp.ge.f32.partialorder %v373, 0.0
      %vm447 = vcmp.ge.f32.partialorder %v375, 0.0
      %vm448 = vcmp.ge.f32.partialorder %v378, 0.0
      %vm449 = vcmp.ge.f32.partialorder %v380, 0.0
      %vm450 = vcmp.ge.f32.partialorder %v383, 0.0
      %vm451 = vcmp.ge.f32.partialorder %v385, 0.0
      %vm452 = vcmp.ge.f32.partialorder %v388, 0.0
      %vm453 = vcmp.ge.f32.partialorder %v390, 0.0
      %vm454 = vcmp.ge.f32.partialorder %v393, 0.0
      %vm455 = vcmp.ge.f32.partialorder %v395, 0.0
      %vm456 = vcmp.ge.f32.partialorder %v398, 0.0
      %vm457 = vcmp.ge.f32.partialorder %v400, 0.0
      %vm458 = vcmp.ge.f32.partialorder %v403, 0.0
      %vm459 = vcmp.ge.f32.partialorder %v405, 0.0
      %vm460 = vcmp.ge.f32.partialorder %v408, 0.0
      %vm461 = vcmp.ge.f32.partialorder %v410, 0.0
      %vm462 = vcmp.ge.f32.partialorder %v413, 0.0
      %vm463 = vcmp.ge.f32.partialorder %v415, 0.0
      %vm464 = vcmp.ge.f32.partialorder %v418, 0.0
      %vm465 = vcmp.ge.f32.partialorder %v420, 0.0
      %vm466 = vcmp.ge.f32.partialorder %v423, 0.0
      %vm467 = vcmp.ge.f32.partialorder %v425, 0.0
      %vm468 = vcmp.ge.f32.partialorder %v428, 0.0
      %vm469 = vcmp.ge.f32.partialorder %v430, 0.0
      %vm470 = vcmp.ge.f32.partialorder %v433, 0.0
      %vm471 = vcmp.ge.f32.partialorder %v435, 0.0
      %vm472 = vcmp.ge.f32.partialorder %v438, 0.0
      %vm473 = vcmp.ge.f32.partialorder %v440, 0.0
      %v474 = vmul.f32 %v363, 0.1
      %v475 = vmul.f32 %v365, 0.1
      %v476 = vmul.f32 %v368, 0.1
      %v477 = vmul.f32 %v370, 0.1
      %v478 = vmul.f32 %v373, 0.1
      %v479 = vmul.f32 %v375, 0.1
      %v480 = vmul.f32 %v378, 0.1
      %v481 = vmul.f32 %v380, 0.1
      %v482 = vmul.f32 %v383, 0.1
      %v483 = vmul.f32 %v385, 0.1
      %v484 = vmul.f32 %v388, 0.1
      %v485 = vmul.f32 %v390, 0.1
      %v486 = vmul.f32 %v393, 0.1
      %v487 = vmul.f32 %v395, 0.1
      %v488 = vmul.f32 %v398, 0.1
      %v489 = vmul.f32 %v400, 0.1
      %v490 = vmul.f32 %v403, 0.1
      %v491 = vmul.f32 %v405, 0.1
      %v492 = vmul.f32 %v408, 0.1
      %v493 = vmul.f32 %v410, 0.1
      %v494 = vmul.f32 %v413, 0.1
      %v495 = vmul.f32 %v415, 0.1
      %v496 = vmul.f32 %v418, 0.1
      %v497 = vmul.f32 %v420, 0.1
      %v498 = vmul.f32 %v423, 0.1
      %v499 = vmul.f32 %v425, 0.1
      %v500 = vmul.f32 %v428, 0.1
      %v501 = vmul.f32 %v430, 0.1
      %v502 = vmul.f32 %v433, 0.1
      %v503 = vmul.f32 %v435, 0.1
      %v504 = vmul.f32 %v438, 0.1
      %v505 = vmul.f32 %v440, 0.1
      %v506 = vsel %vm442, %v363, %v474
      %v507 = vsel %vm443, %v365, %v475
      %v508 = vsel %vm444, %v368, %v476
      %v509 = vsel %vm445, %v370, %v477
      %v510 = vsel %vm446, %v373, %v478
      %v511 = vsel %vm447, %v375, %v479
      %v512 = vsel %vm448, %v378, %v480
      %v513 = vsel %vm449, %v380, %v481
      %v514 = vsel %vm450, %v383, %v482
      %v515 = vsel %vm451, %v385, %v483
      %v516 = vsel %vm452, %v388, %v484
      %v517 = vsel %vm453, %v390, %v485
      %v518 = vsel %vm454, %v393, %v486
      %v519 = vsel %vm455, %v395, %v487
      %v520 = vsel %vm456, %v398, %v488
      %v521 = vsel %vm457, %v400, %v489
      %v522 = vsel %vm458, %v403, %v490
      %v523 = vsel %vm459, %v405, %v491
      %v524 = vsel %vm460, %v408, %v492
      %v525 = vsel %vm461, %v410, %v493
      %v526 = vsel %vm462, %v413, %v494
      %v527 = vsel %vm463, %v415, %v495
      %v528 = vsel %vm464, %v418, %v496
      %v529 = vsel %vm465, %v420, %v497
      %v530 = vsel %vm466, %v423, %v498
      %v531 = vsel %vm467, %v425, %v499
      %v532 = vsel %vm468, %v428, %v500
      %v533 = vsel %vm469, %v430, %v501
      %v534 = vsel %vm470, %v433, %v502
      %v535 = vsel %vm471, %v435, %v503
      %v536 = vsel %vm472, %v438, %v504
      %v537 = vsel %vm473, %v440, %v505
      %vm538 = vcmask 523264
      %539 = vst.msk [vmem:[%s170] sm:$0xff] %vm538, %v506
      %540 = vst.msk [vmem:[%s170 + $0x8] sm:$0xff] %vm538, %v507
      %541 = vst.msk [vmem:[%s170 + $0x10] sm:$0xff] %vm538, %v508
      %542 = vst.msk [vmem:[%s170 + $0x18] sm:$0xff] %vm538, %v509
      %543 = vst.msk [vmem:[%s170 + $0x20] sm:$0xff] %vm538, %v510
      %544 = vst.msk [vmem:[%s170 + $0x28] sm:$0xff] %vm538, %v511
      %545 = vst.msk [vmem:[%s170 + $0x30] sm:$0xff] %vm538, %v512
      %546 = vst.msk [vmem:[%s170 + $0x38] sm:$0xff] %vm538, %v513
      %547 = vst.msk [vmem:[%s170 + $0x40] sm:$0xff] %vm538, %v514
      %548 = vst.msk [vmem:[%s170 + $0x48] sm:$0xff] %vm538, %v515
      %549 = vst.msk [vmem:[%s170 + $0x50] sm:$0xff] %vm538, %v516
      %550 = vst.msk [vmem:[%s170 + $0x58] sm:$0xff] %vm538, %v517
      %551 = vst.msk [vmem:[%s170 + $0x60] sm:$0xff] %vm538, %v518
      %552 = vst.msk [vmem:[%s170 + $0x68] sm:$0xff] %vm538, %v519
      %553 = vst.msk [vmem:[%s170 + $0x70] sm:$0xff] %vm538, %v520
      %554 = vst.msk [vmem:[%s170 + $0x78] sm:$0xff] %vm538, %v521
      %555 = vst.msk [vmem:[%s170 + $0x80] sm:$0xff] %vm538, %v522
      %556 = vst.msk [vmem:[%s170 + $0x88] sm:$0xff] %vm538, %v523
      %557 = vst.msk [vmem:[%s170 + $0x90] sm:$0xff] %vm538, %v524
      %558 = vst.msk [vmem:[%s170 + $0x98] sm:$0xff] %vm538, %v525
      %559 = vst.msk [vmem:[%s170 + $0xa0] sm:$0xff] %vm538, %v526
      %560 = vst.msk [vmem:[%s170 + $0xa8] sm:$0xff] %vm538, %v527
      %561 = vst.msk [vmem:[%s170 + $0xb0] sm:$0xff] %vm538, %v528
      %562 = vst.msk [vmem:[%s170 + $0xb8] sm:$0xff] %vm538, %v529
      %563 = vst.msk [vmem:[%s170 + $0xc0] sm:$0xff] %vm538, %v530
      %564 = vst.msk [vmem:[%s170 + $0xc8] sm:$0xff] %vm538, %v531
      %565 = vst.msk [vmem:[%s170 + $0xd0] sm:$0xff] %vm538, %v532
      %566 = vst.msk [vmem:[%s170 + $0xd8] sm:$0xff] %vm538, %v533
      %567 = vst.msk [vmem:[%s170 + $0xe0] sm:$0xff] %vm538, %v534
      %568 = vst.msk [vmem:[%s170 + $0xe8] sm:$0xff] %vm538, %v535
      %569 = vst.msk [vmem:[%s170 + $0xf0] sm:$0xff] %vm538, %v536
      %570 = vst.msk [vmem:[%s170 + $0xf8] sm:$0xff] %vm538, %v537
      %p571 = scmp.lt.s32.totalorder %s14, 3
      %s572 = scalar_select %p571, %s14, 3
      %s573 = smul.addr %s572, 32
      %s574 = smul.addr %s573, 8
      %s575 = scalar_lea.vmem %s3, %s574
      // Predicated region
      $region33: #{subpixel_forward.2} parent=31 // pred_check
        %p576 = pneg %p100
      $region34: #{subpixel_forward.2} parent=31 // pred_check_branch
        %578 = sbr.rel (%p576) target = $region36
      $region35: #{subpixel_forward.2} parent=31 // pred_region
        _
      $region36: #{subpixel_forward.2} parent=31 // pred_fallthru
        _
    $region32: #{subpixel_forward.2} parent=5 // pred_fallthru
      _
    %p579 = scmp.le.s32.totalorder 2, %s9
    // Predicated region
    $region37: #{subpixel_forward.2} parent=5 // pred_check
      %p580 = pneg %p579
    $region38: #{subpixel_forward.2} parent=5 // pred_check_branch
      %582 = sbr.rel (%p580) target = $region40
    $region39: #{subpixel_forward.2} parent=5 // pred_region
      %s583 = ssub.s32 %s9, 2
      // Predicated region
      $region41: #{subpixel_forward.2} parent=39 // pred_check
        %p584 = pneg %p106
      $region42: #{subpixel_forward.2} parent=39 // pred_check_branch
        %586 = sbr.rel (%p584) target = $region44
      $region43: #{subpixel_forward.2} parent=39 // pred_region
        %p587 = scmp.lt.s32.totalorder %s15, 3
        %s588 = scalar_select %p587, %s15, 3
        %s589 = smul.addr %s588, 32
        %s590 = smul.addr %s589, 8
        %s591 = scalar_lea.vmem %s3, %s590
      $region44: #{subpixel_forward.2} parent=39 // pred_fallthru
        _
    $region40: #{subpixel_forward.2} parent=5 // pred_fallthru
      _
  $region6: #{subpixel_forward.2} parent=0 // loop_footer
    %s13 = sadd.s32 1, %s9
  $region7: #{subpixel_forward.2} parent=0 // loop_footer_branch
    %8 = sbr.rel target = $region3
  $region8: #{subpixel_forward.2} parent=0 // loop_exit
    _

// kernel: subpixel_forward.3
$region0: #{subpixel_forward.3}
  #allocation0 [shape = 'u32[]', space=smem, size = 0x4, offset = 0x4, fixed_abs, tag = 'smem constant byte address 0x4 - core index']
  #allocation1 [shape = 'u32[72,128]{1,0:T(1,128)}', space=vmem, size = 0x9000, scoped, tag = 'internal scratch']
  %s0 = inlined_call_operand.vmem [shape: bf16[2,16,16,128], index: 0, kind: input, shape index: {}]
  %s1 = inlined_call_operand.vmem [shape: bf16[2,16,16,8], index: 1, kind: input, shape index: {}]
  %s2 = inlined_call_operand.vmem [shape: bf16[3,384,128], index: 2, kind: input, shape index: {}]
  %s3 = inlined_call_operand.vmem [shape: bf16[3,24,128], index: 3, kind: input, shape index: {}]
  %s4 = inlined_call_operand.vmem [shape: f32[1,128], index: 4, kind: input, shape index: {}]
  %s5 = inlined_call_operand.vmem [shape: bf16[3,384,64], index: 5, kind: input, shape index: {}]
  %s6 = inlined_call_operand.vmem [shape: f32[1,64], index: 6, kind: input, shape index: {}]
  %s7 = inlined_call_operand.vmem [shape: bf16[3,192,32], index: 7, kind: input, shape index: {}]
  %s8 = inlined_call_operand.vmem [shape: f32[1,32], index: 8, kind: input, shape index: {}]
  %s9 = inlined_call_operand.vmem [shape: bf16[7,224,128], index: 9, kind: input, shape index: {}]
  %s10 = inlined_call_operand.vmem [shape: f32[1,128], index: 10, kind: input, shape index: {}]
  %s11 = inlined_call_operand.vmem [shape: f32[2,16,16,128], index: 11, kind: output, shape index: {}]
  %s12 = sld [smem:[#allocation0]]
  $region77: #{subpixel_forward.3} parent=0
    _
  %s14 = ssub.s32 1, %s12
  %s15 = scalar_select 0, %s14, %s12
  loop: start=0, step=1, limit=4
  $region2: #{subpixel_forward.3} parent=0 // loop_pre_header
    _
  $region3: #{subpixel_forward.3} parent=0 // loop_header
    %s17 = sphi 0, %s21
    %p18 = scmp.ge.s32.totalorder %s17, 4
    %s27 = sphi 0, %s29
    %s30 = sphi 0, %s27
    %s31 = sphi 0, %s30
    %s47 = sphi 0, %s31
    %s53 = sphi 0, %s55
    %s56 = sphi 0, %s53
    %s57 = sphi 0, %s56
    %s73 = sphi 0, %s57
    %s77 = sphi 0, %s77
    %s79 = sphi 0, %s77
    %s80 = sphi 0, %s79
    %s94 = sphi 0, %s80
    %s98 = sphi 0, %s98
    %s100 = sphi 0, %s98
    %s101 = sphi 0, %s100
    %s115 = sphi 0, %s101
    %s119 = sphi 0, %s119
    %s121 = sphi 0, %s119
    %s122 = sphi 0, %s121
    %s136 = sphi 0, %s122
    %s140 = sphi 0, %s140
    %s142 = sphi 0, %s140
    %s143 = sphi 0, %s142
    %s157 = sphi 0, %s143
    %s161 = sphi 0, %s161
    %s163 = sphi 0, %s161
    %s164 = sphi 0, %s163
    %s178 = sphi 0, %s164
    %s182 = sphi 0, %s182
    %s184 = sphi 0, %s182
    %s185 = sphi 0, %s184
    %s199 = sphi 0, %s185
    %s203 = sphi 0, %s203
    %s205 = sphi 0, %s203
    %s206 = sphi 0, %s205
    %s220 = sphi 0, %s206
    %s224 = sphi 0, %s224
    %s226 = sphi 0, %s224
    %s227 = sphi 0, %s226
    %s241 = sphi 0, %s227
    %s245 = sphi 0, %s245
    %s247 = sphi 0, %s245
    %s248 = sphi 0, %s247
    %s262 = sphi 0, %s248
    %s268 = sphi 0, %s270
    %s271 = sphi 0, %s268
    %s272 = sphi 0, %s271
    %s288 = sphi 0, %s272
  $region4: #{subpixel_forward.3} parent=0 // loop_header_branch
    %20 = sbr.rel (%p18) target = $region8
  $region5: #{subpixel_forward.3} parent=0 // loop_body
    %s22 = ssub.s32 %s17, 1
    %s23 = ssub.s32 %s17, 2
    %s24 = sadd.s32 %s17, 1
    %s25 = ssub.s32 %s17, %s24
    %p26 = scmp.eq.s32.totalorder %s25, 0
    %s28 = sadd.s32 %s27, 1
    %s29 = scalar_select %p26, %s27, %s28
    %p32 = pneg %p26
    %p33 = scmp.eq.s32.totalorder %s17, 1
    %p34 = por %p32, %p33
    %p35 = scmp.ne.s32.totalorder %s27, %s30
    %p36 = scmp.eq.s32.totalorder %s17, 0
    %p37 = por %p35, %p36
    %p38 = scmp.ne.s32.totalorder %s27, %s30
    %p39 = scmp.eq.s32.totalorder %s22, 1
    %p40 = por %p38, %p39
    %p41 = scmp.ne.s32.totalorder %s30, %s31
    %p42 = scmp.eq.s32.totalorder %s22, 0
    %p43 = por %p41, %p42
    %p44 = scmp.ne.s32.totalorder %s30, %s31
    %p45 = scmp.eq.s32.totalorder %s23, 1
    %p46 = por %p44, %p45
    %p48 = scmp.ne.s32.totalorder %s31, %s47
    %p49 = scmp.eq.s32.totalorder %s23, 0
    %p50 = por %p48, %p49
    %s51 = ssub.s32 %s17, %s24
    %p52 = scmp.eq.s32.totalorder %s51, 0
    %s54 = sadd.s32 %s53, 1
    %s55 = scalar_select %p52, %s53, %s54
    %p58 = pneg %p52
    %p59 = scmp.eq.s32.totalorder %s17, 1
    %p60 = por %p58, %p59
    %p61 = scmp.ne.s32.totalorder %s53, %s56
    %p62 = scmp.eq.s32.totalorder %s17, 0
    %p63 = por %p61, %p62
    %p64 = scmp.ne.s32.totalorder %s53, %s56
    %p65 = scmp.eq.s32.totalorder %s22, 1
    %p66 = por %p64, %p65
    %p67 = scmp.ne.s32.totalorder %s56, %s57
    %p68 = scmp.eq.s32.totalorder %s22, 0
    %p69 = por %p67, %p68
    %p70 = scmp.ne.s32.totalorder %s56, %s57
    %p71 = scmp.eq.s32.totalorder %s23, 1
    %p72 = por %p70, %p71
    %p74 = scmp.ne.s32.totalorder %s57, %s73
    %p75 = scmp.eq.s32.totalorder %s23, 0
    %p76 = por %p74, %p75
    %s78 = sadd.s32 %s77, 1
    %p81 = scmp.eq.s32.totalorder %s17, 1
    %p82 = scmp.ne.s32.totalorder %s77, %s79
    %p83 = scmp.eq.s32.totalorder %s17, 0
    %p84 = por %p82, %p83
    %p85 = scmp.ne.s32.totalorder %s77, %s79
    %p86 = scmp.eq.s32.totalorder %s22, 1
    %p87 = por %p85, %p86
    %p88 = scmp.ne.s32.totalorder %s79, %s80
    %p89 = scmp.eq.s32.totalorder %s22, 0
    %p90 = por %p88, %p89
    %p91 = scmp.ne.s32.totalorder %s79, %s80
    %p92 = scmp.eq.s32.totalorder %s23, 1
    %p93 = por %p91, %p92
    %p95 = scmp.ne.s32.totalorder %s80, %s94
    %p96 = scmp.eq.s32.totalorder %s23, 0
    %p97 = por %p95, %p96
    %s99 = sadd.s32 %s98, 1
    %p102 = scmp.eq.s32.totalorder %s17, 1
    %p103 = scmp.ne.s32.totalorder %s98, %s100
    %p104 = scmp.eq.s32.totalorder %s17, 0
    %p105 = por %p103, %p104
    %p106 = scmp.ne.s32.totalorder %s98, %s100
    %p107 = scmp.eq.s32.totalorder %s22, 1
    %p108 = por %p106, %p107
    %p109 = scmp.ne.s32.totalorder %s100, %s101
    %p110 = scmp.eq.s32.totalorder %s22, 0
    %p111 = por %p109, %p110
    %p112 = scmp.ne.s32.totalorder %s100, %s101
    %p113 = scmp.eq.s32.totalorder %s23, 1
    %p114 = por %p112, %p113
    %p116 = scmp.ne.s32.totalorder %s101, %s115
    %p117 = scmp.eq.s32.totalorder %s23, 0
    %p118 = por %p116, %p117
    %s120 = sadd.s32 %s119, 1
    %p123 = scmp.eq.s32.totalorder %s17, 1
    %p124 = scmp.ne.s32.totalorder %s119, %s121
    %p125 = scmp.eq.s32.totalorder %s17, 0
    %p126 = por %p124, %p125
    %p127 = scmp.ne.s32.totalorder %s119, %s121
    %p128 = scmp.eq.s32.totalorder %s22, 1
    %p129 = por %p127, %p128
    %p130 = scmp.ne.s32.totalorder %s121, %s122
    %p131 = scmp.eq.s32.totalorder %s22, 0
    %p132 = por %p130, %p131
    %p133 = scmp.ne.s32.totalorder %s121, %s122
    %p134 = scmp.eq.s32.totalorder %s23, 1
    %p135 = por %p133, %p134
    %p137 = scmp.ne.s32.totalorder %s122, %s136
    %p138 = scmp.eq.s32.totalorder %s23, 0
    %p139 = por %p137, %p138
    %s141 = sadd.s32 %s140, 1
    %p144 = scmp.eq.s32.totalorder %s17, 1
    %p145 = scmp.ne.s32.totalorder %s140, %s142
    %p146 = scmp.eq.s32.totalorder %s17, 0
    %p147 = por %p145, %p146
    %p148 = scmp.ne.s32.totalorder %s140, %s142
    %p149 = scmp.eq.s32.totalorder %s22, 1
    %p150 = por %p148, %p149
    %p151 = scmp.ne.s32.totalorder %s142, %s143
    %p152 = scmp.eq.s32.totalorder %s22, 0
    %p153 = por %p151, %p152
    %p154 = scmp.ne.s32.totalorder %s142, %s143
    %p155 = scmp.eq.s32.totalorder %s23, 1
    %p156 = por %p154, %p155
    %p158 = scmp.ne.s32.totalorder %s143, %s157
    %p159 = scmp.eq.s32.totalorder %s23, 0
    %p160 = por %p158, %p159
    %s162 = sadd.s32 %s161, 1
    %p165 = scmp.eq.s32.totalorder %s17, 1
    %p166 = scmp.ne.s32.totalorder %s161, %s163
    %p167 = scmp.eq.s32.totalorder %s17, 0
    %p168 = por %p166, %p167
    %p169 = scmp.ne.s32.totalorder %s161, %s163
    %p170 = scmp.eq.s32.totalorder %s22, 1
    %p171 = por %p169, %p170
    %p172 = scmp.ne.s32.totalorder %s163, %s164
    %p173 = scmp.eq.s32.totalorder %s22, 0
    %p174 = por %p172, %p173
    %p175 = scmp.ne.s32.totalorder %s163, %s164
    %p176 = scmp.eq.s32.totalorder %s23, 1
    %p177 = por %p175, %p176
    %p179 = scmp.ne.s32.totalorder %s164, %s178
    %p180 = scmp.eq.s32.totalorder %s23, 0
    %p181 = por %p179, %p180
    %s183 = sadd.s32 %s182, 1
    %p186 = scmp.eq.s32.totalorder %s17, 1
    %p187 = scmp.ne.s32.totalorder %s182, %s184
    %p188 = scmp.eq.s32.totalorder %s17, 0
    %p189 = por %p187, %p188
    %p190 = scmp.ne.s32.totalorder %s182, %s184
    %p191 = scmp.eq.s32.totalorder %s22, 1
    %p192 = por %p190, %p191
    %p193 = scmp.ne.s32.totalorder %s184, %s185
    %p194 = scmp.eq.s32.totalorder %s22, 0
    %p195 = por %p193, %p194
    %p196 = scmp.ne.s32.totalorder %s184, %s185
    %p197 = scmp.eq.s32.totalorder %s23, 1
    %p198 = por %p196, %p197
    %p200 = scmp.ne.s32.totalorder %s185, %s199
    %p201 = scmp.eq.s32.totalorder %s23, 0
    %p202 = por %p200, %p201
    %s204 = sadd.s32 %s203, 1
    %p207 = scmp.eq.s32.totalorder %s17, 1
    %p208 = scmp.ne.s32.totalorder %s203, %s205
    %p209 = scmp.eq.s32.totalorder %s17, 0
    %p210 = por %p208, %p209
    %p211 = scmp.ne.s32.totalorder %s203, %s205
    %p212 = scmp.eq.s32.totalorder %s22, 1
    %p213 = por %p211, %p212
    %p214 = scmp.ne.s32.totalorder %s205, %s206
    %p215 = scmp.eq.s32.totalorder %s22, 0
    %p216 = por %p214, %p215
    %p217 = scmp.ne.s32.totalorder %s205, %s206
    %p218 = scmp.eq.s32.totalorder %s23, 1
    %p219 = por %p217, %p218
    %p221 = scmp.ne.s32.totalorder %s206, %s220
    %p222 = scmp.eq.s32.totalorder %s23, 0
    %p223 = por %p221, %p222
    %s225 = sadd.s32 %s224, 1
    %p228 = scmp.eq.s32.totalorder %s17, 1
    %p229 = scmp.ne.s32.totalorder %s224, %s226
    %p230 = scmp.eq.s32.totalorder %s17, 0
    %p231 = por %p229, %p230
    %p232 = scmp.ne.s32.totalorder %s224, %s226
    %p233 = scmp.eq.s32.totalorder %s22, 1
    %p234 = por %p232, %p233
    %p235 = scmp.ne.s32.totalorder %s226, %s227
    %p236 = scmp.eq.s32.totalorder %s22, 0
    %p237 = por %p235, %p236
    %p238 = scmp.ne.s32.totalorder %s226, %s227
    %p239 = scmp.eq.s32.totalorder %s23, 1
    %p240 = por %p238, %p239
    %p242 = scmp.ne.s32.totalorder %s227, %s241
    %p243 = scmp.eq.s32.totalorder %s23, 0
    %p244 = por %p242, %p243
    %s246 = sadd.s32 %s245, 1
    %p249 = scmp.eq.s32.totalorder %s17, 1
    %p250 = scmp.ne.s32.totalorder %s245, %s247
    %p251 = scmp.eq.s32.totalorder %s17, 0
    %p252 = por %p250, %p251
    %p253 = scmp.ne.s32.totalorder %s245, %s247
    %p254 = scmp.eq.s32.totalorder %s22, 1
    %p255 = por %p253, %p254
    %p256 = scmp.ne.s32.totalorder %s247, %s248
    %p257 = scmp.eq.s32.totalorder %s22, 0
    %p258 = por %p256, %p257
    %p259 = scmp.ne.s32.totalorder %s247, %s248
    %p260 = scmp.eq.s32.totalorder %s23, 1
    %p261 = por %p259, %p260
    %p263 = scmp.ne.s32.totalorder %s248, %s262
    %p264 = scmp.eq.s32.totalorder %s23, 0
    %p265 = por %p263, %p264
    %s266 = ssub.s32 %s17, %s24
    %p267 = scmp.eq.s32.totalorder %s266, 0
    %s269 = sadd.s32 %s268, 1
    %s270 = scalar_select %p267, %s268, %s269
    %p273 = pneg %p267
    %p274 = scmp.eq.s32.totalorder %s17, 1
    %p275 = por %p273, %p274
    %p276 = scmp.ne.s32.totalorder %s268, %s271
    %p277 = scmp.eq.s32.totalorder %s17, 0
    %p278 = por %p276, %p277
    %p279 = scmp.ne.s32.totalorder %s268, %s271
    %p280 = scmp.eq.s32.totalorder %s22, 1
    %p281 = por %p279, %p280
    %p282 = scmp.ne.s32.totalorder %s271, %s272
    %p283 = scmp.eq.s32.totalorder %s22, 0
    %p284 = por %p282, %p283
    %p285 = scmp.ne.s32.totalorder %s271, %s272
    %p286 = scmp.eq.s32.totalorder %s23, 1
    %p287 = por %p285, %p286
    %p289 = scmp.ne.s32.totalorder %s272, %s288
    %p290 = scmp.eq.s32.totalorder %s23, 0
    %p291 = por %p289, %p290
    %p292 = scmp.le.s32.totalorder 1, %s17
    %p293 = scmp.lt.s32.totalorder %s17, 3
    %p294 = pnand %p292, %p293
    %p295 = pneg %p294
    // Predicated region
    $region9: #{subpixel_forward.3} parent=5 // pred_check
      _
    $region10: #{subpixel_forward.3} parent=5 // pred_check_branch
      %297 = sbr.rel (%p294) target = $region12
    $region11: #{subpixel_forward.3} parent=5 // pred_region
      %s298 = ssub.s32 %s17, 1
      // Predicated region
      $region13: #{subpixel_forward.3} parent=11 // pred_check
        %p299 = pneg %p90
      $region14: #{subpixel_forward.3} parent=11 // pred_check_branch
        %301 = sbr.rel (%p299) target = $region16
      $region15: #{subpixel_forward.3} parent=11 // pred_region
        _
      $region16: #{subpixel_forward.3} parent=11 // pred_fallthru
        _
      // Predicated region
      $region17: #{subpixel_forward.3} parent=11 // pred_check
        %p302 = pneg %p111
      $region18: #{subpixel_forward.3} parent=11 // pred_check_branch
        %304 = sbr.rel (%p302) target = $region20
      $region19: #{subpixel_forward.3} parent=11 // pred_region
        _
      $region20: #{subpixel_forward.3} parent=11 // pred_fallthru
        _
      // Predicated region
      $region21: #{subpixel_forward.3} parent=11 // pred_check
        %p305 = pneg %p132
      $region22: #{subpixel_forward.3} parent=11 // pred_check_branch
        %307 = sbr.rel (%p305) target = $region24
      $region23: #{subpixel_forward.3} parent=11 // pred_region
        _
      $region24: #{subpixel_forward.3} parent=11 // pred_fallthru
        _
      // Predicated region
      $region25: #{subpixel_forward.3} parent=11 // pred_check
        %p308 = pneg %p153
      $region26: #{subpixel_forward.3} parent=11 // pred_check_branch
        %310 = sbr.rel (%p308) target = $region28
      $region27: #{subpixel_forward.3} parent=11 // pred_region
        _
      $region28: #{subpixel_forward.3} parent=11 // pred_fallthru
        _
      // Predicated region
      $region29: #{subpixel_forward.3} parent=11 // pred_check
        %p311 = pneg %p174
      $region30: #{subpixel_forward.3} parent=11 // pred_check_branch
        %313 = sbr.rel (%p311) target = $region32
      $region31: #{subpixel_forward.3} parent=11 // pred_region
        _
      $region32: #{subpixel_forward.3} parent=11 // pred_fallthru
        _
      // Predicated region
      $region33: #{subpixel_forward.3} parent=11 // pred_check
        %p314 = pneg %p195
      $region34: #{subpixel_forward.3} parent=11 // pred_check_branch
        %316 = sbr.rel (%p314) target = $region36
      $region35: #{subpixel_forward.3} parent=11 // pred_region
        _
      $region36: #{subpixel_forward.3} parent=11 // pred_fallthru
        _
      // Predicated region
      $region37: #{subpixel_forward.3} parent=11 // pred_check
        %p317 = pneg %p216
      $region38: #{subpixel_forward.3} parent=11 // pred_check_branch
        %319 = sbr.rel (%p317) target = $region40
      $region39: #{subpixel_forward.3} parent=11 // pred_region
        _
      $region40: #{subpixel_forward.3} parent=11 // pred_fallthru
        _
      // Predicated region
      $region41: #{subpixel_forward.3} parent=11 // pred_check
        %p320 = pneg %p237
      $region42: #{subpixel_forward.3} parent=11 // pred_check_branch
        %322 = sbr.rel (%p320) target = $region44
      $region43: #{subpixel_forward.3} parent=11 // pred_region
        _
      $region44: #{subpixel_forward.3} parent=11 // pred_fallthru
        _
      // Predicated region
      $region45: #{subpixel_forward.3} parent=11 // pred_check
        %p323 = pneg %p258
      $region46: #{subpixel_forward.3} parent=11 // pred_check_branch
        %325 = sbr.rel (%p323) target = $region48
      $region47: #{subpixel_forward.3} parent=11 // pred_region
        _
      $region48: #{subpixel_forward.3} parent=11 // pred_fallthru
        _
    $region12: #{subpixel_forward.3} parent=5 // pred_fallthru
      _
    %p326 = scmp.lt.s32.totalorder %s17, 2
    // Predicated region
    $region49: #{subpixel_forward.3} parent=5 // pred_check
      %p327 = pneg %p326
    $region50: #{subpixel_forward.3} parent=5 // pred_check_branch
      %329 = sbr.rel (%p327) target = $region52
    $region51: #{subpixel_forward.3} parent=5 // pred_region
      // Predicated region
      $region53: #{subpixel_forward.3} parent=51 // pred_check
        %p330 = pneg %p37
      $region54: #{subpixel_forward.3} parent=51 // pred_check_branch
        %332 = sbr.rel (%p330) target = $region56
      $region55: #{subpixel_forward.3} parent=51 // pred_region
        %p333 = scmp.lt.s32.totalorder %s17, 1
        %s334 = scalar_select %p333, %s17, 1
        %s335 = smul.addr %s334, 32
        %s336 = smul.addr %s335, 4
        %s337 = scalar_lea.vmem %s0, %s336
      $region56: #{subpixel_forward.3} parent=51 // pred_fallthru
        _
      // Predicated region
      $region57: #{subpixel_forward.3} parent=51 // pred_check
        %p338 = pneg %p63
      $region58: #{subpixel_forward.3} parent=51 // pred_check_branch
        %340 = sbr.rel (%p338) target = $region60
      $region59: #{subpixel_forward.3} parent=51 // pred_region
        %p341 = scmp.lt.s32.totalorder %s17, 1
        %s342 = scalar_select %p341, %s17, 1
        %s343 = smul.addr %s342, 32
        %s344 = smul.addr %s343, 4
        %s345 = scalar_lea.vmem %s1, %s344
      $region60: #{subpixel_forward.3} parent=51 // pred_fallthru
        _
    $region52: #{subpixel_forward.3} parent=5 // pred_fallthru
      _
    %p346 = scmp.le.s32.totalorder 1, %s17
    %p347 = scmp.lt.s32.totalorder %s17, 3
    %p348 = pnand %p346, %p347
    %p349 = pneg %p348
    // Predicated region
    $region61: #{subpixel_forward.3} parent=5 // pred_check
      _
    $region62: #{subpixel_forward.3} parent=5 // pred_check_branch
      %351 = sbr.rel (%p348) target = $region64
    $region63: #{subpixel_forward.3} parent=5 // pred_region
      %s352 = ssub.s32 %s17, 1
      %p353 = scmp.lt.s32.totalorder %s22, 1
      %s354 = scalar_select %p353, %s22, 1
      %s355 = smul.addr %s354, 32
      %s356 = smul.addr %s355, 4
      %s357 = scalar_lea.vmem %s0, %s356
      %p358 = pneg %p43
      %p359 = pneg %p40
      %p360 = scmp.lt.s32.totalorder %s22, 1
      %s361 = scalar_select %p360, %s22, 1
      %s362 = smul.addr %s361, 32
      %s363 = smul.addr %s362, 4
      %s364 = scalar_lea.vmem %s1, %s363
      %p365 = pneg %p69
      %p366 = pneg %p66
      %p367 = pneg %p90
      %p368 = pneg %p87
      %p369 = pneg %p111
      %p370 = pneg %p108
      %p371 = pneg %p132
      %p372 = pneg %p129
      %p373 = pneg %p153
      %p374 = pneg %p150
      %p375 = pneg %p174
      %p376 = pneg %p171
      %p377 = pneg %p195
      %p378 = pneg %p192
      %p379 = pneg %p216
      %p380 = pneg %p213
      %p381 = pneg %p237
      %p382 = pneg %p234
      %p383 = pneg %p258
      %p384 = pneg %p255
      %p385 = pneg %p284
      %p386 = pneg %p281
      %p387 = scmp.lt.s32.totalorder %s22, 1
      %s388 = scalar_select %p387, %s22, 1
      %s389 = smul.addr %s388, 32
      %s390 = smul.addr %s389, 8
      %s391 = scalar_lea.vmem %s11, %s390
      %p392 = scmp.lt.s32.totalorder %s22, 1
      %s393 = scalar_select %p392, %s22, 1
      %s394 = smul.addr %s393, 32
      %s395 = smul.addr %s394, 4
      %s396 = scalar_lea.vmem %s0, %s395
      %p397 = scmp.lt.s32.totalorder %s22, 1
      %s398 = scalar_select %p397, %s22, 1
      %s399 = smul.addr %s398, 32
      %s400 = smul.addr %s399, 4
      %s401 = scalar_lea.vmem %s1, %s400
      %p402 = scmp.lt.s32.totalorder %s22, 1
      %s403 = scalar_select %p402, %s22, 1
      %s404 = smul.addr %s403, 32
      %s405 = smul.addr %s404, 8
      %s406 = scalar_lea.vmem %s11, %s405
      %v408 = vld [vmem:[%s396] sm:$0xf]
      %v409 = vld [vmem:[%s396 + $0x4] sm:$0xf]
      %v410 = vld [vmem:[%s396 + $0x8] sm:$0xf]
      %v411 = vld [vmem:[%s396 + $0xc] sm:$0xf]
      %v412 = vld [vmem:[%s396 + $0x10] sm:$0xf]
      %v413 = vld [vmem:[%s396 + $0x14] sm:$0xf]
      %v414 = vld [vmem:[%s396 + $0x18] sm:$0xf]
      %v415 = vld [vmem:[%s396 + $0x1c] sm:$0xf]
      %v416 = vld [vmem:[%s396 + $0x20] sm:$0xf]
      %v417 = vld [vmem:[%s396 + $0x24] sm:$0xf]
      %v418 = vld [vmem:[%s396 + $0x28] sm:$0xf]
      %v419 = vld [vmem:[%s396 + $0x2c] sm:$0xf]
      %v420 = vld [vmem:[%s396 + $0x30] sm:$0xf]
      %v421 = vld [vmem:[%s396 + $0x34] sm:$0xf]
      %v422 = vld [vmem:[%s396 + $0x38] sm:$0xf]
      %v423 = vld [vmem:[%s396 + $0x3c] sm:$0xf]
      %v424 = vld [vmem:[%s396 + $0x40] sm:$0xf]
      %v425 = vld [vmem:[%s396 + $0x44] sm:$0xf]
      %v426 = vld [vmem:[%s396 + $0x48] sm:$0xf]
      %v427 = vld [vmem:[%s396 + $0x4c] sm:$0xf]
      %v428 = vld [vmem:[%s396 + $0x50] sm:$0xf]
      %v429 = vld [vmem:[%s396 + $0x54] sm:$0xf]
      %v430 = vld [vmem:[%s396 + $0x58] sm:$0xf]
      %v431 = vld [vmem:[%s396 + $0x5c] sm:$0xf]
      %v432 = vld [vmem:[%s396 + $0x60] sm:$0xf]
      %v433 = vld [vmem:[%s396 + $0x64] sm:$0xf]
      %v434 = vld [vmem:[%s396 + $0x68] sm:$0xf]
      %v435 = vld [vmem:[%s396 + $0x6c] sm:$0xf]
      %v436 = vld [vmem:[%s396 + $0x70] sm:$0xf]
      %v437 = vld [vmem:[%s396 + $0x74] sm:$0xf]
      %v438 = vld [vmem:[%s396 + $0x78] sm:$0xf]
      %v439 = vld [vmem:[%s396 + $0x7c] sm:$0xf]
      %v440 = vld [vmem:[%s401] sm:$0xf]
      %v441 = vld [vmem:[%s401 + $0x4] sm:$0xf]
      %v442 = vld [vmem:[%s401 + $0x8] sm:$0xf]
      %v443 = vld [vmem:[%s401 + $0xc] sm:$0xf]
      %v444 = vld [vmem:[%s401 + $0x10] sm:$0xf]
      %v445 = vld [vmem:[%s401 + $0x14] sm:$0xf]
      %v446 = vld [vmem:[%s401 + $0x18] sm:$0xf]
      %v447 = vld [vmem:[%s401 + $0x1c] sm:$0xf]
      %v448 = vld [vmem:[%s401 + $0x20] sm:$0xf]
      %v449 = vld [vmem:[%s401 + $0x24] sm:$0xf]
      %v450 = vld [vmem:[%s401 + $0x28] sm:$0xf]
      %v451 = vld [vmem:[%s401 + $0x2c] sm:$0xf]
      %v452 = vld [vmem:[%s401 + $0x30] sm:$0xf]
      %v453 = vld [vmem:[%s401 + $0x34] sm:$0xf]
      %v454 = vld [vmem:[%s401 + $0x38] sm:$0xf]
      %v455 = vld [vmem:[%s401 + $0x3c] sm:$0xf]
      %v456 = vld [vmem:[%s401 + $0x40] sm:$0xf]
      %v457 = vld [vmem:[%s401 + $0x44] sm:$0xf]
      %v458 = vld [vmem:[%s401 + $0x48] sm:$0xf]
      %v459 = vld [vmem:[%s401 + $0x4c] sm:$0xf]
      %v460 = vld [vmem:[%s401 + $0x50] sm:$0xf]
      %v461 = vld [vmem:[%s401 + $0x54] sm:$0xf]
      %v462 = vld [vmem:[%s401 + $0x58] sm:$0xf]
      %v463 = vld [vmem:[%s401 + $0x5c] sm:$0xf]
      %v464 = vld [vmem:[%s401 + $0x60] sm:$0xf]
      %v465 = vld [vmem:[%s401 + $0x64] sm:$0xf]
      %v466 = vld [vmem:[%s401 + $0x68] sm:$0xf]
      %v467 = vld [vmem:[%s401 + $0x6c] sm:$0xf]
      %v468 = vld [vmem:[%s401 + $0x70] sm:$0xf]
      %v469 = vld [vmem:[%s401 + $0x74] sm:$0xf]
      %v470 = vld [vmem:[%s401 + $0x78] sm:$0xf]
      %v471 = vld [vmem:[%s401 + $0x7c] sm:$0xf]
      %v504 = vunpack.c.l.b16 %v408
      %v505 = vunpack.c.l.b16 %v409
      %v506 = vunpack.c.l.b16 %v410
      %v507 = vunpack.c.l.b16 %v411
      %v508 = vunpack.c.l.b16 %v412
      %v509 = vunpack.c.l.b16 %v413
      %v510 = vunpack.c.l.b16 %v414
      %v511 = vunpack.c.l.b16 %v415
      %v512 = vunpack.c.l.b16 %v416
      %v513 = vunpack.c.l.b16 %v417
      %v514 = vunpack.c.l.b16 %v418
      %v515 = vunpack.c.l.b16 %v419
      %v516 = vunpack.c.l.b16 %v420
      %v517 = vunpack.c.l.b16 %v421
      %v518 = vunpack.c.l.b16 %v422
      %v519 = vunpack.c.l.b16 %v423
      %v520 = vunpack.c.l.b16 %v424
      %v521 = vunpack.c.l.b16 %v425
      %v522 = vunpack.c.l.b16 %v426
      %v523 = vunpack.c.l.b16 %v427
      %v524 = vunpack.c.l.b16 %v428
      %v525 = vunpack.c.l.b16 %v429
      %v526 = vunpack.c.l.b16 %v430
      %v527 = vunpack.c.l.b16 %v431
      %v528 = vunpack.c.l.b16 %v432
      %v529 = vunpack.c.l.b16 %v433
      %v530 = vunpack.c.l.b16 %v434
      %v531 = vunpack.c.l.b16 %v435
      %v532 = vunpack.c.l.b16 %v436
      %v533 = vunpack.c.l.b16 %v437
      %v534 = vunpack.c.l.b16 %v438
      %v535 = vunpack.c.l.b16 %v439
      %v536 = vpack.c.b16 %v505, %v504
      %v537 = vpack.c.b16 %v507, %v506
      %v538 = vpack.c.b16 %v509, %v508
      %v539 = vpack.c.b16 %v511, %v510
      %v540 = vpack.c.b16 %v513, %v512
      %v541 = vpack.c.b16 %v515, %v514
      %v542 = vpack.c.b16 %v517, %v516
      %v543 = vpack.c.b16 %v519, %v518
      %v544 = vpack.c.b16 %v521, %v520
      %v545 = vpack.c.b16 %v523, %v522
      %v546 = vpack.c.b16 %v525, %v524
      %v547 = vpack.c.b16 %v527, %v526
      %v548 = vpack.c.b16 %v529, %v528
      %v549 = vpack.c.b16 %v531, %v530
      %v550 = vpack.c.b16 %v533, %v532
      %v551 = vpack.c.b16 %v535, %v534
      %v553 = vshrl.u32 %v536, 16
      %v555 = vrot.slane %v553, 7
      %v556 = vshll.u32 %v536, 16
      %v558 = vor.u32 %v555, %v556
      %v560 = vshrl.u32 %v537, 16
      %v562 = vrot.slane %v560, 7
      %v563 = vshll.u32 %v537, 16
      %v565 = vor.u32 %v562, %v563
      %v567 = vshrl.u32 %v538, 16
      %v569 = vrot.slane %v567, 7
      %v570 = vshll.u32 %v538, 16
      %v572 = vor.u32 %v569, %v570
      %v574 = vshrl.u32 %v539, 16
      %v576 = vrot.slane %v574, 7
      %v577 = vshll.u32 %v539, 16
      %v579 = vor.u32 %v576, %v577
      %v581 = vshrl.u32 %v540, 16
      %v583 = vrot.slane %v581, 7
      %v584 = vshll.u32 %v540, 16
      %v586 = vor.u32 %v583, %v584
      %v588 = vshrl.u32 %v541, 16
      %v590 = vrot.slane %v588, 7
      %v591 = vshll.u32 %v541, 16
      %v593 = vor.u32 %v590, %v591
      %v595 = vshrl.u32 %v542, 16
      %v597 = vrot.slane %v595, 7
      %v598 = vshll.u32 %v542, 16
      %v600 = vor.u32 %v597, %v598
      %v602 = vshrl.u32 %v543, 16
      %v604 = vrot.slane %v602, 7
      %v605 = vshll.u32 %v543, 16
      %v607 = vor.u32 %v604, %v605
      %v609 = vshrl.u32 %v544, 16
      %v611 = vrot.slane %v609, 7
      %v612 = vshll.u32 %v544, 16
      %v614 = vor.u32 %v611, %v612
      %v616 = vshrl.u32 %v545, 16
      %v618 = vrot.slane %v616, 7
      %v619 = vshll.u32 %v545, 16
      %v621 = vor.u32 %v618, %v619
      %v623 = vshrl.u32 %v546, 16
      %v625 = vrot.slane %v623, 7
      %v626 = vshll.u32 %v546, 16
      %v628 = vor.u32 %v625, %v626
      %v630 = vshrl.u32 %v547, 16
      %v632 = vrot.slane %v630, 7
      %v633 = vshll.u32 %v547, 16
      %v635 = vor.u32 %v632, %v633
      %v637 = vshrl.u32 %v548, 16
      %v639 = vrot.slane %v637, 7
      %v640 = vshll.u32 %v548, 16
      %v642 = vor.u32 %v639, %v640
      %v644 = vshrl.u32 %v549, 16
      %v646 = vrot.slane %v644, 7
      %v647 = vshll.u32 %v549, 16
      %v649 = vor.u32 %v646, %v647
      %v651 = vshrl.u32 %v550, 16
      %v653 = vrot.slane %v651, 7
      %v654 = vshll.u32 %v550, 16
      %v656 = vor.u32 %v653, %v654
      %v658 = vshrl.u32 %v551, 16
      %v660 = vrot.slane %v658, 7
      %v661 = vshll.u32 %v551, 16
      %v663 = vor.u32 %v660, %v661
      %vm696 = vcmask 1040384
      %vm697 = vsmask.f32 256
      %vm698 = vmand %vm696, %vm697
      %v699 = vsel %vm698, 0, %v558
      %v700 = vsel %vm698, 0, %v565
      %v701 = vsel %vm698, 0, %v572
      %v702 = vsel %vm698, 0, %v579
      %v703 = vsel %vm698, 0, %v586
      %v704 = vsel %vm698, 0, %v593
      %v705 = vsel %vm698, 0, %v600
      %v706 = vsel %vm698, 0, %v607
      %v707 = vsel %vm698, 0, %v614
      %v708 = vsel %vm698, 0, %v621
      %v709 = vsel %vm698, 0, %v628
      %v710 = vsel %vm698, 0, %v635
      %v711 = vsel %vm698, 0, %v642
      %v712 = vsel %vm698, 0, %v649
      %v713 = vsel %vm698, 0, %v656
      %v714 = vsel %vm698, 0, %v663
      %v715 = vsel %vm698, %v555, 0
      %v716 = vsel %vm698, %v562, 0
      %v717 = vsel %vm698, %v569, 0
      %v718 = vsel %vm698, %v576, 0
      %v719 = vsel %vm698, %v583, 0
      %v720 = vsel %vm698, %v590, 0
      %v721 = vsel %vm698, %v597, 0
      %v722 = vsel %vm698, %v604, 0
      %v723 = vsel %vm698, %v611, 0
      %v724 = vsel %vm698, %v618, 0
      %v725 = vsel %vm698, %v625, 0
      %v726 = vsel %vm698, %v632, 0
      %v727 = vsel %vm698, %v639, 0
      %v728 = vsel %vm698, %v646, 0
      %v729 = vsel %vm698, %v653, 0
      %v730 = vsel %vm698, %v660, 0
      %vm731 = vsmask.f32 7424
      %v733 = vshrl.u32 %v699, 16
      %v735 = vshll.u32 %v699, 16
      %v737 = vrot.slane %v735, 1
      %v738 = vor.u32 %v733, %v737
      %v740 = vshll.u32 %v715, 16
      %v742 = vrot.slane %v740, 1
      %v743 = vsel %vm731, %v738, %v742
      %v745 = vshrl.u32 %v700, 16
      %v747 = vshll.u32 %v700, 16
      %v749 = vrot.slane %v747, 1
      %v750 = vor.u32 %v745, %v749
      %v752 = vshll.u32 %v716, 16
      %v754 = vrot.slane %v752, 1
      %v755 = vsel %vm731, %v750, %v754
      %v757 = vshrl.u32 %v701, 16
      %v759 = vshll.u32 %v701, 16
      %v761 = vrot.slane %v759, 1
      %v762 = vor.u32 %v757, %v761
      %v764 = vshll.u32 %v717, 16
      %v766 = vrot.slane %v764, 1
      %v767 = vsel %vm731, %v762, %v766
      %v769 = vshrl.u32 %v702, 16
      %v771 = vshll.u32 %v702, 16
      %v773 = vrot.slane %v771, 1
      %v774 = vor.u32 %v769, %v773
      %v776 = vshll.u32 %v718, 16
      %v778 = vrot.slane %v776, 1
      %v779 = vsel %vm731, %v774, %v778
      %v781 = vshrl.u32 %v703, 16
      %v783 = vshll.u32 %v703, 16
      %v785 = vrot.slane %v783, 1
      %v786 = vor.u32 %v781, %v785
      %v788 = vshll.u32 %v719, 16
      %v790 = vrot.slane %v788, 1
      %v791 = vsel %vm731, %v786, %v790
      %v793 = vshrl.u32 %v704, 16
      %v795 = vshll.u32 %v704, 16
      %v797 = vrot.slane %v795, 1
      %v798 = vor.u32 %v793, %v797
      %v800 = vshll.u32 %v720, 16
      %v802 = vrot.slane %v800, 1
      %v803 = vsel %vm731, %v798, %v802
      %v805 = vshrl.u32 %v705, 16
      %v807 = vshll.u32 %v705, 16
      %v809 = vrot.slane %v807, 1
      %v810 = vor.u32 %v805, %v809
      %v812 = vshll.u32 %v721, 16
      %v814 = vrot.slane %v812, 1
      %v815 = vsel %vm731, %v810, %v814
      %v817 = vshrl.u32 %v706, 16
      %v819 = vshll.u32 %v706, 16
      %v821 = vrot.slane %v819, 1
      %v822 = vor.u32 %v817, %v821
      %v824 = vshll.u32 %v722, 16
      %v826 = vrot.slane %v824, 1
      %v827 = vsel %vm731, %v822, %v826
      %v829 = vshrl.u32 %v707, 16
      %v831 = vshll.u32 %v707, 16
      %v833 = vrot.slane %v831, 1
      %v834 = vor.u32 %v829, %v833
      %v836 = vshll.u32 %v723, 16
      %v838 = vrot.slane %v836, 1
      %v839 = vsel %vm731, %v834, %v838
      %v841 = vshrl.u32 %v708, 16
      %v843 = vshll.u32 %v708, 16
      %v845 = vrot.slane %v843, 1
      %v846 = vor.u32 %v841, %v845
      %v848 = vshll.u32 %v724, 16
      %v850 = vrot.slane %v848, 1
      %v851 = vsel %vm731, %v846, %v850
      %v853 = vshrl.u32 %v709, 16
      %v855 = vshll.u32 %v709, 16
      %v857 = vrot.slane %v855, 1
      %v858 = vor.u32 %v853, %v857
      %v860 = vshll.u32 %v725, 16
      %v862 = vrot.slane %v860, 1
      %v863 = vsel %vm731, %v858, %v862
      %v865 = vshrl.u32 %v710, 16
      %v867 = vshll.u32 %v710, 16
      %v869 = vrot.slane %v867, 1
      %v870 = vor.u32 %v865, %v869
      %v872 = vshll.u32 %v726, 16
      %v874 = vrot.slane %v872, 1
      %v875 = vsel %vm731, %v870, %v874
      %v877 = vshrl.u32 %v711, 16
      %v879 = vshll.u32 %v711, 16
      %v881 = vrot.slane %v879, 1
      %v882 = vor.u32 %v877, %v881
      %v884 = vshll.u32 %v727, 16
      %v886 = vrot.slane %v884, 1
      %v887 = vsel %vm731, %v882, %v886
      %v889 = vshrl.u32 %v712, 16
      %v891 = vshll.u32 %v712, 16
      %v893 = vrot.slane %v891, 1
      %v894 = vor.u32 %v889, %v893
      %v896 = vshll.u32 %v728, 16
      %v898 = vrot.slane %v896, 1
      %v899 = vsel %vm731, %v894, %v898
      %v901 = vshrl.u32 %v713, 16
      %v903 = vshll.u32 %v713, 16
      %v905 = vrot.slane %v903, 1
      %v906 = vor.u32 %v901, %v905
      %v908 = vshll.u32 %v729, 16
      %v910 = vrot.slane %v908, 1
      %v911 = vsel %vm731, %v906, %v910
      %v913 = vshrl.u32 %v714, 16
      %v915 = vshll.u32 %v714, 16
      %v917 = vrot.slane %v915, 1
      %v918 = vor.u32 %v913, %v917
      %v920 = vshll.u32 %v730, 16
      %v922 = vrot.slane %v920, 1
      %v923 = vsel %vm731, %v918, %v922
      %vm972 = vcmask 1046528
      %v973 = vrot.slane %v699, 1
      %v974 = vrot.slane %v715, 1
      %v975 = vsel %vm972, %v973, %v974
      %v976 = vrot.slane %v700, 1
      %v977 = vrot.slane %v716, 1
      %v978 = vsel %vm972, %v976, %v977
      %v979 = vrot.slane %v701, 1
      %v980 = vrot.slane %v717, 1
      %v981 = vsel %vm972, %v979, %v980
      %v982 = vrot.slane %v702, 1
      %v983 = vrot.slane %v718, 1
      %v984 = vsel %vm972, %v982, %v983
      %v985 = vrot.slane %v703, 1
      %v986 = vrot.slane %v719, 1
      %v987 = vsel %vm972, %v985, %v986
      %v988 = vrot.slane %v704, 1
      %v989 = vrot.slane %v720, 1
      %v990 = vsel %vm972, %v988, %v989
      %v991 = vrot.slane %v705, 1
      %v992 = vrot.slane %v721, 1
      %v993 = vsel %vm972, %v991, %v992
      %v994 = vrot.slane %v706, 1
      %v995 = vrot.slane %v722, 1
      %v996 = vsel %vm972, %v994, %v995
      %v997 = vrot.slane %v707, 1
      %v998 = vrot.slane %v723, 1
      %v999 = vsel %vm972, %v997, %v998
      %v1000 = vrot.slane %v708, 1
      %v1001 = vrot.slane %v724, 1
      %v1002 = vsel %vm972, %v1000, %v1001
      %v1003 = vrot.slane %v709, 1
      %v1004 = vrot.slane %v725, 1
      %v1005 = vsel %vm972, %v1003, %v1004
      %v1006 = vrot.slane %v710, 1
      %v1007 = vrot.slane %v726, 1
      %v1008 = vsel %vm972, %v1006, %v1007
      %v1009 = vrot.slane %v711, 1
      %v1010 = vrot.slane %v727, 1
      %v1011 = vsel %vm972, %v1009, %v1010
      %v1012 = vrot.slane %v712, 1
      %v1013 = vrot.slane %v728, 1
      %v1014 = vsel %vm972, %v1012, %v1013
      %v1015 = vrot.slane %v713, 1
      %v1016 = vrot.slane %v729, 1
      %v1017 = vsel %vm972, %v1015, %v1016
      %v1018 = vrot.slane %v714, 1
      %v1019 = vrot.slane %v730, 1
      %v1020 = vsel %vm972, %v1018, %v1019
      %v1037 = vld [vmem:[%s2] sm:$0xf]
      %v1038 = vld [vmem:[%s2 + $0x4] sm:$0xf]
      %v1039 = vld [vmem:[%s2 + $0x8] sm:$0xf]
      %v1040 = vld [vmem:[%s2 + $0xc] sm:$0xf]
      %v1041 = vld [vmem:[%s2 + $0x10] sm:$0xf]
      %v1042 = vld [vmem:[%s2 + $0x14] sm:$0xf]
      %v1043 = vld [vmem:[%s2 + $0x18] sm:$0xf]
      %v1044 = vld [vmem:[%s2 + $0x1c] sm:$0xf]
      %v1045 = vld [vmem:[%s2 + $0x20] sm:$0xf]
      %v1046 = vld [vmem:[%s2 + $0x24] sm:$0xf]
      %v1047 = vld [vmem:[%s2 + $0x28] sm:$0xf]
      %v1048 = vld [vmem:[%s2 + $0x2c] sm:$0xf]
      %v1049 = vld [vmem:[%s2 + $0x30] sm:$0xf]
      %v1050 = vld [vmem:[%s2 + $0x34] sm:$0xf]
      %v1051 = vld [vmem:[%s2 + $0x38] sm:$0xf]
      %v1052 = vld [vmem:[%s2 + $0x3c] sm:$0xf]
      %v1053 = vld [vmem:[%s2 + $0x40] sm:$0xf]
      %v1054 = vld [vmem:[%s2 + $0x44] sm:$0xf]
      %v1055 = vld [vmem:[%s2 + $0x48] sm:$0xf]
      %v1056 = vld [vmem:[%s2 + $0x4c] sm:$0xf]
      %v1057 = vld [vmem:[%s2 + $0x50] sm:$0xf]
      %v1058 = vld [vmem:[%s2 + $0x54] sm:$0xf]
      %v1059 = vld [vmem:[%s2 + $0x58] sm:$0xf]
      %v1060 = vld [vmem:[%s2 + $0x5c] sm:$0xf]
      %v1061 = vld [vmem:[%s2 + $0x60] sm:$0xf]
      %v1062 = vld [vmem:[%s2 + $0x64] sm:$0xf]
      %v1063 = vld [vmem:[%s2 + $0x68] sm:$0xf]
      %v1064 = vld [vmem:[%s2 + $0x6c] sm:$0xf]
      %v1065 = vld [vmem:[%s2 + $0x70] sm:$0xf]
      %v1066 = vld [vmem:[%s2 + $0x74] sm:$0xf]
      %v1067 = vld [vmem:[%s2 + $0x78] sm:$0xf]
      %v1068 = vld [vmem:[%s2 + $0x7c] sm:$0xf]
      %v1069 = vld [vmem:[%s2 + $0x80] sm:$0xf]
      %v1070 = vld [vmem:[%s2 + $0x84] sm:$0xf]
      %v1071 = vld [vmem:[%s2 + $0x88] sm:$0xf]
      %v1072 = vld [vmem:[%s2 + $0x8c] sm:$0xf]
      %v1073 = vld [vmem:[%s2 + $0x90] sm:$0xf]
      %v1074 = vld [vmem:[%s2 + $0x94] sm:$0xf]
      %v1075 = vld [vmem:[%s2 + $0x98] sm:$0xf]
      %v1076 = vld [vmem:[%s2 + $0x9c] sm:$0xf]
      %v1077 = vld [vmem:[%s2 + $0xa0] sm:$0xf]
      %v1078 = vld [vmem:[%s2 + $0xa4] sm:$0xf]
      %v1079 = vld [vmem:[%s2 + $0xa8] sm:$0xf]
      %v1080 = vld [vmem:[%s2 + $0xac] sm:$0xf]
      %v1081 = vld [vmem:[%s2 + $0xb0] sm:$0xf]
      %v1082 = vld [vmem:[%s2 + $0xb4] sm:$0xf]
      %v1083 = vld [vmem:[%s2 + $0xb8] sm:$0xf]
      %v1084 = vld [vmem:[%s2 + $0xbc] sm:$0xf]
      %s1085 = scalar_lea.vmem %s2, 192
      %v1086 = vld [vmem:[%s1085] sm:$0xf]
      %v1087 = vld [vmem:[%s1085 + $0x4] sm:$0xf]
      %v1088 = vld [vmem:[%s1085 + $0x8] sm:$0xf]
      %v1089 = vld [vmem:[%s1085 + $0xc] sm:$0xf]
      %v1090 = vld [vmem:[%s1085 + $0x10] sm:$0xf]
      %v1091 = vld [vmem:[%s1085 + $0x14] sm:$0xf]
      %v1092 = vld [vmem:[%s1085 + $0x18] sm:$0xf]
      %v1093 = vld [vmem:[%s1085 + $0x1c] sm:$0xf]
      %v1094 = vld [vmem:[%s1085 + $0x20] sm:$0xf]
      %v1095 = vld [vmem:[%s1085 + $0x24] sm:$0xf]
      %v1096 = vld [vmem:[%s1085 + $0x28] sm:$0xf]
      %v1097 = vld [vmem:[%s1085 + $0x2c] sm:$0xf]
      %v1098 = vld [vmem:[%s1085 + $0x30] sm:$0xf]
      %v1099 = vld [vmem:[%s1085 + $0x34] sm:$0xf]
      %v1100 = vld [vmem:[%s1085 + $0x38] sm:$0xf]
      %v1101 = vld [vmem:[%s1085 + $0x3c] sm:$0xf]
      %v1102 = vld [vmem:[%s1085 + $0x40] sm:$0xf]
      %v1103 = vld [vmem:[%s1085 + $0x44] sm:$0xf]
      %v1104 = vld [vmem:[%s1085 + $0x48] sm:$0xf]
      %v1105 = vld [vmem:[%s1085 + $0x4c] sm:$0xf]
      %v1106 = vld [vmem:[%s1085 + $0x50] sm:$0xf]
      %v1107 = vld [vmem:[%s1085 + $0x54] sm:$0xf]
      %v1108 = vld [vmem:[%s1085 + $0x58] sm:$0xf]
      %v1109 = vld [vmem:[%s1085 + $0x5c] sm:$0xf]
      %v1110 = vld [vmem:[%s1085 + $0x60] sm:$0xf]
      %v1111 = vld [vmem:[%s1085 + $0x64] sm:$0xf]
      %v1112 = vld [vmem:[%s1085 + $0x68] sm:$0xf]
      %v1113 = vld [vmem:[%s1085 + $0x6c] sm:$0xf]
      %v1114 = vld [vmem:[%s1085 + $0x70] sm:$0xf]
      %v1115 = vld [vmem:[%s1085 + $0x74] sm:$0xf]
      %v1116 = vld [vmem:[%s1085 + $0x78] sm:$0xf]
      %v1117 = vld [vmem:[%s1085 + $0x7c] sm:$0xf]
      %v1118 = vld [vmem:[%s1085 + $0x80] sm:$0xf]
      %v1119 = vld [vmem:[%s1085 + $0x84] sm:$0xf]
      %v1120 = vld [vmem:[%s1085 + $0x88] sm:$0xf]
      %v1121 = vld [vmem:[%s1085 + $0x8c] sm:$0xf]
      %v1122 = vld [vmem:[%s1085 + $0x90] sm:$0xf]
      %v1123 = vld [vmem:[%s1085 + $0x94] sm:$0xf]
      %v1124 = vld [vmem:[%s1085 + $0x98] sm:$0xf]
      %v1125 = vld [vmem:[%s1085 + $0x9c] sm:$0xf]
      %v1126 = vld [vmem:[%s1085 + $0xa0] sm:$0xf]
      %v1127 = vld [vmem:[%s1085 + $0xa4] sm:$0xf]
      %v1128 = vld [vmem:[%s1085 + $0xa8] sm:$0xf]
      %v1129 = vld [vmem:[%s1085 + $0xac] sm:$0xf]
      %v1130 = vld [vmem:[%s1085 + $0xb0] sm:$0xf]
      %v1131 = vld [vmem:[%s1085 + $0xb4] sm:$0xf]
      %v1132 = vld [vmem:[%s1085 + $0xb8] sm:$0xf]
      %v1133 = vld [vmem:[%s1085 + $0xbc] sm:$0xf]
      %v1182 = vunpack.c.l.b16 %v1086
      %v1183 = vunpack.c.l.b16 %v1087
      %v1184 = vunpack.c.l.b16 %v1088
      %v1185 = vunpack.c.l.b16 %v1089
      %v1186 = vunpack.c.l.b16 %v1090
      %v1187 = vunpack.c.l.b16 %v1091
      %v1188 = vunpack.c.l.b16 %v1092
      %v1189 = vunpack.c.l.b16 %v1093
      %v1190 = vunpack.c.l.b16 %v1094
      %v1191 = vunpack.c.l.b16 %v1095
      %v1192 = vunpack.c.l.b16 %v1096
      %v1193 = vunpack.c.l.b16 %v1097
      %v1194 = vunpack.c.l.b16 %v1098
      %v1195 = vunpack.c.l.b16 %v1099
      %v1196 = vunpack.c.l.b16 %v1100
      %v1197 = vunpack.c.l.b16 %v1101
      %v1198 = vunpack.c.l.b16 %v1102
      %v1199 = vunpack.c.l.b16 %v1103
      %v1200 = vunpack.c.l.b16 %v1104
      %v1201 = vunpack.c.l.b16 %v1105
      %v1202 = vunpack.c.l.b16 %v1106
      %v1203 = vunpack.c.l.b16 %v1107
      %v1204 = vunpack.c.l.b16 %v1108
      %v1205 = vunpack.c.l.b16 %v1109
      %v1206 = vunpack.c.l.b16 %v1110
      %v1207 = vunpack.c.l.b16 %v1111
      %v1208 = vunpack.c.l.b16 %v1112
      %v1209 = vunpack.c.l.b16 %v1113
      %v1210 = vunpack.c.l.b16 %v1114
      %v1211 = vunpack.c.l.b16 %v1115
      %v1212 = vunpack.c.l.b16 %v1116
      %v1213 = vunpack.c.l.b16 %v1117
      %v1214 = vunpack.c.l.b16 %v1118
      %v1215 = vunpack.c.l.b16 %v1119
      %v1216 = vunpack.c.l.b16 %v1120
      %v1217 = vunpack.c.l.b16 %v1121
      %v1218 = vunpack.c.l.b16 %v1122
      %v1219 = vunpack.c.l.b16 %v1123
      %v1220 = vunpack.c.l.b16 %v1124
      %v1221 = vunpack.c.l.b16 %v1125
      %v1222 = vunpack.c.l.b16 %v1126
      %v1223 = vunpack.c.l.b16 %v1127
      %v1224 = vunpack.c.l.b16 %v1128
      %v1225 = vunpack.c.l.b16 %v1129
      %v1226 = vunpack.c.l.b16 %v1130
      %v1227 = vunpack.c.l.b16 %v1131
      %v1228 = vunpack.c.l.b16 %v1132
      %v1229 = vunpack.c.l.b16 %v1133
      %v1230 = vpack.c.b16 %v1183, %v1182
      %v1231 = vpack.c.b16 %v1185, %v1184
      %v1232 = vpack.c.b16 %v1187, %v1186
      %v1233 = vpack.c.b16 %v1189, %v1188
      %v1234 = vpack.c.b16 %v1191, %v1190
      %v1235 = vpack.c.b16 %v1193, %v1192
      %v1236 = vpack.c.b16 %v1195, %v1194
      %v1237 = vpack.c.b16 %v1197, %v1196
      %v1238 = vpack.c.b16 %v1199, %v1198
      %v1239 = vpack.c.b16 %v1201, %v1200
      %v1240 = vpack.c.b16 %v1203, %v1202
      %v1241 = vpack.c.b16 %v1205, %v1204
      %v1242 = vpack.c.b16 %v1207, %v1206
      %v1243 = vpack.c.b16 %v1209, %v1208
      %v1244 = vpack.c.b16 %v1211, %v1210
      %v1245 = vpack.c.b16 %v1213, %v1212
      %v1246 = vpack.c.b16 %v1215, %v1214
      %v1247 = vpack.c.b16 %v1217, %v1216
      %v1248 = vpack.c.b16 %v1219, %v1218
      %v1249 = vpack.c.b16 %v1221, %v1220
      %v1250 = vpack.c.b16 %v1223, %v1222
      %v1251 = vpack.c.b16 %v1225, %v1224
      %v1252 = vpack.c.b16 %v1227, %v1226
      %v1253 = vpack.c.b16 %v1229, %v1228
      %1278 = vmatpush.bf16.msra.mxu0 %v1237
      %1279 = vmatpush.bf16.msra.mxu0 %v1236
      %1280 = vmatpush.bf16.msra.mxu0 %v1235
      %1281 = vmatpush.bf16.msra.mxu0 %v1234
      %1282 = vmatpush.bf16.msra.mxu0 %v1233
      %1283 = vmatpush.bf16.msra.mxu0 %v1232
      %1284 = vmatpush.bf16.msra.mxu0 %v1231
      %1285 = vmatpush.bf16.msra.mxu0 %v1230
      %1286 = vmatmul.bf16.gmra.mxu0 %v699
      %v1287 = vpop.f32.mrf.mxu0
      %v1288 = vadd.f32 0.0, %v1287
      %v1289 = vpop.f32.mrf.mxu0
      %v1290 = vadd.f32 0.0, %v1289
      %1291 = vmatmul.bf16.gmra.mxu0 %v700
      %v1292 = vpop.f32.mrf.mxu0
      %v1293 = vadd.f32 0.0, %v1292
      %v1294 = vpop.f32.mrf.mxu0
      %v1295 = vadd.f32 0.0, %v1294
      %1296 = vmatmul.bf16.gmra.mxu0 %v701
      %v1297 = vpop.f32.mrf.mxu0
      %v1298 = vadd.f32 0.0, %v1297
      %v1299 = vpop.f32.mrf.mxu0
      %v1300 = vadd.f32 0.0, %v1299
      %1301 = vmatmul.bf16.gmra.mxu0 %v702
      %v1302 = vpop.f32.mrf.mxu0
      %v1303 = vadd.f32 0.0, %v1302
      %v1304 = vpop.f32.mrf.mxu0
      %v1305 = vadd.f32 0.0, %v1304
      %1306 = vmatmul.bf16.gmra.mxu0 %v703
      %v1307 = vpop.f32.mrf.mxu0
      %v1308 = vadd.f32 0.0, %v1307
      %v1309 = vpop.f32.mrf.mxu0
      %v1310 = vadd.f32 0.0, %v1309
      %1311 = vmatmul.bf16.gmra.mxu0 %v704
      %v1312 = vpop.f32.mrf.mxu0
      %v1313 = vadd.f32 0.0, %v1312
      %v1314 = vpop.f32.mrf.mxu0
      %v1315 = vadd.f32 0.0, %v1314
      %1316 = vmatmul.bf16.gmra.mxu0 %v705
      %v1317 = vpop.f32.mrf.mxu0
      %v1318 = vadd.f32 0.0, %v1317
      %v1319 = vpop.f32.mrf.mxu0
      %v1320 = vadd.f32 0.0, %v1319
      %1321 = vmatmul.bf16.gmra.mxu0 %v706
      %v1322 = vpop.f32.mrf.mxu0
      %v1323 = vadd.f32 0.0, %v1322
      %v1324 = vpop.f32.mrf.mxu0
      %v1325 = vadd.f32 0.0, %v1324
      %1326 = vmatmul.bf16.gmra.mxu0 %v707
      %v1327 = vpop.f32.mrf.mxu0
      %v1328 = vadd.f32 0.0, %v1327
      %v1329 = vpop.f32.mrf.mxu0
      %v1330 = vadd.f32 0.0, %v1329
      %1331 = vmatmul.bf16.gmra.mxu0 %v708
      %v1332 = vpop.f32.mrf.mxu0
      %v1333 = vadd.f32 0.0, %v1332
      %v1334 = vpop.f32.mrf.mxu0
      %v1335 = vadd.f32 0.0, %v1334
      %1336 = vmatmul.bf16.gmra.mxu0 %v709
      %v1337 = vpop.f32.mrf.mxu0
      %v1338 = vadd.f32 0.0, %v1337
      %v1339 = vpop.f32.mrf.mxu0
      %v1340 = vadd.f32 0.0, %v1339
      %1341 = vmatmul.bf16.gmra.mxu0 %v710
      %v1342 = vpop.f32.mrf.mxu0
      %v1343 = vadd.f32 0.0, %v1342
      %v1344 = vpop.f32.mrf.mxu0
      %v1345 = vadd.f32 0.0, %v1344
      %1346 = vmatmul.bf16.gmra.mxu0 %v711
      %v1347 = vpop.f32.mrf.mxu0
      %v1348 = vadd.f32 0.0, %v1347
      %v1349 = vpop.f32.mrf.mxu0
      %v1350 = vadd.f32 0.0, %v1349
      %1351 = vmatmul.bf16.gmra.mxu0 %v712
      %v1352 = vpop.f32.mrf.mxu0
      %v1353 = vadd.f32 0.0, %v1352
      %v1354 = vpop.f32.mrf.mxu0
      %v1355 = vadd.f32 0.0, %v1354
      %1356 = vmatmul.bf16.gmra.mxu0 %v713
      %v1357 = vpop.f32.mrf.mxu0
      %v1358 = vadd.f32 0.0, %v1357
      %v1359 = vpop.f32.mrf.mxu0
      %v1360 = vadd.f32 0.0, %v1359
      %1361 = vmatmul.bf16.gmra.mxu0 %v714
      %v1362 = vpop.f32.mrf.mxu0
      %v1363 = vadd.f32 0.0, %v1362
      %v1364 = vpop.f32.mrf.mxu0
      %v1365 = vadd.f32 0.0, %v1364
      %1366 = vdwg.mxu0
      %1367 = vmatpush.bf16.msra.mxu0 %v1245
      %1368 = vmatpush.bf16.msra.mxu0 %v1244
      %1369 = vmatpush.bf16.msra.mxu0 %v1243
      %1370 = vmatpush.bf16.msra.mxu0 %v1242
      %1371 = vmatpush.bf16.msra.mxu0 %v1241
      %1372 = vmatpush.bf16.msra.mxu0 %v1240
      %1373 = vmatpush.bf16.msra.mxu0 %v1239
      %1374 = vmatpush.bf16.msra.mxu0 %v1238
      %1375 = vmatmul.bf16.gmra.mxu0 %v743
      %v1376 = vpop.f32.mrf.mxu0
      %v1377 = vadd.f32 %v1288, %v1376
      %v1378 = vpop.f32.mrf.mxu0
      %v1379 = vadd.f32 %v1290, %v1378
      %1380 = vmatmul.bf16.gmra.mxu0 %v755
      %v1381 = vpop.f32.mrf.mxu0
      %v1382 = vadd.f32 %v1293, %v1381
      %v1383 = vpop.f32.mrf.mxu0
      %v1384 = vadd.f32 %v1295, %v1383
      %1385 = vmatmul.bf16.gmra.mxu0 %v767
      %v1386 = vpop.f32.mrf.mxu0
      %v1387 = vadd.f32 %v1298, %v1386
      %v1388 = vpop.f32.mrf.mxu0
      %v1389 = vadd.f32 %v1300, %v1388
      %1390 = vmatmul.bf16.gmra.mxu0 %v779
      %v1391 = vpop.f32.mrf.mxu0
      %v1392 = vadd.f32 %v1303, %v1391
      %v1393 = vpop.f32.mrf.mxu0
      %v1394 = vadd.f32 %v1305, %v1393
      %1395 = vmatmul.bf16.gmra.mxu0 %v791
      %v1396 = vpop.f32.mrf.mxu0
      %v1397 = vadd.f32 %v1308, %v1396
      %v1398 = vpop.f32.mrf.mxu0
      %v1399 = vadd.f32 %v1310, %v1398
      %1400 = vmatmul.bf16.gmra.mxu0 %v803
      %v1401 = vpop.f32.mrf.mxu0
      %v1402 = vadd.f32 %v1313, %v1401
      %v1403 = vpop.f32.mrf.mxu0
      %v1404 = vadd.f32 %v1315, %v1403
      %1405 = vmatmul.bf16.gmra.mxu0 %v815
      %v1406 = vpop.f32.mrf.mxu0
      %v1407 = vadd.f32 %v1318, %v1406
      %v1408 = vpop.f32.mrf.mxu0
      %v1409 = vadd.f32 %v1320, %v1408
      %1410 = vmatmul.bf16.gmra.mxu0 %v827
      %v1411 = vpop.f32.mrf.mxu0
      %v1412 = vadd.f32 %v1323, %v1411
      %v1413 = vpop.f32.mrf.mxu0
      %v1414 = vadd.f32 %v1325, %v1413
      %1415 = vmatmul.bf16.gmra.mxu0 %v839
      %v1416 = vpop.f32.mrf.mxu0
      %v1417 = vadd.f32 %v1328, %v1416
      %v1418 = vpop.f32.mrf.mxu0
      %v1419 = vadd.f32 %v1330, %v1418
      %1420 = vmatmul.bf16.gmra.mxu0 %v851
      %v1421 = vpop.f32.mrf.mxu0
      %v1422 = vadd.f32 %v1333, %v1421
      %v1423 = vpop.f32.mrf.mxu0
      %v1424 = vadd.f32 %v1335, %v1423
      %1425 = vmatmul.bf16.gmra.mxu0 %v863
      %v1426 = vpop.f32.mrf.mxu0
      %v1427 = vadd.f32 %v1338, %v1426
      %v1428 = vpop.f32.mrf.mxu0
      %v1429 = vadd.f32 %v1340, %v1428
      %1430 = vmatmul.bf16.gmra.mxu0 %v875
      %v1431 = vpop.f32.mrf.mxu0
      %v1432 = vadd.f32 %v1343, %v1431
      %v1433 = vpop.f32.mrf.mxu0
      %v1434 = vadd.f32 %v1345, %v1433
      %1435 = vmatmul.bf16.gmra.mxu0 %v887
      %v1436 = vpop.f32.mrf.mxu0
      %v1437 = vadd.f32 %v1348, %v1436
      %v1438 = vpop.f32.mrf.mxu0
      %v1439 = vadd.f32 %v1350, %v1438
      %1440 = vmatmul.bf16.gmra.mxu0 %v899
      %v1441 = vpop.f32.mrf.mxu0
      %v1442 = vadd.f32 %v1353, %v1441
      %v1443 = vpop.f32.mrf.mxu0
      %v1444 = vadd.f32 %v1355, %v1443
      %1445 = vmatmul.bf16.gmra.mxu0 %v911
      %v1446 = vpop.f32.mrf.mxu0
      %v1447 = vadd.f32 %v1358, %v1446
      %v1448 = vpop.f32.mrf.mxu0
      %v1449 = vadd.f32 %v1360, %v1448
      %1450 = vmatmul.bf16.gmra.mxu0 %v923
      %v1451 = vpop.f32.mrf.mxu0
      %v1452 = vadd.f32 %v1363, %v1451
      %v1453 = vpop.f32.mrf.mxu0
      %v1454 = vadd.f32 %v1365, %v1453
      %1455 = vdwg.mxu0
      %1456 = vmatpush.bf16.msra.mxu0 %v1253
      %1457 = vmatpush.bf16.msra.mxu0 %v1252
      %1458 = vmatpush.bf16.msra.mxu0 %v1251
      %1459 = vmatpush.bf16.msra.mxu0 %v1250
      %1460 = vmatpush.bf16.msra.mxu0 %v1249
      %1461 = vmatpush.bf16.msra.mxu0 %v1248
      %1462 = vmatpush.bf16.msra.mxu0 %v1247
      %1463 = vmatpush.bf16.msra.mxu0 %v1246
      %1464 = vmatmul.bf16.gmra.mxu0 %v975
      %v1465 = vpop.f32.mrf.mxu0
      %v1466 = vadd.f32 %v1377, %v1465
      %v1467 = vpop.f32.mrf.mxu0
      %v1468 = vadd.f32 %v1379, %v1467
      %1469 = vmatmul.bf16.gmra.mxu0 %v978
      %v1470 = vpop.f32.mrf.mxu0
      %v1471 = vadd.f32 %v1382, %v1470
      %v1472 = vpop.f32.mrf.mxu0
      %v1473 = vadd.f32 %v1384, %v1472
      %1474 = vmatmul.bf16.gmra.mxu0 %v981
      %v1475 = vpop.f32.mrf.mxu0
      %v1476 = vadd.f32 %v1387, %v1475
      %v1477 = vpop.f32.mrf.mxu0
      %v1478 = vadd.f32 %v1389, %v1477
      %1479 = vmatmul.bf16.gmra.mxu0 %v984
      %v1480 = vpop.f32.mrf.mxu0
      %v1481 = vadd.f32 %v1392, %v1480
      %v1482 = vpop.f32.mrf.mxu0
      %v1483 = vadd.f32 %v1394, %v1482
      %1484 = vmatmul.bf16.gmra.mxu0 %v987
      %v1485 = vpop.f32.mrf.mxu0
      %v1486 = vadd.f32 %v1397, %v1485
      %v1487 = vpop.f32.mrf.mxu0
      %v1488 = vadd.f32 %v1399, %v1487
      %1489 = vmatmul.bf16.gmra.mxu0 %v990
      %v1490 = vpop.f32.mrf.mxu0
      %v1491 = vadd.f32 %v1402, %v1490
      %v1492 = vpop.f32.mrf.mxu0
      %v1493 = vadd.f32 %v1404, %v1492
      %1494 = vmatmul.bf16.gmra.mxu0 %v993
      %v1495 = vpop.f32.mrf.mxu0
      %v1496 = vadd.f32 %v1407, %v1495
      %v1497 = vpop.f32.mrf.mxu0
      %v1498 = vadd.f32 %v1409, %v1497
      %1499 = vmatmul.bf16.gmra.mxu0 %v996
      %v1500 = vpop.f32.mrf.mxu0
      %v1501 = vadd.f32 %v1412, %v1500
      %v1502 = vpop.f32.mrf.mxu0
      %v1503 = vadd.f32 %v1414, %v1502
      %1504 = vmatmul.bf16.gmra.mxu0 %v999
      %v1505 = vpop.f32.mrf.mxu0
      %v1506 = vadd.f32 %v1417, %v1505
      %v1507 = vpop.f32.mrf.mxu0
      %v1508 = vadd.f32 %v1419, %v1507
      %1509 = vmatmul.bf16.gmra.mxu0 %v1002
      %v1510 = vpop.f32.mrf.mxu0
      %v1511 = vadd.f32 %v1422, %v1510
      %v1512 = vpop.f32.mrf.mxu0
      %v1513 = vadd.f32 %v1424, %v1512
      %1514 = vmatmul.bf16.gmra.mxu0 %v1005
      %v1515 = vpop.f32.mrf.mxu0
      %v1516 = vadd.f32 %v1427, %v1515
      %v1517 = vpop.f32.mrf.mxu0
      %v1518 = vadd.f32 %v1429, %v1517
      %1519 = vmatmul.bf16.gmra.mxu0 %v1008
      %v1520 = vpop.f32.mrf.mxu0
      %v1521 = vadd.f32 %v1432, %v1520
      %v1522 = vpop.f32.mrf.mxu0
      %v1523 = vadd.f32 %v1434, %v1522
      %1524 = vmatmul.bf16.gmra.mxu0 %v1011
      %v1525 = vpop.f32.mrf.mxu0
      %v1526 = vadd.f32 %v1437, %v1525
      %v1527 = vpop.f32.mrf.mxu0
      %v1528 = vadd.f32 %v1439, %v1527
      %1529 = vmatmul.bf16.gmra.mxu0 %v1014
      %v1530 = vpop.f32.mrf.mxu0
      %v1531 = vadd.f32 %v1442, %v1530
      %v1532 = vpop.f32.mrf.mxu0
      %v1533 = vadd.f32 %v1444, %v1532
      %1534 = vmatmul.bf16.gmra.mxu0 %v1017
      %v1535 = vpop.f32.mrf.mxu0
      %v1536 = vadd.f32 %v1447, %v1535
      %v1537 = vpop.f32.mrf.mxu0
      %v1538 = vadd.f32 %v1449, %v1537
      %1539 = vmatmul.bf16.gmra.mxu0 %v1020
      %v1540 = vpop.f32.mrf.mxu0
      %v1541 = vadd.f32 %v1452, %v1540
      %v1542 = vpop.f32.mrf.mxu0
      %v1543 = vadd.f32 %v1454, %v1542
      %1544 = vdwg.mxu0
      %v1593 = vunpack.c.l.b16 %v1037
      %v1594 = vunpack.c.l.b16 %v1038
      %v1595 = vunpack.c.l.b16 %v1039
      %v1596 = vunpack.c.l.b16 %v1040
      %v1597 = vunpack.c.l.b16 %v1041
      %v1598 = vunpack.c.l.b16 %v1042
      %v1599 = vunpack.c.l.b16 %v1043
      %v1600 = vunpack.c.l.b16 %v1044
      %v1601 = vunpack.c.l.b16 %v1045
      %v1602 = vunpack.c.l.b16 %v1046
      %v1603 = vunpack.c.l.b16 %v1047
      %v1604 = vunpack.c.l.b16 %v1048
      %v1605 = vunpack.c.l.b16 %v1049
      %v1606 = vunpack.c.l.b16 %v1050
      %v1607 = vunpack.c.l.b16 %v1051
      %v1608 = vunpack.c.l.b16 %v1052
      %v1609 = vunpack.c.l.b16 %v1053
      %v1610 = vunpack.c.l.b16 %v1054
      %v1611 = vunpack.c.l.b16 %v1055
      %v1612 = vunpack.c.l.b16 %v1056
      %v1613 = vunpack.c.l.b16 %v1057
      %v1614 = vunpack.c.l.b16 %v1058
      %v1615 = vunpack.c.l.b16 %v1059
      %v1616 = vunpack.c.l.b16 %v1060
      %v1617 = vunpack.c.l.b16 %v1061
      %v1618 = vunpack.c.l.b16 %v1062
      %v1619 = vunpack.c.l.b16 %v1063
      %v1620 = vunpack.c.l.b16 %v1064
      %v1621 = vunpack.c.l.b16 %v1065
      %v1622 = vunpack.c.l.b16 %v1066
      %v1623 = vunpack.c.l.b16 %v1067
      %v1624 = vunpack.c.l.b16 %v1068
      %v1625 = vunpack.c.l.b16 %v1069
      %v1626 = vunpack.c.l.b16 %v1070
      %v1627 = vunpack.c.l.b16 %v1071
      %v1628 = vunpack.c.l.b16 %v1072
      %v1629 = vunpack.c.l.b16 %v1073
      %v1630 = vunpack.c.l.b16 %v1074
      %v1631 = vunpack.c.l.b16 %v1075
      %v1632 = vunpack.c.l.b16 %v1076
      %v1633 = vunpack.c.l.b16 %v1077
      %v1634 = vunpack.c.l.b16 %v1078
      %v1635 = vunpack.c.l.b16 %v1079
      %v1636 = vunpack.c.l.b16 %v1080
      %v1637 = vunpack.c.l.b16 %v1081
      %v1638 = vunpack.c.l.b16 %v1082
      %v1639 = vunpack.c.l.b16 %v1083
      %v1640 = vunpack.c.l.b16 %v1084
      %v1641 = vpack.c.b16 %v1594, %v1593
      %v1642 = vpack.c.b16 %v1596, %v1595
      %v1643 = vpack.c.b16 %v1598, %v1597
      %v1644 = vpack.c.b16 %v1600, %v1599
      %v1645 = vpack.c.b16 %v1602, %v1601
      %v1646 = vpack.c.b16 %v1604, %v1603
      %v1647 = vpack.c.b16 %v1606, %v1605
      %v1648 = vpack.c.b16 %v1608, %v1607
      %v1649 = vpack.c.b16 %v1610, %v1609
      %v1650 = vpack.c.b16 %v1612, %v1611
      %v1651 = vpack.c.b16 %v1614, %v1613
      %v1652 = vpack.c.b16 %v1616, %v1615
      %v1653 = vpack.c.b16 %v1618, %v1617
      %v1654 = vpack.c.b16 %v1620, %v1619
      %v1655 = vpack.c.b16 %v1622, %v1621
      %v1656 = vpack.c.b16 %v1624, %v1623
      %v1657 = vpack.c.b16 %v1626, %v1625
      %v1658 = vpack.c.b16 %v1628, %v1627
      %v1659 = vpack.c.b16 %v1630, %v1629
      %v1660 = vpack.c.b16 %v1632, %v1631
      %v1661 = vpack.c.b16 %v1634, %v1633
      %v1662 = vpack.c.b16 %v1636, %v1635
      %v1663 = vpack.c.b16 %v1638, %v1637
      %v1664 = vpack.c.b16 %v1640, %v1639
      %1689 = vmatpush.bf16.msra.mxu0 %v1648
      %1690 = vmatpush.bf16.msra.mxu0 %v1647
      %1691 = vmatpush.bf16.msra.mxu0 %v1646
      %1692 = vmatpush.bf16.msra.mxu0 %v1645
      %1693 = vmatpush.bf16.msra.mxu0 %v1644
      %1694 = vmatpush.bf16.msra.mxu0 %v1643
      %1695 = vmatpush.bf16.msra.mxu0 %v1642
      %1696 = vmatpush.bf16.msra.mxu0 %v1641
      %1697 = vmatmul.bf16.gmra.mxu0 0
      %v1698 = vpop.f32.mrf.mxu0
      %v1699 = vadd.f32 %v1466, %v1698
      %v1700 = vpop.f32.mrf.mxu0
      %v1701 = vadd.f32 %v1468, %v1700
      %1702 = vmatmul.bf16.gmra.mxu0 %v699
      %v1703 = vpop.f32.mrf.mxu0
      %v1704 = vadd.f32 %v1471, %v1703
      %v1705 = vpop.f32.mrf.mxu0
      %v1706 = vadd.f32 %v1473, %v1705
      %1707 = vmatmul.bf16.gmra.mxu0 %v700
      %v1708 = vpop.f32.mrf.mxu0
      %v1709 = vadd.f32 %v1476, %v1708
      %v1710 = vpop.f32.mrf.mxu0
      %v1711 = vadd.f32 %v1478, %v1710
      %1712 = vmatmul.bf16.gmra.mxu0 %v701
      %v1713 = vpop.f32.mrf.mxu0
      %v1714 = vadd.f32 %v1481, %v1713
      %v1715 = vpop.f32.mrf.mxu0
      %v1716 = vadd.f32 %v1483, %v1715
      %1717 = vmatmul.bf16.gmra.mxu0 %v702
      %v1718 = vpop.f32.mrf.mxu0
      %v1719 = vadd.f32 %v1486, %v1718
      %v1720 = vpop.f32.mrf.mxu0
      %v1721 = vadd.f32 %v1488, %v1720
      %1722 = vmatmul.bf16.gmra.mxu0 %v703
      %v1723 = vpop.f32.mrf.mxu0
      %v1724 = vadd.f32 %v1491, %v1723
      %v1725 = vpop.f32.mrf.mxu0
      %v1726 = vadd.f32 %v1493, %v1725
      %1727 = vmatmul.bf16.gmra.mxu0 %v704
      %v1728 = vpop.f32.mrf.mxu0
      %v1729 = vadd.f32 %v1496, %v1728
      %v1730 = vpop.f32.mrf.mxu0
      %v1731 = vadd.f32 %v1498, %v1730
      %1732 = vmatmul.bf16.gmra.mxu0 %v705
      %v1733 = vpop.f32.mrf.mxu0
      %v1734 = vadd.f32 %v1501, %v1733
      %v1735 = vpop.f32.mrf.mxu0
      %v1736 = vadd.f32 %v1503, %v1735
      %1737 = vmatmul.bf16.gmra.mxu0 %v706
      %v1738 = vpop.f32.mrf.mxu0
      %v1739 = vadd.f32 %v1506, %v1738
      %v1740 = vpop.f32.mrf.mxu0
      %v1741 = vadd.f32 %v1508, %v1740
      %1742 = vmatmul.bf16.gmra.mxu0 %v707
      %v1743 = vpop.f32.mrf.mxu0
      %v1744 = vadd.f32 %v1511, %v1743
      %v1745 = vpop.f32.mrf.mxu0
      %v1746 = vadd.f32 %v1513, %v1745
      %1747 = vmatmul.bf16.gmra.mxu0 %v708
      %v1748 = vpop.f32.mrf.mxu0
      %v1749 = vadd.f32 %v1516, %v1748
      %v1750 = vpop.f32.mrf.mxu0
      %v1751 = vadd.f32 %v1518, %v1750
      %1752 = vmatmul.bf16.gmra.mxu0 %v709
      %v1753 = vpop.f32.mrf.mxu0
      %v1754 = vadd.f32 %v1521, %v1753
      %v1755 = vpop.f32.mrf.mxu0
      %v1756 = vadd.f32 %v1523, %v1755
      %1757 = vmatmul.bf16.gmra.mxu0 %v710
      %v1758 = vpop.f32.mrf.mxu0
      %v1759 = vadd.f32 %v1526, %v1758
      %v1760 = vpop.f32.mrf.mxu0
      %v1761 = vadd.f32 %v1528, %v1760
      %1762 = vmatmul.bf16.gmra.mxu0 %v711
      %v1763 = vpop.f32.mrf.mxu0
      %v1764 = vadd.f32 %v1531, %v1763
      %v1765 = vpop.f32.mrf.mxu0
      %v1766 = vadd.f32 %v1533, %v1765
      %1767 = vmatmul.bf16.gmra.mxu0 %v712
      %v1768 = vpop.f32.mrf.mxu0
      %v1769 = vadd.f32 %v1536, %v1768
      %v1770 = vpop.f32.mrf.mxu0
      %v1771 = vadd.f32 %v1538, %v1770
      %1772 = vmatmul.bf16.gmra.mxu0 %v713
      %v1773 = vpop.f32.mrf.mxu0
      %v1774 = vadd.f32 %v1541, %v1773
      %v1775 = vpop.f32.mrf.mxu0
      %v1776 = vadd.f32 %v1543, %v1775
      %1777 = vdwg.mxu0
      %1778 = vmatpush.bf16.msra.mxu0 %v1656
      %1779 = vmatpush.bf16.msra.mxu0 %v1655
      %1780 = vmatpush.bf16.msra.mxu0 %v1654
      %1781 = vmatpush.bf16.msra.mxu0 %v1653
      %1782 = vmatpush.bf16.msra.mxu0 %v1652
      %1783 = vmatpush.bf16.msra.mxu0 %v1651
      %1784 = vmatpush.bf16.msra.mxu0 %v1650
      %1785 = vmatpush.bf16.msra.mxu0 %v1649
      %1786 = vmatmul.bf16.gmra.mxu0 0
      %v1787 = vpop.f32.mrf.mxu0
      %v1788 = vadd.f32 %v1699, %v1787
      %v1789 = vpop.f32.mrf.mxu0
      %v1790 = vadd.f32 %v1701, %v1789
      %1791 = vmatmul.bf16.gmra.mxu0 %v743
      %v1792 = vpop.f32.mrf.mxu0
      %v1793 = vadd.f32 %v1704, %v1792
      %v1794 = vpop.f32.mrf.mxu0
      %v1795 = vadd.f32 %v1706, %v1794
      %1796 = vmatmul.bf16.gmra.mxu0 %v755
      %v1797 = vpop.f32.mrf.mxu0
      %v1798 = vadd.f32 %v1709, %v1797
      %v1799 = vpop.f32.mrf.mxu0
      %v1800 = vadd.f32 %v1711, %v1799
      %1801 = vmatmul.bf16.gmra.mxu0 %v767
      %v1802 = vpop.f32.mrf.mxu0
      %v1803 = vadd.f32 %v1714, %v1802
      %v1804 = vpop.f32.mrf.mxu0
      %v1805 = vadd.f32 %v1716, %v1804
      %1806 = vmatmul.bf16.gmra.mxu0 %v779
      %v1807 = vpop.f32.mrf.mxu0
      %v1808 = vadd.f32 %v1719, %v1807
      %v1809 = vpop.f32.mrf.mxu0
      %v1810 = vadd.f32 %v1721, %v1809
      %1811 = vmatmul.bf16.gmra.mxu0 %v791
      %v1812 = vpop.f32.mrf.mxu0
      %v1813 = vadd.f32 %v1724, %v1812
      %v1814 = vpop.f32.mrf.mxu0
      %v1815 = vadd.f32 %v1726, %v1814
      %1816 = vmatmul.bf16.gmra.mxu0 %v803
      %v1817 = vpop.f32.mrf.mxu0
      %v1818 = vadd.f32 %v1729, %v1817
      %v1819 = vpop.f32.mrf.mxu0
      %v1820 = vadd.f32 %v1731, %v1819
      %1821 = vmatmul.bf16.gmra.mxu0 %v815
      %v1822 = vpop.f32.mrf.mxu0
      %v1823 = vadd.f32 %v1734, %v1822
      %v1824 = vpop.f32.mrf.mxu0
      %v1825 = vadd.f32 %v1736, %v1824
      %1826 = vmatmul.bf16.gmra.mxu0 %v827
      %v1827 = vpop.f32.mrf.mxu0
      %v1828 = vadd.f32 %v1739, %v1827
      %v1829 = vpop.f32.mrf.mxu0
      %v1830 = vadd.f32 %v1741, %v1829
      %1831 = vmatmul.bf16.gmra.mxu0 %v839
      %v1832 = vpop.f32.mrf.mxu0
      %v1833 = vadd.f32 %v1744, %v1832
      %v1834 = vpop.f32.mrf.mxu0
      %v1835 = vadd.f32 %v1746, %v1834
      %1836 = vmatmul.bf16.gmra.mxu0 %v851
      %v1837 = vpop.f32.mrf.mxu0
      %v1838 = vadd.f32 %v1749, %v1837
      %v1839 = vpop.f32.mrf.mxu0
      %v1840 = vadd.f32 %v1751, %v1839
      %1841 = vmatmul.bf16.gmra.mxu0 %v863
      %v1842 = vpop.f32.mrf.mxu0
      %v1843 = vadd.f32 %v1754, %v1842
      %v1844 = vpop.f32.mrf.mxu0
      %v1845 = vadd.f32 %v1756, %v1844
      %1846 = vmatmul.bf16.gmra.mxu0 %v875
      %v1847 = vpop.f32.mrf.mxu0
      %v1848 = vadd.f32 %v1759, %v1847
      %v1849 = vpop.f32.mrf.mxu0
      %v1850 = vadd.f32 %v1761, %v1849
      %1851 = vmatmul.bf16.gmra.mxu0 %v887
      %v1852 = vpop.f32.mrf.mxu0
      %v1853 = vadd.f32 %v1764, %v1852
      %v1854 = vpop.f32.mrf.mxu0
      %v1855 = vadd.f32 %v1766, %v1854
      %1856 = vmatmul.bf16.gmra.mxu0 %v899
      %v1857 = vpop.f32.mrf.mxu0
      %v1858 = vadd.f32 %v1769, %v1857
      %v1859 = vpop.f32.mrf.mxu0
      %v1860 = vadd.f32 %v1771, %v1859
      %1861 = vmatmul.bf16.gmra.mxu0 %v911
      %v1862 = vpop.f32.mrf.mxu0
      %v1863 = vadd.f32 %v1774, %v1862
      %v1864 = vpop.f32.mrf.mxu0
      %v1865 = vadd.f32 %v1776, %v1864
      %1866 = vdwg.mxu0
      %1867 = vmatpush.bf16.msra.mxu0 %v1664
      %1868 = vmatpush.bf16.msra.mxu0 %v1663
      %1869 = vmatpush.bf16.msra.mxu0 %v1662
      %1870 = vmatpush.bf16.msra.mxu0 %v1661
      %1871 = vmatpush.bf16.msra.mxu0 %v1660
      %1872 = vmatpush.bf16.msra.mxu0 %v1659
      %1873 = vmatpush.bf16.msra.mxu0 %v1658
      %1874 = vmatpush.bf16.msra.mxu0 %v1657
      %1875 = vmatmul.bf16.gmra.mxu0 0
      %v1876 = vpop.f32.mrf.mxu0
      %v1877 = vadd.f32 %v1788, %v1876
      %v1878 = vpop.f32.mrf.mxu0
      %v1879 = vadd.f32 %v1790, %v1878
      %1880 = vmatmul.bf16.gmra.mxu0 %v975
      %v1881 = vpop.f32.mrf.mxu0
      %v1882 = vadd.f32 %v1793, %v1881
      %v1883 = vpop.f32.mrf.mxu0
      %v1884 = vadd.f32 %v1795, %v1883
      %1885 = vmatmul.bf16.gmra.mxu0 %v978
      %v1886 = vpop.f32.mrf.mxu0
      %v1887 = vadd.f32 %v1798, %v1886
      %v1888 = vpop.f32.mrf.mxu0
      %v1889 = vadd.f32 %v1800, %v1888
      %1890 = vmatmul.bf16.gmra.mxu0 %v981
      %v1891 = vpop.f32.mrf.mxu0
      %v1892 = vadd.f32 %v1803, %v1891
      %v1893 = vpop.f32.mrf.mxu0
      %v1894 = vadd.f32 %v1805, %v1893
      %1895 = vmatmul.bf16.gmra.mxu0 %v984
      %v1896 = vpop.f32.mrf.mxu0
      %v1897 = vadd.f32 %v1808, %v1896
      %v1898 = vpop.f32.mrf.mxu0
      %v1899 = vadd.f32 %v1810, %v1898
      %1900 = vmatmul.bf16.gmra.mxu0 %v987
      %v1901 = vpop.f32.mrf.mxu0
      %v1902 = vadd.f32 %v1813, %v1901
      %v1903 = vpop.f32.mrf.mxu0
      %v1904 = vadd.f32 %v1815, %v1903
      %1905 = vmatmul.bf16.gmra.mxu0 %v990
      %v1906 = vpop.f32.mrf.mxu0
      %v1907 = vadd.f32 %v1818, %v1906
      %v1908 = vpop.f32.mrf.mxu0
      %v1909 = vadd.f32 %v1820, %v1908
      %1910 = vmatmul.bf16.gmra.mxu0 %v993
      %v1911 = vpop.f32.mrf.mxu0
      %v1912 = vadd.f32 %v1823, %v1911
      %v1913 = vpop.f32.mrf.mxu0
      %v1914 = vadd.f32 %v1825, %v1913
      %1915 = vmatmul.bf16.gmra.mxu0 %v996
      %v1916 = vpop.f32.mrf.mxu0
      %v1917 = vadd.f32 %v1828, %v1916
      %v1918 = vpop.f32.mrf.mxu0
      %v1919 = vadd.f32 %v1830, %v1918
      %1920 = vmatmul.bf16.gmra.mxu0 %v999
      %v1921 = vpop.f32.mrf.mxu0
      %v1922 = vadd.f32 %v1833, %v1921
      %v1923 = vpop.f32.mrf.mxu0
      %v1924 = vadd.f32 %v1835, %v1923
      %1925 = vmatmul.bf16.gmra.mxu0 %v1002
      %v1926 = vpop.f32.mrf.mxu0
      %v1927 = vadd.f32 %v1838, %v1926
      %v1928 = vpop.f32.mrf.mxu0
      %v1929 = vadd.f32 %v1840, %v1928
      %1930 = vmatmul.bf16.gmra.mxu0 %v1005
      %v1931 = vpop.f32.mrf.mxu0
      %v1932 = vadd.f32 %v1843, %v1931
      %v1933 = vpop.f32.mrf.mxu0
      %v1934 = vadd.f32 %v1845, %v1933
      %1935 = vmatmul.bf16.gmra.mxu0 %v1008
      %v1936 = vpop.f32.mrf.mxu0
      %v1937 = vadd.f32 %v1848, %v1936
      %v1938 = vpop.f32.mrf.mxu0
      %v1939 = vadd.f32 %v1850, %v1938
      %1940 = vmatmul.bf16.gmra.mxu0 %v1011
      %v1941 = vpop.f32.mrf.mxu0
      %v1942 = vadd.f32 %v1853, %v1941
      %v1943 = vpop.f32.mrf.mxu0
      %v1944 = vadd.f32 %v1855, %v1943
      %1945 = vmatmul.bf16.gmra.mxu0 %v1014
      %v1946 = vpop.f32.mrf.mxu0
      %v1947 = vadd.f32 %v1858, %v1946
      %v1948 = vpop.f32.mrf.mxu0
      %v1949 = vadd.f32 %v1860, %v1948
      %1950 = vmatmul.bf16.gmra.mxu0 %v1017
      %v1951 = vpop.f32.mrf.mxu0
      %v1952 = vadd.f32 %v1863, %v1951
      %v1953 = vpop.f32.mrf.mxu0
      %v1954 = vadd.f32 %v1865, %v1953
      %1955 = vdwg.mxu0
      %s1956 = scalar_lea.vmem %s2, 384
      %v1957 = vld [vmem:[%s1956] sm:$0xf]
      %v1958 = vld [vmem:[%s1956 + $0x4] sm:$0xf]
      %v1959 = vld [vmem:[%s1956 + $0x8] sm:$0xf]
      %v1960 = vld [vmem:[%s1956 + $0xc] sm:$0xf]
      %v1961 = vld [vmem:[%s1956 + $0x10] sm:$0xf]
      %v1962 = vld [vmem:[%s1956 + $0x14] sm:$0xf]
      %v1963 = vld [vmem:[%s1956 + $0x18] sm:$0xf]
      %v1964 = vld [vmem:[%s1956 + $0x1c] sm:$0xf]
      %v1965 = vld [vmem:[%s1956 + $0x20] sm:$0xf]
      %v1966 = vld [vmem:[%s1956 + $0x24] sm:$0xf]
      %v1967 = vld [vmem:[%s1956 + $0x28] sm:$0xf]
      %v1968 = vld [vmem:[%s1956 + $0x2c] sm:$0xf]
      %v1969 = vld [vmem:[%s1956 + $0x30] sm:$0xf]
      %v1970 = vld [vmem:[%s1956 + $0x34] sm:$0xf]
      %v1971 = vld [vmem:[%s1956 + $0x38] sm:$0xf]
      %v1972 = vld [vmem:[%s1956 + $0x3c] sm:$0xf]
      %v1973 = vld [vmem:[%s1956 + $0x40] sm:$0xf]
      %v1974 = vld [vmem:[%s1956 + $0x44] sm:$0xf]
      %v1975 = vld [vmem:[%s1956 + $0x48] sm:$0xf]
      %v1976 = vld [vmem:[%s1956 + $0x4c] sm:$0xf]
      %v1977 = vld [vmem:[%s1956 + $0x50] sm:$0xf]
      %v1978 = vld [vmem:[%s1956 + $0x54] sm:$0xf]
      %v1979 = vld [vmem:[%s1956 + $0x58] sm:$0xf]
      %v1980 = vld [vmem:[%s1956 + $0x5c] sm:$0xf]
      %v1981 = vld [vmem:[%s1956 + $0x60] sm:$0xf]
      %v1982 = vld [vmem:[%s1956 + $0x64] sm:$0xf]
      %v1983 = vld [vmem:[%s1956 + $0x68] sm:$0xf]
      %v1984 = vld [vmem:[%s1956 + $0x6c] sm:$0xf]
      %v1985 = vld [vmem:[%s1956 + $0x70] sm:$0xf]
      %v1986 = vld [vmem:[%s1956 + $0x74] sm:$0xf]
      %v1987 = vld [vmem:[%s1956 + $0x78] sm:$0xf]
      %v1988 = vld [vmem:[%s1956 + $0x7c] sm:$0xf]
      %v1989 = vld [vmem:[%s1956 + $0x80] sm:$0xf]
      %v1990 = vld [vmem:[%s1956 + $0x84] sm:$0xf]
      %v1991 = vld [vmem:[%s1956 + $0x88] sm:$0xf]
      %v1992 = vld [vmem:[%s1956 + $0x8c] sm:$0xf]
      %v1993 = vld [vmem:[%s1956 + $0x90] sm:$0xf]
      %v1994 = vld [vmem:[%s1956 + $0x94] sm:$0xf]
      %v1995 = vld [vmem:[%s1956 + $0x98] sm:$0xf]
      %v1996 = vld [vmem:[%s1956 + $0x9c] sm:$0xf]
      %v1997 = vld [vmem:[%s1956 + $0xa0] sm:$0xf]
      %v1998 = vld [vmem:[%s1956 + $0xa4] sm:$0xf]
      %v1999 = vld [vmem:[%s1956 + $0xa8] sm:$0xf]
      %v2000 = vld [vmem:[%s1956 + $0xac] sm:$0xf]
      %v2001 = vld [vmem:[%s1956 + $0xb0] sm:$0xf]
      %v2002 = vld [vmem:[%s1956 + $0xb4] sm:$0xf]
      %v2003 = vld [vmem:[%s1956 + $0xb8] sm:$0xf]
      %v2004 = vld [vmem:[%s1956 + $0xbc] sm:$0xf]
      %v2053 = vunpack.c.l.b16 %v1957
      %v2054 = vunpack.c.l.b16 %v1958
      %v2055 = vunpack.c.l.b16 %v1959
      %v2056 = vunpack.c.l.b16 %v1960
      %v2057 = vunpack.c.l.b16 %v1961
      %v2058 = vunpack.c.l.b16 %v1962
      %v2059 = vunpack.c.l.b16 %v1963
      %v2060 = vunpack.c.l.b16 %v1964
      %v2061 = vunpack.c.l.b16 %v1965
      %v2062 = vunpack.c.l.b16 %v1966
      %v2063 = vunpack.c.l.b16 %v1967
      %v2064 = vunpack.c.l.b16 %v1968
      %v2065 = vunpack.c.l.b16 %v1969
      %v2066 = vunpack.c.l.b16 %v1970
      %v2067 = vunpack.c.l.b16 %v1971
      %v2068 = vunpack.c.l.b16 %v1972
      %v2069 = vunpack.c.l.b16 %v1973
      %v2070 = vunpack.c.l.b16 %v1974
      %v2071 = vunpack.c.l.b16 %v1975
      %v2072 = vunpack.c.l.b16 %v1976
      %v2073 = vunpack.c.l.b16 %v1977
      %v2074 = vunpack.c.l.b16 %v1978
      %v2075 = vunpack.c.l.b16 %v1979
      %v2076 = vunpack.c.l.b16 %v1980
      %v2077 = vunpack.c.l.b16 %v1981
      %v2078 = vunpack.c.l.b16 %v1982
      %v2079 = vunpack.c.l.b16 %v1983
      %v2080 = vunpack.c.l.b16 %v1984
      %v2081 = vunpack.c.l.b16 %v1985
      %v2082 = vunpack.c.l.b16 %v1986
      %v2083 = vunpack.c.l.b16 %v1987
      %v2084 = vunpack.c.l.b16 %v1988
      %v2085 = vunpack.c.l.b16 %v1989
      %v2086 = vunpack.c.l.b16 %v1990
      %v2087 = vunpack.c.l.b16 %v1991
      %v2088 = vunpack.c.l.b16 %v1992
      %v2089 = vunpack.c.l.b16 %v1993
      %v2090 = vunpack.c.l.b16 %v1994
      %v2091 = vunpack.c.l.b16 %v1995
      %v2092 = vunpack.c.l.b16 %v1996
      %v2093 = vunpack.c.l.b16 %v1997
      %v2094 = vunpack.c.l.b16 %v1998
      %v2095 = vunpack.c.l.b16 %v1999
      %v2096 = vunpack.c.l.b16 %v2000
      %v2097 = vunpack.c.l.b16 %v2001
      %v2098 = vunpack.c.l.b16 %v2002
      %v2099 = vunpack.c.l.b16 %v2003
      %v2100 = vunpack.c.l.b16 %v2004
      %v2101 = vpack.c.b16 %v2054, %v2053
      %v2102 = vpack.c.b16 %v2056, %v2055
      %v2103 = vpack.c.b16 %v2058, %v2057
      %v2104 = vpack.c.b16 %v2060, %v2059
      %v2105 = vpack.c.b16 %v2062, %v2061
      %v2106 = vpack.c.b16 %v2064, %v2063
      %v2107 = vpack.c.b16 %v2066, %v2065
      %v2108 = vpack.c.b16 %v2068, %v2067
      %v2109 = vpack.c.b16 %v2070, %v2069
      %v2110 = vpack.c.b16 %v2072, %v2071
      %v2111 = vpack.c.b16 %v2074, %v2073
      %v2112 = vpack.c.b16 %v2076, %v2075
      %v2113 = vpack.c.b16 %v2078, %v2077
      %v2114 = vpack.c.b16 %v2080, %v2079
      %v2115 = vpack.c.b16 %v2082, %v2081
      %v2116 = vpack.c.b16 %v2084, %v2083
      %v2117 = vpack.c.b16 %v2086, %v2085
      %v2118 = vpack.c.b16 %v2088, %v2087
      %v2119 = vpack.c.b16 %v2090, %v2089
      %v2120 = vpack.c.b16 %v2092, %v2091
      %v2121 = vpack.c.b16 %v2094, %v2093
      %v2122 = vpack.c.b16 %v2096, %v2095
      %v2123 = vpack.c.b16 %v2098, %v2097
      %v2124 = vpack.c.b16 %v2100, %v2099
      %2149 = vmatpush.bf16.msra.mxu0 %v2108
      %2150 = vmatpush.bf16.msra.mxu0 %v2107
      %2151 = vmatpush.bf16.msra.mxu0 %v2106
      %2152 = vmatpush.bf16.msra.mxu0 %v2105
      %2153 = vmatpush.bf16.msra.mxu0 %v2104
      %2154 = vmatpush.bf16.msra.mxu0 %v2103
      %2155 = vmatpush.bf16.msra.mxu0 %v2102
      %2156 = vmatpush.bf16.msra.mxu0 %v2101
      %2157 = vmatmul.bf16.gmra.mxu0 %v700
      %v2158 = vpop.f32.mrf.mxu0
      %v2159 = vadd.f32 0.0, %v2158
      %v2160 = vpop.f32.mrf.mxu0
      %v2161 = vadd.f32 0.0, %v2160
      %2162 = vmatmul.bf16.gmra.mxu0 %v701
      %v2163 = vpop.f32.mrf.mxu0
      %v2164 = vadd.f32 0.0, %v2163
      %v2165 = vpop.f32.mrf.mxu0
      %v2166 = vadd.f32 0.0, %v2165
      %2167 = vmatmul.bf16.gmra.mxu0 %v702
      %v2168 = vpop.f32.mrf.mxu0
      %v2169 = vadd.f32 0.0, %v2168
      %v2170 = vpop.f32.mrf.mxu0
      %v2171 = vadd.f32 0.0, %v2170
      %2172 = vmatmul.bf16.gmra.mxu0 %v703
      %v2173 = vpop.f32.mrf.mxu0
      %v2174 = vadd.f32 0.0, %v2173
      %v2175 = vpop.f32.mrf.mxu0
      %v2176 = vadd.f32 0.0, %v2175
      %2177 = vmatmul.bf16.gmra.mxu0 %v704
      %v2178 = vpop.f32.mrf.mxu0
      %v2179 = vadd.f32 0.0, %v2178
      %v2180 = vpop.f32.mrf.mxu0
      %v2181 = vadd.f32 0.0, %v2180
      %2182 = vmatmul.bf16.gmra.mxu0 %v705
      %v2183 = vpop.f32.mrf.mxu0
      %v2184 = vadd.f32 0.0, %v2183
      %v2185 = vpop.f32.mrf.mxu0
      %v2186 = vadd.f32 0.0, %v2185
      %2187 = vmatmul.bf16.gmra.mxu0 %v706
      %v2188 = vpop.f32.mrf.mxu0
      %v2189 = vadd.f32 0.0, %v2188
      %v2190 = vpop.f32.mrf.mxu0
      %v2191 = vadd.f32 0.0, %v2190
      %2192 = vmatmul.bf16.gmra.mxu0 %v707
      %v2193 = vpop.f32.mrf.mxu0
      %v2194 = vadd.f32 0.0, %v2193
      %v2195 = vpop.f32.mrf.mxu0
      %v2196 = vadd.f32 0.0, %v2195
      %2197 = vmatmul.bf16.gmra.mxu0 %v708
      %v2198 = vpop.f32.mrf.mxu0
      %v2199 = vadd.f32 0.0, %v2198
      %v2200 = vpop.f32.mrf.mxu0
      %v2201 = vadd.f32 0.0, %v2200
      %2202 = vmatmul.bf16.gmra.mxu0 %v709
      %v2203 = vpop.f32.mrf.mxu0
      %v2204 = vadd.f32 0.0, %v2203
      %v2205 = vpop.f32.mrf.mxu0
      %v2206 = vadd.f32 0.0, %v2205
      %2207 = vmatmul.bf16.gmra.mxu0 %v710
      %v2208 = vpop.f32.mrf.mxu0
      %v2209 = vadd.f32 0.0, %v2208
      %v2210 = vpop.f32.mrf.mxu0
      %v2211 = vadd.f32 0.0, %v2210
      %2212 = vmatmul.bf16.gmra.mxu0 %v711
      %v2213 = vpop.f32.mrf.mxu0
      %v2214 = vadd.f32 0.0, %v2213
      %v2215 = vpop.f32.mrf.mxu0
      %v2216 = vadd.f32 0.0, %v2215
      %2217 = vmatmul.bf16.gmra.mxu0 %v712
      %v2218 = vpop.f32.mrf.mxu0
      %v2219 = vadd.f32 0.0, %v2218
      %v2220 = vpop.f32.mrf.mxu0
      %v2221 = vadd.f32 0.0, %v2220
      %2222 = vmatmul.bf16.gmra.mxu0 %v713
      %v2223 = vpop.f32.mrf.mxu0
      %v2224 = vadd.f32 0.0, %v2223
      %v2225 = vpop.f32.mrf.mxu0
      %v2226 = vadd.f32 0.0, %v2225
      %2227 = vmatmul.bf16.gmra.mxu0 %v714
      %v2228 = vpop.f32.mrf.mxu0
      %v2229 = vadd.f32 0.0, %v2228
      %v2230 = vpop.f32.mrf.mxu0
      %v2231 = vadd.f32 0.0, %v2230
      %2232 = vmatmul.bf16.gmra.mxu0 0
      %v2233 = vpop.f32.mrf.mxu0
      %v2234 = vadd.f32 0.0, %v2233
      %v2235 = vpop.f32.mrf.mxu0
      %v2236 = vadd.f32 0.0, %v2235
      %2237 = vdwg.mxu0
      %2238 = vmatpush.bf16.msra.mxu0 %v2116
      %2239 = vmatpush.bf16.msra.mxu0 %v2115
      %2240 = vmatpush.bf16.msra.mxu0 %v2114
      %2241 = vmatpush.bf16.msra.mxu0 %v2113
      %2242 = vmatpush.bf16.msra.mxu0 %v2112
      %2243 = vmatpush.bf16.msra.mxu0 %v2111
      %2244 = vmatpush.bf16.msra.mxu0 %v2110
      %2245 = vmatpush.bf16.msra.mxu0 %v2109
      %2246 = vmatmul.bf16.gmra.mxu0 %v755
      %v2247 = vpop.f32.mrf.mxu0
      %v2248 = vadd.f32 %v2159, %v2247
      %v2249 = vpop.f32.mrf.mxu0
      %v2250 = vadd.f32 %v2161, %v2249
      %2251 = vmatmul.bf16.gmra.mxu0 %v767
      %v2252 = vpop.f32.mrf.mxu0
      %v2253 = vadd.f32 %v2164, %v2252
      %v2254 = vpop.f32.mrf.mxu0
      %v2255 = vadd.f32 %v2166, %v2254
      %2256 = vmatmul.bf16.gmra.mxu0 %v779
      %v2257 = vpop.f32.mrf.mxu0
      %v2258 = vadd.f32 %v2169, %v2257
      %v2259 = vpop.f32.mrf.mxu0
      %v2260 = vadd.f32 %v2171, %v2259
      %2261 = vmatmul.bf16.gmra.mxu0 %v791
      %v2262 = vpop.f32.mrf.mxu0
      %v2263 = vadd.f32 %v2174, %v2262
      %v2264 = vpop.f32.mrf.mxu0
      %v2265 = vadd.f32 %v2176, %v2264
      %2266 = vmatmul.bf16.gmra.mxu0 %v803
      %v2267 = vpop.f32.mrf.mxu0
      %v2268 = vadd.f32 %v2179, %v2267
      %v2269 = vpop.f32.mrf.mxu0
      %v2270 = vadd.f32 %v2181, %v2269
      %2271 = vmatmul.bf16.gmra.mxu0 %v815
      %v2272 = vpop.f32.mrf.mxu0
      %v2273 = vadd.f32 %v2184, %v2272
      %v2274 = vpop.f32.mrf.mxu0
      %v2275 = vadd.f32 %v2186, %v2274
      %2276 = vmatmul.bf16.gmra.mxu0 %v827
      %v2277 = vpop.f32.mrf.mxu0
      %v2278 = vadd.f32 %v2189, %v2277
      %v2279 = vpop.f32.mrf.mxu0
      %v2280 = vadd.f32 %v2191, %v2279
      %2281 = vmatmul.bf16.gmra.mxu0 %v839
      %v2282 = vpop.f32.mrf.mxu0
      %v2283 = vadd.f32 %v2194, %v2282
      %v2284 = vpop.f32.mrf.mxu0
      %v2285 = vadd.f32 %v2196, %v2284
      %2286 = vmatmul.bf16.gmra.mxu0 %v851
      %v2287 = vpop.f32.mrf.mxu0
      %v2288 = vadd.f32 %v2199, %v2287
      %v2289 = vpop.f32.mrf.mxu0
      %v2290 = vadd.f32 %v2201, %v2289
      %2291 = vmatmul.bf16.gmra.mxu0 %v863
      %v2292 = vpop.f32.mrf.mxu0
      %v2293 = vadd.f32 %v2204, %v2292
      %v2294 = vpop.f32.mrf.mxu0
      %v2295 = vadd.f32 %v2206, %v2294
      %2296 = vmatmul.bf16.gmra.mxu0 %v875
      %v2297 = vpop.f32.mrf.mxu0
      %v2298 = vadd.f32 %v2209, %v2297
      %v2299 = vpop.f32.mrf.mxu0
      %v2300 = vadd.f32 %v2211, %v2299
      %2301 = vmatmul.bf16.gmra.mxu0 %v887
      %v2302 = vpop.f32.mrf.mxu0
      %v2303 = vadd.f32 %v2214, %v2302
      %v2304 = vpop.f32.mrf.mxu0
      %v2305 = vadd.f32 %v2216, %v2304
      %2306 = vmatmul.bf16.gmra.mxu0 %v899
      %v2307 = vpop.f32.mrf.mxu0
      %v2308 = vadd.f32 %v2219, %v2307
      %v2309 = vpop.f32.mrf.mxu0
      %v2310 = vadd.f32 %v2221, %v2309
      %2311 = vmatmul.bf16.gmra.mxu0 %v911
      %v2312 = vpop.f32.mrf.mxu0
      %v2313 = vadd.f32 %v2224, %v2312
      %v2314 = vpop.f32.mrf.mxu0
      %v2315 = vadd.f32 %v2226, %v2314
      %2316 = vmatmul.bf16.gmra.mxu0 %v923
      %v2317 = vpop.f32.mrf.mxu0
      %v2318 = vadd.f32 %v2229, %v2317
      %v2319 = vpop.f32.mrf.mxu0
      %v2320 = vadd.f32 %v2231, %v2319
      %2321 = vmatmul.bf16.gmra.mxu0 0
      %v2322 = vpop.f32.mrf.mxu0
      %v2323 = vadd.f32 %v2234, %v2322
      %v2324 = vpop.f32.mrf.mxu0
      %v2325 = vadd.f32 %v2236, %v2324
      %2326 = vdwg.mxu0
      %2327 = vmatpush.bf16.msra.mxu0 %v2124
      %2328 = vmatpush.bf16.msra.mxu0 %v2123
      %2329 = vmatpush.bf16.msra.mxu0 %v2122
      %2330 = vmatpush.bf16.msra.mxu0 %v2121
      %2331 = vmatpush.bf16.msra.mxu0 %v2120
      %2332 = vmatpush.bf16.msra.mxu0 %v2119
      %2333 = vmatpush.bf16.msra.mxu0 %v2118
      %2334 = vmatpush.bf16.msra.mxu0 %v2117
      %2335 = vmatmul.bf16.gmra.mxu0 %v978
      %v2336 = vpop.f32.mrf.mxu0
      %v2337 = vadd.f32 %v2248, %v2336
      %v2338 = vpop.f32.mrf.mxu0
      %v2339 = vadd.f32 %v2250, %v2338
      %2340 = vmatmul.bf16.gmra.mxu0 %v981
      %v2341 = vpop.f32.mrf.mxu0
      %v2342 = vadd.f32 %v2253, %v2341
      %v2343 = vpop.f32.mrf.mxu0
      %v2344 = vadd.f32 %v2255, %v2343
      %2345 = vmatmul.bf16.gmra.mxu0 %v984
      %v2346 = vpop.f32.mrf.mxu0
      %v2347 = vadd.f32 %v2258, %v2346
      %v2348 = vpop.f32.mrf.mxu0
      %v2349 = vadd.f32 %v2260, %v2348
      %2350 = vmatmul.bf16.gmra.mxu0 %v987
      %v2351 = vpop.f32.mrf.mxu0
      %v2352 = vadd.f32 %v2263, %v2351
      %v2353 = vpop.f32.mrf.mxu0
      %v2354 = vadd.f32 %v2265, %v2353
      %2355 = vmatmul.bf16.gmra.mxu0 %v990
      %v2356 = vpop.f32.mrf.mxu0
      %v2357 = vadd.f32 %v2268, %v2356
      %v2358 = vpop.f32.mrf.mxu0
      %v2359 = vadd.f32 %v2270, %v2358
      %2360 = vmatmul.bf16.gmra.mxu0 %v993
      %v2361 = vpop.f32.mrf.mxu0
      %v2362 = vadd.f32 %v2273, %v2361
      %v2363 = vpop.f32.mrf.mxu0
      %v2364 = vadd.f32 %v2275, %v2363
      %2365 = vmatmul.bf16.gmra.mxu0 %v996
      %v2366 = vpop.f32.mrf.mxu0
      %v2367 = vadd.f32 %v2278, %v2366
      %v2368 = vpop.f32.mrf.mxu0
      %v2369 = vadd.f32 %v2280, %v2368
      %2370 = vmatmul.bf16.gmra.mxu0 %v999
      %v2371 = vpop.f32.mrf.mxu0
      %v2372 = vadd.f32 %v2283, %v2371
      %v2373 = vpop.f32.mrf.mxu0
      %v2374 = vadd.f32 %v2285, %v2373
      %2375 = vmatmul.bf16.gmra.mxu0 %v1002
      %v2376 = vpop.f32.mrf.mxu0
      %v2377 = vadd.f32 %v2288, %v2376
      %v2378 = vpop.f32.mrf.mxu0
      %v2379 = vadd.f32 %v2290, %v2378
      %2380 = vmatmul.bf16.gmra.mxu0 %v1005
      %v2381 = vpop.f32.mrf.mxu0
      %v2382 = vadd.f32 %v2293, %v2381
      %v2383 = vpop.f32.mrf.mxu0
      %v2384 = vadd.f32 %v2295, %v2383
      %2385 = vmatmul.bf16.gmra.mxu0 %v1008
      %v2386 = vpop.f32.mrf.mxu0
      %v2387 = vadd.f32 %v2298, %v2386
      %v2388 = vpop.f32.mrf.mxu0
      %v2389 = vadd.f32 %v2300, %v2388
      %2390 = vmatmul.bf16.gmra.mxu0 %v1011
      %v2391 = vpop.f32.mrf.mxu0
      %v2392 = vadd.f32 %v2303, %v2391
      %v2393 = vpop.f32.mrf.mxu0
      %v2394 = vadd.f32 %v2305, %v2393
      %2395 = vmatmul.bf16.gmra.mxu0 %v1014
      %v2396 = vpop.f32.mrf.mxu0
      %v2397 = vadd.f32 %v2308, %v2396
      %v2398 = vpop.f32.mrf.mxu0
      %v2399 = vadd.f32 %v2310, %v2398
      %2400 = vmatmul.bf16.gmra.mxu0 %v1017
      %v2401 = vpop.f32.mrf.mxu0
      %v2402 = vadd.f32 %v2313, %v2401
      %v2403 = vpop.f32.mrf.mxu0
      %v2404 = vadd.f32 %v2315, %v2403
      %2405 = vmatmul.bf16.gmra.mxu0 %v1020
      %v2406 = vpop.f32.mrf.mxu0
      %v2407 = vadd.f32 %v2318, %v2406
      %v2408 = vpop.f32.mrf.mxu0
      %v2409 = vadd.f32 %v2320, %v2408
      %2410 = vmatmul.bf16.gmra.mxu0 0
      %v2411 = vpop.f32.mrf.mxu0
      %v2412 = vadd.f32 %v2323, %v2411
      %v2413 = vpop.f32.mrf.mxu0
      %v2414 = vadd.f32 %v2325, %v2413
      %2415 = vdwg.mxu0
      %v2416 = vadd.f32 %v1877, %v2337
      %v2417 = vadd.f32 %v1879, %v2339
      %v2418 = vadd.f32 %v1882, %v2342
      %v2419 = vadd.f32 %v1884, %v2344
      %v2420 = vadd.f32 %v1887, %v2347
      %v2421 = vadd.f32 %v1889, %v2349
      %v2422 = vadd.f32 %v1892, %v2352
      %v2423 = vadd.f32 %v1894, %v2354
      %v2424 = vadd.f32 %v1897, %v2357
      %v2425 = vadd.f32 %v1899, %v2359
      %v2426 = vadd.f32 %v1902, %v2362
      %v2427 = vadd.f32 %v1904, %v2364
      %v2428 = vadd.f32 %v1907, %v2367
      %v2429 = vadd.f32 %v1909, %v2369
      %v2430 = vadd.f32 %v1912, %v2372
      %v2431 = vadd.f32 %v1914, %v2374
      %v2432 = vadd.f32 %v1917, %v2377
      %v2433 = vadd.f32 %v1919, %v2379
      %v2434 = vadd.f32 %v1922, %v2382
      %v2435 = vadd.f32 %v1924, %v2384
      %v2436 = vadd.f32 %v1927, %v2387
      %v2437 = vadd.f32 %v1929, %v2389
      %v2438 = vadd.f32 %v1932, %v2392
      %v2439 = vadd.f32 %v1934, %v2394
      %v2440 = vadd.f32 %v1937, %v2397
      %v2441 = vadd.f32 %v1939, %v2399
      %v2442 = vadd.f32 %v1942, %v2402
      %v2443 = vadd.f32 %v1944, %v2404
      %v2444 = vadd.f32 %v1947, %v2407
      %v2445 = vadd.f32 %v1949, %v2409
      %v2446 = vadd.f32 %v1952, %v2412
      %v2447 = vadd.f32 %v1954, %v2414
      %v2480 = vunpack.c.l.b16 %v440
      %v2481 = vunpack.c.l.b16 %v441
      %v2482 = vunpack.c.l.b16 %v442
      %v2483 = vunpack.c.l.b16 %v443
      %v2484 = vunpack.c.l.b16 %v444
      %v2485 = vunpack.c.l.b16 %v445
      %v2486 = vunpack.c.l.b16 %v446
      %v2487 = vunpack.c.l.b16 %v447
      %v2488 = vunpack.c.l.b16 %v448
      %v2489 = vunpack.c.l.b16 %v449
      %v2490 = vunpack.c.l.b16 %v450
      %v2491 = vunpack.c.l.b16 %v451
      %v2492 = vunpack.c.l.b16 %v452
      %v2493 = vunpack.c.l.b16 %v453
      %v2494 = vunpack.c.l.b16 %v454
      %v2495 = vunpack.c.l.b16 %v455
      %v2496 = vunpack.c.l.b16 %v456
      %v2497 = vunpack.c.l.b16 %v457
      %v2498 = vunpack.c.l.b16 %v458
      %v2499 = vunpack.c.l.b16 %v459
      %v2500 = vunpack.c.l.b16 %v460
      %v2501 = vunpack.c.l.b16 %v461
      %v2502 = vunpack.c.l.b16 %v462
      %v2503 = vunpack.c.l.b16 %v463
      %v2504 = vunpack.c.l.b16 %v464
      %v2505 = vunpack.c.l.b16 %v465
      %v2506 = vunpack.c.l.b16 %v466
      %v2507 = vunpack.c.l.b16 %v467
      %v2508 = vunpack.c.l.b16 %v468
      %v2509 = vunpack.c.l.b16 %v469
      %v2510 = vunpack.c.l.b16 %v470
      %v2511 = vunpack.c.l.b16 %v471
      %v2512 = vpack.c.b16 %v2481, %v2480
      %v2513 = vpack.c.b16 %v2483, %v2482
      %v2514 = vpack.c.b16 %v2485, %v2484
      %v2515 = vpack.c.b16 %v2487, %v2486
      %v2516 = vpack.c.b16 %v2489, %v2488
      %v2517 = vpack.c.b16 %v2491, %v2490
      %v2518 = vpack.c.b16 %v2493, %v2492
      %v2519 = vpack.c.b16 %v2495, %v2494
      %v2520 = vpack.c.b16 %v2497, %v2496
      %v2521 = vpack.c.b16 %v2499, %v2498
      %v2522 = vpack.c.b16 %v2501, %v2500
      %v2523 = vpack.c.b16 %v2503, %v2502
      %v2524 = vpack.c.b16 %v2505, %v2504
      %v2525 = vpack.c.b16 %v2507, %v2506
      %v2526 = vpack.c.b16 %v2509, %v2508
      %v2527 = vpack.c.b16 %v2511, %v2510
      %v2529 = vshrl.u32 %v2512, 16
      %v2531 = vrot.slane %v2529, 7
      %v2532 = vshll.u32 %v2512, 16
      %v2534 = vor.u32 %v2531, %v2532
      %v2536 = vshrl.u32 %v2513, 16
      %v2538 = vrot.slane %v2536, 7
      %v2539 = vshll.u32 %v2513, 16
      %v2541 = vor.u32 %v2538, %v2539
      %v2543 = vshrl.u32 %v2514, 16
      %v2545 = vrot.slane %v2543, 7
      %v2546 = vshll.u32 %v2514, 16
      %v2548 = vor.u32 %v2545, %v2546
      %v2550 = vshrl.u32 %v2515, 16
      %v2552 = vrot.slane %v2550, 7
      %v2553 = vshll.u32 %v2515, 16
      %v2555 = vor.u32 %v2552, %v2553
      %v2557 = vshrl.u32 %v2516, 16
      %v2559 = vrot.slane %v2557, 7
      %v2560 = vshll.u32 %v2516, 16
      %v2562 = vor.u32 %v2559, %v2560
      %v2564 = vshrl.u32 %v2517, 16
      %v2566 = vrot.slane %v2564, 7
      %v2567 = vshll.u32 %v2517, 16
      %v2569 = vor.u32 %v2566, %v2567
      %v2571 = vshrl.u32 %v2518, 16
      %v2573 = vrot.slane %v2571, 7
      %v2574 = vshll.u32 %v2518, 16
      %v2576 = vor.u32 %v2573, %v2574
      %v2578 = vshrl.u32 %v2519, 16
      %v2580 = vrot.slane %v2578, 7
      %v2581 = vshll.u32 %v2519, 16
      %v2583 = vor.u32 %v2580, %v2581
      %v2585 = vshrl.u32 %v2520, 16
      %v2587 = vrot.slane %v2585, 7
      %v2588 = vshll.u32 %v2520, 16
      %v2590 = vor.u32 %v2587, %v2588
      %v2592 = vshrl.u32 %v2521, 16
      %v2594 = vrot.slane %v2592, 7
      %v2595 = vshll.u32 %v2521, 16
      %v2597 = vor.u32 %v2594, %v2595
      %v2599 = vshrl.u32 %v2522, 16
      %v2601 = vrot.slane %v2599, 7
      %v2602 = vshll.u32 %v2522, 16
      %v2604 = vor.u32 %v2601, %v2602
      %v2606 = vshrl.u32 %v2523, 16
      %v2608 = vrot.slane %v2606, 7
      %v2609 = vshll.u32 %v2523, 16
      %v2611 = vor.u32 %v2608, %v2609
      %v2613 = vshrl.u32 %v2524, 16
      %v2615 = vrot.slane %v2613, 7
      %v2616 = vshll.u32 %v2524, 16
      %v2618 = vor.u32 %v2615, %v2616
      %v2620 = vshrl.u32 %v2525, 16
      %v2622 = vrot.slane %v2620, 7
      %v2623 = vshll.u32 %v2525, 16
      %v2625 = vor.u32 %v2622, %v2623
      %v2627 = vshrl.u32 %v2526, 16
      %v2629 = vrot.slane %v2627, 7
      %v2630 = vshll.u32 %v2526, 16
      %v2632 = vor.u32 %v2629, %v2630
      %v2634 = vshrl.u32 %v2527, 16
      %v2636 = vrot.slane %v2634, 7
      %v2637 = vshll.u32 %v2527, 16
      %v2639 = vor.u32 %v2636, %v2637
      %v2672 = vsel %vm698, 0, %v2534
      %v2673 = vsel %vm698, 0, %v2541
      %v2674 = vsel %vm698, 0, %v2548
      %v2675 = vsel %vm698, 0, %v2555
      %v2676 = vsel %vm698, 0, %v2562
      %v2677 = vsel %vm698, 0, %v2569
      %v2678 = vsel %vm698, 0, %v2576
      %v2679 = vsel %vm698, 0, %v2583
      %v2680 = vsel %vm698, 0, %v2590
      %v2681 = vsel %vm698, 0, %v2597
      %v2682 = vsel %vm698, 0, %v2604
      %v2683 = vsel %vm698, 0, %v2611
      %v2684 = vsel %vm698, 0, %v2618
      %v2685 = vsel %vm698, 0, %v2625
      %v2686 = vsel %vm698, 0, %v2632
      %v2687 = vsel %vm698, 0, %v2639
      %v2688 = vsel %vm698, %v2531, 0
      %v2689 = vsel %vm698, %v2538, 0
      %v2690 = vsel %vm698, %v2545, 0
      %v2691 = vsel %vm698, %v2552, 0
      %v2692 = vsel %vm698, %v2559, 0
      %v2693 = vsel %vm698, %v2566, 0
      %v2694 = vsel %vm698, %v2573, 0
      %v2695 = vsel %vm698, %v2580, 0
      %v2696 = vsel %vm698, %v2587, 0
      %v2697 = vsel %vm698, %v2594, 0
      %v2698 = vsel %vm698, %v2601, 0
      %v2699 = vsel %vm698, %v2608, 0
      %v2700 = vsel %vm698, %v2615, 0
      %v2701 = vsel %vm698, %v2622, 0
      %v2702 = vsel %vm698, %v2629, 0
      %v2703 = vsel %vm698, %v2636, 0
      %v2705 = vshrl.u32 %v2672, 16
      %v2707 = vshll.u32 %v2672, 16
      %v2709 = vrot.slane %v2707, 1
      %v2710 = vor.u32 %v2705, %v2709
      %v2712 = vshll.u32 %v2688, 16
      %v2714 = vrot.slane %v2712, 1
      %v2715 = vsel %vm731, %v2710, %v2714
      %v2717 = vshrl.u32 %v2673, 16
      %v2719 = vshll.u32 %v2673, 16
      %v2721 = vrot.slane %v2719, 1
      %v2722 = vor.u32 %v2717, %v2721
      %v2724 = vshll.u32 %v2689, 16
      %v2726 = vrot.slane %v2724, 1
      %v2727 = vsel %vm731, %v2722, %v2726
      %v2729 = vshrl.u32 %v2674, 16
      %v2731 = vshll.u32 %v2674, 16
      %v2733 = vrot.slane %v2731, 1
      %v2734 = vor.u32 %v2729, %v2733
      %v2736 = vshll.u32 %v2690, 16
      %v2738 = vrot.slane %v2736, 1
      %v2739 = vsel %vm731, %v2734, %v2738
      %v2741 = vshrl.u32 %v2675, 16
      %v2743 = vshll.u32 %v2675, 16
      %v2745 = vrot.slane %v2743, 1
      %v2746 = vor.u32 %v2741, %v2745
      %v2748 = vshll.u32 %v2691, 16
      %v2750 = vrot.slane %v2748, 1
      %v2751 = vsel %vm731, %v2746, %v2750
      %v2753 = vshrl.u32 %v2676, 16
      %v2755 = vshll.u32 %v2676, 16
      %v2757 = vrot.slane %v2755, 1
      %v2758 = vor.u32 %v2753, %v2757
      %v2760 = vshll.u32 %v2692, 16
      %v2762 = vrot.slane %v2760, 1
      %v2763 = vsel %vm731, %v2758, %v2762
      %v2765 = vshrl.u32 %v2677, 16
      %v2767 = vshll.u32 %v2677, 16
      %v2769 = vrot.slane %v2767, 1
      %v2770 = vor.u32 %v2765, %v2769
      %v2772 = vshll.u32 %v2693, 16
      %v2774 = vrot.slane %v2772, 1
      %v2775 = vsel %vm731, %v2770, %v2774
      %v2777 = vshrl.u32 %v2678, 16
      %v2779 = vshll.u32 %v2678, 16
      %v2781 = vrot.slane %v2779, 1
      %v2782 = vor.u32 %v2777, %v2781
      %v2784 = vshll.u32 %v2694, 16
      %v2786 = vrot.slane %v2784, 1
      %v2787 = vsel %vm731, %v2782, %v2786
      %v2789 = vshrl.u32 %v2679, 16
      %v2791 = vshll.u32 %v2679, 16
      %v2793 = vrot.slane %v2791, 1
      %v2794 = vor.u32 %v2789, %v2793
      %v2796 = vshll.u32 %v2695, 16
      %v2798 = vrot.slane %v2796, 1
      %v2799 = vsel %vm731, %v2794, %v2798
      %v2801 = vshrl.u32 %v2680, 16
      %v2803 = vshll.u32 %v2680, 16
      %v2805 = vrot.slane %v2803, 1
      %v2806 = vor.u32 %v2801, %v2805
      %v2808 = vshll.u32 %v2696, 16
      %v2810 = vrot.slane %v2808, 1
      %v2811 = vsel %vm731, %v2806, %v2810
      %v2813 = vshrl.u32 %v2681, 16
      %v2815 = vshll.u32 %v2681, 16
      %v2817 = vrot.slane %v2815, 1
      %v2818 = vor.u32 %v2813, %v2817
      %v2820 = vshll.u32 %v2697, 16
      %v2822 = vrot.slane %v2820, 1
      %v2823 = vsel %vm731, %v2818, %v2822
      %v2825 = vshrl.u32 %v2682, 16
      %v2827 = vshll.u32 %v2682, 16
      %v2829 = vrot.slane %v2827, 1
      %v2830 = vor.u32 %v2825, %v2829
      %v2832 = vshll.u32 %v2698, 16
      %v2834 = vrot.slane %v2832, 1
      %v2835 = vsel %vm731, %v2830, %v2834
      %v2837 = vshrl.u32 %v2683, 16
      %v2839 = vshll.u32 %v2683, 16
      %v2841 = vrot.slane %v2839, 1
      %v2842 = vor.u32 %v2837, %v2841
      %v2844 = vshll.u32 %v2699, 16
      %v2846 = vrot.slane %v2844, 1
      %v2847 = vsel %vm731, %v2842, %v2846
      %v2849 = vshrl.u32 %v2684, 16
      %v2851 = vshll.u32 %v2684, 16
      %v2853 = vrot.slane %v2851, 1
      %v2854 = vor.u32 %v2849, %v2853
      %v2856 = vshll.u32 %v2700, 16
      %v2858 = vrot.slane %v2856, 1
      %v2859 = vsel %vm731, %v2854, %v2858
      %v2861 = vshrl.u32 %v2685, 16
      %v2863 = vshll.u32 %v2685, 16
      %v2865 = vrot.slane %v2863, 1
      %v2866 = vor.u32 %v2861, %v2865
      %v2868 = vshll.u32 %v2701, 16
      %v2870 = vrot.slane %v2868, 1
      %v2871 = vsel %vm731, %v2866, %v2870
      %v2873 = vshrl.u32 %v2686, 16
      %v2875 = vshll.u32 %v2686, 16
      %v2877 = vrot.slane %v2875, 1
      %v2878 = vor.u32 %v2873, %v2877
      %v2880 = vshll.u32 %v2702, 16
      %v2882 = vrot.slane %v2880, 1
      %v2883 = vsel %vm731, %v2878, %v2882
      %v2885 = vshrl.u32 %v2687, 16
      %v2887 = vshll.u32 %v2687, 16
      %v2889 = vrot.slane %v2887, 1
      %v2890 = vor.u32 %v2885, %v2889
      %v2892 = vshll.u32 %v2703, 16
      %v2894 = vrot.slane %v2892, 1
      %v2895 = vsel %vm731, %v2890, %v2894
      %2896 = vrot.lane.b32.xlu0 %v2715, 8
      %v2897 = vpop.permute.xlu0 %2896
      %2898 = vrot.lane.b32.xlu0 %v2727, 8
      %v2899 = vpop.permute.xlu0 %2898
      %2900 = vrot.lane.b32.xlu0 %v2739, 8
      %v2901 = vpop.permute.xlu0 %2900
      %2902 = vrot.lane.b32.xlu0 %v2751, 8
      %v2903 = vpop.permute.xlu0 %2902
      %2904 = vrot.lane.b32.xlu0 %v2763, 8
      %v2905 = vpop.permute.xlu0 %2904
      %2906 = vrot.lane.b32.xlu0 %v2775, 8
      %v2907 = vpop.permute.xlu0 %2906
      %2908 = vrot.lane.b32.xlu0 %v2787, 8
      %v2909 = vpop.permute.xlu0 %2908
      %2910 = vrot.lane.b32.xlu0 %v2799, 8
      %v2911 = vpop.permute.xlu0 %2910
      %2912 = vrot.lane.b32.xlu0 %v2811, 8
      %v2913 = vpop.permute.xlu0 %2912
      %2914 = vrot.lane.b32.xlu0 %v2823, 8
      %v2915 = vpop.permute.xlu0 %2914
      %2916 = vrot.lane.b32.xlu0 %v2835, 8
      %v2917 = vpop.permute.xlu0 %2916
      %2918 = vrot.lane.b32.xlu0 %v2847, 8
      %v2919 = vpop.permute.xlu0 %2918
      %2920 = vrot.lane.b32.xlu0 %v2859, 8
      %v2921 = vpop.permute.xlu0 %2920
      %2922 = vrot.lane.b32.xlu0 %v2871, 8
      %v2923 = vpop.permute.xlu0 %2922
      %2924 = vrot.lane.b32.xlu0 %v2883, 8
      %v2925 = vpop.permute.xlu0 %2924
      %2926 = vrot.lane.b32.xlu0 %v2895, 8
      %v2927 = vpop.permute.xlu0 %2926
      %v2960 = vrot.slane %v2672, 1
      %v2961 = vrot.slane %v2688, 1
      %v2962 = vsel %vm972, %v2960, %v2961
      %v2963 = vrot.slane %v2673, 1
      %v2964 = vrot.slane %v2689, 1
      %v2965 = vsel %vm972, %v2963, %v2964
      %v2966 = vrot.slane %v2674, 1
      %v2967 = vrot.slane %v2690, 1
      %v2968 = vsel %vm972, %v2966, %v2967
      %v2969 = vrot.slane %v2675, 1
      %v2970 = vrot.slane %v2691, 1
      %v2971 = vsel %vm972, %v2969, %v2970
      %v2972 = vrot.slane %v2676, 1
      %v2973 = vrot.slane %v2692, 1
      %v2974 = vsel %vm972, %v2972, %v2973
      %v2975 = vrot.slane %v2677, 1
      %v2976 = vrot.slane %v2693, 1
      %v2977 = vsel %vm972, %v2975, %v2976
      %v2978 = vrot.slane %v2678, 1
      %v2979 = vrot.slane %v2694, 1
      %v2980 = vsel %vm972, %v2978, %v2979
      %v2981 = vrot.slane %v2679, 1
      %v2982 = vrot.slane %v2695, 1
      %v2983 = vsel %vm972, %v2981, %v2982
      %v2984 = vrot.slane %v2680, 1
      %v2985 = vrot.slane %v2696, 1
      %v2986 = vsel %vm972, %v2984, %v2985
      %v2987 = vrot.slane %v2681, 1
      %v2988 = vrot.slane %v2697, 1
      %v2989 = vsel %vm972, %v2987, %v2988
      %v2990 = vrot.slane %v2682, 1
      %v2991 = vrot.slane %v2698, 1
      %v2992 = vsel %vm972, %v2990, %v2991
      %v2993 = vrot.slane %v2683, 1
      %v2994 = vrot.slane %v2699, 1
      %v2995 = vsel %vm972, %v2993, %v2994
      %v2996 = vrot.slane %v2684, 1
      %v2997 = vrot.slane %v2700, 1
      %v2998 = vsel %vm972, %v2996, %v2997
      %v2999 = vrot.slane %v2685, 1
      %v3000 = vrot.slane %v2701, 1
      %v3001 = vsel %vm972, %v2999, %v3000
      %v3002 = vrot.slane %v2686, 1
      %v3003 = vrot.slane %v2702, 1
      %v3004 = vsel %vm972, %v3002, %v3003
      %v3005 = vrot.slane %v2687, 1
      %v3006 = vrot.slane %v2703, 1
      %v3007 = vsel %vm972, %v3005, %v3006
      %3008 = vrot.lane.b32.xlu0 %v2962, 16
      %v3009 = vpop.permute.xlu0 %3008
      %3010 = vrot.lane.b32.xlu0 %v2965, 16
      %v3011 = vpop.permute.xlu0 %3010
      %3012 = vrot.lane.b32.xlu0 %v2968, 16
      %v3013 = vpop.permute.xlu0 %3012
      %3014 = vrot.lane.b32.xlu0 %v2971, 16
      %v3015 = vpop.permute.xlu0 %3014
      %3016 = vrot.lane.b32.xlu0 %v2974, 16
      %v3017 = vpop.permute.xlu0 %3016
      %3018 = vrot.lane.b32.xlu0 %v2977, 16
      %v3019 = vpop.permute.xlu0 %3018
      %3020 = vrot.lane.b32.xlu0 %v2980, 16
      %v3021 = vpop.permute.xlu0 %3020
      %3022 = vrot.lane.b32.xlu0 %v2983, 16
      %v3023 = vpop.permute.xlu0 %3022
      %3024 = vrot.lane.b32.xlu0 %v2986, 16
      %v3025 = vpop.permute.xlu0 %3024
      %3026 = vrot.lane.b32.xlu0 %v2989, 16
      %v3027 = vpop.permute.xlu0 %3026
      %3028 = vrot.lane.b32.xlu0 %v2992, 16
      %v3029 = vpop.permute.xlu0 %3028
      %3030 = vrot.lane.b32.xlu0 %v2995, 16
      %v3031 = vpop.permute.xlu0 %3030
      %3032 = vrot.lane.b32.xlu0 %v2998, 16
      %v3033 = vpop.permute.xlu0 %3032
      %3034 = vrot.lane.b32.xlu0 %v3001, 16
      %v3035 = vpop.permute.xlu0 %3034
      %3036 = vrot.lane.b32.xlu0 %v3004, 16
      %v3037 = vpop.permute.xlu0 %3036
      %3038 = vrot.lane.b32.xlu0 %v3007, 16
      %v3039 = vpop.permute.xlu0 %3038
      %vm3040 = vcmask 64512
      %v3042 = vsel %vm3040, %v2672, %v2897
      %v3044 = vsel %vm3040, %v2673, %v2899
      %v3046 = vsel %vm3040, %v2674, %v2901
      %v3048 = vsel %vm3040, %v2675, %v2903
      %v3050 = vsel %vm3040, %v2676, %v2905
      %v3052 = vsel %vm3040, %v2677, %v2907
      %v3054 = vsel %vm3040, %v2678, %v2909
      %v3056 = vsel %vm3040, %v2679, %v2911
      %v3058 = vsel %vm3040, %v2680, %v2913
      %v3060 = vsel %vm3040, %v2681, %v2915
      %v3062 = vsel %vm3040, %v2682, %v2917
      %v3064 = vsel %vm3040, %v2683, %v2919
      %v3066 = vsel %vm3040, %v2684, %v2921
      %v3068 = vsel %vm3040, %v2685, %v2923
      %v3070 = vsel %vm3040, %v2686, %v2925
      %v3072 = vsel %vm3040, %v2687, %v2927
      %vm3073 = vcmask 130048
      %v3075 = vsel %vm3073, %v3042, %v3009
      %v3077 = vsel %vm3073, %v3044, %v3011
      %v3079 = vsel %vm3073, %v3046, %v3013
      %v3081 = vsel %vm3073, %v3048, %v3015
      %v3083 = vsel %vm3073, %v3050, %v3017
      %v3085 = vsel %vm3073, %v3052, %v3019
      %v3087 = vsel %vm3073, %v3054, %v3021
      %v3089 = vsel %vm3073, %v3056, %v3023
      %v3091 = vsel %vm3073, %v3058, %v3025
      %v3093 = vsel %vm3073, %v3060, %v3027
      %v3095 = vsel %vm3073, %v3062, %v3029
      %v3097 = vsel %vm3073, %v3064, %v3031
      %v3099 = vsel %vm3073, %v3066, %v3033
      %v3101 = vsel %vm3073, %v3068, %v3035
      %v3103 = vsel %vm3073, %v3070, %v3037
      %v3105 = vsel %vm3073, %v3072, %v3039
      %v3106 = vld [vmem:[%s3] sm:$0xf]
      %v3107 = vld [vmem:[%s3 + $0x4] sm:$0xf]
      %v3108 = vld [vmem:[%s3 + $0x8] sm:$0xf]
      %s3109 = scalar_lea.vmem %s3, 12
      %v3110 = vld [vmem:[%s3109] sm:$0xf]
      %v3111 = vld [vmem:[%s3109 + $0x4] sm:$0xf]
      %v3112 = vld [vmem:[%s3109 + $0x8] sm:$0xf]
      %v3116 = vunpack.c.l.b16 %v3110
      %v3117 = vunpack.c.l.b16 %v3111
      %v3118 = vunpack.c.l.b16 %v3112
      %v3119 = vpack.c.b16 %v3117, %v3116
      %v3120 = vpack.c.b16 %v3118, %v3118
      %vm3122 = vcmask 195584
      %v3123 = vsel %vm3122, %v3075, 0
      %v3125 = vsel %vm3122, %v3077, 0
      %v3127 = vsel %vm3122, %v3079, 0
      %v3129 = vsel %vm3122, %v3081, 0
      %v3131 = vsel %vm3122, %v3083, 0
      %v3133 = vsel %vm3122, %v3085, 0
      %v3135 = vsel %vm3122, %v3087, 0
      %v3137 = vsel %vm3122, %v3089, 0
      %v3139 = vsel %vm3122, %v3091, 0
      %v3141 = vsel %vm3122, %v3093, 0
      %v3143 = vsel %vm3122, %v3095, 0
      %v3145 = vsel %vm3122, %v3097, 0
      %v3147 = vsel %vm3122, %v3099, 0
      %v3149 = vsel %vm3122, %v3101, 0
      %v3151 = vsel %vm3122, %v3103, 0
      %v3153 = vsel %vm3122, %v3105, 0
      %vm3155 = vcmask 1043456
      %v3157 = vsel %vm3155, %v3120, 0
      %3159 = vmatpush.bf16.msra.mxu0 0
      %3160 = vmatpush.bf16.msra.mxu0 0
      %3161 = vmatpush.bf16.msra.mxu0 0
      %3162 = vmatpush.bf16.msra.mxu0 0
      %3163 = vmatpush.bf16.msra.mxu0 0
      %3164 = vmatpush.bf16.msra.mxu0 0
      %3165 = vmatpush.bf16.msra.mxu0 %v3157
      %3166 = vmatpush.bf16.msra.mxu0 %v3119
      %3167 = vmatmul.bf16.gmra.mxu0 %v3123
      %v3168 = vpop.f32.mrf.mxu0
      %v3169 = vadd.f32 0.0, %v3168
      %v3170 = vpop.f32.mrf.mxu0
      %v3171 = vadd.f32 0.0, %v3170
      %3172 = vmatmul.bf16.gmra.mxu0 %v3125
      %v3173 = vpop.f32.mrf.mxu0
      %v3174 = vadd.f32 0.0, %v3173
      %v3175 = vpop.f32.mrf.mxu0
      %v3176 = vadd.f32 0.0, %v3175
      %3177 = vmatmul.bf16.gmra.mxu0 %v3127
      %v3178 = vpop.f32.mrf.mxu0
      %v3179 = vadd.f32 0.0, %v3178
      %v3180 = vpop.f32.mrf.mxu0
      %v3181 = vadd.f32 0.0, %v3180
      %3182 = vmatmul.bf16.gmra.mxu0 %v3129
      %v3183 = vpop.f32.mrf.mxu0
      %v3184 = vadd.f32 0.0, %v3183
      %v3185 = vpop.f32.mrf.mxu0
      %v3186 = vadd.f32 0.0, %v3185
      %3187 = vmatmul.bf16.gmra.mxu0 %v3131
      %v3188 = vpop.f32.mrf.mxu0
      %v3189 = vadd.f32 0.0, %v3188
      %v3190 = vpop.f32.mrf.mxu0
      %v3191 = vadd.f32 0.0, %v3190
      %3192 = vmatmul.bf16.gmra.mxu0 %v3133
      %v3193 = vpop.f32.mrf.mxu0
      %v3194 = vadd.f32 0.0, %v3193
      %v3195 = vpop.f32.mrf.mxu0
      %v3196 = vadd.f32 0.0, %v3195
      %3197 = vmatmul.bf16.gmra.mxu0 %v3135
      %v3198 = vpop.f32.mrf.mxu0
      %v3199 = vadd.f32 0.0, %v3198
      %v3200 = vpop.f32.mrf.mxu0
      %v3201 = vadd.f32 0.0, %v3200
      %3202 = vmatmul.bf16.gmra.mxu0 %v3137
      %v3203 = vpop.f32.mrf.mxu0
      %v3204 = vadd.f32 0.0, %v3203
      %v3205 = vpop.f32.mrf.mxu0
      %v3206 = vadd.f32 0.0, %v3205
      %3207 = vmatmul.bf16.gmra.mxu0 %v3139
      %v3208 = vpop.f32.mrf.mxu0
      %v3209 = vadd.f32 0.0, %v3208
      %v3210 = vpop.f32.mrf.mxu0
      %v3211 = vadd.f32 0.0, %v3210
      %3212 = vmatmul.bf16.gmra.mxu0 %v3141
      %v3213 = vpop.f32.mrf.mxu0
      %v3214 = vadd.f32 0.0, %v3213
      %v3215 = vpop.f32.mrf.mxu0
      %v3216 = vadd.f32 0.0, %v3215
      %3217 = vmatmul.bf16.gmra.mxu0 %v3143
      %v3218 = vpop.f32.mrf.mxu0
      %v3219 = vadd.f32 0.0, %v3218
      %v3220 = vpop.f32.mrf.mxu0
      %v3221 = vadd.f32 0.0, %v3220
      %3222 = vmatmul.bf16.gmra.mxu0 %v3145
      %v3223 = vpop.f32.mrf.mxu0
      %v3224 = vadd.f32 0.0, %v3223
      %v3225 = vpop.f32.mrf.mxu0
      %v3226 = vadd.f32 0.0, %v3225
      %3227 = vmatmul.bf16.gmra.mxu0 %v3147
      %v3228 = vpop.f32.mrf.mxu0
      %v3229 = vadd.f32 0.0, %v3228
      %v3230 = vpop.f32.mrf.mxu0
      %v3231 = vadd.f32 0.0, %v3230
      %3232 = vmatmul.bf16.gmra.mxu0 %v3149
      %v3233 = vpop.f32.mrf.mxu0
      %v3234 = vadd.f32 0.0, %v3233
      %v3235 = vpop.f32.mrf.mxu0
      %v3236 = vadd.f32 0.0, %v3235
      %3237 = vmatmul.bf16.gmra.mxu0 %v3151
      %v3238 = vpop.f32.mrf.mxu0
      %v3239 = vadd.f32 0.0, %v3238
      %v3240 = vpop.f32.mrf.mxu0
      %v3241 = vadd.f32 0.0, %v3240
      %3242 = vmatmul.bf16.gmra.mxu0 %v3153
      %v3243 = vpop.f32.mrf.mxu0
      %v3244 = vadd.f32 0.0, %v3243
      %v3245 = vpop.f32.mrf.mxu0
      %v3246 = vadd.f32 0.0, %v3245
      %3247 = vdwg.mxu0
      %v3251 = vunpack.c.l.b16 %v3106
      %v3252 = vunpack.c.l.b16 %v3107
      %v3253 = vunpack.c.l.b16 %v3108
      %v3254 = vpack.c.b16 %v3252, %v3251
      %v3255 = vpack.c.b16 %v3253, %v3253
      %v3258 = vsel %vm3122, 0, 0
      %v3261 = vsel %vm3155, %v3255, 0
      %3263 = vmatpush.bf16.msra.mxu0 0
      %3264 = vmatpush.bf16.msra.mxu0 0
      %3265 = vmatpush.bf16.msra.mxu0 0
      %3266 = vmatpush.bf16.msra.mxu0 0
      %3267 = vmatpush.bf16.msra.mxu0 0
      %3268 = vmatpush.bf16.msra.mxu0 0
      %3269 = vmatpush.bf16.msra.mxu0 %v3261
      %3270 = vmatpush.bf16.msra.mxu0 %v3254
      %3271 = vmatmul.bf16.gmra.mxu0 %v3258
      %v3272 = vpop.f32.mrf.mxu0
      %v3273 = vadd.f32 %v3169, %v3272
      %v3274 = vpop.f32.mrf.mxu0
      %v3275 = vadd.f32 %v3171, %v3274
      %3276 = vmatmul.bf16.gmra.mxu0 %v3123
      %v3277 = vpop.f32.mrf.mxu0
      %v3278 = vadd.f32 %v3174, %v3277
      %v3279 = vpop.f32.mrf.mxu0
      %v3280 = vadd.f32 %v3176, %v3279
      %3281 = vmatmul.bf16.gmra.mxu0 %v3125
      %v3282 = vpop.f32.mrf.mxu0
      %v3283 = vadd.f32 %v3179, %v3282
      %v3284 = vpop.f32.mrf.mxu0
      %v3285 = vadd.f32 %v3181, %v3284
      %3286 = vmatmul.bf16.gmra.mxu0 %v3127
      %v3287 = vpop.f32.mrf.mxu0
      %v3288 = vadd.f32 %v3184, %v3287
      %v3289 = vpop.f32.mrf.mxu0
      %v3290 = vadd.f32 %v3186, %v3289
      %3291 = vmatmul.bf16.gmra.mxu0 %v3129
      %v3292 = vpop.f32.mrf.mxu0
      %v3293 = vadd.f32 %v3189, %v3292
      %v3294 = vpop.f32.mrf.mxu0
      %v3295 = vadd.f32 %v3191, %v3294
      %3296 = vmatmul.bf16.gmra.mxu0 %v3131
      %v3297 = vpop.f32.mrf.mxu0
      %v3298 = vadd.f32 %v3194, %v3297
      %v3299 = vpop.f32.mrf.mxu0
      %v3300 = vadd.f32 %v3196, %v3299
      %3301 = vmatmul.bf16.gmra.mxu0 %v3133
      %v3302 = vpop.f32.mrf.mxu0
      %v3303 = vadd.f32 %v3199, %v3302
      %v3304 = vpop.f32.mrf.mxu0
      %v3305 = vadd.f32 %v3201, %v3304
      %3306 = vmatmul.bf16.gmra.mxu0 %v3135
      %v3307 = vpop.f32.mrf.mxu0
      %v3308 = vadd.f32 %v3204, %v3307
      %v3309 = vpop.f32.mrf.mxu0
      %v3310 = vadd.f32 %v3206, %v3309
      %3311 = vmatmul.bf16.gmra.mxu0 %v3137
      %v3312 = vpop.f32.mrf.mxu0
      %v3313 = vadd.f32 %v3209, %v3312
      %v3314 = vpop.f32.mrf.mxu0
      %v3315 = vadd.f32 %v3211, %v3314
      %3316 = vmatmul.bf16.gmra.mxu0 %v3139
      %v3317 = vpop.f32.mrf.mxu0
      %v3318 = vadd.f32 %v3214, %v3317
      %v3319 = vpop.f32.mrf.mxu0
      %v3320 = vadd.f32 %v3216, %v3319
      %3321 = vmatmul.bf16.gmra.mxu0 %v3141
      %v3322 = vpop.f32.mrf.mxu0
      %v3323 = vadd.f32 %v3219, %v3322
      %v3324 = vpop.f32.mrf.mxu0
      %v3325 = vadd.f32 %v3221, %v3324
      %3326 = vmatmul.bf16.gmra.mxu0 %v3143
      %v3327 = vpop.f32.mrf.mxu0
      %v3328 = vadd.f32 %v3224, %v3327
      %v3329 = vpop.f32.mrf.mxu0
      %v3330 = vadd.f32 %v3226, %v3329
      %3331 = vmatmul.bf16.gmra.mxu0 %v3145
      %v3332 = vpop.f32.mrf.mxu0
      %v3333 = vadd.f32 %v3229, %v3332
      %v3334 = vpop.f32.mrf.mxu0
      %v3335 = vadd.f32 %v3231, %v3334
      %3336 = vmatmul.bf16.gmra.mxu0 %v3147
      %v3337 = vpop.f32.mrf.mxu0
      %v3338 = vadd.f32 %v3234, %v3337
      %v3339 = vpop.f32.mrf.mxu0
      %v3340 = vadd.f32 %v3236, %v3339
      %3341 = vmatmul.bf16.gmra.mxu0 %v3149
      %v3342 = vpop.f32.mrf.mxu0
      %v3343 = vadd.f32 %v3239, %v3342
      %v3344 = vpop.f32.mrf.mxu0
      %v3345 = vadd.f32 %v3241, %v3344
      %3346 = vmatmul.bf16.gmra.mxu0 %v3151
      %v3347 = vpop.f32.mrf.mxu0
      %v3348 = vadd.f32 %v3244, %v3347
      %v3349 = vpop.f32.mrf.mxu0
      %v3350 = vadd.f32 %v3246, %v3349
      %3351 = vdwg.mxu0
      %s3352 = scalar_lea.vmem %s3, 24
      %v3353 = vld [vmem:[%s3352] sm:$0xf]
      %v3354 = vld [vmem:[%s3352 + $0x4] sm:$0xf]
      %v3355 = vld [vmem:[%s3352 + $0x8] sm:$0xf]
      %v3359 = vunpack.c.l.b16 %v3353
      %v3360 = vunpack.c.l.b16 %v3354
      %v3361 = vunpack.c.l.b16 %v3355
      %v3362 = vpack.c.b16 %v3360, %v3359
      %v3363 = vpack.c.b16 %v3361, %v3361
      %v3366 = vsel %vm3155, %v3363, 0
      %3368 = vmatpush.bf16.msra.mxu0 0
      %3369 = vmatpush.bf16.msra.mxu0 0
      %3370 = vmatpush.bf16.msra.mxu0 0
      %3371 = vmatpush.bf16.msra.mxu0 0
      %3372 = vmatpush.bf16.msra.mxu0 0
      %3373 = vmatpush.bf16.msra.mxu0 0
      %3374 = vmatpush.bf16.msra.mxu0 %v3366
      %3375 = vmatpush.bf16.msra.mxu0 %v3362
      %3376 = vmatmul.bf16.gmra.mxu0 %v3125
      %v3377 = vpop.f32.mrf.mxu0
      %v3378 = vadd.f32 0.0, %v3377
      %v3379 = vpop.f32.mrf.mxu0
      %v3380 = vadd.f32 0.0, %v3379
      %3381 = vmatmul.bf16.gmra.mxu0 %v3127
      %v3382 = vpop.f32.mrf.mxu0
      %v3383 = vadd.f32 0.0, %v3382
      %v3384 = vpop.f32.mrf.mxu0
      %v3385 = vadd.f32 0.0, %v3384
      %3386 = vmatmul.bf16.gmra.mxu0 %v3129
      %v3387 = vpop.f32.mrf.mxu0
      %v3388 = vadd.f32 0.0, %v3387
      %v3389 = vpop.f32.mrf.mxu0
      %v3390 = vadd.f32 0.0, %v3389
      %3391 = vmatmul.bf16.gmra.mxu0 %v3131
      %v3392 = vpop.f32.mrf.mxu0
      %v3393 = vadd.f32 0.0, %v3392
      %v3394 = vpop.f32.mrf.mxu0
      %v3395 = vadd.f32 0.0, %v3394
      %3396 = vmatmul.bf16.gmra.mxu0 %v3133
      %v3397 = vpop.f32.mrf.mxu0
      %v3398 = vadd.f32 0.0, %v3397
      %v3399 = vpop.f32.mrf.mxu0
      %v3400 = vadd.f32 0.0, %v3399
      %3401 = vmatmul.bf16.gmra.mxu0 %v3135
      %v3402 = vpop.f32.mrf.mxu0
      %v3403 = vadd.f32 0.0, %v3402
      %v3404 = vpop.f32.mrf.mxu0
      %v3405 = vadd.f32 0.0, %v3404
      %3406 = vmatmul.bf16.gmra.mxu0 %v3137
      %v3407 = vpop.f32.mrf.mxu0
      %v3408 = vadd.f32 0.0, %v3407
      %v3409 = vpop.f32.mrf.mxu0
      %v3410 = vadd.f32 0.0, %v3409
      %3411 = vmatmul.bf16.gmra.mxu0 %v3139
      %v3412 = vpop.f32.mrf.mxu0
      %v3413 = vadd.f32 0.0, %v3412
      %v3414 = vpop.f32.mrf.mxu0
      %v3415 = vadd.f32 0.0, %v3414
      %3416 = vmatmul.bf16.gmra.mxu0 %v3141
      %v3417 = vpop.f32.mrf.mxu0
      %v3418 = vadd.f32 0.0, %v3417
      %v3419 = vpop.f32.mrf.mxu0
      %v3420 = vadd.f32 0.0, %v3419
      %3421 = vmatmul.bf16.gmra.mxu0 %v3143
      %v3422 = vpop.f32.mrf.mxu0
      %v3423 = vadd.f32 0.0, %v3422
      %v3424 = vpop.f32.mrf.mxu0
      %v3425 = vadd.f32 0.0, %v3424
      %3426 = vmatmul.bf16.gmra.mxu0 %v3145
      %v3427 = vpop.f32.mrf.mxu0
      %v3428 = vadd.f32 0.0, %v3427
      %v3429 = vpop.f32.mrf.mxu0
      %v3430 = vadd.f32 0.0, %v3429
      %3431 = vmatmul.bf16.gmra.mxu0 %v3147
      %v3432 = vpop.f32.mrf.mxu0
      %v3433 = vadd.f32 0.0, %v3432
      %v3434 = vpop.f32.mrf.mxu0
      %v3435 = vadd.f32 0.0, %v3434
      %3436 = vmatmul.bf16.gmra.mxu0 %v3149
      %v3437 = vpop.f32.mrf.mxu0
      %v3438 = vadd.f32 0.0, %v3437
      %v3439 = vpop.f32.mrf.mxu0
      %v3440 = vadd.f32 0.0, %v3439
      %3441 = vmatmul.bf16.gmra.mxu0 %v3151
      %v3442 = vpop.f32.mrf.mxu0
      %v3443 = vadd.f32 0.0, %v3442
      %v3444 = vpop.f32.mrf.mxu0
      %v3445 = vadd.f32 0.0, %v3444
      %3446 = vmatmul.bf16.gmra.mxu0 %v3153
      %v3447 = vpop.f32.mrf.mxu0
      %v3448 = vadd.f32 0.0, %v3447
      %v3449 = vpop.f32.mrf.mxu0
      %v3450 = vadd.f32 0.0, %v3449
      %3451 = vmatmul.bf16.gmra.mxu0 %v3258
      %v3452 = vpop.f32.mrf.mxu0
      %v3453 = vadd.f32 0.0, %v3452
      %v3454 = vpop.f32.mrf.mxu0
      %v3455 = vadd.f32 0.0, %v3454
      %3456 = vdwg.mxu0
      %v3457 = vadd.f32 %v3273, %v3378
      %v3458 = vadd.f32 %v3275, %v3380
      %v3459 = vadd.f32 %v3278, %v3383
      %v3460 = vadd.f32 %v3280, %v3385
      %v3461 = vadd.f32 %v3283, %v3388
      %v3462 = vadd.f32 %v3285, %v3390
      %v3463 = vadd.f32 %v3288, %v3393
      %v3464 = vadd.f32 %v3290, %v3395
      %v3465 = vadd.f32 %v3293, %v3398
      %v3466 = vadd.f32 %v3295, %v3400
      %v3467 = vadd.f32 %v3298, %v3403
      %v3468 = vadd.f32 %v3300, %v3405
      %v3469 = vadd.f32 %v3303, %v3408
      %v3470 = vadd.f32 %v3305, %v3410
      %v3471 = vadd.f32 %v3308, %v3413
      %v3472 = vadd.f32 %v3310, %v3415
      %v3473 = vadd.f32 %v3313, %v3418
      %v3474 = vadd.f32 %v3315, %v3420
      %v3475 = vadd.f32 %v3318, %v3423
      %v3476 = vadd.f32 %v3320, %v3425
      %v3477 = vadd.f32 %v3323, %v3428
      %v3478 = vadd.f32 %v3325, %v3430
      %v3479 = vadd.f32 %v3328, %v3433
      %v3480 = vadd.f32 %v3330, %v3435
      %v3481 = vadd.f32 %v3333, %v3438
      %v3482 = vadd.f32 %v3335, %v3440
      %v3483 = vadd.f32 %v3338, %v3443
      %v3484 = vadd.f32 %v3340, %v3445
      %v3485 = vadd.f32 %v3343, %v3448
      %v3486 = vadd.f32 %v3345, %v3450
      %v3487 = vadd.f32 %v3348, %v3453
      %v3488 = vadd.f32 %v3350, %v3455
      %v3489 = vadd.f32 %v2416, %v3457
      %v3490 = vadd.f32 %v2417, %v3458
      %v3491 = vadd.f32 %v2418, %v3459
      %v3492 = vadd.f32 %v2419, %v3460
      %v3493 = vadd.f32 %v2420, %v3461
      %v3494 = vadd.f32 %v2421, %v3462
      %v3495 = vadd.f32 %v2422, %v3463
      %v3496 = vadd.f32 %v2423, %v3464
      %v3497 = vadd.f32 %v2424, %v3465
      %v3498 = vadd.f32 %v2425, %v3466
      %v3499 = vadd.f32 %v2426, %v3467
      %v3500 = vadd.f32 %v2427, %v3468
      %v3501 = vadd.f32 %v2428, %v3469
      %v3502 = vadd.f32 %v2429, %v3470
      %v3503 = vadd.f32 %v2430, %v3471
      %v3504 = vadd.f32 %v2431, %v3472
      %v3505 = vadd.f32 %v2432, %v3473
      %v3506 = vadd.f32 %v2433, %v3474
      %v3507 = vadd.f32 %v2434, %v3475
      %v3508 = vadd.f32 %v2435, %v3476
      %v3509 = vadd.f32 %v2436, %v3477
      %v3510 = vadd.f32 %v2437, %v3478
      %v3511 = vadd.f32 %v2438, %v3479
      %v3512 = vadd.f32 %v2439, %v3480
      %v3513 = vadd.f32 %v2440, %v3481
      %v3514 = vadd.f32 %v2441, %v3482
      %v3515 = vadd.f32 %v2442, %v3483
      %v3516 = vadd.f32 %v2443, %v3484
      %v3517 = vadd.f32 %v2444, %v3485
      %v3518 = vadd.f32 %v2445, %v3486
      %v3519 = vadd.f32 %v2446, %v3487
      %v3520 = vadd.f32 %v2447, %v3488
      %v3521 = vld [vmem:[%s4] sm:$0x1]
      %v3523 = vperm.slane %v3521, 0
      %v3525 = vadd.f32 %v3489, %v3523
      %v3526 = vadd.f32 %v3490, %v3523
      %v3527 = vadd.f32 %v3491, %v3523
      %v3528 = vadd.f32 %v3492, %v3523
      %v3529 = vadd.f32 %v3493, %v3523
      %v3530 = vadd.f32 %v3494, %v3523
      %v3531 = vadd.f32 %v3495, %v3523
      %v3532 = vadd.f32 %v3496, %v3523
      %v3533 = vadd.f32 %v3497, %v3523
      %v3534 = vadd.f32 %v3498, %v3523
      %v3535 = vadd.f32 %v3499, %v3523
      %v3536 = vadd.f32 %v3500, %v3523
      %v3537 = vadd.f32 %v3501, %v3523
      %v3538 = vadd.f32 %v3502, %v3523
      %v3539 = vadd.f32 %v3503, %v3523
      %v3540 = vadd.f32 %v3504, %v3523
      %v3541 = vadd.f32 %v3505, %v3523
      %v3542 = vadd.f32 %v3506, %v3523
      %v3543 = vadd.f32 %v3507, %v3523
      %v3544 = vadd.f32 %v3508, %v3523
      %v3545 = vadd.f32 %v3509, %v3523
      %v3546 = vadd.f32 %v3510, %v3523
      %v3547 = vadd.f32 %v3511, %v3523
      %v3548 = vadd.f32 %v3512, %v3523
      %v3549 = vadd.f32 %v3513, %v3523
      %v3550 = vadd.f32 %v3514, %v3523
      %v3551 = vadd.f32 %v3515, %v3523
      %v3552 = vadd.f32 %v3516, %v3523
      %v3553 = vadd.f32 %v3517, %v3523
      %v3554 = vadd.f32 %v3518, %v3523
      %v3555 = vadd.f32 %v3519, %v3523
      %v3556 = vadd.f32 %v3520, %v3523
      %vm3557 = vcmp.ge.f32.partialorder %v3525, 0.0
      %vm3558 = vcmp.ge.f32.partialorder %v3526, 0.0
      %vm3559 = vcmp.ge.f32.partialorder %v3527, 0.0
      %vm3560 = vcmp.ge.f32.partialorder %v3528, 0.0
      %vm3561 = vcmp.ge.f32.partialorder %v3529, 0.0
      %vm3562 = vcmp.ge.f32.partialorder %v3530, 0.0
      %vm3563 = vcmp.ge.f32.partialorder %v3531, 0.0
      %vm3564 = vcmp.ge.f32.partialorder %v3532, 0.0
      %vm3565 = vcmp.ge.f32.partialorder %v3533, 0.0
      %vm3566 = vcmp.ge.f32.partialorder %v3534, 0.0
      %vm3567 = vcmp.ge.f32.partialorder %v3535, 0.0
      %vm3568 = vcmp.ge.f32.partialorder %v3536, 0.0
      %vm3569 = vcmp.ge.f32.partialorder %v3537, 0.0
      %vm3570 = vcmp.ge.f32.partialorder %v3538, 0.0
      %vm3571 = vcmp.ge.f32.partialorder %v3539, 0.0
      %vm3572 = vcmp.ge.f32.partialorder %v3540, 0.0
      %vm3573 = vcmp.ge.f32.partialorder %v3541, 0.0
      %vm3574 = vcmp.ge.f32.partialorder %v3542, 0.0
      %vm3575 = vcmp.ge.f32.partialorder %v3543, 0.0
      %vm3576 = vcmp.ge.f32.partialorder %v3544, 0.0
      %vm3577 = vcmp.ge.f32.partialorder %v3545, 0.0
      %vm3578 = vcmp.ge.f32.partialorder %v3546, 0.0
      %vm3579 = vcmp.ge.f32.partialorder %v3547, 0.0
      %vm3580 = vcmp.ge.f32.partialorder %v3548, 0.0
      %vm3581 = vcmp.ge.f32.partialorder %v3549, 0.0
      %vm3582 = vcmp.ge.f32.partialorder %v3550, 0.0
      %vm3583 = vcmp.ge.f32.partialorder %v3551, 0.0
      %vm3584 = vcmp.ge.f32.partialorder %v3552, 0.0
      %vm3585 = vcmp.ge.f32.partialorder %v3553, 0.0
      %vm3586 = vcmp.ge.f32.partialorder %v3554, 0.0
      %vm3587 = vcmp.ge.f32.partialorder %v3555, 0.0
      %vm3588 = vcmp.ge.f32.partialorder %v3556, 0.0
      %v3589 = vmul.f32 %v3525, 0.1
      %v3590 = vmul.f32 %v3526, 0.1
      %v3591 = vmul.f32 %v3527, 0.1
      %v3592 = vmul.f32 %v3528, 0.1
      %v3593 = vmul.f32 %v3529, 0.1
      %v3594 = vmul.f32 %v3530, 0.1
      %v3595 = vmul.f32 %v3531, 0.1
      %v3596 = vmul.f32 %v3532, 0.1
      %v3597 = vmul.f32 %v3533, 0.1
      %v3598 = vmul.f32 %v3534, 0.1
      %v3599 = vmul.f32 %v3535, 0.1
      %v3600 = vmul.f32 %v3536, 0.1
      %v3601 = vmul.f32 %v3537, 0.1
      %v3602 = vmul.f32 %v3538, 0.1
      %v3603 = vmul.f32 %v3539, 0.1
      %v3604 = vmul.f32 %v3540, 0.1
      %v3605 = vmul.f32 %v3541, 0.1
      %v3606 = vmul.f32 %v3542, 0.1
      %v3607 = vmul.f32 %v3543, 0.1
      %v3608 = vmul.f32 %v3544, 0.1
      %v3609 = vmul.f32 %v3545, 0.1
      %v3610 = vmul.f32 %v3546, 0.1
      %v3611 = vmul.f32 %v3547, 0.1
      %v3612 = vmul.f32 %v3548, 0.1
      %v3613 = vmul.f32 %v3549, 0.1
      %v3614 = vmul.f32 %v3550, 0.1
      %v3615 = vmul.f32 %v3551, 0.1
      %v3616 = vmul.f32 %v3552, 0.1
      %v3617 = vmul.f32 %v3553, 0.1
      %v3618 = vmul.f32 %v3554, 0.1
      %v3619 = vmul.f32 %v3555, 0.1
      %v3620 = vmul.f32 %v3556, 0.1
      %v3621 = vsel %vm3557, %v3525, %v3589
      %v3622 = vsel %vm3558, %v3526, %v3590
      %v3623 = vsel %vm3559, %v3527, %v3591
      %v3624 = vsel %vm3560, %v3528, %v3592
      %v3625 = vsel %vm3561, %v3529, %v3593
      %v3626 = vsel %vm3562, %v3530, %v3594
      %v3627 = vsel %vm3563, %v3531, %v3595
      %v3628 = vsel %vm3564, %v3532, %v3596
      %v3629 = vsel %vm3565, %v3533, %v3597
      %v3630 = vsel %vm3566, %v3534, %v3598
      %v3631 = vsel %vm3567, %v3535, %v3599
      %v3632 = vsel %vm3568, %v3536, %v3600
      %v3633 = vsel %vm3569, %v3537, %v3601
      %v3634 = vsel %vm3570, %v3538, %v3602
      %v3635 = vsel %vm3571, %v3539, %v3603
      %v3636 = vsel %vm3572, %v3540, %v3604
      %v3637 = vsel %vm3573, %v3541, %v3605
      %v3638 = vsel %vm3574, %v3542, %v3606
      %v3639 = vsel %vm3575, %v3543, %v3607
      %v3640 = vsel %vm3576, %v3544, %v3608
      %v3641 = vsel %vm3577, %v3545, %v3609
      %v3642 = vsel %vm3578, %v3546, %v3610
      %v3643 = vsel %vm3579, %v3547, %v3611
      %v3644 = vsel %vm3580, %v3548, %v3612
      %v3645 = vsel %vm3581, %v3549, %v3613
      %v3646 = vsel %vm3582, %v3550, %v3614
      %v3647 = vsel %vm3583, %v3551, %v3615
      %v3648 = vsel %vm3584, %v3552, %v3616
      %v3649 = vsel %vm3585, %v3553, %v3617
      %v3650 = vsel %vm3586, %v3554, %v3618
      %v3651 = vsel %vm3587, %v3555, %v3619
      %v3652 = vsel %vm3588, %v3556, %v3620
      %v3653 = vpack.c.bf16 %v3621, %v3621
      %v3654 = vpack.c.bf16 %v3622, %v3622
      %v3655 = vpack.c.bf16 %v3623, %v3623
      %v3656 = vpack.c.bf16 %v3624, %v3624
      %v3657 = vpack.c.bf16 %v3625, %v3625
      %v3658 = vpack.c.bf16 %v3626, %v3626
      %v3659 = vpack.c.bf16 %v3627, %v3627
      %v3660 = vpack.c.bf16 %v3628, %v3628
      %v3661 = vpack.c.bf16 %v3629, %v3629
      %v3662 = vpack.c.bf16 %v3630, %v3630
      %v3663 = vpack.c.bf16 %v3631, %v3631
      %v3664 = vpack.c.bf16 %v3632, %v3632
      %v3665 = vpack.c.bf16 %v3633, %v3633
      %v3666 = vpack.c.bf16 %v3634, %v3634
      %v3667 = vpack.c.bf16 %v3635, %v3635
      %v3668 = vpack.c.bf16 %v3636, %v3636
      %v3669 = vpack.c.bf16 %v3637, %v3637
      %v3670 = vpack.c.bf16 %v3638, %v3638
      %v3671 = vpack.c.bf16 %v3639, %v3639
      %v3672 = vpack.c.bf16 %v3640, %v3640
      %v3673 = vpack.c.bf16 %v3641, %v3641
      %v3674 = vpack.c.bf16 %v3642, %v3642
      %v3675 = vpack.c.bf16 %v3643, %v3643
      %v3676 = vpack.c.bf16 %v3644, %v3644
      %v3677 = vpack.c.bf16 %v3645, %v3645
      %v3678 = vpack.c.bf16 %v3646, %v3646
      %v3679 = vpack.c.bf16 %v3647, %v3647
      %v3680 = vpack.c.bf16 %v3648, %v3648
      %v3681 = vpack.c.bf16 %v3649, %v3649
      %v3682 = vpack.c.bf16 %v3650, %v3650
      %v3683 = vpack.c.bf16 %v3651, %v3651
      %v3684 = vpack.c.bf16 %v3652, %v3652
      %v3717 = vunpack.c.l.b16 %v3653
      %v3718 = vunpack.c.l.b16 %v3654
      %v3719 = vunpack.c.l.b16 %v3655
      %v3720 = vunpack.c.l.b16 %v3656
      %v3721 = vunpack.c.l.b16 %v3657
      %v3722 = vunpack.c.l.b16 %v3658
      %v3723 = vunpack.c.l.b16 %v3659
      %v3724 = vunpack.c.l.b16 %v3660
      %v3725 = vunpack.c.l.b16 %v3661
      %v3726 = vunpack.c.l.b16 %v3662
      %v3727 = vunpack.c.l.b16 %v3663
      %v3728 = vunpack.c.l.b16 %v3664
      %v3729 = vunpack.c.l.b16 %v3665
      %v3730 = vunpack.c.l.b16 %v3666
      %v3731 = vunpack.c.l.b16 %v3667
      %v3732 = vunpack.c.l.b16 %v3668
      %v3733 = vunpack.c.l.b16 %v3669
      %v3734 = vunpack.c.l.b16 %v3670
      %v3735 = vunpack.c.l.b16 %v3671
      %v3736 = vunpack.c.l.b16 %v3672
      %v3737 = vunpack.c.l.b16 %v3673
      %v3738 = vunpack.c.l.b16 %v3674
      %v3739 = vunpack.c.l.b16 %v3675
      %v3740 = vunpack.c.l.b16 %v3676
      %v3741 = vunpack.c.l.b16 %v3677
      %v3742 = vunpack.c.l.b16 %v3678
      %v3743 = vunpack.c.l.b16 %v3679
      %v3744 = vunpack.c.l.b16 %v3680
      %v3745 = vunpack.c.l.b16 %v3681
      %v3746 = vunpack.c.l.b16 %v3682
      %v3747 = vunpack.c.l.b16 %v3683
      %v3748 = vunpack.c.l.b16 %v3684
      %v3749 = vpack.c.b16 %v3718, %v3717
      %v3750 = vpack.c.b16 %v3720, %v3719
      %v3751 = vpack.c.b16 %v3722, %v3721
      %v3752 = vpack.c.b16 %v3724, %v3723
      %v3753 = vpack.c.b16 %v3726, %v3725
      %v3754 = vpack.c.b16 %v3728, %v3727
      %v3755 = vpack.c.b16 %v3730, %v3729
      %v3756 = vpack.c.b16 %v3732, %v3731
      %v3757 = vpack.c.b16 %v3734, %v3733
      %v3758 = vpack.c.b16 %v3736, %v3735
      %v3759 = vpack.c.b16 %v3738, %v3737
      %v3760 = vpack.c.b16 %v3740, %v3739
      %v3761 = vpack.c.b16 %v3742, %v3741
      %v3762 = vpack.c.b16 %v3744, %v3743
      %v3763 = vpack.c.b16 %v3746, %v3745
      %v3764 = vpack.c.b16 %v3748, %v3747
      %v3766 = vshrl.u32 %v3749, 16
      %v3768 = vrot.slane %v3766, 7
      %v3769 = vshll.u32 %v3749, 16
      %v3771 = vor.u32 %v3768, %v3769
      %v3773 = vshrl.u32 %v3750, 16
      %v3775 = vrot.slane %v3773, 7
      %v3776 = vshll.u32 %v3750, 16
      %v3778 = vor.u32 %v3775, %v3776
      %v3780 = vshrl.u32 %v3751, 16
      %v3782 = vrot.slane %v3780, 7
      %v3783 = vshll.u32 %v3751, 16
      %v3785 = vor.u32 %v3782, %v3783
      %v3787 = vshrl.u32 %v3752, 16
      %v3789 = vrot.slane %v3787, 7
      %v3790 = vshll.u32 %v3752, 16
      %v3792 = vor.u32 %v3789, %v3790
      %v3794 = vshrl.u32 %v3753, 16
      %v3796 = vrot.slane %v3794, 7
      %v3797 = vshll.u32 %v3753, 16
      %v3799 = vor.u32 %v3796, %v3797
      %v3801 = vshrl.u32 %v3754, 16
      %v3803 = vrot.slane %v3801, 7
      %v3804 = vshll.u32 %v3754, 16
      %v3806 = vor.u32 %v3803, %v3804
      %v3808 = vshrl.u32 %v3755, 16
      %v3810 = vrot.slane %v3808, 7
      %v3811 = vshll.u32 %v3755, 16
      %v3813 = vor.u32 %v3810, %v3811
      %v3815 = vshrl.u32 %v3756, 16
      %v3817 = vrot.slane %v3815, 7
      %v3818 = vshll.u32 %v3756, 16
      %v3820 = vor.u32 %v3817, %v3818
      %v3822 = vshrl.u32 %v3757, 16
      %v3824 = vrot.slane %v3822, 7
      %v3825 = vshll.u32 %v3757, 16
      %v3827 = vor.u32 %v3824, %v3825
      %v3829 = vshrl.u32 %v3758, 16
      %v3831 = vrot.slane %v3829, 7
      %v3832 = vshll.u32 %v3758, 16
      %v3834 = vor.u32 %v3831, %v3832
      %v3836 = vshrl.u32 %v3759, 16
      %v3838 = vrot.slane %v3836, 7
      %v3839 = vshll.u32 %v3759, 16
      %v3841 = vor.u32 %v3838, %v3839
      %v3843 = vshrl.u32 %v3760, 16
      %v3845 = vrot.slane %v3843, 7
      %v3846 = vshll.u32 %v3760, 16
      %v3848 = vor.u32 %v3845, %v3846
      %v3850 = vshrl.u32 %v3761, 16
      %v3852 = vrot.slane %v3850, 7
      %v3853 = vshll.u32 %v3761, 16
      %v3855 = vor.u32 %v3852, %v3853
      %v3857 = vshrl.u32 %v3762, 16
      %v3859 = vrot.slane %v3857, 7
      %v3860 = vshll.u32 %v3762, 16
      %v3862 = vor.u32 %v3859, %v3860
      %v3864 = vshrl.u32 %v3763, 16
      %v3866 = vrot.slane %v3864, 7
      %v3867 = vshll.u32 %v3763, 16
      %v3869 = vor.u32 %v3866, %v3867
      %v3871 = vshrl.u32 %v3764, 16
      %v3873 = vrot.slane %v3871, 7
      %v3874 = vshll.u32 %v3764, 16
      %v3876 = vor.u32 %v3873, %v3874
      %v3909 = vsel %vm698, 0, %v3771
      %v3910 = vsel %vm698, 0, %v3778
      %v3911 = vsel %vm698, 0, %v3785
      %v3912 = vsel %vm698, 0, %v3792
      %v3913 = vsel %vm698, 0, %v3799
      %v3914 = vsel %vm698, 0, %v3806
      %v3915 = vsel %vm698, 0, %v3813
      %v3916 = vsel %vm698, 0, %v3820
      %v3917 = vsel %vm698, 0, %v3827
      %v3918 = vsel %vm698, 0, %v3834
      %v3919 = vsel %vm698, 0, %v3841
      %v3920 = vsel %vm698, 0, %v3848
      %v3921 = vsel %vm698, 0, %v3855
      %v3922 = vsel %vm698, 0, %v3862
      %v3923 = vsel %vm698, 0, %v3869
      %v3924 = vsel %vm698, 0, %v3876
      %v3925 = vsel %vm698, %v3768, 0
      %v3926 = vsel %vm698, %v3775, 0
      %v3927 = vsel %vm698, %v3782, 0
      %v3928 = vsel %vm698, %v3789, 0
      %v3929 = vsel %vm698, %v3796, 0
      %v3930 = vsel %vm698, %v3803, 0
      %v3931 = vsel %vm698, %v3810, 0
      %v3932 = vsel %vm698, %v3817, 0
      %v3933 = vsel %vm698, %v3824, 0
      %v3934 = vsel %vm698, %v3831, 0
      %v3935 = vsel %vm698, %v3838, 0
      %v3936 = vsel %vm698, %v3845, 0
      %v3937 = vsel %vm698, %v3852, 0
      %v3938 = vsel %vm698, %v3859, 0
      %v3939 = vsel %vm698, %v3866, 0
      %v3940 = vsel %vm698, %v3873, 0
      %v3942 = vshrl.u32 %v3909, 16
      %v3944 = vshll.u32 %v3909, 16
      %v3946 = vrot.slane %v3944, 1
      %v3947 = vor.u32 %v3942, %v3946
      %v3949 = vshll.u32 %v3925, 16
      %v3951 = vrot.slane %v3949, 1
      %v3952 = vsel %vm731, %v3947, %v3951
      %v3954 = vshrl.u32 %v3910, 16
      %v3956 = vshll.u32 %v3910, 16
      %v3958 = vrot.slane %v3956, 1
      %v3959 = vor.u32 %v3954, %v3958
      %v3961 = vshll.u32 %v3926, 16
      %v3963 = vrot.slane %v3961, 1
      %v3964 = vsel %vm731, %v3959, %v3963
      %v3966 = vshrl.u32 %v3911, 16
      %v3968 = vshll.u32 %v3911, 16
      %v3970 = vrot.slane %v3968, 1
      %v3971 = vor.u32 %v3966, %v3970
      %v3973 = vshll.u32 %v3927, 16
      %v3975 = vrot.slane %v3973, 1
      %v3976 = vsel %vm731, %v3971, %v3975
      %v3978 = vshrl.u32 %v3912, 16
      %v3980 = vshll.u32 %v3912, 16
      %v3982 = vrot.slane %v3980, 1
      %v3983 = vor.u32 %v3978, %v3982
      %v3985 = vshll.u32 %v3928, 16
      %v3987 = vrot.slane %v3985, 1
      %v3988 = vsel %vm731, %v3983, %v3987
      %v3990 = vshrl.u32 %v3913, 16
      %v3992 = vshll.u32 %v3913, 16
      %v3994 = vrot.slane %v3992, 1
      %v3995 = vor.u32 %v3990, %v3994
      %v3997 = vshll.u32 %v3929, 16
      %v3999 = vrot.slane %v3997, 1
      %v4000 = vsel %vm731, %v3995, %v3999
      %v4002 = vshrl.u32 %v3914, 16
      %v4004 = vshll.u32 %v3914, 16
      %v4006 = vrot.slane %v4004, 1
      %v4007 = vor.u32 %v4002, %v4006
      %v4009 = vshll.u32 %v3930, 16
      %v4011 = vrot.slane %v4009, 1
      %v4012 = vsel %vm731, %v4007, %v4011
      %v4014 = vshrl.u32 %v3915, 16
      %v4016 = vshll.u32 %v3915, 16
      %v4018 = vrot.slane %v4016, 1
      %v4019 = vor.u32 %v4014, %v4018
      %v4021 = vshll.u32 %v3931, 16
      %v4023 = vrot.slane %v4021, 1
      %v4024 = vsel %vm731, %v4019, %v4023
      %v4026 = vshrl.u32 %v3916, 16
      %v4028 = vshll.u32 %v3916, 16
      %v4030 = vrot.slane %v4028, 1
      %v4031 = vor.u32 %v4026, %v4030
      %v4033 = vshll.u32 %v3932, 16
      %v4035 = vrot.slane %v4033, 1
      %v4036 = vsel %vm731, %v4031, %v4035
      %v4038 = vshrl.u32 %v3917, 16
      %v4040 = vshll.u32 %v3917, 16
      %v4042 = vrot.slane %v4040, 1
      %v4043 = vor.u32 %v4038, %v4042
      %v4045 = vshll.u32 %v3933, 16
      %v4047 = vrot.slane %v4045, 1
      %v4048 = vsel %vm731, %v4043, %v4047
      %v4050 = vshrl.u32 %v3918, 16
      %v4052 = vshll.u32 %v3918, 16
      %v4054 = vrot.slane %v4052, 1
      %v4055 = vor.u32 %v4050, %v4054
      %v4057 = vshll.u32 %v3934, 16
      %v4059 = vrot.slane %v4057, 1
      %v4060 = vsel %vm731, %v4055, %v4059
      %v4062 = vshrl.u32 %v3919, 16
      %v4064 = vshll.u32 %v3919, 16
      %v4066 = vrot.slane %v4064, 1
      %v4067 = vor.u32 %v4062, %v4066
      %v4069 = vshll.u32 %v3935, 16
      %v4071 = vrot.slane %v4069, 1
      %v4072 = vsel %vm731, %v4067, %v4071
      %v4074 = vshrl.u32 %v3920, 16
      %v4076 = vshll.u32 %v3920, 16
      %v4078 = vrot.slane %v4076, 1
      %v4079 = vor.u32 %v4074, %v4078
      %v4081 = vshll.u32 %v3936, 16
      %v4083 = vrot.slane %v4081, 1
      %v4084 = vsel %vm731, %v4079, %v4083
      %v4086 = vshrl.u32 %v3921, 16
      %v4088 = vshll.u32 %v3921, 16
      %v4090 = vrot.slane %v4088, 1
      %v4091 = vor.u32 %v4086, %v4090
      %v4093 = vshll.u32 %v3937, 16
      %v4095 = vrot.slane %v4093, 1
      %v4096 = vsel %vm731, %v4091, %v4095
      %v4098 = vshrl.u32 %v3922, 16
      %v4100 = vshll.u32 %v3922, 16
      %v4102 = vrot.slane %v4100, 1
      %v4103 = vor.u32 %v4098, %v4102
      %v4105 = vshll.u32 %v3938, 16
      %v4107 = vrot.slane %v4105, 1
      %v4108 = vsel %vm731, %v4103, %v4107
      %v4110 = vshrl.u32 %v3923, 16
      %v4112 = vshll.u32 %v3923, 16
      %v4114 = vrot.slane %v4112, 1
      %v4115 = vor.u32 %v4110, %v4114
      %v4117 = vshll.u32 %v3939, 16
      %v4119 = vrot.slane %v4117, 1
      %v4120 = vsel %vm731, %v4115, %v4119
      %v4122 = vshrl.u32 %v3924, 16
      %v4124 = vshll.u32 %v3924, 16
      %v4126 = vrot.slane %v4124, 1
      %v4127 = vor.u32 %v4122, %v4126
      %v4129 = vshll.u32 %v3940, 16
      %v4131 = vrot.slane %v4129, 1
      %v4132 = vsel %vm731, %v4127, %v4131
      %v4181 = vrot.slane %v3909, 1
      %v4182 = vrot.slane %v3925, 1
      %v4183 = vsel %vm972, %v4181, %v4182
      %v4184 = vrot.slane %v3910, 1
      %v4185 = vrot.slane %v3926, 1
      %v4186 = vsel %vm972, %v4184, %v4185
      %v4187 = vrot.slane %v3911, 1
      %v4188 = vrot.slane %v3927, 1
      %v4189 = vsel %vm972, %v4187, %v4188
      %v4190 = vrot.slane %v3912, 1
      %v4191 = vrot.slane %v3928, 1
      %v4192 = vsel %vm972, %v4190, %v4191
      %v4193 = vrot.slane %v3913, 1
      %v4194 = vrot.slane %v3929, 1
      %v4195 = vsel %vm972, %v4193, %v4194
      %v4196 = vrot.slane %v3914, 1
      %v4197 = vrot.slane %v3930, 1
      %v4198 = vsel %vm972, %v4196, %v4197
      %v4199 = vrot.slane %v3915, 1
      %v4200 = vrot.slane %v3931, 1
      %v4201 = vsel %vm972, %v4199, %v4200
      %v4202 = vrot.slane %v3916, 1
      %v4203 = vrot.slane %v3932, 1
      %v4204 = vsel %vm972, %v4202, %v4203
      %v4205 = vrot.slane %v3917, 1
      %v4206 = vrot.slane %v3933, 1
      %v4207 = vsel %vm972, %v4205, %v4206
      %v4208 = vrot.slane %v3918, 1
      %v4209 = vrot.slane %v3934, 1
      %v4210 = vsel %vm972, %v4208, %v4209
      %v4211 = vrot.slane %v3919, 1
      %v4212 = vrot.slane %v3935, 1
      %v4213 = vsel %vm972, %v4211, %v4212
      %v4214 = vrot.slane %v3920, 1
      %v4215 = vrot.slane %v3936, 1
      %v4216 = vsel %vm972, %v4214, %v4215
      %v4217 = vrot.slane %v3921, 1
      %v4218 = vrot.slane %v3937, 1
      %v4219 = vsel %vm972, %v4217, %v4218
      %v4220 = vrot.slane %v3922, 1
      %v4221 = vrot.slane %v3938, 1
      %v4222 = vsel %vm972, %v4220, %v4221
      %v4223 = vrot.slane %v3923, 1
      %v4224 = vrot.slane %v3939, 1
      %v4225 = vsel %vm972, %v4223, %v4224
      %v4226 = vrot.slane %v3924, 1
      %v4227 = vrot.slane %v3940, 1
      %v4228 = vsel %vm972, %v4226, %v4227
      %v4245 = vld [vmem:[%s5] sm:$0xf]
      %v4246 = vld [vmem:[%s5 + $0x4] sm:$0xf]
      %v4247 = vld [vmem:[%s5 + $0x8] sm:$0xf]
      %v4248 = vld [vmem:[%s5 + $0xc] sm:$0xf]
      %v4249 = vld [vmem:[%s5 + $0x10] sm:$0xf]
      %v4250 = vld [vmem:[%s5 + $0x14] sm:$0xf]
      %v4251 = vld [vmem:[%s5 + $0x18] sm:$0xf]
      %v4252 = vld [vmem:[%s5 + $0x1c] sm:$0xf]
      %v4253 = vld [vmem:[%s5 + $0x20] sm:$0xf]
      %v4254 = vld [vmem:[%s5 + $0x24] sm:$0xf]
      %v4255 = vld [vmem:[%s5 + $0x28] sm:$0xf]
      %v4256 = vld [vmem:[%s5 + $0x2c] sm:$0xf]
      %v4257 = vld [vmem:[%s5 + $0x30] sm:$0xf]
      %v4258 = vld [vmem:[%s5 + $0x34] sm:$0xf]
      %v4259 = vld [vmem:[%s5 + $0x38] sm:$0xf]
      %v4260 = vld [vmem:[%s5 + $0x3c] sm:$0xf]
      %v4261 = vld [vmem:[%s5 + $0x40] sm:$0xf]
      %v4262 = vld [vmem:[%s5 + $0x44] sm:$0xf]
      %v4263 = vld [vmem:[%s5 + $0x48] sm:$0xf]
      %v4264 = vld [vmem:[%s5 + $0x4c] sm:$0xf]
      %v4265 = vld [vmem:[%s5 + $0x50] sm:$0xf]
      %v4266 = vld [vmem:[%s5 + $0x54] sm:$0xf]
      %v4267 = vld [vmem:[%s5 + $0x58] sm:$0xf]
      %v4268 = vld [vmem:[%s5 + $0x5c] sm:$0xf]
      %v4269 = vld [vmem:[%s5 + $0x60] sm:$0xf]
      %v4270 = vld [vmem:[%s5 + $0x64] sm:$0xf]
      %v4271 = vld [vmem:[%s5 + $0x68] sm:$0xf]
      %v4272 = vld [vmem:[%s5 + $0x6c] sm:$0xf]
      %v4273 = vld [vmem:[%s5 + $0x70] sm:$0xf]
      %v4274 = vld [vmem:[%s5 + $0x74] sm:$0xf]
      %v4275 = vld [vmem:[%s5 + $0x78] sm:$0xf]
      %v4276 = vld [vmem:[%s5 + $0x7c] sm:$0xf]
      %v4277 = vld [vmem:[%s5 + $0x80] sm:$0xf]
      %v4278 = vld [vmem:[%s5 + $0x84] sm:$0xf]
      %v4279 = vld [vmem:[%s5 + $0x88] sm:$0xf]
      %v4280 = vld [vmem:[%s5 + $0x8c] sm:$0xf]
      %v4281 = vld [vmem:[%s5 + $0x90] sm:$0xf]
      %v4282 = vld [vmem:[%s5 + $0x94] sm:$0xf]
      %v4283 = vld [vmem:[%s5 + $0x98] sm:$0xf]
      %v4284 = vld [vmem:[%s5 + $0x9c] sm:$0xf]
      %v4285 = vld [vmem:[%s5 + $0xa0] sm:$0xf]
      %v4286 = vld [vmem:[%s5 + $0xa4] sm:$0xf]
      %v4287 = vld [vmem:[%s5 + $0xa8] sm:$0xf]
      %v4288 = vld [vmem:[%s5 + $0xac] sm:$0xf]
      %v4289 = vld [vmem:[%s5 + $0xb0] sm:$0xf]
      %v4290 = vld [vmem:[%s5 + $0xb4] sm:$0xf]
      %v4291 = vld [vmem:[%s5 + $0xb8] sm:$0xf]
      %v4292 = vld [vmem:[%s5 + $0xbc] sm:$0xf]
      %s4293 = scalar_lea.vmem %s5, 192
      %v4294 = vld [vmem:[%s4293] sm:$0xf]
      %v4295 = vld [vmem:[%s4293 + $0x4] sm:$0xf]
      %v4296 = vld [vmem:[%s4293 + $0x8] sm:$0xf]
      %v4297 = vld [vmem:[%s4293 + $0xc] sm:$0xf]
      %v4298 = vld [vmem:[%s4293 + $0x10] sm:$0xf]
      %v4299 = vld [vmem:[%s4293 + $0x14] sm:$0xf]
      %v4300 = vld [vmem:[%s4293 + $0x18] sm:$0xf]
      %v4301 = vld [vmem:[%s4293 + $0x1c] sm:$0xf]
      %v4302 = vld [vmem:[%s4293 + $0x20] sm:$0xf]
      %v4303 = vld [vmem:[%s4293 + $0x24] sm:$0xf]
      %v4304 = vld [vmem:[%s4293 + $0x28] sm:$0xf]
      %v4305 = vld [vmem:[%s4293 + $0x2c] sm:$0xf]
      %v4306 = vld [vmem:[%s4293 + $0x30] sm:$0xf]
      %v4307 = vld [vmem:[%s4293 + $0x34] sm:$0xf]
      %v4308 = vld [vmem:[%s4293 + $0x38] sm:$0xf]
      %v4309 = vld [vmem:[%s4293 + $0x3c] sm:$0xf]
      %v4310 = vld [vmem:[%s4293 + $0x40] sm:$0xf]
      %v4311 = vld [vmem:[%s4293 + $0x44] sm:$0xf]
      %v4312 = vld [vmem:[%s4293 + $0x48] sm:$0xf]
      %v4313 = vld [vmem:[%s4293 + $0x4c] sm:$0xf]
      %v4314 = vld [vmem:[%s4293 + $0x50] sm:$0xf]
      %v4315 = vld [vmem:[%s4293 + $0x54] sm:$0xf]
      %v4316 = vld [vmem:[%s4293 + $0x58] sm:$0xf]
      %v4317 = vld [vmem:[%s4293 + $0x5c] sm:$0xf]
      %v4318 = vld [vmem:[%s4293 + $0x60] sm:$0xf]
      %v4319 = vld [vmem:[%s4293 + $0x64] sm:$0xf]
      %v4320 = vld [vmem:[%s4293 + $0x68] sm:$0xf]
      %v4321 = vld [vmem:[%s4293 + $0x6c] sm:$0xf]
      %v4322 = vld [vmem:[%s4293 + $0x70] sm:$0xf]
      %v4323 = vld [vmem:[%s4293 + $0x74] sm:$0xf]
      %v4324 = vld [vmem:[%s4293 + $0x78] sm:$0xf]
      %v4325 = vld [vmem:[%s4293 + $0x7c] sm:$0xf]
      %v4326 = vld [vmem:[%s4293 + $0x80] sm:$0xf]
      %v4327 = vld [vmem:[%s4293 + $0x84] sm:$0xf]
      %v4328 = vld [vmem:[%s4293 + $0x88] sm:$0xf]
      %v4329 = vld [vmem:[%s4293 + $0x8c] sm:$0xf]
      %v4330 = vld [vmem:[%s4293 + $0x90] sm:$0xf]
      %v4331 = vld [vmem:[%s4293 + $0x94] sm:$0xf]
      %v4332 = vld [vmem:[%s4293 + $0x98] sm:$0xf]
      %v4333 = vld [vmem:[%s4293 + $0x9c] sm:$0xf]
      %v4334 = vld [vmem:[%s4293 + $0xa0] sm:$0xf]
      %v4335 = vld [vmem:[%s4293 + $0xa4] sm:$0xf]
      %v4336 = vld [vmem:[%s4293 + $0xa8] sm:$0xf]
      %v4337 = vld [vmem:[%s4293 + $0xac] sm:$0xf]
      %v4338 = vld [vmem:[%s4293 + $0xb0] sm:$0xf]
      %v4339 = vld [vmem:[%s4293 + $0xb4] sm:$0xf]
      %v4340 = vld [vmem:[%s4293 + $0xb8] sm:$0xf]
      %v4341 = vld [vmem:[%s4293 + $0xbc] sm:$0xf]
      %v4390 = vunpack.c.l.b16 %v4294
      %v4391 = vunpack.c.l.b16 %v4295
      %v4392 = vunpack.c.l.b16 %v4296
      %v4393 = vunpack.c.l.b16 %v4297
      %v4394 = vunpack.c.l.b16 %v4298
      %v4395 = vunpack.c.l.b16 %v4299
      %v4396 = vunpack.c.l.b16 %v4300
      %v4397 = vunpack.c.l.b16 %v4301
      %v4398 = vunpack.c.l.b16 %v4302
      %v4399 = vunpack.c.l.b16 %v4303
      %v4400 = vunpack.c.l.b16 %v4304
      %v4401 = vunpack.c.l.b16 %v4305
      %v4402 = vunpack.c.l.b16 %v4306
      %v4403 = vunpack.c.l.b16 %v4307
      %v4404 = vunpack.c.l.b16 %v4308
      %v4405 = vunpack.c.l.b16 %v4309
      %v4406 = vunpack.c.l.b16 %v4310
      %v4407 = vunpack.c.l.b16 %v4311
      %v4408 = vunpack.c.l.b16 %v4312
      %v4409 = vunpack.c.l.b16 %v4313
      %v4410 = vunpack.c.l.b16 %v4314
      %v4411 = vunpack.c.l.b16 %v4315
      %v4412 = vunpack.c.l.b16 %v4316
      %v4413 = vunpack.c.l.b16 %v4317
      %v4414 = vunpack.c.l.b16 %v4318
      %v4415 = vunpack.c.l.b16 %v4319
      %v4416 = vunpack.c.l.b16 %v4320
      %v4417 = vunpack.c.l.b16 %v4321
      %v4418 = vunpack.c.l.b16 %v4322
      %v4419 = vunpack.c.l.b16 %v4323
      %v4420 = vunpack.c.l.b16 %v4324
      %v4421 = vunpack.c.l.b16 %v4325
      %v4422 = vunpack.c.l.b16 %v4326
      %v4423 = vunpack.c.l.b16 %v4327
      %v4424 = vunpack.c.l.b16 %v4328
      %v4425 = vunpack.c.l.b16 %v4329
      %v4426 = vunpack.c.l.b16 %v4330
      %v4427 = vunpack.c.l.b16 %v4331
      %v4428 = vunpack.c.l.b16 %v4332
      %v4429 = vunpack.c.l.b16 %v4333
      %v4430 = vunpack.c.l.b16 %v4334
      %v4431 = vunpack.c.l.b16 %v4335
      %v4432 = vunpack.c.l.b16 %v4336
      %v4433 = vunpack.c.l.b16 %v4337
      %v4434 = vunpack.c.l.b16 %v4338
      %v4435 = vunpack.c.l.b16 %v4339
      %v4436 = vunpack.c.l.b16 %v4340
      %v4437 = vunpack.c.l.b16 %v4341
      %v4438 = vpack.c.b16 %v4391, %v4390
      %v4439 = vpack.c.b16 %v4393, %v4392
      %v4440 = vpack.c.b16 %v4395, %v4394
      %v4441 = vpack.c.b16 %v4397, %v4396
      %v4442 = vpack.c.b16 %v4399, %v4398
      %v4443 = vpack.c.b16 %v4401, %v4400
      %v4444 = vpack.c.b16 %v4403, %v4402
      %v4445 = vpack.c.b16 %v4405, %v4404
      %v4446 = vpack.c.b16 %v4407, %v4406
      %v4447 = vpack.c.b16 %v4409, %v4408
      %v4448 = vpack.c.b16 %v4411, %v4410
      %v4449 = vpack.c.b16 %v4413, %v4412
      %v4450 = vpack.c.b16 %v4415, %v4414
      %v4451 = vpack.c.b16 %v4417, %v4416
      %v4452 = vpack.c.b16 %v4419, %v4418
      %v4453 = vpack.c.b16 %v4421, %v4420
      %v4454 = vpack.c.b16 %v4423, %v4422
      %v4455 = vpack.c.b16 %v4425, %v4424
      %v4456 = vpack.c.b16 %v4427, %v4426
      %v4457 = vpack.c.b16 %v4429, %v4428
      %v4458 = vpack.c.b16 %v4431, %v4430
      %v4459 = vpack.c.b16 %v4433, %v4432
      %v4460 = vpack.c.b16 %v4435, %v4434
      %v4461 = vpack.c.b16 %v4437, %v4436
      %4486 = vmatpush.bf16.msra.mxu0 %v4445
      %4487 = vmatpush.bf16.msra.mxu0 %v4444
      %4488 = vmatpush.bf16.msra.mxu0 %v4443
      %4489 = vmatpush.bf16.msra.mxu0 %v4442
      %4490 = vmatpush.bf16.msra.mxu0 %v4441
      %4491 = vmatpush.bf16.msra.mxu0 %v4440
      %4492 = vmatpush.bf16.msra.mxu0 %v4439
      %4493 = vmatpush.bf16.msra.mxu0 %v4438
      %4494 = vmatmul.bf16.gmra.mxu0 %v3909
      %v4495 = vpop.f32.mrf.mxu0
      %v4496 = vadd.f32 0.0, %v4495
      %v4497 = vpop.f32.mrf.mxu0
      %v4498 = vadd.f32 0.0, %v4497
      %4499 = vmatmul.bf16.gmra.mxu0 %v3910
      %v4500 = vpop.f32.mrf.mxu0
      %v4501 = vadd.f32 0.0, %v4500
      %v4502 = vpop.f32.mrf.mxu0
      %v4503 = vadd.f32 0.0, %v4502
      %4504 = vmatmul.bf16.gmra.mxu0 %v3911
      %v4505 = vpop.f32.mrf.mxu0
      %v4506 = vadd.f32 0.0, %v4505
      %v4507 = vpop.f32.mrf.mxu0
      %v4508 = vadd.f32 0.0, %v4507
      %4509 = vmatmul.bf16.gmra.mxu0 %v3912
      %v4510 = vpop.f32.mrf.mxu0
      %v4511 = vadd.f32 0.0, %v4510
      %v4512 = vpop.f32.mrf.mxu0
      %v4513 = vadd.f32 0.0, %v4512
      %4514 = vmatmul.bf16.gmra.mxu0 %v3913
      %v4515 = vpop.f32.mrf.mxu0
      %v4516 = vadd.f32 0.0, %v4515
      %v4517 = vpop.f32.mrf.mxu0
      %v4518 = vadd.f32 0.0, %v4517
      %4519 = vmatmul.bf16.gmra.mxu0 %v3914
      %v4520 = vpop.f32.mrf.mxu0
      %v4521 = vadd.f32 0.0, %v4520
      %v4522 = vpop.f32.mrf.mxu0
      %v4523 = vadd.f32 0.0, %v4522
      %4524 = vmatmul.bf16.gmra.mxu0 %v3915
      %v4525 = vpop.f32.mrf.mxu0
      %v4526 = vadd.f32 0.0, %v4525
      %v4527 = vpop.f32.mrf.mxu0
      %v4528 = vadd.f32 0.0, %v4527
      %4529 = vmatmul.bf16.gmra.mxu0 %v3916
      %v4530 = vpop.f32.mrf.mxu0
      %v4531 = vadd.f32 0.0, %v4530
      %v4532 = vpop.f32.mrf.mxu0
      %v4533 = vadd.f32 0.0, %v4532
      %4534 = vmatmul.bf16.gmra.mxu0 %v3917
      %v4535 = vpop.f32.mrf.mxu0
      %v4536 = vadd.f32 0.0, %v4535
      %v4537 = vpop.f32.mrf.mxu0
      %v4538 = vadd.f32 0.0, %v4537
      %4539 = vmatmul.bf16.gmra.mxu0 %v3918
      %v4540 = vpop.f32.mrf.mxu0
      %v4541 = vadd.f32 0.0, %v4540
      %v4542 = vpop.f32.mrf.mxu0
      %v4543 = vadd.f32 0.0, %v4542
      %4544 = vmatmul.bf16.gmra.mxu0 %v3919
      %v4545 = vpop.f32.mrf.mxu0
      %v4546 = vadd.f32 0.0, %v4545
      %v4547 = vpop.f32.mrf.mxu0
      %v4548 = vadd.f32 0.0, %v4547
      %4549 = vmatmul.bf16.gmra.mxu0 %v3920
      %v4550 = vpop.f32.mrf.mxu0
      %v4551 = vadd.f32 0.0, %v4550
      %v4552 = vpop.f32.mrf.mxu0
      %v4553 = vadd.f32 0.0, %v4552
      %4554 = vmatmul.bf16.gmra.mxu0 %v3921
      %v4555 = vpop.f32.mrf.mxu0
      %v4556 = vadd.f32 0.0, %v4555
      %v4557 = vpop.f32.mrf.mxu0
      %v4558 = vadd.f32 0.0, %v4557
      %4559 = vmatmul.bf16.gmra.mxu0 %v3922
      %v4560 = vpop.f32.mrf.mxu0
      %v4561 = vadd.f32 0.0, %v4560
      %v4562 = vpop.f32.mrf.mxu0
      %v4563 = vadd.f32 0.0, %v4562
      %4564 = vmatmul.bf16.gmra.mxu0 %v3923
      %v4565 = vpop.f32.mrf.mxu0
      %v4566 = vadd.f32 0.0, %v4565
      %v4567 = vpop.f32.mrf.mxu0
      %v4568 = vadd.f32 0.0, %v4567
      %4569 = vmatmul.bf16.gmra.mxu0 %v3924
      %v4570 = vpop.f32.mrf.mxu0
      %v4571 = vadd.f32 0.0, %v4570
      %v4572 = vpop.f32.mrf.mxu0
      %v4573 = vadd.f32 0.0, %v4572
      %4574 = vdwg.mxu0
      %4575 = vmatpush.bf16.msra.mxu0 %v4453
      %4576 = vmatpush.bf16.msra.mxu0 %v4452
      %4577 = vmatpush.bf16.msra.mxu0 %v4451
      %4578 = vmatpush.bf16.msra.mxu0 %v4450
      %4579 = vmatpush.bf16.msra.mxu0 %v4449
      %4580 = vmatpush.bf16.msra.mxu0 %v4448
      %4581 = vmatpush.bf16.msra.mxu0 %v4447
      %4582 = vmatpush.bf16.msra.mxu0 %v4446
      %4583 = vmatmul.bf16.gmra.mxu0 %v3952
      %v4584 = vpop.f32.mrf.mxu0
      %v4585 = vadd.f32 %v4496, %v4584
      %v4586 = vpop.f32.mrf.mxu0
      %v4587 = vadd.f32 %v4498, %v4586
      %4588 = vmatmul.bf16.gmra.mxu0 %v3964
      %v4589 = vpop.f32.mrf.mxu0
      %v4590 = vadd.f32 %v4501, %v4589
      %v4591 = vpop.f32.mrf.mxu0
      %v4592 = vadd.f32 %v4503, %v4591
      %4593 = vmatmul.bf16.gmra.mxu0 %v3976
      %v4594 = vpop.f32.mrf.mxu0
      %v4595 = vadd.f32 %v4506, %v4594
      %v4596 = vpop.f32.mrf.mxu0
      %v4597 = vadd.f32 %v4508, %v4596
      %4598 = vmatmul.bf16.gmra.mxu0 %v3988
      %v4599 = vpop.f32.mrf.mxu0
      %v4600 = vadd.f32 %v4511, %v4599
      %v4601 = vpop.f32.mrf.mxu0
      %v4602 = vadd.f32 %v4513, %v4601
      %4603 = vmatmul.bf16.gmra.mxu0 %v4000
      %v4604 = vpop.f32.mrf.mxu0
      %v4605 = vadd.f32 %v4516, %v4604
      %v4606 = vpop.f32.mrf.mxu0
      %v4607 = vadd.f32 %v4518, %v4606
      %4608 = vmatmul.bf16.gmra.mxu0 %v4012
      %v4609 = vpop.f32.mrf.mxu0
      %v4610 = vadd.f32 %v4521, %v4609
      %v4611 = vpop.f32.mrf.mxu0
      %v4612 = vadd.f32 %v4523, %v4611
      %4613 = vmatmul.bf16.gmra.mxu0 %v4024
      %v4614 = vpop.f32.mrf.mxu0
      %v4615 = vadd.f32 %v4526, %v4614
      %v4616 = vpop.f32.mrf.mxu0
      %v4617 = vadd.f32 %v4528, %v4616
      %4618 = vmatmul.bf16.gmra.mxu0 %v4036
      %v4619 = vpop.f32.mrf.mxu0
      %v4620 = vadd.f32 %v4531, %v4619
      %v4621 = vpop.f32.mrf.mxu0
      %v4622 = vadd.f32 %v4533, %v4621
      %4623 = vmatmul.bf16.gmra.mxu0 %v4048
      %v4624 = vpop.f32.mrf.mxu0
      %v4625 = vadd.f32 %v4536, %v4624
      %v4626 = vpop.f32.mrf.mxu0
      %v4627 = vadd.f32 %v4538, %v4626
      %4628 = vmatmul.bf16.gmra.mxu0 %v4060
      %v4629 = vpop.f32.mrf.mxu0
      %v4630 = vadd.f32 %v4541, %v4629
      %v4631 = vpop.f32.mrf.mxu0
      %v4632 = vadd.f32 %v4543, %v4631
      %4633 = vmatmul.bf16.gmra.mxu0 %v4072
      %v4634 = vpop.f32.mrf.mxu0
      %v4635 = vadd.f32 %v4546, %v4634
      %v4636 = vpop.f32.mrf.mxu0
      %v4637 = vadd.f32 %v4548, %v4636
      %4638 = vmatmul.bf16.gmra.mxu0 %v4084
      %v4639 = vpop.f32.mrf.mxu0
      %v4640 = vadd.f32 %v4551, %v4639
      %v4641 = vpop.f32.mrf.mxu0
      %v4642 = vadd.f32 %v4553, %v4641
      %4643 = vmatmul.bf16.gmra.mxu0 %v4096
      %v4644 = vpop.f32.mrf.mxu0
      %v4645 = vadd.f32 %v4556, %v4644
      %v4646 = vpop.f32.mrf.mxu0
      %v4647 = vadd.f32 %v4558, %v4646
      %4648 = vmatmul.bf16.gmra.mxu0 %v4108
      %v4649 = vpop.f32.mrf.mxu0
      %v4650 = vadd.f32 %v4561, %v4649
      %v4651 = vpop.f32.mrf.mxu0
      %v4652 = vadd.f32 %v4563, %v4651
      %4653 = vmatmul.bf16.gmra.mxu0 %v4120
      %v4654 = vpop.f32.mrf.mxu0
      %v4655 = vadd.f32 %v4566, %v4654
      %v4656 = vpop.f32.mrf.mxu0
      %v4657 = vadd.f32 %v4568, %v4656
      %4658 = vmatmul.bf16.gmra.mxu0 %v4132
      %v4659 = vpop.f32.mrf.mxu0
      %v4660 = vadd.f32 %v4571, %v4659
      %v4661 = vpop.f32.mrf.mxu0
      %v4662 = vadd.f32 %v4573, %v4661
      %4663 = vdwg.mxu0
      %4664 = vmatpush.bf16.msra.mxu0 %v4461
      %4665 = vmatpush.bf16.msra.mxu0 %v4460
      %4666 = vmatpush.bf16.msra.mxu0 %v4459
      %4667 = vmatpush.bf16.msra.mxu0 %v4458
      %4668 = vmatpush.bf16.msra.mxu0 %v4457
      %4669 = vmatpush.bf16.msra.mxu0 %v4456
      %4670 = vmatpush.bf16.msra.mxu0 %v4455
      %4671 = vmatpush.bf16.msra.mxu0 %v4454
      %4672 = vmatmul.bf16.gmra.mxu0 %v4183
      %v4673 = vpop.f32.mrf.mxu0
      %v4674 = vadd.f32 %v4585, %v4673
      %v4675 = vpop.f32.mrf.mxu0
      %v4676 = vadd.f32 %v4587, %v4675
      %4677 = vmatmul.bf16.gmra.mxu0 %v4186
      %v4678 = vpop.f32.mrf.mxu0
      %v4679 = vadd.f32 %v4590, %v4678
      %v4680 = vpop.f32.mrf.mxu0
      %v4681 = vadd.f32 %v4592, %v4680
      %4682 = vmatmul.bf16.gmra.mxu0 %v4189
      %v4683 = vpop.f32.mrf.mxu0
      %v4684 = vadd.f32 %v4595, %v4683
      %v4685 = vpop.f32.mrf.mxu0
      %v4686 = vadd.f32 %v4597, %v4685
      %4687 = vmatmul.bf16.gmra.mxu0 %v4192
      %v4688 = vpop.f32.mrf.mxu0
      %v4689 = vadd.f32 %v4600, %v4688
      %v4690 = vpop.f32.mrf.mxu0
      %v4691 = vadd.f32 %v4602, %v4690
      %4692 = vmatmul.bf16.gmra.mxu0 %v4195
      %v4693 = vpop.f32.mrf.mxu0
      %v4694 = vadd.f32 %v4605, %v4693
      %v4695 = vpop.f32.mrf.mxu0
      %v4696 = vadd.f32 %v4607, %v4695
      %4697 = vmatmul.bf16.gmra.mxu0 %v4198
      %v4698 = vpop.f32.mrf.mxu0
      %v4699 = vadd.f32 %v4610, %v4698
      %v4700 = vpop.f32.mrf.mxu0
      %v4701 = vadd.f32 %v4612, %v4700
      %4702 = vmatmul.bf16.gmra.mxu0 %v4201
      %v4703 = vpop.f32.mrf.mxu0
      %v4704 = vadd.f32 %v4615, %v4703
      %v4705 = vpop.f32.mrf.mxu0
      %v4706 = vadd.f32 %v4617, %v4705
      %4707 = vmatmul.bf16.gmra.mxu0 %v4204
      %v4708 = vpop.f32.mrf.mxu0
      %v4709 = vadd.f32 %v4620, %v4708
      %v4710 = vpop.f32.mrf.mxu0
      %v4711 = vadd.f32 %v4622, %v4710
      %4712 = vmatmul.bf16.gmra.mxu0 %v4207
      %v4713 = vpop.f32.mrf.mxu0
      %v4714 = vadd.f32 %v4625, %v4713
      %v4715 = vpop.f32.mrf.mxu0
      %v4716 = vadd.f32 %v4627, %v4715
      %4717 = vmatmul.bf16.gmra.mxu0 %v4210
      %v4718 = vpop.f32.mrf.mxu0
      %v4719 = vadd.f32 %v4630, %v4718
      %v4720 = vpop.f32.mrf.mxu0
      %v4721 = vadd.f32 %v4632, %v4720
      %4722 = vmatmul.bf16.gmra.mxu0 %v4213
      %v4723 = vpop.f32.mrf.mxu0
      %v4724 = vadd.f32 %v4635, %v4723
      %v4725 = vpop.f32.mrf.mxu0
      %v4726 = vadd.f32 %v4637, %v4725
      %4727 = vmatmul.bf16.gmra.mxu0 %v4216
      %v4728 = vpop.f32.mrf.mxu0
      %v4729 = vadd.f32 %v4640, %v4728
      %v4730 = vpop.f32.mrf.mxu0
      %v4731 = vadd.f32 %v4642, %v4730
      %4732 = vmatmul.bf16.gmra.mxu0 %v4219
      %v4733 = vpop.f32.mrf.mxu0
      %v4734 = vadd.f32 %v4645, %v4733
      %v4735 = vpop.f32.mrf.mxu0
      %v4736 = vadd.f32 %v4647, %v4735
      %4737 = vmatmul.bf16.gmra.mxu0 %v4222
      %v4738 = vpop.f32.mrf.mxu0
      %v4739 = vadd.f32 %v4650, %v4738
      %v4740 = vpop.f32.mrf.mxu0
      %v4741 = vadd.f32 %v4652, %v4740
      %4742 = vmatmul.bf16.gmra.mxu0 %v4225
      %v4743 = vpop.f32.mrf.mxu0
      %v4744 = vadd.f32 %v4655, %v4743
      %v4745 = vpop.f32.mrf.mxu0
      %v4746 = vadd.f32 %v4657, %v4745
      %4747 = vmatmul.bf16.gmra.mxu0 %v4228
      %v4748 = vpop.f32.mrf.mxu0
      %v4749 = vadd.f32 %v4660, %v4748
      %v4750 = vpop.f32.mrf.mxu0
      %v4751 = vadd.f32 %v4662, %v4750
      %4752 = vdwg.mxu0
      %v4801 = vunpack.c.l.b16 %v4245
      %v4802 = vunpack.c.l.b16 %v4246
      %v4803 = vunpack.c.l.b16 %v4247
      %v4804 = vunpack.c.l.b16 %v4248
      %v4805 = vunpack.c.l.b16 %v4249
      %v4806 = vunpack.c.l.b16 %v4250
      %v4807 = vunpack.c.l.b16 %v4251
      %v4808 = vunpack.c.l.b16 %v4252
      %v4809 = vunpack.c.l.b16 %v4253
      %v4810 = vunpack.c.l.b16 %v4254
      %v4811 = vunpack.c.l.b16 %v4255
      %v4812 = vunpack.c.l.b16 %v4256
      %v4813 = vunpack.c.l.b16 %v4257
      %v4814 = vunpack.c.l.b16 %v4258
      %v4815 = vunpack.c.l.b16 %v4259
      %v4816 = vunpack.c.l.b16 %v4260
      %v4817 = vunpack.c.l.b16 %v4261
      %v4818 = vunpack.c.l.b16 %v4262
      %v4819 = vunpack.c.l.b16 %v4263
      %v4820 = vunpack.c.l.b16 %v4264
      %v4821 = vunpack.c.l.b16 %v4265
      %v4822 = vunpack.c.l.b16 %v4266
      %v4823 = vunpack.c.l.b16 %v4267
      %v4824 = vunpack.c.l.b16 %v4268
      %v4825 = vunpack.c.l.b16 %v4269
      %v4826 = vunpack.c.l.b16 %v4270
      %v4827 = vunpack.c.l.b16 %v4271
      %v4828 = vunpack.c.l.b16 %v4272
      %v4829 = vunpack.c.l.b16 %v4273
      %v4830 = vunpack.c.l.b16 %v4274
      %v4831 = vunpack.c.l.b16 %v4275
      %v4832 = vunpack.c.l.b16 %v4276
      %v4833 = vunpack.c.l.b16 %v4277
      %v4834 = vunpack.c.l.b16 %v4278
      %v4835 = vunpack.c.l.b16 %v4279
      %v4836 = vunpack.c.l.b16 %v4280
      %v4837 = vunpack.c.l.b16 %v4281
      %v4838 = vunpack.c.l.b16 %v4282
      %v4839 = vunpack.c.l.b16 %v4283
      %v4840 = vunpack.c.l.b16 %v4284
      %v4841 = vunpack.c.l.b16 %v4285
      %v4842 = vunpack.c.l.b16 %v4286
      %v4843 = vunpack.c.l.b16 %v4287
      %v4844 = vunpack.c.l.b16 %v4288
      %v4845 = vunpack.c.l.b16 %v4289
      %v4846 = vunpack.c.l.b16 %v4290
      %v4847 = vunpack.c.l.b16 %v4291
      %v4848 = vunpack.c.l.b16 %v4292
      %v4849 = vpack.c.b16 %v4802, %v4801
      %v4850 = vpack.c.b16 %v4804, %v4803
      %v4851 = vpack.c.b16 %v4806, %v4805
      %v4852 = vpack.c.b16 %v4808, %v4807
      %v4853 = vpack.c.b16 %v4810, %v4809
      %v4854 = vpack.c.b16 %v4812, %v4811
      %v4855 = vpack.c.b16 %v4814, %v4813
      %v4856 = vpack.c.b16 %v4816, %v4815
      %v4857 = vpack.c.b16 %v4818, %v4817
      %v4858 = vpack.c.b16 %v4820, %v4819
      %v4859 = vpack.c.b16 %v4822, %v4821
      %v4860 = vpack.c.b16 %v4824, %v4823
      %v4861 = vpack.c.b16 %v4826, %v4825
      %v4862 = vpack.c.b16 %v4828, %v4827
      %v4863 = vpack.c.b16 %v4830, %v4829
      %v4864 = vpack.c.b16 %v4832, %v4831
      %v4865 = vpack.c.b16 %v4834, %v4833
      %v4866 = vpack.c.b16 %v4836, %v4835
      %v4867 = vpack.c.b16 %v4838, %v4837
      %v4868 = vpack.c.b16 %v4840, %v4839
      %v4869 = vpack.c.b16 %v4842, %v4841
      %v4870 = vpack.c.b16 %v4844, %v4843
      %v4871 = vpack.c.b16 %v4846, %v4845
      %v4872 = vpack.c.b16 %v4848, %v4847
      %4897 = vmatpush.bf16.msra.mxu0 %v4856
      %4898 = vmatpush.bf16.msra.mxu0 %v4855
      %4899 = vmatpush.bf16.msra.mxu0 %v4854
      %4900 = vmatpush.bf16.msra.mxu0 %v4853
      %4901 = vmatpush.bf16.msra.mxu0 %v4852
      %4902 = vmatpush.bf16.msra.mxu0 %v4851
      %4903 = vmatpush.bf16.msra.mxu0 %v4850
      %4904 = vmatpush.bf16.msra.mxu0 %v4849
      %4905 = vmatmul.bf16.gmra.mxu0 0
      %v4906 = vpop.f32.mrf.mxu0
      %v4907 = vadd.f32 %v4674, %v4906
      %v4908 = vpop.f32.mrf.mxu0
      %v4909 = vadd.f32 %v4676, %v4908
      %4910 = vmatmul.bf16.gmra.mxu0 %v3909
      %v4911 = vpop.f32.mrf.mxu0
      %v4912 = vadd.f32 %v4679, %v4911
      %v4913 = vpop.f32.mrf.mxu0
      %v4914 = vadd.f32 %v4681, %v4913
      %4915 = vmatmul.bf16.gmra.mxu0 %v3910
      %v4916 = vpop.f32.mrf.mxu0
      %v4917 = vadd.f32 %v4684, %v4916
      %v4918 = vpop.f32.mrf.mxu0
      %v4919 = vadd.f32 %v4686, %v4918
      %4920 = vmatmul.bf16.gmra.mxu0 %v3911
      %v4921 = vpop.f32.mrf.mxu0
      %v4922 = vadd.f32 %v4689, %v4921
      %v4923 = vpop.f32.mrf.mxu0
      %v4924 = vadd.f32 %v4691, %v4923
      %4925 = vmatmul.bf16.gmra.mxu0 %v3912
      %v4926 = vpop.f32.mrf.mxu0
      %v4927 = vadd.f32 %v4694, %v4926
      %v4928 = vpop.f32.mrf.mxu0
      %v4929 = vadd.f32 %v4696, %v4928
      %4930 = vmatmul.bf16.gmra.mxu0 %v3913
      %v4931 = vpop.f32.mrf.mxu0
      %v4932 = vadd.f32 %v4699, %v4931
      %v4933 = vpop.f32.mrf.mxu0
      %v4934 = vadd.f32 %v4701, %v4933
      %4935 = vmatmul.bf16.gmra.mxu0 %v3914
      %v4936 = vpop.f32.mrf.mxu0
      %v4937 = vadd.f32 %v4704, %v4936
      %v4938 = vpop.f32.mrf.mxu0
      %v4939 = vadd.f32 %v4706, %v4938
      %4940 = vmatmul.bf16.gmra.mxu0 %v3915
      %v4941 = vpop.f32.mrf.mxu0
      %v4942 = vadd.f32 %v4709, %v4941
      %v4943 = vpop.f32.mrf.mxu0
      %v4944 = vadd.f32 %v4711, %v4943
      %4945 = vmatmul.bf16.gmra.mxu0 %v3916
      %v4946 = vpop.f32.mrf.mxu0
      %v4947 = vadd.f32 %v4714, %v4946
      %v4948 = vpop.f32.mrf.mxu0
      %v4949 = vadd.f32 %v4716, %v4948
      %4950 = vmatmul.bf16.gmra.mxu0 %v3917
      %v4951 = vpop.f32.mrf.mxu0
      %v4952 = vadd.f32 %v4719, %v4951
      %v4953 = vpop.f32.mrf.mxu0
      %v4954 = vadd.f32 %v4721, %v4953
      %4955 = vmatmul.bf16.gmra.mxu0 %v3918
      %v4956 = vpop.f32.mrf.mxu0
      %v4957 = vadd.f32 %v4724, %v4956
      %v4958 = vpop.f32.mrf.mxu0
      %v4959 = vadd.f32 %v4726, %v4958
      %4960 = vmatmul.bf16.gmra.mxu0 %v3919
      %v4961 = vpop.f32.mrf.mxu0
      %v4962 = vadd.f32 %v4729, %v4961
      %v4963 = vpop.f32.mrf.mxu0
      %v4964 = vadd.f32 %v4731, %v4963
      %4965 = vmatmul.bf16.gmra.mxu0 %v3920
      %v4966 = vpop.f32.mrf.mxu0
      %v4967 = vadd.f32 %v4734, %v4966
      %v4968 = vpop.f32.mrf.mxu0
      %v4969 = vadd.f32 %v4736, %v4968
      %4970 = vmatmul.bf16.gmra.mxu0 %v3921
      %v4971 = vpop.f32.mrf.mxu0
      %v4972 = vadd.f32 %v4739, %v4971
      %v4973 = vpop.f32.mrf.mxu0
      %v4974 = vadd.f32 %v4741, %v4973
      %4975 = vmatmul.bf16.gmra.mxu0 %v3922
      %v4976 = vpop.f32.mrf.mxu0
      %v4977 = vadd.f32 %v4744, %v4976
      %v4978 = vpop.f32.mrf.mxu0
      %v4979 = vadd.f32 %v4746, %v4978
      %4980 = vmatmul.bf16.gmra.mxu0 %v3923
      %v4981 = vpop.f32.mrf.mxu0
      %v4982 = vadd.f32 %v4749, %v4981
      %v4983 = vpop.f32.mrf.mxu0
      %v4984 = vadd.f32 %v4751, %v4983
      %4985 = vdwg.mxu0
      %4986 = vmatpush.bf16.msra.mxu0 %v4864
      %4987 = vmatpush.bf16.msra.mxu0 %v4863
      %4988 = vmatpush.bf16.msra.mxu0 %v4862
      %4989 = vmatpush.bf16.msra.mxu0 %v4861
      %4990 = vmatpush.bf16.msra.mxu0 %v4860
      %4991 = vmatpush.bf16.msra.mxu0 %v4859
      %4992 = vmatpush.bf16.msra.mxu0 %v4858
      %4993 = vmatpush.bf16.msra.mxu0 %v4857
      %4994 = vmatmul.bf16.gmra.mxu0 0
      %v4995 = vpop.f32.mrf.mxu0
      %v4996 = vadd.f32 %v4907, %v4995
      %v4997 = vpop.f32.mrf.mxu0
      %v4998 = vadd.f32 %v4909, %v4997
      %4999 = vmatmul.bf16.gmra.mxu0 %v3952
      %v5000 = vpop.f32.mrf.mxu0
      %v5001 = vadd.f32 %v4912, %v5000
      %v5002 = vpop.f32.mrf.mxu0
      %v5003 = vadd.f32 %v4914, %v5002
      %5004 = vmatmul.bf16.gmra.mxu0 %v3964
      %v5005 = vpop.f32.mrf.mxu0
      %v5006 = vadd.f32 %v4917, %v5005
      %v5007 = vpop.f32.mrf.mxu0
      %v5008 = vadd.f32 %v4919, %v5007
      %5009 = vmatmul.bf16.gmra.mxu0 %v3976
      %v5010 = vpop.f32.mrf.mxu0
      %v5011 = vadd.f32 %v4922, %v5010
      %v5012 = vpop.f32.mrf.mxu0
      %v5013 = vadd.f32 %v4924, %v5012
      %5014 = vmatmul.bf16.gmra.mxu0 %v3988
      %v5015 = vpop.f32.mrf.mxu0
      %v5016 = vadd.f32 %v4927, %v5015
      %v5017 = vpop.f32.mrf.mxu0
      %v5018 = vadd.f32 %v4929, %v5017
      %5019 = vmatmul.bf16.gmra.mxu0 %v4000
      %v5020 = vpop.f32.mrf.mxu0
      %v5021 = vadd.f32 %v4932, %v5020
      %v5022 = vpop.f32.mrf.mxu0
      %v5023 = vadd.f32 %v4934, %v5022
      %5024 = vmatmul.bf16.gmra.mxu0 %v4012
      %v5025 = vpop.f32.mrf.mxu0
      %v5026 = vadd.f32 %v4937, %v5025
      %v5027 = vpop.f32.mrf.mxu0
      %v5028 = vadd.f32 %v4939, %v5027
      %5029 = vmatmul.bf16.gmra.mxu0 %v4024
      %v5030 = vpop.f32.mrf.mxu0
      %v5031 = vadd.f32 %v4942, %v5030
      %v5032 = vpop.f32.mrf.mxu0
      %v5033 = vadd.f32 %v4944, %v5032
      %5034 = vmatmul.bf16.gmra.mxu0 %v4036
      %v5035 = vpop.f32.mrf.mxu0
      %v5036 = vadd.f32 %v4947, %v5035
      %v5037 = vpop.f32.mrf.mxu0
      %v5038 = vadd.f32 %v4949, %v5037
      %5039 = vmatmul.bf16.gmra.mxu0 %v4048
      %v5040 = vpop.f32.mrf.mxu0
      %v5041 = vadd.f32 %v4952, %v5040
      %v5042 = vpop.f32.mrf.mxu0
      %v5043 = vadd.f32 %v4954, %v5042
      %5044 = vmatmul.bf16.gmra.mxu0 %v4060
      %v5045 = vpop.f32.mrf.mxu0
      %v5046 = vadd.f32 %v4957, %v5045
      %v5047 = vpop.f32.mrf.mxu0
      %v5048 = vadd.f32 %v4959, %v5047
      %5049 = vmatmul.bf16.gmra.mxu0 %v4072
      %v5050 = vpop.f32.mrf.mxu0
      %v5051 = vadd.f32 %v4962, %v5050
      %v5052 = vpop.f32.mrf.mxu0
      %v5053 = vadd.f32 %v4964, %v5052
      %5054 = vmatmul.bf16.gmra.mxu0 %v4084
      %v5055 = vpop.f32.mrf.mxu0
      %v5056 = vadd.f32 %v4967, %v5055
      %v5057 = vpop.f32.mrf.mxu0
      %v5058 = vadd.f32 %v4969, %v5057
      %5059 = vmatmul.bf16.gmra.mxu0 %v4096
      %v5060 = vpop.f32.mrf.mxu0
      %v5061 = vadd.f32 %v4972, %v5060
      %v5062 = vpop.f32.mrf.mxu0
      %v5063 = vadd.f32 %v4974, %v5062
      %5064 = vmatmul.bf16.gmra.mxu0 %v4108
      %v5065 = vpop.f32.mrf.mxu0
      %v5066 = vadd.f32 %v4977, %v5065
      %v5067 = vpop.f32.mrf.mxu0
      %v5068 = vadd.f32 %v4979, %v5067
      %5069 = vmatmul.bf16.gmra.mxu0 %v4120
      %v5070 = vpop.f32.mrf.mxu0
      %v5071 = vadd.f32 %v4982, %v5070
      %v5072 = vpop.f32.mrf.mxu0
      %v5073 = vadd.f32 %v4984, %v5072
      %5074 = vdwg.mxu0
      %5075 = vmatpush.bf16.msra.mxu0 %v4872
      %5076 = vmatpush.bf16.msra.mxu0 %v4871
      %5077 = vmatpush.bf16.msra.mxu0 %v4870
      %5078 = vmatpush.bf16.msra.mxu0 %v4869
      %5079 = vmatpush.bf16.msra.mxu0 %v4868
      %5080 = vmatpush.bf16.msra.mxu0 %v4867
      %5081 = vmatpush.bf16.msra.mxu0 %v4866
      %5082 = vmatpush.bf16.msra.mxu0 %v4865
      %5083 = vmatmul.bf16.gmra.mxu0 0
      %v5084 = vpop.f32.mrf.mxu0
      %v5085 = vadd.f32 %v4996, %v5084
      %v5086 = vpop.f32.mrf.mxu0
      %v5087 = vadd.f32 %v4998, %v5086
      %5088 = vmatmul.bf16.gmra.mxu0 %v4183
      %v5089 = vpop.f32.mrf.mxu0
      %v5090 = vadd.f32 %v5001, %v5089
      %v5091 = vpop.f32.mrf.mxu0
      %v5092 = vadd.f32 %v5003, %v5091
      %5093 = vmatmul.bf16.gmra.mxu0 %v4186
      %v5094 = vpop.f32.mrf.mxu0
      %v5095 = vadd.f32 %v5006, %v5094
      %v5096 = vpop.f32.mrf.mxu0
      %v5097 = vadd.f32 %v5008, %v5096
      %5098 = vmatmul.bf16.gmra.mxu0 %v4189
      %v5099 = vpop.f32.mrf.mxu0
      %v5100 = vadd.f32 %v5011, %v5099
      %v5101 = vpop.f32.mrf.mxu0
      %v5102 = vadd.f32 %v5013, %v5101
      %5103 = vmatmul.bf16.gmra.mxu0 %v4192
      %v5104 = vpop.f32.mrf.mxu0
      %v5105 = vadd.f32 %v5016, %v5104
      %v5106 = vpop.f32.mrf.mxu0
      %v5107 = vadd.f32 %v5018, %v5106
      %5108 = vmatmul.bf16.gmra.mxu0 %v4195
      %v5109 = vpop.f32.mrf.mxu0
      %v5110 = vadd.f32 %v5021, %v5109
      %v5111 = vpop.f32.mrf.mxu0
      %v5112 = vadd.f32 %v5023, %v5111
      %5113 = vmatmul.bf16.gmra.mxu0 %v4198
      %v5114 = vpop.f32.mrf.mxu0
      %v5115 = vadd.f32 %v5026, %v5114
      %v5116 = vpop.f32.mrf.mxu0
      %v5117 = vadd.f32 %v5028, %v5116
      %5118 = vmatmul.bf16.gmra.mxu0 %v4201
      %v5119 = vpop.f32.mrf.mxu0
      %v5120 = vadd.f32 %v5031, %v5119
      %v5121 = vpop.f32.mrf.mxu0
      %v5122 = vadd.f32 %v5033, %v5121
      %5123 = vmatmul.bf16.gmra.mxu0 %v4204
      %v5124 = vpop.f32.mrf.mxu0
      %v5125 = vadd.f32 %v5036, %v5124
      %v5126 = vpop.f32.mrf.mxu0
      %v5127 = vadd.f32 %v5038, %v5126
      %5128 = vmatmul.bf16.gmra.mxu0 %v4207
      %v5129 = vpop.f32.mrf.mxu0
      %v5130 = vadd.f32 %v5041, %v5129
      %v5131 = vpop.f32.mrf.mxu0
      %v5132 = vadd.f32 %v5043, %v5131
      %5133 = vmatmul.bf16.gmra.mxu0 %v4210
      %v5134 = vpop.f32.mrf.mxu0
      %v5135 = vadd.f32 %v5046, %v5134
      %v5136 = vpop.f32.mrf.mxu0
      %v5137 = vadd.f32 %v5048, %v5136
      %5138 = vmatmul.bf16.gmra.mxu0 %v4213
      %v5139 = vpop.f32.mrf.mxu0
      %v5140 = vadd.f32 %v5051, %v5139
      %v5141 = vpop.f32.mrf.mxu0
      %v5142 = vadd.f32 %v5053, %v5141
      %5143 = vmatmul.bf16.gmra.mxu0 %v4216
      %v5144 = vpop.f32.mrf.mxu0
      %v5145 = vadd.f32 %v5056, %v5144
      %v5146 = vpop.f32.mrf.mxu0
      %v5147 = vadd.f32 %v5058, %v5146
      %5148 = vmatmul.bf16.gmra.mxu0 %v4219
      %v5149 = vpop.f32.mrf.mxu0
      %v5150 = vadd.f32 %v5061, %v5149
      %v5151 = vpop.f32.mrf.mxu0
      %v5152 = vadd.f32 %v5063, %v5151
      %5153 = vmatmul.bf16.gmra.mxu0 %v4222
      %v5154 = vpop.f32.mrf.mxu0
      %v5155 = vadd.f32 %v5066, %v5154
      %v5156 = vpop.f32.mrf.mxu0
      %v5157 = vadd.f32 %v5068, %v5156
      %5158 = vmatmul.bf16.gmra.mxu0 %v4225
      %v5159 = vpop.f32.mrf.mxu0
      %v5160 = vadd.f32 %v5071, %v5159
      %v5161 = vpop.f32.mrf.mxu0
      %v5162 = vadd.f32 %v5073, %v5161
      %5163 = vdwg.mxu0
      %s5164 = scalar_lea.vmem %s5, 384
      %v5165 = vld [vmem:[%s5164] sm:$0xf]
      %v5166 = vld [vmem:[%s5164 + $0x4] sm:$0xf]
      %v5167 = vld [vmem:[%s5164 + $0x8] sm:$0xf]
      %v5168 = vld [vmem:[%s5164 + $0xc] sm:$0xf]
      %v5169 = vld [vmem:[%s5164 + $0x10] sm:$0xf]
      %v5170 = vld [vmem:[%s5164 + $0x14] sm:$0xf]
      %v5171 = vld [vmem:[%s5164 + $0x18] sm:$0xf]
      %v5172 = vld [vmem:[%s5164 + $0x1c] sm:$0xf]
      %v5173 = vld [vmem:[%s5164 + $0x20] sm:$0xf]
      %v5174 = vld [vmem:[%s5164 + $0x24] sm:$0xf]
      %v5175 = vld [vmem:[%s5164 + $0x28] sm:$0xf]
      %v5176 = vld [vmem:[%s5164 + $0x2c] sm:$0xf]
      %v5177 = vld [vmem:[%s5164 + $0x30] sm:$0xf]
      %v5178 = vld [vmem:[%s5164 + $0x34] sm:$0xf]
      %v5179 = vld [vmem:[%s5164 + $0x38] sm:$0xf]
      %v5180 = vld [vmem:[%s5164 + $0x3c] sm:$0xf]
      %v5181 = vld [vmem:[%s5164 + $0x40] sm:$0xf]
      %v5182 = vld [vmem:[%s5164 + $0x44] sm:$0xf]
      %v5183 = vld [vmem:[%s5164 + $0x48] sm:$0xf]
      %v5184 = vld [vmem:[%s5164 + $0x4c] sm:$0xf]
      %v5185 = vld [vmem:[%s5164 + $0x50] sm:$0xf]
      %v5186 = vld [vmem:[%s5164 + $0x54] sm:$0xf]
      %v5187 = vld [vmem:[%s5164 + $0x58] sm:$0xf]
      %v5188 = vld [vmem:[%s5164 + $0x5c] sm:$0xf]
      %v5189 = vld [vmem:[%s5164 + $0x60] sm:$0xf]
      %v5190 = vld [vmem:[%s5164 + $0x64] sm:$0xf]
      %v5191 = vld [vmem:[%s5164 + $0x68] sm:$0xf]
      %v5192 = vld [vmem:[%s5164 + $0x6c] sm:$0xf]
      %v5193 = vld [vmem:[%s5164 + $0x70] sm:$0xf]
      %v5194 = vld [vmem:[%s5164 + $0x74] sm:$0xf]
      %v5195 = vld [vmem:[%s5164 + $0x78] sm:$0xf]
      %v5196 = vld [vmem:[%s5164 + $0x7c] sm:$0xf]
      %v5197 = vld [vmem:[%s5164 + $0x80] sm:$0xf]
      %v5198 = vld [vmem:[%s5164 + $0x84] sm:$0xf]
      %v5199 = vld [vmem:[%s5164 + $0x88] sm:$0xf]
      %v5200 = vld [vmem:[%s5164 + $0x8c] sm:$0xf]
      %v5201 = vld [vmem:[%s5164 + $0x90] sm:$0xf]
      %v5202 = vld [vmem:[%s5164 + $0x94] sm:$0xf]
      %v5203 = vld [vmem:[%s5164 + $0x98] sm:$0xf]
      %v5204 = vld [vmem:[%s5164 + $0x9c] sm:$0xf]
      %v5205 = vld [vmem:[%s5164 + $0xa0] sm:$0xf]
      %v5206 = vld [vmem:[%s5164 + $0xa4] sm:$0xf]
      %v5207 = vld [vmem:[%s5164 + $0xa8] sm:$0xf]
      %v5208 = vld [vmem:[%s5164 + $0xac] sm:$0xf]
      %v5209 = vld [vmem:[%s5164 + $0xb0] sm:$0xf]
      %v5210 = vld [vmem:[%s5164 + $0xb4] sm:$0xf]
      %v5211 = vld [vmem:[%s5164 + $0xb8] sm:$0xf]
      %v5212 = vld [vmem:[%s5164 + $0xbc] sm:$0xf]
      %v5261 = vunpack.c.l.b16 %v5165
      %v5262 = vunpack.c.l.b16 %v5166
      %v5263 = vunpack.c.l.b16 %v5167
      %v5264 = vunpack.c.l.b16 %v5168
      %v5265 = vunpack.c.l.b16 %v5169
      %v5266 = vunpack.c.l.b16 %v5170
      %v5267 = vunpack.c.l.b16 %v5171
      %v5268 = vunpack.c.l.b16 %v5172
      %v5269 = vunpack.c.l.b16 %v5173
      %v5270 = vunpack.c.l.b16 %v5174
      %v5271 = vunpack.c.l.b16 %v5175
      %v5272 = vunpack.c.l.b16 %v5176
      %v5273 = vunpack.c.l.b16 %v5177
      %v5274 = vunpack.c.l.b16 %v5178
      %v5275 = vunpack.c.l.b16 %v5179
      %v5276 = vunpack.c.l.b16 %v5180
      %v5277 = vunpack.c.l.b16 %v5181
      %v5278 = vunpack.c.l.b16 %v5182
      %v5279 = vunpack.c.l.b16 %v5183
      %v5280 = vunpack.c.l.b16 %v5184
      %v5281 = vunpack.c.l.b16 %v5185
      %v5282 = vunpack.c.l.b16 %v5186
      %v5283 = vunpack.c.l.b16 %v5187
      %v5284 = vunpack.c.l.b16 %v5188
      %v5285 = vunpack.c.l.b16 %v5189
      %v5286 = vunpack.c.l.b16 %v5190
      %v5287 = vunpack.c.l.b16 %v5191
      %v5288 = vunpack.c.l.b16 %v5192
      %v5289 = vunpack.c.l.b16 %v5193
      %v5290 = vunpack.c.l.b16 %v5194
      %v5291 = vunpack.c.l.b16 %v5195
      %v5292 = vunpack.c.l.b16 %v5196
      %v5293 = vunpack.c.l.b16 %v5197
      %v5294 = vunpack.c.l.b16 %v5198
      %v5295 = vunpack.c.l.b16 %v5199
      %v5296 = vunpack.c.l.b16 %v5200
      %v5297 = vunpack.c.l.b16 %v5201
      %v5298 = vunpack.c.l.b16 %v5202
      %v5299 = vunpack.c.l.b16 %v5203
      %v5300 = vunpack.c.l.b16 %v5204
      %v5301 = vunpack.c.l.b16 %v5205
      %v5302 = vunpack.c.l.b16 %v5206
      %v5303 = vunpack.c.l.b16 %v5207
      %v5304 = vunpack.c.l.b16 %v5208
      %v5305 = vunpack.c.l.b16 %v5209
      %v5306 = vunpack.c.l.b16 %v5210
      %v5307 = vunpack.c.l.b16 %v5211
      %v5308 = vunpack.c.l.b16 %v5212
      %v5309 = vpack.c.b16 %v5262, %v5261
      %v5310 = vpack.c.b16 %v5264, %v5263
      %v5311 = vpack.c.b16 %v5266, %v5265
      %v5312 = vpack.c.b16 %v5268, %v5267
      %v5313 = vpack.c.b16 %v5270, %v5269
      %v5314 = vpack.c.b16 %v5272, %v5271
      %v5315 = vpack.c.b16 %v5274, %v5273
      %v5316 = vpack.c.b16 %v5276, %v5275
      %v5317 = vpack.c.b16 %v5278, %v5277
      %v5318 = vpack.c.b16 %v5280, %v5279
      %v5319 = vpack.c.b16 %v5282, %v5281
      %v5320 = vpack.c.b16 %v5284, %v5283
      %v5321 = vpack.c.b16 %v5286, %v5285
      %v5322 = vpack.c.b16 %v5288, %v5287
      %v5323 = vpack.c.b16 %v5290, %v5289
      %v5324 = vpack.c.b16 %v5292, %v5291
      %v5325 = vpack.c.b16 %v5294, %v5293
      %v5326 = vpack.c.b16 %v5296, %v5295
      %v5327 = vpack.c.b16 %v5298, %v5297
      %v5328 = vpack.c.b16 %v5300, %v5299
      %v5329 = vpack.c.b16 %v5302, %v5301
      %v5330 = vpack.c.b16 %v5304, %v5303
      %v5331 = vpack.c.b16 %v5306, %v5305
      %v5332 = vpack.c.b16 %v5308, %v5307
      %5357 = vmatpush.bf16.msra.mxu0 %v5316
      %5358 = vmatpush.bf16.msra.mxu0 %v5315
      %5359 = vmatpush.bf16.msra.mxu0 %v5314
      %5360 = vmatpush.bf16.msra.mxu0 %v5313
      %5361 = vmatpush.bf16.msra.mxu0 %v5312
      %5362 = vmatpush.bf16.msra.mxu0 %v5311
      %5363 = vmatpush.bf16.msra.mxu0 %v5310
      %5364 = vmatpush.bf16.msra.mxu0 %v5309
      %5365 = vmatmul.bf16.gmra.mxu0 %v3910
      %v5366 = vpop.f32.mrf.mxu0
      %v5367 = vadd.f32 0.0, %v5366
      %v5368 = vpop.f32.mrf.mxu0
      %v5369 = vadd.f32 0.0, %v5368
      %5370 = vmatmul.bf16.gmra.mxu0 %v3911
      %v5371 = vpop.f32.mrf.mxu0
      %v5372 = vadd.f32 0.0, %v5371
      %v5373 = vpop.f32.mrf.mxu0
      %v5374 = vadd.f32 0.0, %v5373
      %5375 = vmatmul.bf16.gmra.mxu0 %v3912
      %v5376 = vpop.f32.mrf.mxu0
      %v5377 = vadd.f32 0.0, %v5376
      %v5378 = vpop.f32.mrf.mxu0
      %v5379 = vadd.f32 0.0, %v5378
      %5380 = vmatmul.bf16.gmra.mxu0 %v3913
      %v5381 = vpop.f32.mrf.mxu0
      %v5382 = vadd.f32 0.0, %v5381
      %v5383 = vpop.f32.mrf.mxu0
      %v5384 = vadd.f32 0.0, %v5383
      %5385 = vmatmul.bf16.gmra.mxu0 %v3914
      %v5386 = vpop.f32.mrf.mxu0
      %v5387 = vadd.f32 0.0, %v5386
      %v5388 = vpop.f32.mrf.mxu0
      %v5389 = vadd.f32 0.0, %v5388
      %5390 = vmatmul.bf16.gmra.mxu0 %v3915
      %v5391 = vpop.f32.mrf.mxu0
      %v5392 = vadd.f32 0.0, %v5391
      %v5393 = vpop.f32.mrf.mxu0
      %v5394 = vadd.f32 0.0, %v5393
      %5395 = vmatmul.bf16.gmra.mxu0 %v3916
      %v5396 = vpop.f32.mrf.mxu0
      %v5397 = vadd.f32 0.0, %v5396
      %v5398 = vpop.f32.mrf.mxu0
      %v5399 = vadd.f32 0.0, %v5398
      %5400 = vmatmul.bf16.gmra.mxu0 %v3917
      %v5401 = vpop.f32.mrf.mxu0
      %v5402 = vadd.f32 0.0, %v5401
      %v5403 = vpop.f32.mrf.mxu0
      %v5404 = vadd.f32 0.0, %v5403
      %5405 = vmatmul.bf16.gmra.mxu0 %v3918
      %v5406 = vpop.f32.mrf.mxu0
      %v5407 = vadd.f32 0.0, %v5406
      %v5408 = vpop.f32.mrf.mxu0
      %v5409 = vadd.f32 0.0, %v5408
      %5410 = vmatmul.bf16.gmra.mxu0 %v3919
      %v5411 = vpop.f32.mrf.mxu0
      %v5412 = vadd.f32 0.0, %v5411
      %v5413 = vpop.f32.mrf.mxu0
      %v5414 = vadd.f32 0.0, %v5413
      %5415 = vmatmul.bf16.gmra.mxu0 %v3920
      %v5416 = vpop.f32.mrf.mxu0
      %v5417 = vadd.f32 0.0, %v5416
      %v5418 = vpop.f32.mrf.mxu0
      %v5419 = vadd.f32 0.0, %v5418
      %5420 = vmatmul.bf16.gmra.mxu0 %v3921
      %v5421 = vpop.f32.mrf.mxu0
      %v5422 = vadd.f32 0.0, %v5421
      %v5423 = vpop.f32.mrf.mxu0
      %v5424 = vadd.f32 0.0, %v5423
      %5425 = vmatmul.bf16.gmra.mxu0 %v3922
      %v5426 = vpop.f32.mrf.mxu0
      %v5427 = vadd.f32 0.0, %v5426
      %v5428 = vpop.f32.mrf.mxu0
      %v5429 = vadd.f32 0.0, %v5428
      %5430 = vmatmul.bf16.gmra.mxu0 %v3923
      %v5431 = vpop.f32.mrf.mxu0
      %v5432 = vadd.f32 0.0, %v5431
      %v5433 = vpop.f32.mrf.mxu0
      %v5434 = vadd.f32 0.0, %v5433
      %5435 = vmatmul.bf16.gmra.mxu0 %v3924
      %v5436 = vpop.f32.mrf.mxu0
      %v5437 = vadd.f32 0.0, %v5436
      %v5438 = vpop.f32.mrf.mxu0
      %v5439 = vadd.f32 0.0, %v5438
      %5440 = vmatmul.bf16.gmra.mxu0 0
      %v5441 = vpop.f32.mrf.mxu0
      %v5442 = vadd.f32 0.0, %v5441
      %v5443 = vpop.f32.mrf.mxu0
      %v5444 = vadd.f32 0.0, %v5443
      %5445 = vdwg.mxu0
      %5446 = vmatpush.bf16.msra.mxu0 %v5324
      %5447 = vmatpush.bf16.msra.mxu0 %v5323
      %5448 = vmatpush.bf16.msra.mxu0 %v5322
      %5449 = vmatpush.bf16.msra.mxu0 %v5321
      %5450 = vmatpush.bf16.msra.mxu0 %v5320
      %5451 = vmatpush.bf16.msra.mxu0 %v5319
      %5452 = vmatpush.bf16.msra.mxu0 %v5318
      %5453 = vmatpush.bf16.msra.mxu0 %v5317
      %5454 = vmatmul.bf16.gmra.mxu0 %v3964
      %v5455 = vpop.f32.mrf.mxu0
      %v5456 = vadd.f32 %v5367, %v5455
      %v5457 = vpop.f32.mrf.mxu0
      %v5458 = vadd.f32 %v5369, %v5457
      %5459 = vmatmul.bf16.gmra.mxu0 %v3976
      %v5460 = vpop.f32.mrf.mxu0
      %v5461 = vadd.f32 %v5372, %v5460
      %v5462 = vpop.f32.mrf.mxu0
      %v5463 = vadd.f32 %v5374, %v5462
      %5464 = vmatmul.bf16.gmra.mxu0 %v3988
      %v5465 = vpop.f32.mrf.mxu0
      %v5466 = vadd.f32 %v5377, %v5465
      %v5467 = vpop.f32.mrf.mxu0
      %v5468 = vadd.f32 %v5379, %v5467
      %5469 = vmatmul.bf16.gmra.mxu0 %v4000
      %v5470 = vpop.f32.mrf.mxu0
      %v5471 = vadd.f32 %v5382, %v5470
      %v5472 = vpop.f32.mrf.mxu0
      %v5473 = vadd.f32 %v5384, %v5472
      %5474 = vmatmul.bf16.gmra.mxu0 %v4012
      %v5475 = vpop.f32.mrf.mxu0
      %v5476 = vadd.f32 %v5387, %v5475
      %v5477 = vpop.f32.mrf.mxu0
      %v5478 = vadd.f32 %v5389, %v5477
      %5479 = vmatmul.bf16.gmra.mxu0 %v4024
      %v5480 = vpop.f32.mrf.mxu0
      %v5481 = vadd.f32 %v5392, %v5480
      %v5482 = vpop.f32.mrf.mxu0
      %v5483 = vadd.f32 %v5394, %v5482
      %5484 = vmatmul.bf16.gmra.mxu0 %v4036
      %v5485 = vpop.f32.mrf.mxu0
      %v5486 = vadd.f32 %v5397, %v5485
      %v5487 = vpop.f32.mrf.mxu0
      %v5488 = vadd.f32 %v5399, %v5487
      %5489 = vmatmul.bf16.gmra.mxu0 %v4048
      %v5490 = vpop.f32.mrf.mxu0
      %v5491 = vadd.f32 %v5402, %v5490
      %v5492 = vpop.f32.mrf.mxu0
      %v5493 = vadd.f32 %v5404, %v5492
      %5494 = vmatmul.bf16.gmra.mxu0 %v4060
      %v5495 = vpop.f32.mrf.mxu0
      %v5496 = vadd.f32 %v5407, %v5495
      %v5497 = vpop.f32.mrf.mxu0
      %v5498 = vadd.f32 %v5409, %v5497
      %5499 = vmatmul.bf16.gmra.mxu0 %v4072
      %v5500 = vpop.f32.mrf.mxu0
      %v5501 = vadd.f32 %v5412, %v5500
      %v5502 = vpop.f32.mrf.mxu0
      %v5503 = vadd.f32 %v5414, %v5502
      %5504 = vmatmul.bf16.gmra.mxu0 %v4084
      %v5505 = vpop.f32.mrf.mxu0
      %v5506 = vadd.f32 %v5417, %v5505
      %v5507 = vpop.f32.mrf.mxu0
      %v5508 = vadd.f32 %v5419, %v5507
      %5509 = vmatmul.bf16.gmra.mxu0 %v4096
      %v5510 = vpop.f32.mrf.mxu0
      %v5511 = vadd.f32 %v5422, %v5510
      %v5512 = vpop.f32.mrf.mxu0
      %v5513 = vadd.f32 %v5424, %v5512
      %5514 = vmatmul.bf16.gmra.mxu0 %v4108
      %v5515 = vpop.f32.mrf.mxu0
      %v5516 = vadd.f32 %v5427, %v5515
      %v5517 = vpop.f32.mrf.mxu0
      %v5518 = vadd.f32 %v5429, %v5517
      %5519 = vmatmul.bf16.gmra.mxu0 %v4120
      %v5520 = vpop.f32.mrf.mxu0
      %v5521 = vadd.f32 %v5432, %v5520
      %v5522 = vpop.f32.mrf.mxu0
      %v5523 = vadd.f32 %v5434, %v5522
      %5524 = vmatmul.bf16.gmra.mxu0 %v4132
      %v5525 = vpop.f32.mrf.mxu0
      %v5526 = vadd.f32 %v5437, %v5525
      %v5527 = vpop.f32.mrf.mxu0
      %v5528 = vadd.f32 %v5439, %v5527
      %5529 = vmatmul.bf16.gmra.mxu0 0
      %v5530 = vpop.f32.mrf.mxu0
      %v5531 = vadd.f32 %v5442, %v5530
      %v5532 = vpop.f32.mrf.mxu0
      %v5533 = vadd.f32 %v5444, %v5532
      %5534 = vdwg.mxu0
      %5535 = vmatpush.bf16.msra.mxu0 %v5332
      %5536 = vmatpush.bf16.msra.mxu0 %v5331
      %5537 = vmatpush.bf16.msra.mxu0 %v5330
      %5538 = vmatpush.bf16.msra.mxu0 %v5329
      %5539 = vmatpush.bf16.msra.mxu0 %v5328
      %5540 = vmatpush.bf16.msra.mxu0 %v5327
      %5541 = vmatpush.bf16.msra.mxu0 %v5326
      %5542 = vmatpush.bf16.msra.mxu0 %v5325
      %5543 = vmatmul.bf16.gmra.mxu0 %v4186
      %v5544 = vpop.f32.mrf.mxu0
      %v5545 = vadd.f32 %v5456, %v5544
      %v5546 = vpop.f32.mrf.mxu0
      %v5547 = vadd.f32 %v5458, %v5546
      %5548 = vmatmul.bf16.gmra.mxu0 %v4189
      %v5549 = vpop.f32.mrf.mxu0
      %v5550 = vadd.f32 %v5461, %v5549
      %v5551 = vpop.f32.mrf.mxu0
      %v5552 = vadd.f32 %v5463, %v5551
      %5553 = vmatmul.bf16.gmra.mxu0 %v4192
      %v5554 = vpop.f32.mrf.mxu0
      %v5555 = vadd.f32 %v5466, %v5554
      %v5556 = vpop.f32.mrf.mxu0
      %v5557 = vadd.f32 %v5468, %v5556
      %5558 = vmatmul.bf16.gmra.mxu0 %v4195
      %v5559 = vpop.f32.mrf.mxu0
      %v5560 = vadd.f32 %v5471, %v5559
      %v5561 = vpop.f32.mrf.mxu0
      %v5562 = vadd.f32 %v5473, %v5561
      %5563 = vmatmul.bf16.gmra.mxu0 %v4198
      %v5564 = vpop.f32.mrf.mxu0
      %v5565 = vadd.f32 %v5476, %v5564
      %v5566 = vpop.f32.mrf.mxu0
      %v5567 = vadd.f32 %v5478, %v5566
      %5568 = vmatmul.bf16.gmra.mxu0 %v4201
      %v5569 = vpop.f32.mrf.mxu0
      %v5570 = vadd.f32 %v5481, %v5569
      %v5571 = vpop.f32.mrf.mxu0
      %v5572 = vadd.f32 %v5483, %v5571
      %5573 = vmatmul.bf16.gmra.mxu0 %v4204
      %v5574 = vpop.f32.mrf.mxu0
      %v5575 = vadd.f32 %v5486, %v5574
      %v5576 = vpop.f32.mrf.mxu0
      %v5577 = vadd.f32 %v5488, %v5576
      %5578 = vmatmul.bf16.gmra.mxu0 %v4207
      %v5579 = vpop.f32.mrf.mxu0
      %v5580 = vadd.f32 %v5491, %v5579
      %v5581 = vpop.f32.mrf.mxu0
      %v5582 = vadd.f32 %v5493, %v5581
      %5583 = vmatmul.bf16.gmra.mxu0 %v4210
      %v5584 = vpop.f32.mrf.mxu0
      %v5585 = vadd.f32 %v5496, %v5584
      %v5586 = vpop.f32.mrf.mxu0
      %v5587 = vadd.f32 %v5498, %v5586
      %5588 = vmatmul.bf16.gmra.mxu0 %v4213
      %v5589 = vpop.f32.mrf.mxu0
      %v5590 = vadd.f32 %v5501, %v5589
      %v5591 = vpop.f32.mrf.mxu0
      %v5592 = vadd.f32 %v5503, %v5591
      %5593 = vmatmul.bf16.gmra.mxu0 %v4216
      %v5594 = vpop.f32.mrf.mxu0
      %v5595 = vadd.f32 %v5506, %v5594
      %v5596 = vpop.f32.mrf.mxu0
      %v5597 = vadd.f32 %v5508, %v5596
      %5598 = vmatmul.bf16.gmra.mxu0 %v4219
      %v5599 = vpop.f32.mrf.mxu0
      %v5600 = vadd.f32 %v5511, %v5599
      %v5601 = vpop.f32.mrf.mxu0
      %v5602 = vadd.f32 %v5513, %v5601
      %5603 = vmatmul.bf16.gmra.mxu0 %v4222
      %v5604 = vpop.f32.mrf.mxu0
      %v5605 = vadd.f32 %v5516, %v5604
      %v5606 = vpop.f32.mrf.mxu0
      %v5607 = vadd.f32 %v5518, %v5606
      %5608 = vmatmul.bf16.gmra.mxu0 %v4225
      %v5609 = vpop.f32.mrf.mxu0
      %v5610 = vadd.f32 %v5521, %v5609
      %v5611 = vpop.f32.mrf.mxu0
      %v5612 = vadd.f32 %v5523, %v5611
      %5613 = vmatmul.bf16.gmra.mxu0 %v4228
      %v5614 = vpop.f32.mrf.mxu0
      %v5615 = vadd.f32 %v5526, %v5614
      %v5616 = vpop.f32.mrf.mxu0
      %v5617 = vadd.f32 %v5528, %v5616
      %5618 = vmatmul.bf16.gmra.mxu0 0
      %v5619 = vpop.f32.mrf.mxu0
      %v5620 = vadd.f32 %v5531, %v5619
      %v5621 = vpop.f32.mrf.mxu0
      %v5622 = vadd.f32 %v5533, %v5621
      %5623 = vdwg.mxu0
      %v5624 = vadd.f32 %v5085, %v5545
      %v5625 = vadd.f32 %v5087, %v5547
      %v5626 = vadd.f32 %v5090, %v5550
      %v5627 = vadd.f32 %v5092, %v5552
      %v5628 = vadd.f32 %v5095, %v5555
      %v5629 = vadd.f32 %v5097, %v5557
      %v5630 = vadd.f32 %v5100, %v5560
      %v5631 = vadd.f32 %v5102, %v5562
      %v5632 = vadd.f32 %v5105, %v5565
      %v5633 = vadd.f32 %v5107, %v5567
      %v5634 = vadd.f32 %v5110, %v5570
      %v5635 = vadd.f32 %v5112, %v5572
      %v5636 = vadd.f32 %v5115, %v5575
      %v5637 = vadd.f32 %v5117, %v5577
      %v5638 = vadd.f32 %v5120, %v5580
      %v5639 = vadd.f32 %v5122, %v5582
      %v5640 = vadd.f32 %v5125, %v5585
      %v5641 = vadd.f32 %v5127, %v5587
      %v5642 = vadd.f32 %v5130, %v5590
      %v5643 = vadd.f32 %v5132, %v5592
      %v5644 = vadd.f32 %v5135, %v5595
      %v5645 = vadd.f32 %v5137, %v5597
      %v5646 = vadd.f32 %v5140, %v5600
      %v5647 = vadd.f32 %v5142, %v5602
      %v5648 = vadd.f32 %v5145, %v5605
      %v5649 = vadd.f32 %v5147, %v5607
      %v5650 = vadd.f32 %v5150, %v5610
      %v5651 = vadd.f32 %v5152, %v5612
      %v5652 = vadd.f32 %v5155, %v5615
      %v5653 = vadd.f32 %v5157, %v5617
      %v5654 = vadd.f32 %v5160, %v5620
      %v5655 = vadd.f32 %v5162, %v5622
      %v5656 = vld [vmem:[%s6] sm:$0x1]
      %v5658 = vperm.slane %v5656, 0
      %v5660 = vadd.f32 %v5624, %v5658
      %v5661 = vadd.f32 %v5625, %v5658
      %v5662 = vadd.f32 %v5626, %v5658
      %v5663 = vadd.f32 %v5627, %v5658
      %v5664 = vadd.f32 %v5628, %v5658
      %v5665 = vadd.f32 %v5629, %v5658
      %v5666 = vadd.f32 %v5630, %v5658
      %v5667 = vadd.f32 %v5631, %v5658
      %v5668 = vadd.f32 %v5632, %v5658
      %v5669 = vadd.f32 %v5633, %v5658
      %v5670 = vadd.f32 %v5634, %v5658
      %v5671 = vadd.f32 %v5635, %v5658
      %v5672 = vadd.f32 %v5636, %v5658
      %v5673 = vadd.f32 %v5637, %v5658
      %v5674 = vadd.f32 %v5638, %v5658
      %v5675 = vadd.f32 %v5639, %v5658
      %v5676 = vadd.f32 %v5640, %v5658
      %v5677 = vadd.f32 %v5641, %v5658
      %v5678 = vadd.f32 %v5642, %v5658
      %v5679 = vadd.f32 %v5643, %v5658
      %v5680 = vadd.f32 %v5644, %v5658
      %v5681 = vadd.f32 %v5645, %v5658
      %v5682 = vadd.f32 %v5646, %v5658
      %v5683 = vadd.f32 %v5647, %v5658
      %v5684 = vadd.f32 %v5648, %v5658
      %v5685 = vadd.f32 %v5649, %v5658
      %v5686 = vadd.f32 %v5650, %v5658
      %v5687 = vadd.f32 %v5651, %v5658
      %v5688 = vadd.f32 %v5652, %v5658
      %v5689 = vadd.f32 %v5653, %v5658
      %v5690 = vadd.f32 %v5654, %v5658
      %v5691 = vadd.f32 %v5655, %v5658
      %vm5692 = vcmp.ge.f32.partialorder %v5660, 0.0
      %vm5693 = vcmp.ge.f32.partialorder %v5661, 0.0
      %vm5694 = vcmp.ge.f32.partialorder %v5662, 0.0
      %vm5695 = vcmp.ge.f32.partialorder %v5663, 0.0
      %vm5696 = vcmp.ge.f32.partialorder %v5664, 0.0
      %vm5697 = vcmp.ge.f32.partialorder %v5665, 0.0
      %vm5698 = vcmp.ge.f32.partialorder %v5666, 0.0
      %vm5699 = vcmp.ge.f32.partialorder %v5667, 0.0
      %vm5700 = vcmp.ge.f32.partialorder %v5668, 0.0
      %vm5701 = vcmp.ge.f32.partialorder %v5669, 0.0
      %vm5702 = vcmp.ge.f32.partialorder %v5670, 0.0
      %vm5703 = vcmp.ge.f32.partialorder %v5671, 0.0
      %vm5704 = vcmp.ge.f32.partialorder %v5672, 0.0
      %vm5705 = vcmp.ge.f32.partialorder %v5673, 0.0
      %vm5706 = vcmp.ge.f32.partialorder %v5674, 0.0
      %vm5707 = vcmp.ge.f32.partialorder %v5675, 0.0
      %vm5708 = vcmp.ge.f32.partialorder %v5676, 0.0
      %vm5709 = vcmp.ge.f32.partialorder %v5677, 0.0
      %vm5710 = vcmp.ge.f32.partialorder %v5678, 0.0
      %vm5711 = vcmp.ge.f32.partialorder %v5679, 0.0
      %vm5712 = vcmp.ge.f32.partialorder %v5680, 0.0
      %vm5713 = vcmp.ge.f32.partialorder %v5681, 0.0
      %vm5714 = vcmp.ge.f32.partialorder %v5682, 0.0
      %vm5715 = vcmp.ge.f32.partialorder %v5683, 0.0
      %vm5716 = vcmp.ge.f32.partialorder %v5684, 0.0
      %vm5717 = vcmp.ge.f32.partialorder %v5685, 0.0
      %vm5718 = vcmp.ge.f32.partialorder %v5686, 0.0
      %vm5719 = vcmp.ge.f32.partialorder %v5687, 0.0
      %vm5720 = vcmp.ge.f32.partialorder %v5688, 0.0
      %vm5721 = vcmp.ge.f32.partialorder %v5689, 0.0
      %vm5722 = vcmp.ge.f32.partialorder %v5690, 0.0
      %vm5723 = vcmp.ge.f32.partialorder %v5691, 0.0
      %v5724 = vmul.f32 %v5660, 0.1
      %v5725 = vmul.f32 %v5661, 0.1
      %v5726 = vmul.f32 %v5662, 0.1
      %v5727 = vmul.f32 %v5663, 0.1
      %v5728 = vmul.f32 %v5664, 0.1
      %v5729 = vmul.f32 %v5665, 0.1
      %v5730 = vmul.f32 %v5666, 0.1
      %v5731 = vmul.f32 %v5667, 0.1
      %v5732 = vmul.f32 %v5668, 0.1
      %v5733 = vmul.f32 %v5669, 0.1
      %v5734 = vmul.f32 %v5670, 0.1
      %v5735 = vmul.f32 %v5671, 0.1
      %v5736 = vmul.f32 %v5672, 0.1
      %v5737 = vmul.f32 %v5673, 0.1
      %v5738 = vmul.f32 %v5674, 0.1
      %v5739 = vmul.f32 %v5675, 0.1
      %v5740 = vmul.f32 %v5676, 0.1
      %v5741 = vmul.f32 %v5677, 0.1
      %v5742 = vmul.f32 %v5678, 0.1
      %v5743 = vmul.f32 %v5679, 0.1
      %v5744 = vmul.f32 %v5680, 0.1
      %v5745 = vmul.f32 %v5681, 0.1
      %v5746 = vmul.f32 %v5682, 0.1
      %v5747 = vmul.f32 %v5683, 0.1
      %v5748 = vmul.f32 %v5684, 0.1
      %v5749 = vmul.f32 %v5685, 0.1
      %v5750 = vmul.f32 %v5686, 0.1
      %v5751 = vmul.f32 %v5687, 0.1
      %v5752 = vmul.f32 %v5688, 0.1
      %v5753 = vmul.f32 %v5689, 0.1
      %v5754 = vmul.f32 %v5690, 0.1
      %v5755 = vmul.f32 %v5691, 0.1
      %v5756 = vsel %vm5692, %v5660, %v5724
      %v5757 = vsel %vm5693, %v5661, %v5725
      %v5758 = vsel %vm5694, %v5662, %v5726
      %v5759 = vsel %vm5695, %v5663, %v5727
      %v5760 = vsel %vm5696, %v5664, %v5728
      %v5761 = vsel %vm5697, %v5665, %v5729
      %v5762 = vsel %vm5698, %v5666, %v5730
      %v5763 = vsel %vm5699, %v5667, %v5731
      %v5764 = vsel %vm5700, %v5668, %v5732
      %v5765 = vsel %vm5701, %v5669, %v5733
      %v5766 = vsel %vm5702, %v5670, %v5734
      %v5767 = vsel %vm5703, %v5671, %v5735
      %v5768 = vsel %vm5704, %v5672, %v5736
      %v5769 = vsel %vm5705, %v5673, %v5737
      %v5770 = vsel %vm5706, %v5674, %v5738
      %v5771 = vsel %vm5707, %v5675, %v5739
      %v5772 = vsel %vm5708, %v5676, %v5740
      %v5773 = vsel %vm5709, %v5677, %v5741
      %v5774 = vsel %vm5710, %v5678, %v5742
      %v5775 = vsel %vm5711, %v5679, %v5743
      %v5776 = vsel %vm5712, %v5680, %v5744
      %v5777 = vsel %vm5713, %v5681, %v5745
      %v5778 = vsel %vm5714, %v5682, %v5746
      %v5779 = vsel %vm5715, %v5683, %v5747
      %v5780 = vsel %vm5716, %v5684, %v5748
      %v5781 = vsel %vm5717, %v5685, %v5749
      %v5782 = vsel %vm5718, %v5686, %v5750
      %v5783 = vsel %vm5719, %v5687, %v5751
      %v5784 = vsel %vm5720, %v5688, %v5752
      %v5785 = vsel %vm5721, %v5689, %v5753
      %v5786 = vsel %vm5722, %v5690, %v5754
      %v5787 = vsel %vm5723, %v5691, %v5755
      %v5788 = vpack.c.bf16 %v5756, %v5756
      %v5789 = vpack.c.bf16 %v5757, %v5757
      %v5790 = vpack.c.bf16 %v5758, %v5758
      %v5791 = vpack.c.bf16 %v5759, %v5759
      %v5792 = vpack.c.bf16 %v5760, %v5760
      %v5793 = vpack.c.bf16 %v5761, %v5761
      %v5794 = vpack.c.bf16 %v5762, %v5762
      %v5795 = vpack.c.bf16 %v5763, %v5763
      %v5796 = vpack.c.bf16 %v5764, %v5764
      %v5797 = vpack.c.bf16 %v5765, %v5765
      %v5798 = vpack.c.bf16 %v5766, %v5766
      %v5799 = vpack.c.bf16 %v5767, %v5767
      %v5800 = vpack.c.bf16 %v5768, %v5768
      %v5801 = vpack.c.bf16 %v5769, %v5769
      %v5802 = vpack.c.bf16 %v5770, %v5770
      %v5803 = vpack.c.bf16 %v5771, %v5771
      %v5804 = vpack.c.bf16 %v5772, %v5772
      %v5805 = vpack.c.bf16 %v5773, %v5773
      %v5806 = vpack.c.bf16 %v5774, %v5774
      %v5807 = vpack.c.bf16 %v5775, %v5775
      %v5808 = vpack.c.bf16 %v5776, %v5776
      %v5809 = vpack.c.bf16 %v5777, %v5777
      %v5810 = vpack.c.bf16 %v5778, %v5778
      %v5811 = vpack.c.bf16 %v5779, %v5779
      %v5812 = vpack.c.bf16 %v5780, %v5780
      %v5813 = vpack.c.bf16 %v5781, %v5781
      %v5814 = vpack.c.bf16 %v5782, %v5782
      %v5815 = vpack.c.bf16 %v5783, %v5783
      %v5816 = vpack.c.bf16 %v5784, %v5784
      %v5817 = vpack.c.bf16 %v5785, %v5785
      %v5818 = vpack.c.bf16 %v5786, %v5786
      %v5819 = vpack.c.bf16 %v5787, %v5787
      %v5852 = vunpack.c.l.b16 %v5788
      %v5853 = vunpack.c.l.b16 %v5789
      %v5854 = vunpack.c.l.b16 %v5790
      %v5855 = vunpack.c.l.b16 %v5791
      %v5856 = vunpack.c.l.b16 %v5792
      %v5857 = vunpack.c.l.b16 %v5793
      %v5858 = vunpack.c.l.b16 %v5794
      %v5859 = vunpack.c.l.b16 %v5795
      %v5860 = vunpack.c.l.b16 %v5796
      %v5861 = vunpack.c.l.b16 %v5797
      %v5862 = vunpack.c.l.b16 %v5798
      %v5863 = vunpack.c.l.b16 %v5799
      %v5864 = vunpack.c.l.b16 %v5800
      %v5865 = vunpack.c.l.b16 %v5801
      %v5866 = vunpack.c.l.b16 %v5802
      %v5867 = vunpack.c.l.b16 %v5803
      %v5868 = vunpack.c.l.b16 %v5804
      %v5869 = vunpack.c.l.b16 %v5805
      %v5870 = vunpack.c.l.b16 %v5806
      %v5871 = vunpack.c.l.b16 %v5807
      %v5872 = vunpack.c.l.b16 %v5808
      %v5873 = vunpack.c.l.b16 %v5809
      %v5874 = vunpack.c.l.b16 %v5810
      %v5875 = vunpack.c.l.b16 %v5811
      %v5876 = vunpack.c.l.b16 %v5812
      %v5877 = vunpack.c.l.b16 %v5813
      %v5878 = vunpack.c.l.b16 %v5814
      %v5879 = vunpack.c.l.b16 %v5815
      %v5880 = vunpack.c.l.b16 %v5816
      %v5881 = vunpack.c.l.b16 %v5817
      %v5882 = vunpack.c.l.b16 %v5818
      %v5883 = vunpack.c.l.b16 %v5819
      %v5884 = vpack.c.b16 %v5853, %v5852
      %v5885 = vpack.c.b16 %v5855, %v5854
      %v5886 = vpack.c.b16 %v5857, %v5856
      %v5887 = vpack.c.b16 %v5859, %v5858
      %v5888 = vpack.c.b16 %v5861, %v5860
      %v5889 = vpack.c.b16 %v5863, %v5862
      %v5890 = vpack.c.b16 %v5865, %v5864
      %v5891 = vpack.c.b16 %v5867, %v5866
      %v5892 = vpack.c.b16 %v5869, %v5868
      %v5893 = vpack.c.b16 %v5871, %v5870
      %v5894 = vpack.c.b16 %v5873, %v5872
      %v5895 = vpack.c.b16 %v5875, %v5874
      %v5896 = vpack.c.b16 %v5877, %v5876
      %v5897 = vpack.c.b16 %v5879, %v5878
      %v5898 = vpack.c.b16 %v5881, %v5880
      %v5899 = vpack.c.b16 %v5883, %v5882
      %v5901 = vshrl.u32 %v5884, 16
      %v5903 = vrot.slane %v5901, 7
      %v5904 = vshll.u32 %v5884, 16
      %v5906 = vor.u32 %v5903, %v5904
      %v5908 = vshrl.u32 %v5885, 16
      %v5910 = vrot.slane %v5908, 7
      %v5911 = vshll.u32 %v5885, 16
      %v5913 = vor.u32 %v5910, %v5911
      %v5915 = vshrl.u32 %v5886, 16
      %v5917 = vrot.slane %v5915, 7
      %v5918 = vshll.u32 %v5886, 16
      %v5920 = vor.u32 %v5917, %v5918
      %v5922 = vshrl.u32 %v5887, 16
      %v5924 = vrot.slane %v5922, 7
      %v5925 = vshll.u32 %v5887, 16
      %v5927 = vor.u32 %v5924, %v5925
      %v5929 = vshrl.u32 %v5888, 16
      %v5931 = vrot.slane %v5929, 7
      %v5932 = vshll.u32 %v5888, 16
      %v5934 = vor.u32 %v5931, %v5932
      %v5936 = vshrl.u32 %v5889, 16
      %v5938 = vrot.slane %v5936, 7
      %v5939 = vshll.u32 %v5889, 16
      %v5941 = vor.u32 %v5938, %v5939
      %v5943 = vshrl.u32 %v5890, 16
      %v5945 = vrot.slane %v5943, 7
      %v5946 = vshll.u32 %v5890, 16
      %v5948 = vor.u32 %v5945, %v5946
      %v5950 = vshrl.u32 %v5891, 16
      %v5952 = vrot.slane %v5950, 7
      %v5953 = vshll.u32 %v5891, 16
      %v5955 = vor.u32 %v5952, %v5953
      %v5957 = vshrl.u32 %v5892, 16
      %v5959 = vrot.slane %v5957, 7
      %v5960 = vshll.u32 %v5892, 16
      %v5962 = vor.u32 %v5959, %v5960
      %v5964 = vshrl.u32 %v5893, 16
      %v5966 = vrot.slane %v5964, 7
      %v5967 = vshll.u32 %v5893, 16
      %v5969 = vor.u32 %v5966, %v5967
      %v5971 = vshrl.u32 %v5894, 16
      %v5973 = vrot.slane %v5971, 7
      %v5974 = vshll.u32 %v5894, 16
      %v5976 = vor.u32 %v5973, %v5974
      %v5978 = vshrl.u32 %v5895, 16
      %v5980 = vrot.slane %v5978, 7
      %v5981 = vshll.u32 %v5895, 16
      %v5983 = vor.u32 %v5980, %v5981
      %v5985 = vshrl.u32 %v5896, 16
      %v5987 = vrot.slane %v5985, 7
      %v5988 = vshll.u32 %v5896, 16
      %v5990 = vor.u32 %v5987, %v5988
      %v5992 = vshrl.u32 %v5897, 16
      %v5994 = vrot.slane %v5992, 7
      %v5995 = vshll.u32 %v5897, 16
      %v5997 = vor.u32 %v5994, %v5995
      %v5999 = vshrl.u32 %v5898, 16
      %v6001 = vrot.slane %v5999, 7
      %v6002 = vshll.u32 %v5898, 16
      %v6004 = vor.u32 %v6001, %v6002
      %v6006 = vshrl.u32 %v5899, 16
      %v6008 = vrot.slane %v6006, 7
      %v6009 = vshll.u32 %v5899, 16
      %v6011 = vor.u32 %v6008, %v6009
      %v6044 = vsel %vm698, 0, %v5906
      %v6045 = vsel %vm698, 0, %v5913
      %v6046 = vsel %vm698, 0, %v5920
      %v6047 = vsel %vm698, 0, %v5927
      %v6048 = vsel %vm698, 0, %v5934
      %v6049 = vsel %vm698, 0, %v5941
      %v6050 = vsel %vm698, 0, %v5948
      %v6051 = vsel %vm698, 0, %v5955
      %v6052 = vsel %vm698, 0, %v5962
      %v6053 = vsel %vm698, 0, %v5969
      %v6054 = vsel %vm698, 0, %v5976
      %v6055 = vsel %vm698, 0, %v5983
      %v6056 = vsel %vm698, 0, %v5990
      %v6057 = vsel %vm698, 0, %v5997
      %v6058 = vsel %vm698, 0, %v6004
      %v6059 = vsel %vm698, 0, %v6011
      %v6060 = vsel %vm698, %v5903, 0
      %v6061 = vsel %vm698, %v5910, 0
      %v6062 = vsel %vm698, %v5917, 0
      %v6063 = vsel %vm698, %v5924, 0
      %v6064 = vsel %vm698, %v5931, 0
      %v6065 = vsel %vm698, %v5938, 0
      %v6066 = vsel %vm698, %v5945, 0
      %v6067 = vsel %vm698, %v5952, 0
      %v6068 = vsel %vm698, %v5959, 0
      %v6069 = vsel %vm698, %v5966, 0
      %v6070 = vsel %vm698, %v5973, 0
      %v6071 = vsel %vm698, %v5980, 0
      %v6072 = vsel %vm698, %v5987, 0
      %v6073 = vsel %vm698, %v5994, 0
      %v6074 = vsel %vm698, %v6001, 0
      %v6075 = vsel %vm698, %v6008, 0
      %v6077 = vshrl.u32 %v6044, 16
      %v6079 = vshll.u32 %v6044, 16
      %v6081 = vrot.slane %v6079, 1
      %v6082 = vor.u32 %v6077, %v6081
      %v6084 = vshll.u32 %v6060, 16
      %v6086 = vrot.slane %v6084, 1
      %v6087 = vsel %vm731, %v6082, %v6086
      %v6089 = vshrl.u32 %v6045, 16
      %v6091 = vshll.u32 %v6045, 16
      %v6093 = vrot.slane %v6091, 1
      %v6094 = vor.u32 %v6089, %v6093
      %v6096 = vshll.u32 %v6061, 16
      %v6098 = vrot.slane %v6096, 1
      %v6099 = vsel %vm731, %v6094, %v6098
      %v6101 = vshrl.u32 %v6046, 16
      %v6103 = vshll.u32 %v6046, 16
      %v6105 = vrot.slane %v6103, 1
      %v6106 = vor.u32 %v6101, %v6105
      %v6108 = vshll.u32 %v6062, 16
      %v6110 = vrot.slane %v6108, 1
      %v6111 = vsel %vm731, %v6106, %v6110
      %v6113 = vshrl.u32 %v6047, 16
      %v6115 = vshll.u32 %v6047, 16
      %v6117 = vrot.slane %v6115, 1
      %v6118 = vor.u32 %v6113, %v6117
      %v6120 = vshll.u32 %v6063, 16
      %v6122 = vrot.slane %v6120, 1
      %v6123 = vsel %vm731, %v6118, %v6122
      %v6125 = vshrl.u32 %v6048, 16
      %v6127 = vshll.u32 %v6048, 16
      %v6129 = vrot.slane %v6127, 1
      %v6130 = vor.u32 %v6125, %v6129
      %v6132 = vshll.u32 %v6064, 16
      %v6134 = vrot.slane %v6132, 1
      %v6135 = vsel %vm731, %v6130, %v6134
      %v6137 = vshrl.u32 %v6049, 16
      %v6139 = vshll.u32 %v6049, 16
      %v6141 = vrot.slane %v6139, 1
      %v6142 = vor.u32 %v6137, %v6141
      %v6144 = vshll.u32 %v6065, 16
      %v6146 = vrot.slane %v6144, 1
      %v6147 = vsel %vm731, %v6142, %v6146
      %v6149 = vshrl.u32 %v6050, 16
      %v6151 = vshll.u32 %v6050, 16
      %v6153 = vrot.slane %v6151, 1
      %v6154 = vor.u32 %v6149, %v6153
      %v6156 = vshll.u32 %v6066, 16
      %v6158 = vrot.slane %v6156, 1
      %v6159 = vsel %vm731, %v6154, %v6158
      %v6161 = vshrl.u32 %v6051, 16
      %v6163 = vshll.u32 %v6051, 16
      %v6165 = vrot.slane %v6163, 1
      %v6166 = vor.u32 %v6161, %v6165
      %v6168 = vshll.u32 %v6067, 16
      %v6170 = vrot.slane %v6168, 1
      %v6171 = vsel %vm731, %v6166, %v6170
      %v6173 = vshrl.u32 %v6052, 16
      %v6175 = vshll.u32 %v6052, 16
      %v6177 = vrot.slane %v6175, 1
      %v6178 = vor.u32 %v6173, %v6177
      %v6180 = vshll.u32 %v6068, 16
      %v6182 = vrot.slane %v6180, 1
      %v6183 = vsel %vm731, %v6178, %v6182
      %v6185 = vshrl.u32 %v6053, 16
      %v6187 = vshll.u32 %v6053, 16
      %v6189 = vrot.slane %v6187, 1
      %v6190 = vor.u32 %v6185, %v6189
      %v6192 = vshll.u32 %v6069, 16
      %v6194 = vrot.slane %v6192, 1
      %v6195 = vsel %vm731, %v6190, %v6194
      %v6197 = vshrl.u32 %v6054, 16
      %v6199 = vshll.u32 %v6054, 16
      %v6201 = vrot.slane %v6199, 1
      %v6202 = vor.u32 %v6197, %v6201
      %v6204 = vshll.u32 %v6070, 16
      %v6206 = vrot.slane %v6204, 1
      %v6207 = vsel %vm731, %v6202, %v6206
      %v6209 = vshrl.u32 %v6055, 16
      %v6211 = vshll.u32 %v6055, 16
      %v6213 = vrot.slane %v6211, 1
      %v6214 = vor.u32 %v6209, %v6213
      %v6216 = vshll.u32 %v6071, 16
      %v6218 = vrot.slane %v6216, 1
      %v6219 = vsel %vm731, %v6214, %v6218
      %v6221 = vshrl.u32 %v6056, 16
      %v6223 = vshll.u32 %v6056, 16
      %v6225 = vrot.slane %v6223, 1
      %v6226 = vor.u32 %v6221, %v6225
      %v6228 = vshll.u32 %v6072, 16
      %v6230 = vrot.slane %v6228, 1
      %v6231 = vsel %vm731, %v6226, %v6230
      %v6233 = vshrl.u32 %v6057, 16
      %v6235 = vshll.u32 %v6057, 16
      %v6237 = vrot.slane %v6235, 1
      %v6238 = vor.u32 %v6233, %v6237
      %v6240 = vshll.u32 %v6073, 16
      %v6242 = vrot.slane %v6240, 1
      %v6243 = vsel %vm731, %v6238, %v6242
      %v6245 = vshrl.u32 %v6058, 16
      %v6247 = vshll.u32 %v6058, 16
      %v6249 = vrot.slane %v6247, 1
      %v6250 = vor.u32 %v6245, %v6249
      %v6252 = vshll.u32 %v6074, 16
      %v6254 = vrot.slane %v6252, 1
      %v6255 = vsel %vm731, %v6250, %v6254
      %v6257 = vshrl.u32 %v6059, 16
      %v6259 = vshll.u32 %v6059, 16
      %v6261 = vrot.slane %v6259, 1
      %v6262 = vor.u32 %v6257, %v6261
      %v6264 = vshll.u32 %v6075, 16
      %v6266 = vrot.slane %v6264, 1
      %v6267 = vsel %vm731, %v6262, %v6266
      %6268 = vrot.lane.b32.xlu0 %v6087, 64
      %v6269 = vpop.permute.xlu0 %6268
      %6270 = vrot.lane.b32.xlu0 %v6099, 64
      %v6271 = vpop.permute.xlu0 %6270
      %6272 = vrot.lane.b32.xlu0 %v6111, 64
      %v6273 = vpop.permute.xlu0 %6272
      %6274 = vrot.lane.b32.xlu0 %v6123, 64
      %v6275 = vpop.permute.xlu0 %6274
      %6276 = vrot.lane.b32.xlu0 %v6135, 64
      %v6277 = vpop.permute.xlu0 %6276
      %6278 = vrot.lane.b32.xlu0 %v6147, 64
      %v6279 = vpop.permute.xlu0 %6278
      %6280 = vrot.lane.b32.xlu0 %v6159, 64
      %v6281 = vpop.permute.xlu0 %6280
      %6282 = vrot.lane.b32.xlu0 %v6171, 64
      %v6283 = vpop.permute.xlu0 %6282
      %6284 = vrot.lane.b32.xlu0 %v6183, 64
      %v6285 = vpop.permute.xlu0 %6284
      %6286 = vrot.lane.b32.xlu0 %v6195, 64
      %v6287 = vpop.permute.xlu0 %6286
      %6288 = vrot.lane.b32.xlu0 %v6207, 64
      %v6289 = vpop.permute.xlu0 %6288
      %6290 = vrot.lane.b32.xlu0 %v6219, 64
      %v6291 = vpop.permute.xlu0 %6290
      %6292 = vrot.lane.b32.xlu0 %v6231, 64
      %v6293 = vpop.permute.xlu0 %6292
      %6294 = vrot.lane.b32.xlu0 %v6243, 64
      %v6295 = vpop.permute.xlu0 %6294
      %6296 = vrot.lane.b32.xlu0 %v6255, 64
      %v6297 = vpop.permute.xlu0 %6296
      %6298 = vrot.lane.b32.xlu0 %v6267, 64
      %v6299 = vpop.permute.xlu0 %6298
      %v6332 = vrot.slane %v6044, 1
      %v6333 = vrot.slane %v6060, 1
      %v6334 = vsel %vm972, %v6332, %v6333
      %v6335 = vrot.slane %v6045, 1
      %v6336 = vrot.slane %v6061, 1
      %v6337 = vsel %vm972, %v6335, %v6336
      %v6338 = vrot.slane %v6046, 1
      %v6339 = vrot.slane %v6062, 1
      %v6340 = vsel %vm972, %v6338, %v6339
      %v6341 = vrot.slane %v6047, 1
      %v6342 = vrot.slane %v6063, 1
      %v6343 = vsel %vm972, %v6341, %v6342
      %v6344 = vrot.slane %v6048, 1
      %v6345 = vrot.slane %v6064, 1
      %v6346 = vsel %vm972, %v6344, %v6345
      %v6347 = vrot.slane %v6049, 1
      %v6348 = vrot.slane %v6065, 1
      %v6349 = vsel %vm972, %v6347, %v6348
      %v6350 = vrot.slane %v6050, 1
      %v6351 = vrot.slane %v6066, 1
      %v6352 = vsel %vm972, %v6350, %v6351
      %v6353 = vrot.slane %v6051, 1
      %v6354 = vrot.slane %v6067, 1
      %v6355 = vsel %vm972, %v6353, %v6354
      %v6356 = vrot.slane %v6052, 1
      %v6357 = vrot.slane %v6068, 1
      %v6358 = vsel %vm972, %v6356, %v6357
      %v6359 = vrot.slane %v6053, 1
      %v6360 = vrot.slane %v6069, 1
      %v6361 = vsel %vm972, %v6359, %v6360
      %v6362 = vrot.slane %v6054, 1
      %v6363 = vrot.slane %v6070, 1
      %v6364 = vsel %vm972, %v6362, %v6363
      %v6365 = vrot.slane %v6055, 1
      %v6366 = vrot.slane %v6071, 1
      %v6367 = vsel %vm972, %v6365, %v6366
      %v6368 = vrot.slane %v6056, 1
      %v6369 = vrot.slane %v6072, 1
      %v6370 = vsel %vm972, %v6368, %v6369
      %v6371 = vrot.slane %v6057, 1
      %v6372 = vrot.slane %v6073, 1
      %v6373 = vsel %vm972, %v6371, %v6372
      %v6374 = vrot.slane %v6058, 1
      %v6375 = vrot.slane %v6074, 1
      %v6376 = vsel %vm972, %v6374, %v6375
      %v6377 = vrot.slane %v6059, 1
      %v6378 = vrot.slane %v6075, 1
      %v6379 = vsel %vm972, %v6377, %v6378
      %vm6380 = vcmask 523264
      %v6382 = vsel %vm6380, %v6044, %v6269
      %v6385 = vsel %vm6380, %v6045, %v6271
      %v6388 = vsel %vm6380, %v6046, %v6273
      %v6391 = vsel %vm6380, %v6047, %v6275
      %v6394 = vsel %vm6380, %v6048, %v6277
      %v6397 = vsel %vm6380, %v6049, %v6279
      %v6400 = vsel %vm6380, %v6050, %v6281
      %v6403 = vsel %vm6380, %v6051, %v6283
      %v6406 = vsel %vm6380, %v6052, %v6285
      %v6409 = vsel %vm6380, %v6053, %v6287
      %v6412 = vsel %vm6380, %v6054, %v6289
      %v6415 = vsel %vm6380, %v6055, %v6291
      %v6418 = vsel %vm6380, %v6056, %v6293
      %v6421 = vsel %vm6380, %v6057, %v6295
      %v6424 = vsel %vm6380, %v6058, %v6297
      %v6427 = vsel %vm6380, %v6059, %v6299
      %v6429 = vld [vmem:[%s7] sm:$0xf]
      %v6430 = vld [vmem:[%s7 + $0x4] sm:$0xf]
      %v6431 = vld [vmem:[%s7 + $0x8] sm:$0xf]
      %v6432 = vld [vmem:[%s7 + $0xc] sm:$0xf]
      %v6433 = vld [vmem:[%s7 + $0x10] sm:$0xf]
      %v6434 = vld [vmem:[%s7 + $0x14] sm:$0xf]
      %v6435 = vld [vmem:[%s7 + $0x18] sm:$0xf]
      %v6436 = vld [vmem:[%s7 + $0x1c] sm:$0xf]
      %v6437 = vld [vmem:[%s7 + $0x20] sm:$0xf]
      %v6438 = vld [vmem:[%s7 + $0x24] sm:$0xf]
      %v6439 = vld [vmem:[%s7 + $0x28] sm:$0xf]
      %v6440 = vld [vmem:[%s7 + $0x2c] sm:$0xf]
      %v6441 = vld [vmem:[%s7 + $0x30] sm:$0xf]
      %v6442 = vld [vmem:[%s7 + $0x34] sm:$0xf]
      %v6443 = vld [vmem:[%s7 + $0x38] sm:$0xf]
      %v6444 = vld [vmem:[%s7 + $0x3c] sm:$0xf]
      %v6445 = vld [vmem:[%s7 + $0x40] sm:$0xf]
      %v6446 = vld [vmem:[%s7 + $0x44] sm:$0xf]
      %v6447 = vld [vmem:[%s7 + $0x48] sm:$0xf]
      %v6448 = vld [vmem:[%s7 + $0x4c] sm:$0xf]
      %v6449 = vld [vmem:[%s7 + $0x50] sm:$0xf]
      %v6450 = vld [vmem:[%s7 + $0x54] sm:$0xf]
      %v6451 = vld [vmem:[%s7 + $0x58] sm:$0xf]
      %v6452 = vld [vmem:[%s7 + $0x5c] sm:$0xf]
      %s6453 = scalar_lea.vmem %s7, 96
      %v6454 = vld [vmem:[%s6453] sm:$0xf]
      %v6455 = vld [vmem:[%s6453 + $0x4] sm:$0xf]
      %v6456 = vld [vmem:[%s6453 + $0x8] sm:$0xf]
      %v6457 = vld [vmem:[%s6453 + $0xc] sm:$0xf]
      %v6458 = vld [vmem:[%s6453 + $0x10] sm:$0xf]
      %v6459 = vld [vmem:[%s6453 + $0x14] sm:$0xf]
      %v6460 = vld [vmem:[%s6453 + $0x18] sm:$0xf]
      %v6461 = vld [vmem:[%s6453 + $0x1c] sm:$0xf]
      %v6462 = vld [vmem:[%s6453 + $0x20] sm:$0xf]
      %v6463 = vld [vmem:[%s6453 + $0x24] sm:$0xf]
      %v6464 = vld [vmem:[%s6453 + $0x28] sm:$0xf]
      %v6465 = vld [vmem:[%s6453 + $0x2c] sm:$0xf]
      %v6466 = vld [vmem:[%s6453 + $0x30] sm:$0xf]
      %v6467 = vld [vmem:[%s6453 + $0x34] sm:$0xf]
      %v6468 = vld [vmem:[%s6453 + $0x38] sm:$0xf]
      %v6469 = vld [vmem:[%s6453 + $0x3c] sm:$0xf]
      %v6470 = vld [vmem:[%s6453 + $0x40] sm:$0xf]
      %v6471 = vld [vmem:[%s6453 + $0x44] sm:$0xf]
      %v6472 = vld [vmem:[%s6453 + $0x48] sm:$0xf]
      %v6473 = vld [vmem:[%s6453 + $0x4c] sm:$0xf]
      %v6474 = vld [vmem:[%s6453 + $0x50] sm:$0xf]
      %v6475 = vld [vmem:[%s6453 + $0x54] sm:$0xf]
      %v6476 = vld [vmem:[%s6453 + $0x58] sm:$0xf]
      %v6477 = vld [vmem:[%s6453 + $0x5c] sm:$0xf]
      %v6502 = vunpack.c.l.b16 %v6454
      %v6503 = vunpack.c.l.b16 %v6455
      %v6504 = vunpack.c.l.b16 %v6456
      %v6505 = vunpack.c.l.b16 %v6457
      %v6506 = vunpack.c.l.b16 %v6458
      %v6507 = vunpack.c.l.b16 %v6459
      %v6508 = vunpack.c.l.b16 %v6460
      %v6509 = vunpack.c.l.b16 %v6461
      %v6510 = vunpack.c.l.b16 %v6462
      %v6511 = vunpack.c.l.b16 %v6463
      %v6512 = vunpack.c.l.b16 %v6464
      %v6513 = vunpack.c.l.b16 %v6465
      %v6514 = vunpack.c.l.b16 %v6466
      %v6515 = vunpack.c.l.b16 %v6467
      %v6516 = vunpack.c.l.b16 %v6468
      %v6517 = vunpack.c.l.b16 %v6469
      %v6518 = vunpack.c.l.b16 %v6470
      %v6519 = vunpack.c.l.b16 %v6471
      %v6520 = vunpack.c.l.b16 %v6472
      %v6521 = vunpack.c.l.b16 %v6473
      %v6522 = vunpack.c.l.b16 %v6474
      %v6523 = vunpack.c.l.b16 %v6475
      %v6524 = vunpack.c.l.b16 %v6476
      %v6525 = vunpack.c.l.b16 %v6477
      %v6526 = vpack.c.b16 %v6503, %v6502
      %v6527 = vpack.c.b16 %v6505, %v6504
      %v6528 = vpack.c.b16 %v6507, %v6506
      %v6529 = vpack.c.b16 %v6509, %v6508
      %v6530 = vpack.c.b16 %v6511, %v6510
      %v6531 = vpack.c.b16 %v6513, %v6512
      %v6532 = vpack.c.b16 %v6515, %v6514
      %v6533 = vpack.c.b16 %v6517, %v6516
      %v6534 = vpack.c.b16 %v6519, %v6518
      %v6535 = vpack.c.b16 %v6521, %v6520
      %v6536 = vpack.c.b16 %v6523, %v6522
      %v6537 = vpack.c.b16 %v6525, %v6524
      %v6551 = vsel %vm6380, %v6334, 0
      %v6554 = vsel %vm6380, %v6337, 0
      %v6557 = vsel %vm6380, %v6340, 0
      %v6560 = vsel %vm6380, %v6343, 0
      %v6563 = vsel %vm6380, %v6346, 0
      %v6566 = vsel %vm6380, %v6349, 0
      %v6569 = vsel %vm6380, %v6352, 0
      %v6572 = vsel %vm6380, %v6355, 0
      %v6575 = vsel %vm6380, %v6358, 0
      %v6578 = vsel %vm6380, %v6361, 0
      %v6581 = vsel %vm6380, %v6364, 0
      %v6584 = vsel %vm6380, %v6367, 0
      %v6587 = vsel %vm6380, %v6370, 0
      %v6590 = vsel %vm6380, %v6373, 0
      %v6593 = vsel %vm6380, %v6376, 0
      %v6596 = vsel %vm6380, %v6379, 0
      %6598 = vmatpush.bf16.msra.mxu0 %v6533
      %6599 = vmatpush.bf16.msra.mxu0 %v6532
      %6600 = vmatpush.bf16.msra.mxu0 %v6531
      %6601 = vmatpush.bf16.msra.mxu0 %v6530
      %6602 = vmatpush.bf16.msra.mxu0 %v6529
      %6603 = vmatpush.bf16.msra.mxu0 %v6528
      %6604 = vmatpush.bf16.msra.mxu0 %v6527
      %6605 = vmatpush.bf16.msra.mxu0 %v6526
      %6606 = vmatmul.bf16.gmra.mxu0 %v6382
      %v6607 = vpop.f32.mrf.mxu0
      %v6608 = vadd.f32 0.0, %v6607
      %v6609 = vpop.f32.mrf.mxu0
      %v6610 = vadd.f32 0.0, %v6609
      %6611 = vmatmul.bf16.gmra.mxu0 %v6385
      %v6612 = vpop.f32.mrf.mxu0
      %v6613 = vadd.f32 0.0, %v6612
      %v6614 = vpop.f32.mrf.mxu0
      %v6615 = vadd.f32 0.0, %v6614
      %6616 = vmatmul.bf16.gmra.mxu0 %v6388
      %v6617 = vpop.f32.mrf.mxu0
      %v6618 = vadd.f32 0.0, %v6617
      %v6619 = vpop.f32.mrf.mxu0
      %v6620 = vadd.f32 0.0, %v6619
      %6621 = vmatmul.bf16.gmra.mxu0 %v6391
      %v6622 = vpop.f32.mrf.mxu0
      %v6623 = vadd.f32 0.0, %v6622
      %v6624 = vpop.f32.mrf.mxu0
      %v6625 = vadd.f32 0.0, %v6624
      %6626 = vmatmul.bf16.gmra.mxu0 %v6394
      %v6627 = vpop.f32.mrf.mxu0
      %v6628 = vadd.f32 0.0, %v6627
      %v6629 = vpop.f32.mrf.mxu0
      %v6630 = vadd.f32 0.0, %v6629
      %6631 = vmatmul.bf16.gmra.mxu0 %v6397
      %v6632 = vpop.f32.mrf.mxu0
      %v6633 = vadd.f32 0.0, %v6632
      %v6634 = vpop.f32.mrf.mxu0
      %v6635 = vadd.f32 0.0, %v6634
      %6636 = vmatmul.bf16.gmra.mxu0 %v6400
      %v6637 = vpop.f32.mrf.mxu0
      %v6638 = vadd.f32 0.0, %v6637
      %v6639 = vpop.f32.mrf.mxu0
      %v6640 = vadd.f32 0.0, %v6639
      %6641 = vmatmul.bf16.gmra.mxu0 %v6403
      %v6642 = vpop.f32.mrf.mxu0
      %v6643 = vadd.f32 0.0, %v6642
      %v6644 = vpop.f32.mrf.mxu0
      %v6645 = vadd.f32 0.0, %v6644
      %6646 = vmatmul.bf16.gmra.mxu0 %v6406
      %v6647 = vpop.f32.mrf.mxu0
      %v6648 = vadd.f32 0.0, %v6647
      %v6649 = vpop.f32.mrf.mxu0
      %v6650 = vadd.f32 0.0, %v6649
      %6651 = vmatmul.bf16.gmra.mxu0 %v6409
      %v6652 = vpop.f32.mrf.mxu0
      %v6653 = vadd.f32 0.0, %v6652
      %v6654 = vpop.f32.mrf.mxu0
      %v6655 = vadd.f32 0.0, %v6654
      %6656 = vmatmul.bf16.gmra.mxu0 %v6412
      %v6657 = vpop.f32.mrf.mxu0
      %v6658 = vadd.f32 0.0, %v6657
      %v6659 = vpop.f32.mrf.mxu0
      %v6660 = vadd.f32 0.0, %v6659
      %6661 = vmatmul.bf16.gmra.mxu0 %v6415
      %v6662 = vpop.f32.mrf.mxu0
      %v6663 = vadd.f32 0.0, %v6662
      %v6664 = vpop.f32.mrf.mxu0
      %v6665 = vadd.f32 0.0, %v6664
      %6666 = vmatmul.bf16.gmra.mxu0 %v6418
      %v6667 = vpop.f32.mrf.mxu0
      %v6668 = vadd.f32 0.0, %v6667
      %v6669 = vpop.f32.mrf.mxu0
      %v6670 = vadd.f32 0.0, %v6669
      %6671 = vmatmul.bf16.gmra.mxu0 %v6421
      %v6672 = vpop.f32.mrf.mxu0
      %v6673 = vadd.f32 0.0, %v6672
      %v6674 = vpop.f32.mrf.mxu0
      %v6675 = vadd.f32 0.0, %v6674
      %6676 = vmatmul.bf16.gmra.mxu0 %v6424
      %v6677 = vpop.f32.mrf.mxu0
      %v6678 = vadd.f32 0.0, %v6677
      %v6679 = vpop.f32.mrf.mxu0
      %v6680 = vadd.f32 0.0, %v6679
      %6681 = vmatmul.bf16.gmra.mxu0 %v6427
      %v6682 = vpop.f32.mrf.mxu0
      %v6683 = vadd.f32 0.0, %v6682
      %v6684 = vpop.f32.mrf.mxu0
      %v6685 = vadd.f32 0.0, %v6684
      %6686 = vdwg.mxu0
      %6687 = vmatpush.bf16.msra.mxu0 0
      %6688 = vmatpush.bf16.msra.mxu0 0
      %6689 = vmatpush.bf16.msra.mxu0 0
      %6690 = vmatpush.bf16.msra.mxu0 0
      %6691 = vmatpush.bf16.msra.mxu0 %v6537
      %6692 = vmatpush.bf16.msra.mxu0 %v6536
      %6693 = vmatpush.bf16.msra.mxu0 %v6535
      %6694 = vmatpush.bf16.msra.mxu0 %v6534
      %6695 = vmatmul.bf16.gmra.mxu0 %v6551
      %v6696 = vpop.f32.mrf.mxu0
      %v6697 = vadd.f32 %v6608, %v6696
      %v6698 = vpop.f32.mrf.mxu0
      %v6699 = vadd.f32 %v6610, %v6698
      %6700 = vmatmul.bf16.gmra.mxu0 %v6554
      %v6701 = vpop.f32.mrf.mxu0
      %v6702 = vadd.f32 %v6613, %v6701
      %v6703 = vpop.f32.mrf.mxu0
      %v6704 = vadd.f32 %v6615, %v6703
      %6705 = vmatmul.bf16.gmra.mxu0 %v6557
      %v6706 = vpop.f32.mrf.mxu0
      %v6707 = vadd.f32 %v6618, %v6706
      %v6708 = vpop.f32.mrf.mxu0
      %v6709 = vadd.f32 %v6620, %v6708
      %6710 = vmatmul.bf16.gmra.mxu0 %v6560
      %v6711 = vpop.f32.mrf.mxu0
      %v6712 = vadd.f32 %v6623, %v6711
      %v6713 = vpop.f32.mrf.mxu0
      %v6714 = vadd.f32 %v6625, %v6713
      %6715 = vmatmul.bf16.gmra.mxu0 %v6563
      %v6716 = vpop.f32.mrf.mxu0
      %v6717 = vadd.f32 %v6628, %v6716
      %v6718 = vpop.f32.mrf.mxu0
      %v6719 = vadd.f32 %v6630, %v6718
      %6720 = vmatmul.bf16.gmra.mxu0 %v6566
      %v6721 = vpop.f32.mrf.mxu0
      %v6722 = vadd.f32 %v6633, %v6721
      %v6723 = vpop.f32.mrf.mxu0
      %v6724 = vadd.f32 %v6635, %v6723
      %6725 = vmatmul.bf16.gmra.mxu0 %v6569
      %v6726 = vpop.f32.mrf.mxu0
      %v6727 = vadd.f32 %v6638, %v6726
      %v6728 = vpop.f32.mrf.mxu0
      %v6729 = vadd.f32 %v6640, %v6728
      %6730 = vmatmul.bf16.gmra.mxu0 %v6572
      %v6731 = vpop.f32.mrf.mxu0
      %v6732 = vadd.f32 %v6643, %v6731
      %v6733 = vpop.f32.mrf.mxu0
      %v6734 = vadd.f32 %v6645, %v6733
      %6735 = vmatmul.bf16.gmra.mxu0 %v6575
      %v6736 = vpop.f32.mrf.mxu0
      %v6737 = vadd.f32 %v6648, %v6736
      %v6738 = vpop.f32.mrf.mxu0
      %v6739 = vadd.f32 %v6650, %v6738
      %6740 = vmatmul.bf16.gmra.mxu0 %v6578
      %v6741 = vpop.f32.mrf.mxu0
      %v6742 = vadd.f32 %v6653, %v6741
      %v6743 = vpop.f32.mrf.mxu0
      %v6744 = vadd.f32 %v6655, %v6743
      %6745 = vmatmul.bf16.gmra.mxu0 %v6581
      %v6746 = vpop.f32.mrf.mxu0
      %v6747 = vadd.f32 %v6658, %v6746
      %v6748 = vpop.f32.mrf.mxu0
      %v6749 = vadd.f32 %v6660, %v6748
      %6750 = vmatmul.bf16.gmra.mxu0 %v6584
      %v6751 = vpop.f32.mrf.mxu0
      %v6752 = vadd.f32 %v6663, %v6751
      %v6753 = vpop.f32.mrf.mxu0
      %v6754 = vadd.f32 %v6665, %v6753
      %6755 = vmatmul.bf16.gmra.mxu0 %v6587
      %v6756 = vpop.f32.mrf.mxu0
      %v6757 = vadd.f32 %v6668, %v6756
      %v6758 = vpop.f32.mrf.mxu0
      %v6759 = vadd.f32 %v6670, %v6758
      %6760 = vmatmul.bf16.gmra.mxu0 %v6590
      %v6761 = vpop.f32.mrf.mxu0
      %v6762 = vadd.f32 %v6673, %v6761
      %v6763 = vpop.f32.mrf.mxu0
      %v6764 = vadd.f32 %v6675, %v6763
      %6765 = vmatmul.bf16.gmra.mxu0 %v6593
      %v6766 = vpop.f32.mrf.mxu0
      %v6767 = vadd.f32 %v6678, %v6766
      %v6768 = vpop.f32.mrf.mxu0
      %v6769 = vadd.f32 %v6680, %v6768
      %6770 = vmatmul.bf16.gmra.mxu0 %v6596
      %v6771 = vpop.f32.mrf.mxu0
      %v6772 = vadd.f32 %v6683, %v6771
      %v6773 = vpop.f32.mrf.mxu0
      %v6774 = vadd.f32 %v6685, %v6773
      %6775 = vdwg.mxu0
      %v6800 = vunpack.c.l.b16 %v6429
      %v6801 = vunpack.c.l.b16 %v6430
      %v6802 = vunpack.c.l.b16 %v6431
      %v6803 = vunpack.c.l.b16 %v6432
      %v6804 = vunpack.c.l.b16 %v6433
      %v6805 = vunpack.c.l.b16 %v6434
      %v6806 = vunpack.c.l.b16 %v6435
      %v6807 = vunpack.c.l.b16 %v6436
      %v6808 = vunpack.c.l.b16 %v6437
      %v6809 = vunpack.c.l.b16 %v6438
      %v6810 = vunpack.c.l.b16 %v6439
      %v6811 = vunpack.c.l.b16 %v6440
      %v6812 = vunpack.c.l.b16 %v6441
      %v6813 = vunpack.c.l.b16 %v6442
      %v6814 = vunpack.c.l.b16 %v6443
      %v6815 = vunpack.c.l.b16 %v6444
      %v6816 = vunpack.c.l.b16 %v6445
      %v6817 = vunpack.c.l.b16 %v6446
      %v6818 = vunpack.c.l.b16 %v6447
      %v6819 = vunpack.c.l.b16 %v6448
      %v6820 = vunpack.c.l.b16 %v6449
      %v6821 = vunpack.c.l.b16 %v6450
      %v6822 = vunpack.c.l.b16 %v6451
      %v6823 = vunpack.c.l.b16 %v6452
      %v6824 = vpack.c.b16 %v6801, %v6800
      %v6825 = vpack.c.b16 %v6803, %v6802
      %v6826 = vpack.c.b16 %v6805, %v6804
      %v6827 = vpack.c.b16 %v6807, %v6806
      %v6828 = vpack.c.b16 %v6809, %v6808
      %v6829 = vpack.c.b16 %v6811, %v6810
      %v6830 = vpack.c.b16 %v6813, %v6812
      %v6831 = vpack.c.b16 %v6815, %v6814
      %v6832 = vpack.c.b16 %v6817, %v6816
      %v6833 = vpack.c.b16 %v6819, %v6818
      %v6834 = vpack.c.b16 %v6821, %v6820
      %v6835 = vpack.c.b16 %v6823, %v6822
      %v6848 = vsel %vm6380, 0, 0
      %6850 = vmatpush.bf16.msra.mxu0 %v6831
      %6851 = vmatpush.bf16.msra.mxu0 %v6830
      %6852 = vmatpush.bf16.msra.mxu0 %v6829
      %6853 = vmatpush.bf16.msra.mxu0 %v6828
      %6854 = vmatpush.bf16.msra.mxu0 %v6827
      %6855 = vmatpush.bf16.msra.mxu0 %v6826
      %6856 = vmatpush.bf16.msra.mxu0 %v6825
      %6857 = vmatpush.bf16.msra.mxu0 %v6824
      %6858 = vmatmul.bf16.gmra.mxu0 0
      %v6859 = vpop.f32.mrf.mxu0
      %v6860 = vadd.f32 %v6697, %v6859
      %v6861 = vpop.f32.mrf.mxu0
      %v6862 = vadd.f32 %v6699, %v6861
      %6863 = vmatmul.bf16.gmra.mxu0 %v6382
      %v6864 = vpop.f32.mrf.mxu0
      %v6865 = vadd.f32 %v6702, %v6864
      %v6866 = vpop.f32.mrf.mxu0
      %v6867 = vadd.f32 %v6704, %v6866
      %6868 = vmatmul.bf16.gmra.mxu0 %v6385
      %v6869 = vpop.f32.mrf.mxu0
      %v6870 = vadd.f32 %v6707, %v6869
      %v6871 = vpop.f32.mrf.mxu0
      %v6872 = vadd.f32 %v6709, %v6871
      %6873 = vmatmul.bf16.gmra.mxu0 %v6388
      %v6874 = vpop.f32.mrf.mxu0
      %v6875 = vadd.f32 %v6712, %v6874
      %v6876 = vpop.f32.mrf.mxu0
      %v6877 = vadd.f32 %v6714, %v6876
      %6878 = vmatmul.bf16.gmra.mxu0 %v6391
      %v6879 = vpop.f32.mrf.mxu0
      %v6880 = vadd.f32 %v6717, %v6879
      %v6881 = vpop.f32.mrf.mxu0
      %v6882 = vadd.f32 %v6719, %v6881
      %6883 = vmatmul.bf16.gmra.mxu0 %v6394
      %v6884 = vpop.f32.mrf.mxu0
      %v6885 = vadd.f32 %v6722, %v6884
      %v6886 = vpop.f32.mrf.mxu0
      %v6887 = vadd.f32 %v6724, %v6886
      %6888 = vmatmul.bf16.gmra.mxu0 %v6397
      %v6889 = vpop.f32.mrf.mxu0
      %v6890 = vadd.f32 %v6727, %v6889
      %v6891 = vpop.f32.mrf.mxu0
      %v6892 = vadd.f32 %v6729, %v6891
      %6893 = vmatmul.bf16.gmra.mxu0 %v6400
      %v6894 = vpop.f32.mrf.mxu0
      %v6895 = vadd.f32 %v6732, %v6894
      %v6896 = vpop.f32.mrf.mxu0
      %v6897 = vadd.f32 %v6734, %v6896
      %6898 = vmatmul.bf16.gmra.mxu0 %v6403
      %v6899 = vpop.f32.mrf.mxu0
      %v6900 = vadd.f32 %v6737, %v6899
      %v6901 = vpop.f32.mrf.mxu0
      %v6902 = vadd.f32 %v6739, %v6901
      %6903 = vmatmul.bf16.gmra.mxu0 %v6406
      %v6904 = vpop.f32.mrf.mxu0
      %v6905 = vadd.f32 %v6742, %v6904
      %v6906 = vpop.f32.mrf.mxu0
      %v6907 = vadd.f32 %v6744, %v6906
      %6908 = vmatmul.bf16.gmra.mxu0 %v6409
      %v6909 = vpop.f32.mrf.mxu0
      %v6910 = vadd.f32 %v6747, %v6909
      %v6911 = vpop.f32.mrf.mxu0
      %v6912 = vadd.f32 %v6749, %v6911
      %6913 = vmatmul.bf16.gmra.mxu0 %v6412
      %v6914 = vpop.f32.mrf.mxu0
      %v6915 = vadd.f32 %v6752, %v6914
      %v6916 = vpop.f32.mrf.mxu0
      %v6917 = vadd.f32 %v6754, %v6916
      %6918 = vmatmul.bf16.gmra.mxu0 %v6415
      %v6919 = vpop.f32.mrf.mxu0
      %v6920 = vadd.f32 %v6757, %v6919
      %v6921 = vpop.f32.mrf.mxu0
      %v6922 = vadd.f32 %v6759, %v6921
      %6923 = vmatmul.bf16.gmra.mxu0 %v6418
      %v6924 = vpop.f32.mrf.mxu0
      %v6925 = vadd.f32 %v6762, %v6924
      %v6926 = vpop.f32.mrf.mxu0
      %v6927 = vadd.f32 %v6764, %v6926
      %6928 = vmatmul.bf16.gmra.mxu0 %v6421
      %v6929 = vpop.f32.mrf.mxu0
      %v6930 = vadd.f32 %v6767, %v6929
      %v6931 = vpop.f32.mrf.mxu0
      %v6932 = vadd.f32 %v6769, %v6931
      %6933 = vmatmul.bf16.gmra.mxu0 %v6424
      %v6934 = vpop.f32.mrf.mxu0
      %v6935 = vadd.f32 %v6772, %v6934
      %v6936 = vpop.f32.mrf.mxu0
      %v6937 = vadd.f32 %v6774, %v6936
      %6938 = vdwg.mxu0
      %6939 = vmatpush.bf16.msra.mxu0 0
      %6940 = vmatpush.bf16.msra.mxu0 0
      %6941 = vmatpush.bf16.msra.mxu0 0
      %6942 = vmatpush.bf16.msra.mxu0 0
      %6943 = vmatpush.bf16.msra.mxu0 %v6835
      %6944 = vmatpush.bf16.msra.mxu0 %v6834
      %6945 = vmatpush.bf16.msra.mxu0 %v6833
      %6946 = vmatpush.bf16.msra.mxu0 %v6832
      %6947 = vmatmul.bf16.gmra.mxu0 %v6848
      %v6948 = vpop.f32.mrf.mxu0
      %v6949 = vadd.f32 %v6860, %v6948
      %v6950 = vpop.f32.mrf.mxu0
      %v6951 = vadd.f32 %v6862, %v6950
      %6952 = vmatmul.bf16.gmra.mxu0 %v6551
      %v6953 = vpop.f32.mrf.mxu0
      %v6954 = vadd.f32 %v6865, %v6953
      %v6955 = vpop.f32.mrf.mxu0
      %v6956 = vadd.f32 %v6867, %v6955
      %6957 = vmatmul.bf16.gmra.mxu0 %v6554
      %v6958 = vpop.f32.mrf.mxu0
      %v6959 = vadd.f32 %v6870, %v6958
      %v6960 = vpop.f32.mrf.mxu0
      %v6961 = vadd.f32 %v6872, %v6960
      %6962 = vmatmul.bf16.gmra.mxu0 %v6557
      %v6963 = vpop.f32.mrf.mxu0
      %v6964 = vadd.f32 %v6875, %v6963
      %v6965 = vpop.f32.mrf.mxu0
      %v6966 = vadd.f32 %v6877, %v6965
      %6967 = vmatmul.bf16.gmra.mxu0 %v6560
      %v6968 = vpop.f32.mrf.mxu0
      %v6969 = vadd.f32 %v6880, %v6968
      %v6970 = vpop.f32.mrf.mxu0
      %v6971 = vadd.f32 %v6882, %v6970
      %6972 = vmatmul.bf16.gmra.mxu0 %v6563
      %v6973 = vpop.f32.mrf.mxu0
      %v6974 = vadd.f32 %v6885, %v6973
      %v6975 = vpop.f32.mrf.mxu0
      %v6976 = vadd.f32 %v6887, %v6975
      %6977 = vmatmul.bf16.gmra.mxu0 %v6566
      %v6978 = vpop.f32.mrf.mxu0
      %v6979 = vadd.f32 %v6890, %v6978
      %v6980 = vpop.f32.mrf.mxu0
      %v6981 = vadd.f32 %v6892, %v6980
      %6982 = vmatmul.bf16.gmra.mxu0 %v6569
      %v6983 = vpop.f32.mrf.mxu0
      %v6984 = vadd.f32 %v6895, %v6983
      %v6985 = vpop.f32.mrf.mxu0
      %v6986 = vadd.f32 %v6897, %v6985
      %6987 = vmatmul.bf16.gmra.mxu0 %v6572
      %v6988 = vpop.f32.mrf.mxu0
      %v6989 = vadd.f32 %v6900, %v6988
      %v6990 = vpop.f32.mrf.mxu0
      %v6991 = vadd.f32 %v6902, %v6990
      %6992 = vmatmul.bf16.gmra.mxu0 %v6575
      %v6993 = vpop.f32.mrf.mxu0
      %v6994 = vadd.f32 %v6905, %v6993
      %v6995 = vpop.f32.mrf.mxu0
      %v6996 = vadd.f32 %v6907, %v6995
      %6997 = vmatmul.bf16.gmra.mxu0 %v6578
      %v6998 = vpop.f32.mrf.mxu0
      %v6999 = vadd.f32 %v6910, %v6998
      %v7000 = vpop.f32.mrf.mxu0
      %v7001 = vadd.f32 %v6912, %v7000
      %7002 = vmatmul.bf16.gmra.mxu0 %v6581
      %v7003 = vpop.f32.mrf.mxu0
      %v7004 = vadd.f32 %v6915, %v7003
      %v7005 = vpop.f32.mrf.mxu0
      %v7006 = vadd.f32 %v6917, %v7005
      %7007 = vmatmul.bf16.gmra.mxu0 %v6584
      %v7008 = vpop.f32.mrf.mxu0
      %v7009 = vadd.f32 %v6920, %v7008
      %v7010 = vpop.f32.mrf.mxu0
      %v7011 = vadd.f32 %v6922, %v7010
      %7012 = vmatmul.bf16.gmra.mxu0 %v6587
      %v7013 = vpop.f32.mrf.mxu0
      %v7014 = vadd.f32 %v6925, %v7013
      %v7015 = vpop.f32.mrf.mxu0
      %v7016 = vadd.f32 %v6927, %v7015
      %7017 = vmatmul.bf16.gmra.mxu0 %v6590
      %v7018 = vpop.f32.mrf.mxu0
      %v7019 = vadd.f32 %v6930, %v7018
      %v7020 = vpop.f32.mrf.mxu0
      %v7021 = vadd.f32 %v6932, %v7020
      %7022 = vmatmul.bf16.gmra.mxu0 %v6593
      %v7023 = vpop.f32.mrf.mxu0
      %v7024 = vadd.f32 %v6935, %v7023
      %v7025 = vpop.f32.mrf.mxu0
      %v7026 = vadd.f32 %v6937, %v7025
      %7027 = vdwg.mxu0
      %s7028 = scalar_lea.vmem %s7, 192
      %v7029 = vld [vmem:[%s7028] sm:$0xf]
      %v7030 = vld [vmem:[%s7028 + $0x4] sm:$0xf]
      %v7031 = vld [vmem:[%s7028 + $0x8] sm:$0xf]
      %v7032 = vld [vmem:[%s7028 + $0xc] sm:$0xf]
      %v7033 = vld [vmem:[%s7028 + $0x10] sm:$0xf]
      %v7034 = vld [vmem:[%s7028 + $0x14] sm:$0xf]
      %v7035 = vld [vmem:[%s7028 + $0x18] sm:$0xf]
      %v7036 = vld [vmem:[%s7028 + $0x1c] sm:$0xf]
      %v7037 = vld [vmem:[%s7028 + $0x20] sm:$0xf]
      %v7038 = vld [vmem:[%s7028 + $0x24] sm:$0xf]
      %v7039 = vld [vmem:[%s7028 + $0x28] sm:$0xf]
      %v7040 = vld [vmem:[%s7028 + $0x2c] sm:$0xf]
      %v7041 = vld [vmem:[%s7028 + $0x30] sm:$0xf]
      %v7042 = vld [vmem:[%s7028 + $0x34] sm:$0xf]
      %v7043 = vld [vmem:[%s7028 + $0x38] sm:$0xf]
      %v7044 = vld [vmem:[%s7028 + $0x3c] sm:$0xf]
      %v7045 = vld [vmem:[%s7028 + $0x40] sm:$0xf]
      %v7046 = vld [vmem:[%s7028 + $0x44] sm:$0xf]
      %v7047 = vld [vmem:[%s7028 + $0x48] sm:$0xf]
      %v7048 = vld [vmem:[%s7028 + $0x4c] sm:$0xf]
      %v7049 = vld [vmem:[%s7028 + $0x50] sm:$0xf]
      %v7050 = vld [vmem:[%s7028 + $0x54] sm:$0xf]
      %v7051 = vld [vmem:[%s7028 + $0x58] sm:$0xf]
      %v7052 = vld [vmem:[%s7028 + $0x5c] sm:$0xf]
      %v7077 = vunpack.c.l.b16 %v7029
      %v7078 = vunpack.c.l.b16 %v7030
      %v7079 = vunpack.c.l.b16 %v7031
      %v7080 = vunpack.c.l.b16 %v7032
      %v7081 = vunpack.c.l.b16 %v7033
      %v7082 = vunpack.c.l.b16 %v7034
      %v7083 = vunpack.c.l.b16 %v7035
      %v7084 = vunpack.c.l.b16 %v7036
      %v7085 = vunpack.c.l.b16 %v7037
      %v7086 = vunpack.c.l.b16 %v7038
      %v7087 = vunpack.c.l.b16 %v7039
      %v7088 = vunpack.c.l.b16 %v7040
      %v7089 = vunpack.c.l.b16 %v7041
      %v7090 = vunpack.c.l.b16 %v7042
      %v7091 = vunpack.c.l.b16 %v7043
      %v7092 = vunpack.c.l.b16 %v7044
      %v7093 = vunpack.c.l.b16 %v7045
      %v7094 = vunpack.c.l.b16 %v7046
      %v7095 = vunpack.c.l.b16 %v7047
      %v7096 = vunpack.c.l.b16 %v7048
      %v7097 = vunpack.c.l.b16 %v7049
      %v7098 = vunpack.c.l.b16 %v7050
      %v7099 = vunpack.c.l.b16 %v7051
      %v7100 = vunpack.c.l.b16 %v7052
      %v7101 = vpack.c.b16 %v7078, %v7077
      %v7102 = vpack.c.b16 %v7080, %v7079
      %v7103 = vpack.c.b16 %v7082, %v7081
      %v7104 = vpack.c.b16 %v7084, %v7083
      %v7105 = vpack.c.b16 %v7086, %v7085
      %v7106 = vpack.c.b16 %v7088, %v7087
      %v7107 = vpack.c.b16 %v7090, %v7089
      %v7108 = vpack.c.b16 %v7092, %v7091
      %v7109 = vpack.c.b16 %v7094, %v7093
      %v7110 = vpack.c.b16 %v7096, %v7095
      %v7111 = vpack.c.b16 %v7098, %v7097
      %v7112 = vpack.c.b16 %v7100, %v7099
      %7125 = vmatpush.bf16.msra.mxu0 %v7108
      %7126 = vmatpush.bf16.msra.mxu0 %v7107
      %7127 = vmatpush.bf16.msra.mxu0 %v7106
      %7128 = vmatpush.bf16.msra.mxu0 %v7105
      %7129 = vmatpush.bf16.msra.mxu0 %v7104
      %7130 = vmatpush.bf16.msra.mxu0 %v7103
      %7131 = vmatpush.bf16.msra.mxu0 %v7102
      %7132 = vmatpush.bf16.msra.mxu0 %v7101
      %7133 = vmatmul.bf16.gmra.mxu0 %v6385
      %v7134 = vpop.f32.mrf.mxu0
      %v7135 = vadd.f32 0.0, %v7134
      %v7136 = vpop.f32.mrf.mxu0
      %v7137 = vadd.f32 0.0, %v7136
      %7138 = vmatmul.bf16.gmra.mxu0 %v6388
      %v7139 = vpop.f32.mrf.mxu0
      %v7140 = vadd.f32 0.0, %v7139
      %v7141 = vpop.f32.mrf.mxu0
      %v7142 = vadd.f32 0.0, %v7141
      %7143 = vmatmul.bf16.gmra.mxu0 %v6391
      %v7144 = vpop.f32.mrf.mxu0
      %v7145 = vadd.f32 0.0, %v7144
      %v7146 = vpop.f32.mrf.mxu0
      %v7147 = vadd.f32 0.0, %v7146
      %7148 = vmatmul.bf16.gmra.mxu0 %v6394
      %v7149 = vpop.f32.mrf.mxu0
      %v7150 = vadd.f32 0.0, %v7149
      %v7151 = vpop.f32.mrf.mxu0
      %v7152 = vadd.f32 0.0, %v7151
      %7153 = vmatmul.bf16.gmra.mxu0 %v6397
      %v7154 = vpop.f32.mrf.mxu0
      %v7155 = vadd.f32 0.0, %v7154
      %v7156 = vpop.f32.mrf.mxu0
      %v7157 = vadd.f32 0.0, %v7156
      %7158 = vmatmul.bf16.gmra.mxu0 %v6400
      %v7159 = vpop.f32.mrf.mxu0
      %v7160 = vadd.f32 0.0, %v7159
      %v7161 = vpop.f32.mrf.mxu0
      %v7162 = vadd.f32 0.0, %v7161
      %7163 = vmatmul.bf16.gmra.mxu0 %v6403
      %v7164 = vpop.f32.mrf.mxu0
      %v7165 = vadd.f32 0.0, %v7164
      %v7166 = vpop.f32.mrf.mxu0
      %v7167 = vadd.f32 0.0, %v7166
      %7168 = vmatmul.bf16.gmra.mxu0 %v6406
      %v7169 = vpop.f32.mrf.mxu0
      %v7170 = vadd.f32 0.0, %v7169
      %v7171 = vpop.f32.mrf.mxu0
      %v7172 = vadd.f32 0.0, %v7171
      %7173 = vmatmul.bf16.gmra.mxu0 %v6409
      %v7174 = vpop.f32.mrf.mxu0
      %v7175 = vadd.f32 0.0, %v7174
      %v7176 = vpop.f32.mrf.mxu0
      %v7177 = vadd.f32 0.0, %v7176
      %7178 = vmatmul.bf16.gmra.mxu0 %v6412
      %v7179 = vpop.f32.mrf.mxu0
      %v7180 = vadd.f32 0.0, %v7179
      %v7181 = vpop.f32.mrf.mxu0
      %v7182 = vadd.f32 0.0, %v7181
      %7183 = vmatmul.bf16.gmra.mxu0 %v6415
      %v7184 = vpop.f32.mrf.mxu0
      %v7185 = vadd.f32 0.0, %v7184
      %v7186 = vpop.f32.mrf.mxu0
      %v7187 = vadd.f32 0.0, %v7186
      %7188 = vmatmul.bf16.gmra.mxu0 %v6418
      %v7189 = vpop.f32.mrf.mxu0
      %v7190 = vadd.f32 0.0, %v7189
      %v7191 = vpop.f32.mrf.mxu0
      %v7192 = vadd.f32 0.0, %v7191
      %7193 = vmatmul.bf16.gmra.mxu0 %v6421
      %v7194 = vpop.f32.mrf.mxu0
      %v7195 = vadd.f32 0.0, %v7194
      %v7196 = vpop.f32.mrf.mxu0
      %v7197 = vadd.f32 0.0, %v7196
      %7198 = vmatmul.bf16.gmra.mxu0 %v6424
      %v7199 = vpop.f32.mrf.mxu0
      %v7200 = vadd.f32 0.0, %v7199
      %v7201 = vpop.f32.mrf.mxu0
      %v7202 = vadd.f32 0.0, %v7201
      %7203 = vmatmul.bf16.gmra.mxu0 %v6427
      %v7204 = vpop.f32.mrf.mxu0
      %v7205 = vadd.f32 0.0, %v7204
      %v7206 = vpop.f32.mrf.mxu0
      %v7207 = vadd.f32 0.0, %v7206
      %7208 = vmatmul.bf16.gmra.mxu0 0
      %v7209 = vpop.f32.mrf.mxu0
      %v7210 = vadd.f32 0.0, %v7209
      %v7211 = vpop.f32.mrf.mxu0
      %v7212 = vadd.f32 0.0, %v7211
      %7213 = vdwg.mxu0
      %7214 = vmatpush.bf16.msra.mxu0 0
      %7215 = vmatpush.bf16.msra.mxu0 0
      %7216 = vmatpush.bf16.msra.mxu0 0
      %7217 = vmatpush.bf16.msra.mxu0 0
      %7218 = vmatpush.bf16.msra.mxu0 %v7112
      %7219 = vmatpush.bf16.msra.mxu0 %v7111
      %7220 = vmatpush.bf16.msra.mxu0 %v7110
      %7221 = vmatpush.bf16.msra.mxu0 %v7109
      %7222 = vmatmul.bf16.gmra.mxu0 %v6554
      %v7223 = vpop.f32.mrf.mxu0
      %v7224 = vadd.f32 %v7135, %v7223
      %v7225 = vpop.f32.mrf.mxu0
      %v7226 = vadd.f32 %v7137, %v7225
      %7227 = vmatmul.bf16.gmra.mxu0 %v6557
      %v7228 = vpop.f32.mrf.mxu0
      %v7229 = vadd.f32 %v7140, %v7228
      %v7230 = vpop.f32.mrf.mxu0
      %v7231 = vadd.f32 %v7142, %v7230
      %7232 = vmatmul.bf16.gmra.mxu0 %v6560
      %v7233 = vpop.f32.mrf.mxu0
      %v7234 = vadd.f32 %v7145, %v7233
      %v7235 = vpop.f32.mrf.mxu0
      %v7236 = vadd.f32 %v7147, %v7235
      %7237 = vmatmul.bf16.gmra.mxu0 %v6563
      %v7238 = vpop.f32.mrf.mxu0
      %v7239 = vadd.f32 %v7150, %v7238
      %v7240 = vpop.f32.mrf.mxu0
      %v7241 = vadd.f32 %v7152, %v7240
      %7242 = vmatmul.bf16.gmra.mxu0 %v6566
      %v7243 = vpop.f32.mrf.mxu0
      %v7244 = vadd.f32 %v7155, %v7243
      %v7245 = vpop.f32.mrf.mxu0
      %v7246 = vadd.f32 %v7157, %v7245
      %7247 = vmatmul.bf16.gmra.mxu0 %v6569
      %v7248 = vpop.f32.mrf.mxu0
      %v7249 = vadd.f32 %v7160, %v7248
      %v7250 = vpop.f32.mrf.mxu0
      %v7251 = vadd.f32 %v7162, %v7250
      %7252 = vmatmul.bf16.gmra.mxu0 %v6572
      %v7253 = vpop.f32.mrf.mxu0
      %v7254 = vadd.f32 %v7165, %v7253
      %v7255 = vpop.f32.mrf.mxu0
      %v7256 = vadd.f32 %v7167, %v7255
      %7257 = vmatmul.bf16.gmra.mxu0 %v6575
      %v7258 = vpop.f32.mrf.mxu0
      %v7259 = vadd.f32 %v7170, %v7258
      %v7260 = vpop.f32.mrf.mxu0
      %v7261 = vadd.f32 %v7172, %v7260
      %7262 = vmatmul.bf16.gmra.mxu0 %v6578
      %v7263 = vpop.f32.mrf.mxu0
      %v7264 = vadd.f32 %v7175, %v7263
      %v7265 = vpop.f32.mrf.mxu0
      %v7266 = vadd.f32 %v7177, %v7265
      %7267 = vmatmul.bf16.gmra.mxu0 %v6581
      %v7268 = vpop.f32.mrf.mxu0
      %v7269 = vadd.f32 %v7180, %v7268
      %v7270 = vpop.f32.mrf.mxu0
      %v7271 = vadd.f32 %v7182, %v7270
      %7272 = vmatmul.bf16.gmra.mxu0 %v6584
      %v7273 = vpop.f32.mrf.mxu0
      %v7274 = vadd.f32 %v7185, %v7273
      %v7275 = vpop.f32.mrf.mxu0
      %v7276 = vadd.f32 %v7187, %v7275
      %7277 = vmatmul.bf16.gmra.mxu0 %v6587
      %v7278 = vpop.f32.mrf.mxu0
      %v7279 = vadd.f32 %v7190, %v7278
      %v7280 = vpop.f32.mrf.mxu0
      %v7281 = vadd.f32 %v7192, %v7280
      %7282 = vmatmul.bf16.gmra.mxu0 %v6590
      %v7283 = vpop.f32.mrf.mxu0
      %v7284 = vadd.f32 %v7195, %v7283
      %v7285 = vpop.f32.mrf.mxu0
      %v7286 = vadd.f32 %v7197, %v7285
      %7287 = vmatmul.bf16.gmra.mxu0 %v6593
      %v7288 = vpop.f32.mrf.mxu0
      %v7289 = vadd.f32 %v7200, %v7288
      %v7290 = vpop.f32.mrf.mxu0
      %v7291 = vadd.f32 %v7202, %v7290
      %7292 = vmatmul.bf16.gmra.mxu0 %v6596
      %v7293 = vpop.f32.mrf.mxu0
      %v7294 = vadd.f32 %v7205, %v7293
      %v7295 = vpop.f32.mrf.mxu0
      %v7296 = vadd.f32 %v7207, %v7295
      %7297 = vmatmul.bf16.gmra.mxu0 %v6848
      %v7298 = vpop.f32.mrf.mxu0
      %v7299 = vadd.f32 %v7210, %v7298
      %v7300 = vpop.f32.mrf.mxu0
      %v7301 = vadd.f32 %v7212, %v7300
      %7302 = vdwg.mxu0
      %v7303 = vadd.f32 %v6949, %v7224
      %v7304 = vadd.f32 %v6951, %v7226
      %v7305 = vadd.f32 %v6954, %v7229
      %v7306 = vadd.f32 %v6956, %v7231
      %v7307 = vadd.f32 %v6959, %v7234
      %v7308 = vadd.f32 %v6961, %v7236
      %v7309 = vadd.f32 %v6964, %v7239
      %v7310 = vadd.f32 %v6966, %v7241
      %v7311 = vadd.f32 %v6969, %v7244
      %v7312 = vadd.f32 %v6971, %v7246
      %v7313 = vadd.f32 %v6974, %v7249
      %v7314 = vadd.f32 %v6976, %v7251
      %v7315 = vadd.f32 %v6979, %v7254
      %v7316 = vadd.f32 %v6981, %v7256
      %v7317 = vadd.f32 %v6984, %v7259
      %v7318 = vadd.f32 %v6986, %v7261
      %v7319 = vadd.f32 %v6989, %v7264
      %v7320 = vadd.f32 %v6991, %v7266
      %v7321 = vadd.f32 %v6994, %v7269
      %v7322 = vadd.f32 %v6996, %v7271
      %v7323 = vadd.f32 %v6999, %v7274
      %v7324 = vadd.f32 %v7001, %v7276
      %v7325 = vadd.f32 %v7004, %v7279
      %v7326 = vadd.f32 %v7006, %v7281
      %v7327 = vadd.f32 %v7009, %v7284
      %v7328 = vadd.f32 %v7011, %v7286
      %v7329 = vadd.f32 %v7014, %v7289
      %v7330 = vadd.f32 %v7016, %v7291
      %v7331 = vadd.f32 %v7019, %v7294
      %v7332 = vadd.f32 %v7021, %v7296
      %v7333 = vadd.f32 %v7024, %v7299
      %v7334 = vadd.f32 %v7026, %v7301
      %v7335 = vld [vmem:[%s8] sm:$0x1]
      %v7337 = vperm.slane %v7335, 0
      %v7339 = vadd.f32 %v7303, %v7337
      %v7340 = vadd.f32 %v7304, %v7337
      %v7341 = vadd.f32 %v7305, %v7337
      %v7342 = vadd.f32 %v7306, %v7337
      %v7343 = vadd.f32 %v7307, %v7337
      %v7344 = vadd.f32 %v7308, %v7337
      %v7345 = vadd.f32 %v7309, %v7337
      %v7346 = vadd.f32 %v7310, %v7337
      %v7347 = vadd.f32 %v7311, %v7337
      %v7348 = vadd.f32 %v7312, %v7337
      %v7349 = vadd.f32 %v7313, %v7337
      %v7350 = vadd.f32 %v7314, %v7337
      %v7351 = vadd.f32 %v7315, %v7337
      %v7352 = vadd.f32 %v7316, %v7337
      %v7353 = vadd.f32 %v7317, %v7337
      %v7354 = vadd.f32 %v7318, %v7337
      %v7355 = vadd.f32 %v7319, %v7337
      %v7356 = vadd.f32 %v7320, %v7337
      %v7357 = vadd.f32 %v7321, %v7337
      %v7358 = vadd.f32 %v7322, %v7337
      %v7359 = vadd.f32 %v7323, %v7337
      %v7360 = vadd.f32 %v7324, %v7337
      %v7361 = vadd.f32 %v7325, %v7337
      %v7362 = vadd.f32 %v7326, %v7337
      %v7363 = vadd.f32 %v7327, %v7337
      %v7364 = vadd.f32 %v7328, %v7337
      %v7365 = vadd.f32 %v7329, %v7337
      %v7366 = vadd.f32 %v7330, %v7337
      %v7367 = vadd.f32 %v7331, %v7337
      %v7368 = vadd.f32 %v7332, %v7337
      %v7369 = vadd.f32 %v7333, %v7337
      %v7370 = vadd.f32 %v7334, %v7337
      %vm7371 = vcmp.ge.f32.partialorder %v7339, 0.0
      %vm7372 = vcmp.ge.f32.partialorder %v7340, 0.0
      %vm7373 = vcmp.ge.f32.partialorder %v7341, 0.0
      %vm7374 = vcmp.ge.f32.partialorder %v7342, 0.0
      %vm7375 = vcmp.ge.f32.partialorder %v7343, 0.0
      %vm7376 = vcmp.ge.f32.partialorder %v7344, 0.0
      %vm7377 = vcmp.ge.f32.partialorder %v7345, 0.0
      %vm7378 = vcmp.ge.f32.partialorder %v7346, 0.0
      %vm7379 = vcmp.ge.f32.partialorder %v7347, 0.0
      %vm7380 = vcmp.ge.f32.partialorder %v7348, 0.0
      %vm7381 = vcmp.ge.f32.partialorder %v7349, 0.0
      %vm7382 = vcmp.ge.f32.partialorder %v7350, 0.0
      %vm7383 = vcmp.ge.f32.partialorder %v7351, 0.0
      %vm7384 = vcmp.ge.f32.partialorder %v7352, 0.0
      %vm7385 = vcmp.ge.f32.partialorder %v7353, 0.0
      %vm7386 = vcmp.ge.f32.partialorder %v7354, 0.0
      %vm7387 = vcmp.ge.f32.partialorder %v7355, 0.0
      %vm7388 = vcmp.ge.f32.partialorder %v7356, 0.0
      %vm7389 = vcmp.ge.f32.partialorder %v7357, 0.0
      %vm7390 = vcmp.ge.f32.partialorder %v7358, 0.0
      %vm7391 = vcmp.ge.f32.partialorder %v7359, 0.0
      %vm7392 = vcmp.ge.f32.partialorder %v7360, 0.0
      %vm7393 = vcmp.ge.f32.partialorder %v7361, 0.0
      %vm7394 = vcmp.ge.f32.partialorder %v7362, 0.0
      %vm7395 = vcmp.ge.f32.partialorder %v7363, 0.0
      %vm7396 = vcmp.ge.f32.partialorder %v7364, 0.0
      %vm7397 = vcmp.ge.f32.partialorder %v7365, 0.0
      %vm7398 = vcmp.ge.f32.partialorder %v7366, 0.0
      %vm7399 = vcmp.ge.f32.partialorder %v7367, 0.0
      %vm7400 = vcmp.ge.f32.partialorder %v7368, 0.0
      %vm7401 = vcmp.ge.f32.partialorder %v7369, 0.0
      %vm7402 = vcmp.ge.f32.partialorder %v7370, 0.0
      %v7403 = vmul.f32 %v7339, 0.1
      %v7404 = vmul.f32 %v7340, 0.1
      %v7405 = vmul.f32 %v7341, 0.1
      %v7406 = vmul.f32 %v7342, 0.1
      %v7407 = vmul.f32 %v7343, 0.1
      %v7408 = vmul.f32 %v7344, 0.1
      %v7409 = vmul.f32 %v7345, 0.1
      %v7410 = vmul.f32 %v7346, 0.1
      %v7411 = vmul.f32 %v7347, 0.1
      %v7412 = vmul.f32 %v7348, 0.1
      %v7413 = vmul.f32 %v7349, 0.1
      %v7414 = vmul.f32 %v7350, 0.1
      %v7415 = vmul.f32 %v7351, 0.1
      %v7416 = vmul.f32 %v7352, 0.1
      %v7417 = vmul.f32 %v7353, 0.1
      %v7418 = vmul.f32 %v7354, 0.1
      %v7419 = vmul.f32 %v7355, 0.1
      %v7420 = vmul.f32 %v7356, 0.1
      %v7421 = vmul.f32 %v7357, 0.1
      %v7422 = vmul.f32 %v7358, 0.1
      %v7423 = vmul.f32 %v7359, 0.1
      %v7424 = vmul.f32 %v7360, 0.1
      %v7425 = vmul.f32 %v7361, 0.1
      %v7426 = vmul.f32 %v7362, 0.1
      %v7427 = vmul.f32 %v7363, 0.1
      %v7428 = vmul.f32 %v7364, 0.1
      %v7429 = vmul.f32 %v7365, 0.1
      %v7430 = vmul.f32 %v7366, 0.1
      %v7431 = vmul.f32 %v7367, 0.1
      %v7432 = vmul.f32 %v7368, 0.1
      %v7433 = vmul.f32 %v7369, 0.1
      %v7434 = vmul.f32 %v7370, 0.1
      %v7435 = vsel %vm7371, %v7339, %v7403
      %v7436 = vsel %vm7372, %v7340, %v7404
      %v7437 = vsel %vm7373, %v7341, %v7405
      %v7438 = vsel %vm7374, %v7342, %v7406
      %v7439 = vsel %vm7375, %v7343, %v7407
      %v7440 = vsel %vm7376, %v7344, %v7408
      %v7441 = vsel %vm7377, %v7345, %v7409
      %v7442 = vsel %vm7378, %v7346, %v7410
      %v7443 = vsel %vm7379, %v7347, %v7411
      %v7444 = vsel %vm7380, %v7348, %v7412
      %v7445 = vsel %vm7381, %v7349, %v7413
      %v7446 = vsel %vm7382, %v7350, %v7414
      %v7447 = vsel %vm7383, %v7351, %v7415
      %v7448 = vsel %vm7384, %v7352, %v7416
      %v7449 = vsel %vm7385, %v7353, %v7417
      %v7450 = vsel %vm7386, %v7354, %v7418
      %v7451 = vsel %vm7387, %v7355, %v7419
      %v7452 = vsel %vm7388, %v7356, %v7420
      %v7453 = vsel %vm7389, %v7357, %v7421
      %v7454 = vsel %vm7390, %v7358, %v7422
      %v7455 = vsel %vm7391, %v7359, %v7423
      %v7456 = vsel %vm7392, %v7360, %v7424
      %v7457 = vsel %vm7393, %v7361, %v7425
      %v7458 = vsel %vm7394, %v7362, %v7426
      %v7459 = vsel %vm7395, %v7363, %v7427
      %v7460 = vsel %vm7396, %v7364, %v7428
      %v7461 = vsel %vm7397, %v7365, %v7429
      %v7462 = vsel %vm7398, %v7366, %v7430
      %v7463 = vsel %vm7399, %v7367, %v7431
      %v7464 = vsel %vm7400, %v7368, %v7432
      %v7465 = vsel %vm7401, %v7369, %v7433
      %v7466 = vsel %vm7402, %v7370, %v7434
      %v7467 = vpack.c.bf16 %v7435, %v7435
      %v7468 = vpack.c.bf16 %v7436, %v7436
      %v7469 = vpack.c.bf16 %v7437, %v7437
      %v7470 = vpack.c.bf16 %v7438, %v7438
      %v7471 = vpack.c.bf16 %v7439, %v7439
      %v7472 = vpack.c.bf16 %v7440, %v7440
      %v7473 = vpack.c.bf16 %v7441, %v7441
      %v7474 = vpack.c.bf16 %v7442, %v7442
      %v7475 = vpack.c.bf16 %v7443, %v7443
      %v7476 = vpack.c.bf16 %v7444, %v7444
      %v7477 = vpack.c.bf16 %v7445, %v7445
      %v7478 = vpack.c.bf16 %v7446, %v7446
      %v7479 = vpack.c.bf16 %v7447, %v7447
      %v7480 = vpack.c.bf16 %v7448, %v7448
      %v7481 = vpack.c.bf16 %v7449, %v7449
      %v7482 = vpack.c.bf16 %v7450, %v7450
      %v7483 = vpack.c.bf16 %v7451, %v7451
      %v7484 = vpack.c.bf16 %v7452, %v7452
      %v7485 = vpack.c.bf16 %v7453, %v7453
      %v7486 = vpack.c.bf16 %v7454, %v7454
      %v7487 = vpack.c.bf16 %v7455, %v7455
      %v7488 = vpack.c.bf16 %v7456, %v7456
      %v7489 = vpack.c.bf16 %v7457, %v7457
      %v7490 = vpack.c.bf16 %v7458, %v7458
      %v7491 = vpack.c.bf16 %v7459, %v7459
      %v7492 = vpack.c.bf16 %v7460, %v7460
      %v7493 = vpack.c.bf16 %v7461, %v7461
      %v7494 = vpack.c.bf16 %v7462, %v7462
      %v7495 = vpack.c.bf16 %v7463, %v7463
      %v7496 = vpack.c.bf16 %v7464, %v7464
      %v7497 = vpack.c.bf16 %v7465, %v7465
      %v7498 = vpack.c.bf16 %v7466, %v7466
      %v7531 = vunpack.c.l.b16 %v7467
      %v7532 = vunpack.c.l.b16 %v7468
      %v7533 = vunpack.c.l.b16 %v7469
      %v7534 = vunpack.c.l.b16 %v7470
      %v7535 = vunpack.c.l.b16 %v7471
      %v7536 = vunpack.c.l.b16 %v7472
      %v7537 = vunpack.c.l.b16 %v7473
      %v7538 = vunpack.c.l.b16 %v7474
      %v7539 = vunpack.c.l.b16 %v7475
      %v7540 = vunpack.c.l.b16 %v7476
      %v7541 = vunpack.c.l.b16 %v7477
      %v7542 = vunpack.c.l.b16 %v7478
      %v7543 = vunpack.c.l.b16 %v7479
      %v7544 = vunpack.c.l.b16 %v7480
      %v7545 = vunpack.c.l.b16 %v7481
      %v7546 = vunpack.c.l.b16 %v7482
      %v7547 = vunpack.c.l.b16 %v7483
      %v7548 = vunpack.c.l.b16 %v7484
      %v7549 = vunpack.c.l.b16 %v7485
      %v7550 = vunpack.c.l.b16 %v7486
      %v7551 = vunpack.c.l.b16 %v7487
      %v7552 = vunpack.c.l.b16 %v7488
      %v7553 = vunpack.c.l.b16 %v7489
      %v7554 = vunpack.c.l.b16 %v7490
      %v7555 = vunpack.c.l.b16 %v7491
      %v7556 = vunpack.c.l.b16 %v7492
      %v7557 = vunpack.c.l.b16 %v7493
      %v7558 = vunpack.c.l.b16 %v7494
      %v7559 = vunpack.c.l.b16 %v7495
      %v7560 = vunpack.c.l.b16 %v7496
      %v7561 = vunpack.c.l.b16 %v7497
      %v7562 = vunpack.c.l.b16 %v7498
      %v7563 = vpack.c.b16 %v7532, %v7531
      %v7564 = vpack.c.b16 %v7534, %v7533
      %v7565 = vpack.c.b16 %v7536, %v7535
      %v7566 = vpack.c.b16 %v7538, %v7537
      %v7567 = vpack.c.b16 %v7540, %v7539
      %v7568 = vpack.c.b16 %v7542, %v7541
      %v7569 = vpack.c.b16 %v7544, %v7543
      %v7570 = vpack.c.b16 %v7546, %v7545
      %v7571 = vpack.c.b16 %v7548, %v7547
      %v7572 = vpack.c.b16 %v7550, %v7549
      %v7573 = vpack.c.b16 %v7552, %v7551
      %v7574 = vpack.c.b16 %v7554, %v7553
      %v7575 = vpack.c.b16 %v7556, %v7555
      %v7576 = vpack.c.b16 %v7558, %v7557
      %v7577 = vpack.c.b16 %v7560, %v7559
      %v7578 = vpack.c.b16 %v7562, %v7561
      %v7580 = vshrl.u32 %v7563, 16
      %v7582 = vrot.slane %v7580, 6
      %v7583 = vshll.u32 %v7563, 16
      %v7585 = vrot.slane %v7583, 7
      %v7586 = vor.u32 %v7582, %v7585
      %v7588 = vshrl.u32 %v7564, 16
      %v7590 = vrot.slane %v7588, 6
      %v7591 = vshll.u32 %v7564, 16
      %v7593 = vrot.slane %v7591, 7
      %v7594 = vor.u32 %v7590, %v7593
      %v7596 = vshrl.u32 %v7565, 16
      %v7598 = vrot.slane %v7596, 6
      %v7599 = vshll.u32 %v7565, 16
      %v7601 = vrot.slane %v7599, 7
      %v7602 = vor.u32 %v7598, %v7601
      %v7604 = vshrl.u32 %v7566, 16
      %v7606 = vrot.slane %v7604, 6
      %v7607 = vshll.u32 %v7566, 16
      %v7609 = vrot.slane %v7607, 7
      %v7610 = vor.u32 %v7606, %v7609
      %v7612 = vshrl.u32 %v7567, 16
      %v7614 = vrot.slane %v7612, 6
      %v7615 = vshll.u32 %v7567, 16
      %v7617 = vrot.slane %v7615, 7
      %v7618 = vor.u32 %v7614, %v7617
      %v7620 = vshrl.u32 %v7568, 16
      %v7622 = vrot.slane %v7620, 6
      %v7623 = vshll.u32 %v7568, 16
      %v7625 = vrot.slane %v7623, 7
      %v7626 = vor.u32 %v7622, %v7625
      %v7628 = vshrl.u32 %v7569, 16
      %v7630 = vrot.slane %v7628, 6
      %v7631 = vshll.u32 %v7569, 16
      %v7633 = vrot.slane %v7631, 7
      %v7634 = vor.u32 %v7630, %v7633
      %v7636 = vshrl.u32 %v7570, 16
      %v7638 = vrot.slane %v7636, 6
      %v7639 = vshll.u32 %v7570, 16
      %v7641 = vrot.slane %v7639, 7
      %v7642 = vor.u32 %v7638, %v7641
      %v7644 = vshrl.u32 %v7571, 16
      %v7646 = vrot.slane %v7644, 6
      %v7647 = vshll.u32 %v7571, 16
      %v7649 = vrot.slane %v7647, 7
      %v7650 = vor.u32 %v7646, %v7649
      %v7652 = vshrl.u32 %v7572, 16
      %v7654 = vrot.slane %v7652, 6
      %v7655 = vshll.u32 %v7572, 16
      %v7657 = vrot.slane %v7655, 7
      %v7658 = vor.u32 %v7654, %v7657
      %v7660 = vshrl.u32 %v7573, 16
      %v7662 = vrot.slane %v7660, 6
      %v7663 = vshll.u32 %v7573, 16
      %v7665 = vrot.slane %v7663, 7
      %v7666 = vor.u32 %v7662, %v7665
      %v7668 = vshrl.u32 %v7574, 16
      %v7670 = vrot.slane %v7668, 6
      %v7671 = vshll.u32 %v7574, 16
      %v7673 = vrot.slane %v7671, 7
      %v7674 = vor.u32 %v7670, %v7673
      %v7676 = vshrl.u32 %v7575, 16
      %v7678 = vrot.slane %v7676, 6
      %v7679 = vshll.u32 %v7575, 16
      %v7681 = vrot.slane %v7679, 7
      %v7682 = vor.u32 %v7678, %v7681
      %v7684 = vshrl.u32 %v7576, 16
      %v7686 = vrot.slane %v7684, 6
      %v7687 = vshll.u32 %v7576, 16
      %v7689 = vrot.slane %v7687, 7
      %v7690 = vor.u32 %v7686, %v7689
      %v7692 = vshrl.u32 %v7577, 16
      %v7694 = vrot.slane %v7692, 6
      %v7695 = vshll.u32 %v7577, 16
      %v7697 = vrot.slane %v7695, 7
      %v7698 = vor.u32 %v7694, %v7697
      %v7700 = vshrl.u32 %v7578, 16
      %v7702 = vrot.slane %v7700, 6
      %v7703 = vshll.u32 %v7578, 16
      %v7705 = vrot.slane %v7703, 7
      %v7706 = vor.u32 %v7702, %v7705
      %vm7723 = vcmask 1041408
      %vm7724 = vsmask.f32 1280
      %vm7725 = vmand %vm7723, %vm7724
      %v7726 = vsel %vm7725, 0, %v7586
      %v7727 = vsel %vm7725, 0, %v7594
      %v7728 = vsel %vm7725, 0, %v7602
      %v7729 = vsel %vm7725, 0, %v7610
      %v7730 = vsel %vm7725, 0, %v7618
      %v7731 = vsel %vm7725, 0, %v7626
      %v7732 = vsel %vm7725, 0, %v7634
      %v7733 = vsel %vm7725, 0, %v7642
      %v7734 = vsel %vm7725, 0, %v7650
      %v7735 = vsel %vm7725, 0, %v7658
      %v7736 = vsel %vm7725, 0, %v7666
      %v7737 = vsel %vm7725, 0, %v7674
      %v7738 = vsel %vm7725, 0, %v7682
      %v7739 = vsel %vm7725, 0, %v7690
      %v7740 = vsel %vm7725, 0, %v7698
      %v7741 = vsel %vm7725, 0, %v7706
      %v7742 = vsel %vm7725, %v7586, 0
      %v7743 = vsel %vm7725, %v7594, 0
      %v7744 = vsel %vm7725, %v7602, 0
      %v7745 = vsel %vm7725, %v7610, 0
      %v7746 = vsel %vm7725, %v7618, 0
      %v7747 = vsel %vm7725, %v7626, 0
      %v7748 = vsel %vm7725, %v7634, 0
      %v7749 = vsel %vm7725, %v7642, 0
      %v7750 = vsel %vm7725, %v7650, 0
      %v7751 = vsel %vm7725, %v7658, 0
      %v7752 = vsel %vm7725, %v7666, 0
      %v7753 = vsel %vm7725, %v7674, 0
      %v7754 = vsel %vm7725, %v7682, 0
      %v7755 = vsel %vm7725, %v7690, 0
      %v7756 = vsel %vm7725, %v7698, 0
      %v7757 = vsel %vm7725, %v7706, 0
      %v7759 = vshrl.u32 %v7726, 16
      %v7761 = vshll.u32 %v7726, 16
      %v7763 = vrot.slane %v7761, 1
      %v7764 = vor.u32 %v7759, %v7763
      %v7766 = vshll.u32 %v7742, 16
      %v7768 = vrot.slane %v7766, 1
      %v7769 = vsel %vm731, %v7764, %v7768
      %v7771 = vshrl.u32 %v7727, 16
      %v7773 = vshll.u32 %v7727, 16
      %v7775 = vrot.slane %v7773, 1
      %v7776 = vor.u32 %v7771, %v7775
      %v7778 = vshll.u32 %v7743, 16
      %v7780 = vrot.slane %v7778, 1
      %v7781 = vsel %vm731, %v7776, %v7780
      %v7783 = vshrl.u32 %v7728, 16
      %v7785 = vshll.u32 %v7728, 16
      %v7787 = vrot.slane %v7785, 1
      %v7788 = vor.u32 %v7783, %v7787
      %v7790 = vshll.u32 %v7744, 16
      %v7792 = vrot.slane %v7790, 1
      %v7793 = vsel %vm731, %v7788, %v7792
      %v7795 = vshrl.u32 %v7729, 16
      %v7797 = vshll.u32 %v7729, 16
      %v7799 = vrot.slane %v7797, 1
      %v7800 = vor.u32 %v7795, %v7799
      %v7802 = vshll.u32 %v7745, 16
      %v7804 = vrot.slane %v7802, 1
      %v7805 = vsel %vm731, %v7800, %v7804
      %v7807 = vshrl.u32 %v7730, 16
      %v7809 = vshll.u32 %v7730, 16
      %v7811 = vrot.slane %v7809, 1
      %v7812 = vor.u32 %v7807, %v7811
      %v7814 = vshll.u32 %v7746, 16
      %v7816 = vrot.slane %v7814, 1
      %v7817 = vsel %vm731, %v7812, %v7816
      %v7819 = vshrl.u32 %v7731, 16
      %v7821 = vshll.u32 %v7731, 16
      %v7823 = vrot.slane %v7821, 1
      %v7824 = vor.u32 %v7819, %v7823
      %v7826 = vshll.u32 %v7747, 16
      %v7828 = vrot.slane %v7826, 1
      %v7829 = vsel %vm731, %v7824, %v7828
      %v7831 = vshrl.u32 %v7732, 16
      %v7833 = vshll.u32 %v7732, 16
      %v7835 = vrot.slane %v7833, 1
      %v7836 = vor.u32 %v7831, %v7835
      %v7838 = vshll.u32 %v7748, 16
      %v7840 = vrot.slane %v7838, 1
      %v7841 = vsel %vm731, %v7836, %v7840
      %v7843 = vshrl.u32 %v7733, 16
      %v7845 = vshll.u32 %v7733, 16
      %v7847 = vrot.slane %v7845, 1
      %v7848 = vor.u32 %v7843, %v7847
      %v7850 = vshll.u32 %v7749, 16
      %v7852 = vrot.slane %v7850, 1
      %v7853 = vsel %vm731, %v7848, %v7852
      %v7855 = vshrl.u32 %v7734, 16
      %v7857 = vshll.u32 %v7734, 16
      %v7859 = vrot.slane %v7857, 1
      %v7860 = vor.u32 %v7855, %v7859
      %v7862 = vshll.u32 %v7750, 16
      %v7864 = vrot.slane %v7862, 1
      %v7865 = vsel %vm731, %v7860, %v7864
      %v7867 = vshrl.u32 %v7735, 16
      %v7869 = vshll.u32 %v7735, 16
      %v7871 = vrot.slane %v7869, 1
      %v7872 = vor.u32 %v7867, %v7871
      %v7874 = vshll.u32 %v7751, 16
      %v7876 = vrot.slane %v7874, 1
      %v7877 = vsel %vm731, %v7872, %v7876
      %v7879 = vshrl.u32 %v7736, 16
      %v7881 = vshll.u32 %v7736, 16
      %v7883 = vrot.slane %v7881, 1
      %v7884 = vor.u32 %v7879, %v7883
      %v7886 = vshll.u32 %v7752, 16
      %v7888 = vrot.slane %v7886, 1
      %v7889 = vsel %vm731, %v7884, %v7888
      %v7891 = vshrl.u32 %v7737, 16
      %v7893 = vshll.u32 %v7737, 16
      %v7895 = vrot.slane %v7893, 1
      %v7896 = vor.u32 %v7891, %v7895
      %v7898 = vshll.u32 %v7753, 16
      %v7900 = vrot.slane %v7898, 1
      %v7901 = vsel %vm731, %v7896, %v7900
      %v7903 = vshrl.u32 %v7738, 16
      %v7905 = vshll.u32 %v7738, 16
      %v7907 = vrot.slane %v7905, 1
      %v7908 = vor.u32 %v7903, %v7907
      %v7910 = vshll.u32 %v7754, 16
      %v7912 = vrot.slane %v7910, 1
      %v7913 = vsel %vm731, %v7908, %v7912
      %v7915 = vshrl.u32 %v7739, 16
      %v7917 = vshll.u32 %v7739, 16
      %v7919 = vrot.slane %v7917, 1
      %v7920 = vor.u32 %v7915, %v7919
      %v7922 = vshll.u32 %v7755, 16
      %v7924 = vrot.slane %v7922, 1
      %v7925 = vsel %vm731, %v7920, %v7924
      %v7927 = vshrl.u32 %v7740, 16
      %v7929 = vshll.u32 %v7740, 16
      %v7931 = vrot.slane %v7929, 1
      %v7932 = vor.u32 %v7927, %v7931
      %v7934 = vshll.u32 %v7756, 16
      %v7936 = vrot.slane %v7934, 1
      %v7937 = vsel %vm731, %v7932, %v7936
      %v7939 = vshrl.u32 %v7741, 16
      %v7941 = vshll.u32 %v7741, 16
      %v7943 = vrot.slane %v7941, 1
      %v7944 = vor.u32 %v7939, %v7943
      %v7946 = vshll.u32 %v7757, 16
      %v7948 = vrot.slane %v7946, 1
      %v7949 = vsel %vm731, %v7944, %v7948
      %7950 = vrot.lane.b32.xlu0 %v7769, 32
      %v7951 = vpop.permute.xlu0 %7950
      %7952 = vrot.lane.b32.xlu0 %v7781, 32
      %v7953 = vpop.permute.xlu0 %7952
      %7954 = vrot.lane.b32.xlu0 %v7793, 32
      %v7955 = vpop.permute.xlu0 %7954
      %7956 = vrot.lane.b32.xlu0 %v7805, 32
      %v7957 = vpop.permute.xlu0 %7956
      %7958 = vrot.lane.b32.xlu0 %v7817, 32
      %v7959 = vpop.permute.xlu0 %7958
      %7960 = vrot.lane.b32.xlu0 %v7829, 32
      %v7961 = vpop.permute.xlu0 %7960
      %7962 = vrot.lane.b32.xlu0 %v7841, 32
      %v7963 = vpop.permute.xlu0 %7962
      %7964 = vrot.lane.b32.xlu0 %v7853, 32
      %v7965 = vpop.permute.xlu0 %7964
      %7966 = vrot.lane.b32.xlu0 %v7865, 32
      %v7967 = vpop.permute.xlu0 %7966
      %7968 = vrot.lane.b32.xlu0 %v7877, 32
      %v7969 = vpop.permute.xlu0 %7968
      %7970 = vrot.lane.b32.xlu0 %v7889, 32
      %v7971 = vpop.permute.xlu0 %7970
      %7972 = vrot.lane.b32.xlu0 %v7901, 32
      %v7973 = vpop.permute.xlu0 %7972
      %7974 = vrot.lane.b32.xlu0 %v7913, 32
      %v7975 = vpop.permute.xlu0 %7974
      %7976 = vrot.lane.b32.xlu0 %v7925, 32
      %v7977 = vpop.permute.xlu0 %7976
      %7978 = vrot.lane.b32.xlu0 %v7937, 32
      %v7979 = vpop.permute.xlu0 %7978
      %7980 = vrot.lane.b32.xlu0 %v7949, 32
      %v7981 = vpop.permute.xlu0 %7980
      %v8014 = vrot.slane %v7726, 1
      %v8015 = vrot.slane %v7742, 1
      %v8016 = vsel %vm972, %v8014, %v8015
      %v8017 = vrot.slane %v7727, 1
      %v8018 = vrot.slane %v7743, 1
      %v8019 = vsel %vm972, %v8017, %v8018
      %v8020 = vrot.slane %v7728, 1
      %v8021 = vrot.slane %v7744, 1
      %v8022 = vsel %vm972, %v8020, %v8021
      %v8023 = vrot.slane %v7729, 1
      %v8024 = vrot.slane %v7745, 1
      %v8025 = vsel %vm972, %v8023, %v8024
      %v8026 = vrot.slane %v7730, 1
      %v8027 = vrot.slane %v7746, 1
      %v8028 = vsel %vm972, %v8026, %v8027
      %v8029 = vrot.slane %v7731, 1
      %v8030 = vrot.slane %v7747, 1
      %v8031 = vsel %vm972, %v8029, %v8030
      %v8032 = vrot.slane %v7732, 1
      %v8033 = vrot.slane %v7748, 1
      %v8034 = vsel %vm972, %v8032, %v8033
      %v8035 = vrot.slane %v7733, 1
      %v8036 = vrot.slane %v7749, 1
      %v8037 = vsel %vm972, %v8035, %v8036
      %v8038 = vrot.slane %v7734, 1
      %v8039 = vrot.slane %v7750, 1
      %v8040 = vsel %vm972, %v8038, %v8039
      %v8041 = vrot.slane %v7735, 1
      %v8042 = vrot.slane %v7751, 1
      %v8043 = vsel %vm972, %v8041, %v8042
      %v8044 = vrot.slane %v7736, 1
      %v8045 = vrot.slane %v7752, 1
      %v8046 = vsel %vm972, %v8044, %v8045
      %v8047 = vrot.slane %v7737, 1
      %v8048 = vrot.slane %v7753, 1
      %v8049 = vsel %vm972, %v8047, %v8048
      %v8050 = vrot.slane %v7738, 1
      %v8051 = vrot.slane %v7754, 1
      %v8052 = vsel %vm972, %v8050, %v8051
      %v8053 = vrot.slane %v7739, 1
      %v8054 = vrot.slane %v7755, 1
      %v8055 = vsel %vm972, %v8053, %v8054
      %v8056 = vrot.slane %v7740, 1
      %v8057 = vrot.slane %v7756, 1
      %v8058 = vsel %vm972, %v8056, %v8057
      %v8059 = vrot.slane %v7741, 1
      %v8060 = vrot.slane %v7757, 1
      %v8061 = vsel %vm972, %v8059, %v8060
      %8062 = vrot.lane.b32.xlu0 %v8016, 64
      %v8063 = vpop.permute.xlu0 %8062
      %8064 = vrot.lane.b32.xlu0 %v8019, 64
      %v8065 = vpop.permute.xlu0 %8064
      %8066 = vrot.lane.b32.xlu0 %v8022, 64
      %v8067 = vpop.permute.xlu0 %8066
      %8068 = vrot.lane.b32.xlu0 %v8025, 64
      %v8069 = vpop.permute.xlu0 %8068
      %8070 = vrot.lane.b32.xlu0 %v8028, 64
      %v8071 = vpop.permute.xlu0 %8070
      %8072 = vrot.lane.b32.xlu0 %v8031, 64
      %v8073 = vpop.permute.xlu0 %8072
      %8074 = vrot.lane.b32.xlu0 %v8034, 64
      %v8075 = vpop.permute.xlu0 %8074
      %8076 = vrot.lane.b32.xlu0 %v8037, 64
      %v8077 = vpop.permute.xlu0 %8076
      %8078 = vrot.lane.b32.xlu0 %v8040, 64
      %v8079 = vpop.permute.xlu0 %8078
      %8080 = vrot.lane.b32.xlu0 %v8043, 64
      %v8081 = vpop.permute.xlu0 %8080
      %8082 = vrot.lane.b32.xlu0 %v8046, 64
      %v8083 = vpop.permute.xlu0 %8082
      %8084 = vrot.lane.b32.xlu0 %v8049, 64
      %v8085 = vpop.permute.xlu0 %8084
      %8086 = vrot.lane.b32.xlu0 %v8052, 64
      %v8087 = vpop.permute.xlu0 %8086
      %8088 = vrot.lane.b32.xlu0 %v8055, 64
      %v8089 = vpop.permute.xlu0 %8088
      %8090 = vrot.lane.b32.xlu0 %v8058, 64
      %v8091 = vpop.permute.xlu0 %8090
      %8092 = vrot.lane.b32.xlu0 %v8061, 64
      %v8093 = vpop.permute.xlu0 %8092
      %vm8094 = vsmask.f32 6400
      %v8095 = vrot.slane %v7759, 1
      %v8096 = vrot.slane %v7761, 2
      %v8097 = vor.u32 %v8095, %v8096
      %v8098 = vshrl.u32 %v7742, 16
      %v8100 = vrot.slane %v8098, 1
      %v8101 = vrot.slane %v7766, 2
      %v8102 = vor.u32 %v8100, %v8101
      %v8103 = vsel %vm8094, %v8097, %v8102
      %v8104 = vrot.slane %v7771, 1
      %v8105 = vrot.slane %v7773, 2
      %v8106 = vor.u32 %v8104, %v8105
      %v8107 = vshrl.u32 %v7743, 16
      %v8109 = vrot.slane %v8107, 1
      %v8110 = vrot.slane %v7778, 2
      %v8111 = vor.u32 %v8109, %v8110
      %v8112 = vsel %vm8094, %v8106, %v8111
      %v8113 = vrot.slane %v7783, 1
      %v8114 = vrot.slane %v7785, 2
      %v8115 = vor.u32 %v8113, %v8114
      %v8116 = vshrl.u32 %v7744, 16
      %v8118 = vrot.slane %v8116, 1
      %v8119 = vrot.slane %v7790, 2
      %v8120 = vor.u32 %v8118, %v8119
      %v8121 = vsel %vm8094, %v8115, %v8120
      %v8122 = vrot.slane %v7795, 1
      %v8123 = vrot.slane %v7797, 2
      %v8124 = vor.u32 %v8122, %v8123
      %v8125 = vshrl.u32 %v7745, 16
      %v8127 = vrot.slane %v8125, 1
      %v8128 = vrot.slane %v7802, 2
      %v8129 = vor.u32 %v8127, %v8128
      %v8130 = vsel %vm8094, %v8124, %v8129
      %v8131 = vrot.slane %v7807, 1
      %v8132 = vrot.slane %v7809, 2
      %v8133 = vor.u32 %v8131, %v8132
      %v8134 = vshrl.u32 %v7746, 16
      %v8136 = vrot.slane %v8134, 1
      %v8137 = vrot.slane %v7814, 2
      %v8138 = vor.u32 %v8136, %v8137
      %v8139 = vsel %vm8094, %v8133, %v8138
      %v8140 = vrot.slane %v7819, 1
      %v8141 = vrot.slane %v7821, 2
      %v8142 = vor.u32 %v8140, %v8141
      %v8143 = vshrl.u32 %v7747, 16
      %v8145 = vrot.slane %v8143, 1
      %v8146 = vrot.slane %v7826, 2
      %v8147 = vor.u32 %v8145, %v8146
      %v8148 = vsel %vm8094, %v8142, %v8147
      %v8149 = vrot.slane %v7831, 1
      %v8150 = vrot.slane %v7833, 2
      %v8151 = vor.u32 %v8149, %v8150
      %v8152 = vshrl.u32 %v7748, 16
      %v8154 = vrot.slane %v8152, 1
      %v8155 = vrot.slane %v7838, 2
      %v8156 = vor.u32 %v8154, %v8155
      %v8157 = vsel %vm8094, %v8151, %v8156
      %v8158 = vrot.slane %v7843, 1
      %v8159 = vrot.slane %v7845, 2
      %v8160 = vor.u32 %v8158, %v8159
      %v8161 = vshrl.u32 %v7749, 16
      %v8163 = vrot.slane %v8161, 1
      %v8164 = vrot.slane %v7850, 2
      %v8165 = vor.u32 %v8163, %v8164
      %v8166 = vsel %vm8094, %v8160, %v8165
      %v8167 = vrot.slane %v7855, 1
      %v8168 = vrot.slane %v7857, 2
      %v8169 = vor.u32 %v8167, %v8168
      %v8170 = vshrl.u32 %v7750, 16
      %v8172 = vrot.slane %v8170, 1
      %v8173 = vrot.slane %v7862, 2
      %v8174 = vor.u32 %v8172, %v8173
      %v8175 = vsel %vm8094, %v8169, %v8174
      %v8176 = vrot.slane %v7867, 1
      %v8177 = vrot.slane %v7869, 2
      %v8178 = vor.u32 %v8176, %v8177
      %v8179 = vshrl.u32 %v7751, 16
      %v8181 = vrot.slane %v8179, 1
      %v8182 = vrot.slane %v7874, 2
      %v8183 = vor.u32 %v8181, %v8182
      %v8184 = vsel %vm8094, %v8178, %v8183
      %v8185 = vrot.slane %v7879, 1
      %v8186 = vrot.slane %v7881, 2
      %v8187 = vor.u32 %v8185, %v8186
      %v8188 = vshrl.u32 %v7752, 16
      %v8190 = vrot.slane %v8188, 1
      %v8191 = vrot.slane %v7886, 2
      %v8192 = vor.u32 %v8190, %v8191
      %v8193 = vsel %vm8094, %v8187, %v8192
      %v8194 = vrot.slane %v7891, 1
      %v8195 = vrot.slane %v7893, 2
      %v8196 = vor.u32 %v8194, %v8195
      %v8197 = vshrl.u32 %v7753, 16
      %v8199 = vrot.slane %v8197, 1
      %v8200 = vrot.slane %v7898, 2
      %v8201 = vor.u32 %v8199, %v8200
      %v8202 = vsel %vm8094, %v8196, %v8201
      %v8203 = vrot.slane %v7903, 1
      %v8204 = vrot.slane %v7905, 2
      %v8205 = vor.u32 %v8203, %v8204
      %v8206 = vshrl.u32 %v7754, 16
      %v8208 = vrot.slane %v8206, 1
      %v8209 = vrot.slane %v7910, 2
      %v8210 = vor.u32 %v8208, %v8209
      %v8211 = vsel %vm8094, %v8205, %v8210
      %v8212 = vrot.slane %v7915, 1
      %v8213 = vrot.slane %v7917, 2
      %v8214 = vor.u32 %v8212, %v8213
      %v8215 = vshrl.u32 %v7755, 16
      %v8217 = vrot.slane %v8215, 1
      %v8218 = vrot.slane %v7922, 2
      %v8219 = vor.u32 %v8217, %v8218
      %v8220 = vsel %vm8094, %v8214, %v8219
      %v8221 = vrot.slane %v7927, 1
      %v8222 = vrot.slane %v7929, 2
      %v8223 = vor.u32 %v8221, %v8222
      %v8224 = vshrl.u32 %v7756, 16
      %v8226 = vrot.slane %v8224, 1
      %v8227 = vrot.slane %v7934, 2
      %v8228 = vor.u32 %v8226, %v8227
      %v8229 = vsel %vm8094, %v8223, %v8228
      %v8230 = vrot.slane %v7939, 1
      %v8231 = vrot.slane %v7941, 2
      %v8232 = vor.u32 %v8230, %v8231
      %v8233 = vshrl.u32 %v7757, 16
      %v8235 = vrot.slane %v8233, 1
      %v8236 = vrot.slane %v7946, 2
      %v8237 = vor.u32 %v8235, %v8236
      %v8238 = vsel %vm8094, %v8232, %v8237
      %8239 = vrot.lane.b32.xlu0 %v8103, 96
      %v8240 = vpop.permute.xlu0 %8239
      %8241 = vrot.lane.b32.xlu0 %v8112, 96
      %v8242 = vpop.permute.xlu0 %8241
      %8243 = vrot.lane.b32.xlu0 %v8121, 96
      %v8244 = vpop.permute.xlu0 %8243
      %8245 = vrot.lane.b32.xlu0 %v8130, 96
      %v8246 = vpop.permute.xlu0 %8245
      %8247 = vrot.lane.b32.xlu0 %v8139, 96
      %v8248 = vpop.permute.xlu0 %8247
      %8249 = vrot.lane.b32.xlu0 %v8148, 96
      %v8250 = vpop.permute.xlu0 %8249
      %8251 = vrot.lane.b32.xlu0 %v8157, 96
      %v8252 = vpop.permute.xlu0 %8251
      %8253 = vrot.lane.b32.xlu0 %v8166, 96
      %v8254 = vpop.permute.xlu0 %8253
      %8255 = vrot.lane.b32.xlu0 %v8175, 96
      %v8256 = vpop.permute.xlu0 %8255
      %8257 = vrot.lane.b32.xlu0 %v8184, 96
      %v8258 = vpop.permute.xlu0 %8257
      %8259 = vrot.lane.b32.xlu0 %v8193, 96
      %v8260 = vpop.permute.xlu0 %8259
      %8261 = vrot.lane.b32.xlu0 %v8202, 96
      %v8262 = vpop.permute.xlu0 %8261
      %8263 = vrot.lane.b32.xlu0 %v8211, 96
      %v8264 = vpop.permute.xlu0 %8263
      %8265 = vrot.lane.b32.xlu0 %v8220, 96
      %v8266 = vpop.permute.xlu0 %8265
      %8267 = vrot.lane.b32.xlu0 %v8229, 96
      %v8268 = vpop.permute.xlu0 %8267
      %8269 = vrot.lane.b32.xlu0 %v8238, 96
      %v8270 = vpop.permute.xlu0 %8269
      %vm8271 = vcmask 1045504
      %v8272 = vrot.slane %v7726, 2
      %v8273 = vrot.slane %v7742, 2
      %v8274 = vsel %vm8271, %v8272, %v8273
      %v8275 = vrot.slane %v7727, 2
      %v8276 = vrot.slane %v7743, 2
      %v8277 = vsel %vm8271, %v8275, %v8276
      %v8278 = vrot.slane %v7728, 2
      %v8279 = vrot.slane %v7744, 2
      %v8280 = vsel %vm8271, %v8278, %v8279
      %v8281 = vrot.slane %v7729, 2
      %v8282 = vrot.slane %v7745, 2
      %v8283 = vsel %vm8271, %v8281, %v8282
      %v8284 = vrot.slane %v7730, 2
      %v8285 = vrot.slane %v7746, 2
      %v8286 = vsel %vm8271, %v8284, %v8285
      %v8287 = vrot.slane %v7731, 2
      %v8288 = vrot.slane %v7747, 2
      %v8289 = vsel %vm8271, %v8287, %v8288
      %v8290 = vrot.slane %v7732, 2
      %v8291 = vrot.slane %v7748, 2
      %v8292 = vsel %vm8271, %v8290, %v8291
      %v8293 = vrot.slane %v7733, 2
      %v8294 = vrot.slane %v7749, 2
      %v8295 = vsel %vm8271, %v8293, %v8294
      %v8296 = vrot.slane %v7734, 2
      %v8297 = vrot.slane %v7750, 2
      %v8298 = vsel %vm8271, %v8296, %v8297
      %v8299 = vrot.slane %v7735, 2
      %v8300 = vrot.slane %v7751, 2
      %v8301 = vsel %vm8271, %v8299, %v8300
      %v8302 = vrot.slane %v7736, 2
      %v8303 = vrot.slane %v7752, 2
      %v8304 = vsel %vm8271, %v8302, %v8303
      %v8305 = vrot.slane %v7737, 2
      %v8306 = vrot.slane %v7753, 2
      %v8307 = vsel %vm8271, %v8305, %v8306
      %v8308 = vrot.slane %v7738, 2
      %v8309 = vrot.slane %v7754, 2
      %v8310 = vsel %vm8271, %v8308, %v8309
      %v8311 = vrot.slane %v7739, 2
      %v8312 = vrot.slane %v7755, 2
      %v8313 = vsel %vm8271, %v8311, %v8312
      %v8314 = vrot.slane %v7740, 2
      %v8315 = vrot.slane %v7756, 2
      %v8316 = vsel %vm8271, %v8314, %v8315
      %v8317 = vrot.slane %v7741, 2
      %v8318 = vrot.slane %v7757, 2
      %v8319 = vsel %vm8271, %v8317, %v8318
      %vm8320 = vsmask.f32 5376
      %v8321 = vrot.slane %v7759, 2
      %v8322 = vrot.slane %v7761, 3
      %v8323 = vor.u32 %v8321, %v8322
      %v8324 = vrot.slane %v8098, 2
      %v8325 = vrot.slane %v7766, 3
      %v8326 = vor.u32 %v8324, %v8325
      %v8327 = vsel %vm8320, %v8323, %v8326
      %v8328 = vrot.slane %v7771, 2
      %v8329 = vrot.slane %v7773, 3
      %v8330 = vor.u32 %v8328, %v8329
      %v8331 = vrot.slane %v8107, 2
      %v8332 = vrot.slane %v7778, 3
      %v8333 = vor.u32 %v8331, %v8332
      %v8334 = vsel %vm8320, %v8330, %v8333
      %v8335 = vrot.slane %v7783, 2
      %v8336 = vrot.slane %v7785, 3
      %v8337 = vor.u32 %v8335, %v8336
      %v8338 = vrot.slane %v8116, 2
      %v8339 = vrot.slane %v7790, 3
      %v8340 = vor.u32 %v8338, %v8339
      %v8341 = vsel %vm8320, %v8337, %v8340
      %v8342 = vrot.slane %v7795, 2
      %v8343 = vrot.slane %v7797, 3
      %v8344 = vor.u32 %v8342, %v8343
      %v8345 = vrot.slane %v8125, 2
      %v8346 = vrot.slane %v7802, 3
      %v8347 = vor.u32 %v8345, %v8346
      %v8348 = vsel %vm8320, %v8344, %v8347
      %v8349 = vrot.slane %v7807, 2
      %v8350 = vrot.slane %v7809, 3
      %v8351 = vor.u32 %v8349, %v8350
      %v8352 = vrot.slane %v8134, 2
      %v8353 = vrot.slane %v7814, 3
      %v8354 = vor.u32 %v8352, %v8353
      %v8355 = vsel %vm8320, %v8351, %v8354
      %v8356 = vrot.slane %v7819, 2
      %v8357 = vrot.slane %v7821, 3
      %v8358 = vor.u32 %v8356, %v8357
      %v8359 = vrot.slane %v8143, 2
      %v8360 = vrot.slane %v7826, 3
      %v8361 = vor.u32 %v8359, %v8360
      %v8362 = vsel %vm8320, %v8358, %v8361
      %v8363 = vrot.slane %v7831, 2
      %v8364 = vrot.slane %v7833, 3
      %v8365 = vor.u32 %v8363, %v8364
      %v8366 = vrot.slane %v8152, 2
      %v8367 = vrot.slane %v7838, 3
      %v8368 = vor.u32 %v8366, %v8367
      %v8369 = vsel %vm8320, %v8365, %v8368
      %v8370 = vrot.slane %v7843, 2
      %v8371 = vrot.slane %v7845, 3
      %v8372 = vor.u32 %v8370, %v8371
      %v8373 = vrot.slane %v8161, 2
      %v8374 = vrot.slane %v7850, 3
      %v8375 = vor.u32 %v8373, %v8374
      %v8376 = vsel %vm8320, %v8372, %v8375
      %v8377 = vrot.slane %v7855, 2
      %v8378 = vrot.slane %v7857, 3
      %v8379 = vor.u32 %v8377, %v8378
      %v8380 = vrot.slane %v8170, 2
      %v8381 = vrot.slane %v7862, 3
      %v8382 = vor.u32 %v8380, %v8381
      %v8383 = vsel %vm8320, %v8379, %v8382
      %v8384 = vrot.slane %v7867, 2
      %v8385 = vrot.slane %v7869, 3
      %v8386 = vor.u32 %v8384, %v8385
      %v8387 = vrot.slane %v8179, 2
      %v8388 = vrot.slane %v7874, 3
      %v8389 = vor.u32 %v8387, %v8388
      %v8390 = vsel %vm8320, %v8386, %v8389
      %v8391 = vrot.slane %v7879, 2
      %v8392 = vrot.slane %v7881, 3
      %v8393 = vor.u32 %v8391, %v8392
      %v8394 = vrot.slane %v8188, 2
      %v8395 = vrot.slane %v7886, 3
      %v8396 = vor.u32 %v8394, %v8395
      %v8397 = vsel %vm8320, %v8393, %v8396
      %v8398 = vrot.slane %v7891, 2
      %v8399 = vrot.slane %v7893, 3
      %v8400 = vor.u32 %v8398, %v8399
      %v8401 = vrot.slane %v8197, 2
      %v8402 = vrot.slane %v7898, 3
      %v8403 = vor.u32 %v8401, %v8402
      %v8404 = vsel %vm8320, %v8400, %v8403
      %v8405 = vrot.slane %v7903, 2
      %v8406 = vrot.slane %v7905, 3
      %v8407 = vor.u32 %v8405, %v8406
      %v8408 = vrot.slane %v8206, 2
      %v8409 = vrot.slane %v7910, 3
      %v8410 = vor.u32 %v8408, %v8409
      %v8411 = vsel %vm8320, %v8407, %v8410
      %v8412 = vrot.slane %v7915, 2
      %v8413 = vrot.slane %v7917, 3
      %v8414 = vor.u32 %v8412, %v8413
      %v8415 = vrot.slane %v8215, 2
      %v8416 = vrot.slane %v7922, 3
      %v8417 = vor.u32 %v8415, %v8416
      %v8418 = vsel %vm8320, %v8414, %v8417
      %v8419 = vrot.slane %v7927, 2
      %v8420 = vrot.slane %v7929, 3
      %v8421 = vor.u32 %v8419, %v8420
      %v8422 = vrot.slane %v8224, 2
      %v8423 = vrot.slane %v7934, 3
      %v8424 = vor.u32 %v8422, %v8423
      %v8425 = vsel %vm8320, %v8421, %v8424
      %v8426 = vrot.slane %v7939, 2
      %v8427 = vrot.slane %v7941, 3
      %v8428 = vor.u32 %v8426, %v8427
      %v8429 = vrot.slane %v8233, 2
      %v8430 = vrot.slane %v7946, 3
      %v8431 = vor.u32 %v8429, %v8430
      %v8432 = vsel %vm8320, %v8428, %v8431
      %8433 = vrot.lane.b32.xlu0 %v8327, 32
      %v8434 = vpop.permute.xlu0 %8433
      %8435 = vrot.lane.b32.xlu0 %v8334, 32
      %v8436 = vpop.permute.xlu0 %8435
      %8437 = vrot.lane.b32.xlu0 %v8341, 32
      %v8438 = vpop.permute.xlu0 %8437
      %8439 = vrot.lane.b32.xlu0 %v8348, 32
      %v8440 = vpop.permute.xlu0 %8439
      %8441 = vrot.lane.b32.xlu0 %v8355, 32
      %v8442 = vpop.permute.xlu0 %8441
      %8443 = vrot.lane.b32.xlu0 %v8362, 32
      %v8444 = vpop.permute.xlu0 %8443
      %8445 = vrot.lane.b32.xlu0 %v8369, 32
      %v8446 = vpop.permute.xlu0 %8445
      %8447 = vrot.lane.b32.xlu0 %v8376, 32
      %v8448 = vpop.permute.xlu0 %8447
      %8449 = vrot.lane.b32.xlu0 %v8383, 32
      %v8450 = vpop.permute.xlu0 %8449
      %8451 = vrot.lane.b32.xlu0 %v8390, 32
      %v8452 = vpop.permute.xlu0 %8451
      %8453 = vrot.lane.b32.xlu0 %v8397, 32
      %v8454 = vpop.permute.xlu0 %8453
      %8455 = vrot.lane.b32.xlu0 %v8404, 32
      %v8456 = vpop.permute.xlu0 %8455
      %8457 = vrot.lane.b32.xlu0 %v8411, 32
      %v8458 = vpop.permute.xlu0 %8457
      %8459 = vrot.lane.b32.xlu0 %v8418, 32
      %v8460 = vpop.permute.xlu0 %8459
      %8461 = vrot.lane.b32.xlu0 %v8425, 32
      %v8462 = vpop.permute.xlu0 %8461
      %8463 = vrot.lane.b32.xlu0 %v8432, 32
      %v8464 = vpop.permute.xlu0 %8463
      %vm8465 = vcmask 1044480
      %v8466 = vrot.slane %v7726, 3
      %v8467 = vrot.slane %v7742, 3
      %v8468 = vsel %vm8465, %v8466, %v8467
      %v8469 = vrot.slane %v7727, 3
      %v8470 = vrot.slane %v7743, 3
      %v8471 = vsel %vm8465, %v8469, %v8470
      %v8472 = vrot.slane %v7728, 3
      %v8473 = vrot.slane %v7744, 3
      %v8474 = vsel %vm8465, %v8472, %v8473
      %v8475 = vrot.slane %v7729, 3
      %v8476 = vrot.slane %v7745, 3
      %v8477 = vsel %vm8465, %v8475, %v8476
      %v8478 = vrot.slane %v7730, 3
      %v8479 = vrot.slane %v7746, 3
      %v8480 = vsel %vm8465, %v8478, %v8479
      %v8481 = vrot.slane %v7731, 3
      %v8482 = vrot.slane %v7747, 3
      %v8483 = vsel %vm8465, %v8481, %v8482
      %v8484 = vrot.slane %v7732, 3
      %v8485 = vrot.slane %v7748, 3
      %v8486 = vsel %vm8465, %v8484, %v8485
      %v8487 = vrot.slane %v7733, 3
      %v8488 = vrot.slane %v7749, 3
      %v8489 = vsel %vm8465, %v8487, %v8488
      %v8490 = vrot.slane %v7734, 3
      %v8491 = vrot.slane %v7750, 3
      %v8492 = vsel %vm8465, %v8490, %v8491
      %v8493 = vrot.slane %v7735, 3
      %v8494 = vrot.slane %v7751, 3
      %v8495 = vsel %vm8465, %v8493, %v8494
      %v8496 = vrot.slane %v7736, 3
      %v8497 = vrot.slane %v7752, 3
      %v8498 = vsel %vm8465, %v8496, %v8497
      %v8499 = vrot.slane %v7737, 3
      %v8500 = vrot.slane %v7753, 3
      %v8501 = vsel %vm8465, %v8499, %v8500
      %v8502 = vrot.slane %v7738, 3
      %v8503 = vrot.slane %v7754, 3
      %v8504 = vsel %vm8465, %v8502, %v8503
      %v8505 = vrot.slane %v7739, 3
      %v8506 = vrot.slane %v7755, 3
      %v8507 = vsel %vm8465, %v8505, %v8506
      %v8508 = vrot.slane %v7740, 3
      %v8509 = vrot.slane %v7756, 3
      %v8510 = vsel %vm8465, %v8508, %v8509
      %v8511 = vrot.slane %v7741, 3
      %v8512 = vrot.slane %v7757, 3
      %v8513 = vsel %vm8465, %v8511, %v8512
      %8514 = vrot.lane.b32.xlu0 %v8468, 64
      %v8515 = vpop.permute.xlu0 %8514
      %8516 = vrot.lane.b32.xlu0 %v8471, 64
      %v8517 = vpop.permute.xlu0 %8516
      %8518 = vrot.lane.b32.xlu0 %v8474, 64
      %v8519 = vpop.permute.xlu0 %8518
      %8520 = vrot.lane.b32.xlu0 %v8477, 64
      %v8521 = vpop.permute.xlu0 %8520
      %8522 = vrot.lane.b32.xlu0 %v8480, 64
      %v8523 = vpop.permute.xlu0 %8522
      %8524 = vrot.lane.b32.xlu0 %v8483, 64
      %v8525 = vpop.permute.xlu0 %8524
      %8526 = vrot.lane.b32.xlu0 %v8486, 64
      %v8527 = vpop.permute.xlu0 %8526
      %8528 = vrot.lane.b32.xlu0 %v8489, 64
      %v8529 = vpop.permute.xlu0 %8528
      %8530 = vrot.lane.b32.xlu0 %v8492, 64
      %v8531 = vpop.permute.xlu0 %8530
      %8532 = vrot.lane.b32.xlu0 %v8495, 64
      %v8533 = vpop.permute.xlu0 %8532
      %8534 = vrot.lane.b32.xlu0 %v8498, 64
      %v8535 = vpop.permute.xlu0 %8534
      %8536 = vrot.lane.b32.xlu0 %v8501, 64
      %v8537 = vpop.permute.xlu0 %8536
      %8538 = vrot.lane.b32.xlu0 %v8504, 64
      %v8539 = vpop.permute.xlu0 %8538
      %8540 = vrot.lane.b32.xlu0 %v8507, 64
      %v8541 = vpop.permute.xlu0 %8540
      %8542 = vrot.lane.b32.xlu0 %v8510, 64
      %v8543 = vpop.permute.xlu0 %8542
      %8544 = vrot.lane.b32.xlu0 %v8513, 64
      %v8545 = vpop.permute.xlu0 %8544
      %vm8546 = vcmask 261120
      %v8548 = vsel %vm8546, %v7726, %v7951
      %v8550 = vsel %vm8546, %v7727, %v7953
      %v8552 = vsel %vm8546, %v7728, %v7955
      %v8554 = vsel %vm8546, %v7729, %v7957
      %v8556 = vsel %vm8546, %v7730, %v7959
      %v8558 = vsel %vm8546, %v7731, %v7961
      %v8560 = vsel %vm8546, %v7732, %v7963
      %v8562 = vsel %vm8546, %v7733, %v7965
      %v8564 = vsel %vm8546, %v7734, %v7967
      %v8566 = vsel %vm8546, %v7735, %v7969
      %v8568 = vsel %vm8546, %v7736, %v7971
      %v8570 = vsel %vm8546, %v7737, %v7973
      %v8572 = vsel %vm8546, %v7738, %v7975
      %v8574 = vsel %vm8546, %v7739, %v7977
      %v8576 = vsel %vm8546, %v7740, %v7979
      %v8578 = vsel %vm8546, %v7741, %v7981
      %v8580 = vsel %vm6380, %v8548, %v8063
      %v8582 = vsel %vm6380, %v8550, %v8065
      %v8584 = vsel %vm6380, %v8552, %v8067
      %v8586 = vsel %vm6380, %v8554, %v8069
      %v8588 = vsel %vm6380, %v8556, %v8071
      %v8590 = vsel %vm6380, %v8558, %v8073
      %v8592 = vsel %vm6380, %v8560, %v8075
      %v8594 = vsel %vm6380, %v8562, %v8077
      %v8596 = vsel %vm6380, %v8564, %v8079
      %v8598 = vsel %vm6380, %v8566, %v8081
      %v8600 = vsel %vm6380, %v8568, %v8083
      %v8602 = vsel %vm6380, %v8570, %v8085
      %v8604 = vsel %vm6380, %v8572, %v8087
      %v8606 = vsel %vm6380, %v8574, %v8089
      %v8608 = vsel %vm6380, %v8576, %v8091
      %v8610 = vsel %vm6380, %v8578, %v8093
      %vm8611 = vcmask 785408
      %v8613 = vsel %vm8611, %v8580, %v8240
      %v8616 = vsel %vm8611, %v8582, %v8242
      %v8619 = vsel %vm8611, %v8584, %v8244
      %v8622 = vsel %vm8611, %v8586, %v8246
      %v8625 = vsel %vm8611, %v8588, %v8248
      %v8628 = vsel %vm8611, %v8590, %v8250
      %v8631 = vsel %vm8611, %v8592, %v8252
      %v8634 = vsel %vm8611, %v8594, %v8254
      %v8637 = vsel %vm8611, %v8596, %v8256
      %v8640 = vsel %vm8611, %v8598, %v8258
      %v8643 = vsel %vm8611, %v8600, %v8260
      %v8646 = vsel %vm8611, %v8602, %v8262
      %v8649 = vsel %vm8611, %v8604, %v8264
      %v8652 = vsel %vm8611, %v8606, %v8266
      %v8655 = vsel %vm8611, %v8608, %v8268
      %v8658 = vsel %vm8611, %v8610, %v8270
      %v8662 = vsel %vm8546, %v8274, %v8434
      %v8665 = vsel %vm8546, %v8277, %v8436
      %v8668 = vsel %vm8546, %v8280, %v8438
      %v8671 = vsel %vm8546, %v8283, %v8440
      %v8674 = vsel %vm8546, %v8286, %v8442
      %v8677 = vsel %vm8546, %v8289, %v8444
      %v8680 = vsel %vm8546, %v8292, %v8446
      %v8683 = vsel %vm8546, %v8295, %v8448
      %v8686 = vsel %vm8546, %v8298, %v8450
      %v8689 = vsel %vm8546, %v8301, %v8452
      %v8692 = vsel %vm8546, %v8304, %v8454
      %v8695 = vsel %vm8546, %v8307, %v8456
      %v8698 = vsel %vm8546, %v8310, %v8458
      %v8701 = vsel %vm8546, %v8313, %v8460
      %v8704 = vsel %vm8546, %v8316, %v8462
      %v8707 = vsel %vm8546, %v8319, %v8464
      %v8709 = vsel %vm6380, %v8662, %v8515
      %v8711 = vsel %vm6380, %v8665, %v8517
      %v8713 = vsel %vm6380, %v8668, %v8519
      %v8715 = vsel %vm6380, %v8671, %v8521
      %v8717 = vsel %vm6380, %v8674, %v8523
      %v8719 = vsel %vm6380, %v8677, %v8525
      %v8721 = vsel %vm6380, %v8680, %v8527
      %v8723 = vsel %vm6380, %v8683, %v8529
      %v8725 = vsel %vm6380, %v8686, %v8531
      %v8727 = vsel %vm6380, %v8689, %v8533
      %v8729 = vsel %vm6380, %v8692, %v8535
      %v8731 = vsel %vm6380, %v8695, %v8537
      %v8733 = vsel %vm6380, %v8698, %v8539
      %v8735 = vsel %vm6380, %v8701, %v8541
      %v8737 = vsel %vm6380, %v8704, %v8543
      %v8739 = vsel %vm6380, %v8707, %v8545
      %v8740 = vld [vmem:[%s9] sm:$0xf]
      %v8741 = vld [vmem:[%s9 + $0x4] sm:$0xf]
      %v8742 = vld [vmem:[%s9 + $0x8] sm:$0xf]
      %v8743 = vld [vmem:[%s9 + $0xc] sm:$0xf]
      %v8744 = vld [vmem:[%s9 + $0x10] sm:$0xf]
      %v8745 = vld [vmem:[%s9 + $0x14] sm:$0xf]
      %v8746 = vld [vmem:[%s9 + $0x18] sm:$0xf]
      %v8747 = vld [vmem:[%s9 + $0x1c] sm:$0xf]
      %v8748 = vld [vmem:[%s9 + $0x20] sm:$0xf]
      %v8749 = vld [vmem:[%s9 + $0x24] sm:$0xf]
      %v8750 = vld [vmem:[%s9 + $0x28] sm:$0xf]
      %v8751 = vld [vmem:[%s9 + $0x2c] sm:$0xf]
      %v8752 = vld [vmem:[%s9 + $0x30] sm:$0xf]
      %v8753 = vld [vmem:[%s9 + $0x34] sm:$0xf]
      %v8754 = vld [vmem:[%s9 + $0x38] sm:$0xf]
      %v8755 = vld [vmem:[%s9 + $0x3c] sm:$0xf]
      %v8756 = vld [vmem:[%s9 + $0x40] sm:$0xf]
      %v8757 = vld [vmem:[%s9 + $0x44] sm:$0xf]
      %v8758 = vld [vmem:[%s9 + $0x48] sm:$0xf]
      %v8759 = vld [vmem:[%s9 + $0x4c] sm:$0xf]
      %v8760 = vld [vmem:[%s9 + $0x50] sm:$0xf]
      %v8761 = vld [vmem:[%s9 + $0x54] sm:$0xf]
      %v8762 = vld [vmem:[%s9 + $0x58] sm:$0xf]
      %v8763 = vld [vmem:[%s9 + $0x5c] sm:$0xf]
      %v8764 = vld [vmem:[%s9 + $0x60] sm:$0xf]
      %v8765 = vld [vmem:[%s9 + $0x64] sm:$0xf]
      %v8766 = vld [vmem:[%s9 + $0x68] sm:$0xf]
      %v8767 = vld [vmem:[%s9 + $0x6c] sm:$0xf]
      %s8768 = scalar_lea.vmem %s9, 112
      %v8769 = vld [vmem:[%s8768] sm:$0xf]
      %v8770 = vld [vmem:[%s8768 + $0x4] sm:$0xf]
      %v8771 = vld [vmem:[%s8768 + $0x8] sm:$0xf]
      %v8772 = vld [vmem:[%s8768 + $0xc] sm:$0xf]
      %v8773 = vld [vmem:[%s8768 + $0x10] sm:$0xf]
      %v8774 = vld [vmem:[%s8768 + $0x14] sm:$0xf]
      %v8775 = vld [vmem:[%s8768 + $0x18] sm:$0xf]
      %v8776 = vld [vmem:[%s8768 + $0x1c] sm:$0xf]
      %v8777 = vld [vmem:[%s8768 + $0x20] sm:$0xf]
      %v8778 = vld [vmem:[%s8768 + $0x24] sm:$0xf]
      %v8779 = vld [vmem:[%s8768 + $0x28] sm:$0xf]
      %v8780 = vld [vmem:[%s8768 + $0x2c] sm:$0xf]
      %v8781 = vld [vmem:[%s8768 + $0x30] sm:$0xf]
      %v8782 = vld [vmem:[%s8768 + $0x34] sm:$0xf]
      %v8783 = vld [vmem:[%s8768 + $0x38] sm:$0xf]
      %v8784 = vld [vmem:[%s8768 + $0x3c] sm:$0xf]
      %v8785 = vld [vmem:[%s8768 + $0x40] sm:$0xf]
      %v8786 = vld [vmem:[%s8768 + $0x44] sm:$0xf]
      %v8787 = vld [vmem:[%s8768 + $0x48] sm:$0xf]
      %v8788 = vld [vmem:[%s8768 + $0x4c] sm:$0xf]
      %v8789 = vld [vmem:[%s8768 + $0x50] sm:$0xf]
      %v8790 = vld [vmem:[%s8768 + $0x54] sm:$0xf]
      %v8791 = vld [vmem:[%s8768 + $0x58] sm:$0xf]
      %v8792 = vld [vmem:[%s8768 + $0x5c] sm:$0xf]
      %v8793 = vld [vmem:[%s8768 + $0x60] sm:$0xf]
      %v8794 = vld [vmem:[%s8768 + $0x64] sm:$0xf]
      %v8795 = vld [vmem:[%s8768 + $0x68] sm:$0xf]
      %v8796 = vld [vmem:[%s8768 + $0x6c] sm:$0xf]
      %v8825 = vunpack.c.l.b16 %v8769
      %v8826 = vunpack.c.l.b16 %v8770
      %v8827 = vunpack.c.l.b16 %v8771
      %v8828 = vunpack.c.l.b16 %v8772
      %v8829 = vunpack.c.l.b16 %v8773
      %v8830 = vunpack.c.l.b16 %v8774
      %v8831 = vunpack.c.l.b16 %v8775
      %v8832 = vunpack.c.l.b16 %v8776
      %v8833 = vunpack.c.l.b16 %v8777
      %v8834 = vunpack.c.l.b16 %v8778
      %v8835 = vunpack.c.l.b16 %v8779
      %v8836 = vunpack.c.l.b16 %v8780
      %v8837 = vunpack.c.l.b16 %v8781
      %v8838 = vunpack.c.l.b16 %v8782
      %v8839 = vunpack.c.l.b16 %v8783
      %v8840 = vunpack.c.l.b16 %v8784
      %v8841 = vunpack.c.l.b16 %v8785
      %v8842 = vunpack.c.l.b16 %v8786
      %v8843 = vunpack.c.l.b16 %v8787
      %v8844 = vunpack.c.l.b16 %v8788
      %v8845 = vunpack.c.l.b16 %v8789
      %v8846 = vunpack.c.l.b16 %v8790
      %v8847 = vunpack.c.l.b16 %v8791
      %v8848 = vunpack.c.l.b16 %v8792
      %v8849 = vunpack.c.l.b16 %v8793
      %v8850 = vunpack.c.l.b16 %v8794
      %v8851 = vunpack.c.l.b16 %v8795
      %v8852 = vunpack.c.l.b16 %v8796
      %v8853 = vpack.c.b16 %v8826, %v8825
      %v8854 = vpack.c.b16 %v8828, %v8827
      %v8855 = vpack.c.b16 %v8830, %v8829
      %v8856 = vpack.c.b16 %v8832, %v8831
      %v8857 = vpack.c.b16 %v8834, %v8833
      %v8858 = vpack.c.b16 %v8836, %v8835
      %v8859 = vpack.c.b16 %v8838, %v8837
      %v8860 = vpack.c.b16 %v8840, %v8839
      %v8861 = vpack.c.b16 %v8842, %v8841
      %v8862 = vpack.c.b16 %v8844, %v8843
      %v8863 = vpack.c.b16 %v8846, %v8845
      %v8864 = vpack.c.b16 %v8848, %v8847
      %v8865 = vpack.c.b16 %v8850, %v8849
      %v8866 = vpack.c.b16 %v8852, %v8851
      %v8881 = vsel %vm8611, 0, 0
      %v8883 = vsel %vm8611, %v8709, 0
      %v8885 = vsel %vm8611, %v8711, 0
      %v8887 = vsel %vm8611, %v8713, 0
      %v8889 = vsel %vm8611, %v8715, 0
      %v8891 = vsel %vm8611, %v8717, 0
      %v8893 = vsel %vm8611, %v8719, 0
      %v8895 = vsel %vm8611, %v8721, 0
      %v8897 = vsel %vm8611, %v8723, 0
      %v8899 = vsel %vm8611, %v8725, 0
      %v8901 = vsel %vm8611, %v8727, 0
      %v8903 = vsel %vm8611, %v8729, 0
      %v8905 = vsel %vm8611, %v8731, 0
      %v8907 = vsel %vm8611, %v8733, 0
      %v8909 = vsel %vm8611, %v8735, 0
      %8911 = vmatpush.bf16.msra.mxu0 %v8860
      %8912 = vmatpush.bf16.msra.mxu0 %v8859
      %8913 = vmatpush.bf16.msra.mxu0 %v8858
      %8914 = vmatpush.bf16.msra.mxu0 %v8857
      %8915 = vmatpush.bf16.msra.mxu0 %v8856
      %8916 = vmatpush.bf16.msra.mxu0 %v8855
      %8917 = vmatpush.bf16.msra.mxu0 %v8854
      %8918 = vmatpush.bf16.msra.mxu0 %v8853
      %8919 = vmatmul.bf16.gmra.mxu0 0
      %v8920 = vpop.f32.mrf.mxu0
      %v8921 = vadd.f32 0.0, %v8920
      %v8922 = vpop.f32.mrf.mxu0
      %v8923 = vadd.f32 0.0, %v8922
      %8924 = vmatmul.bf16.gmra.mxu0 0
      %v8925 = vpop.f32.mrf.mxu0
      %v8926 = vadd.f32 0.0, %v8925
      %v8927 = vpop.f32.mrf.mxu0
      %v8928 = vadd.f32 0.0, %v8927
      %8929 = vmatmul.bf16.gmra.mxu0 %v8613
      %v8930 = vpop.f32.mrf.mxu0
      %v8931 = vadd.f32 0.0, %v8930
      %v8932 = vpop.f32.mrf.mxu0
      %v8933 = vadd.f32 0.0, %v8932
      %8934 = vmatmul.bf16.gmra.mxu0 %v8616
      %v8935 = vpop.f32.mrf.mxu0
      %v8936 = vadd.f32 0.0, %v8935
      %v8937 = vpop.f32.mrf.mxu0
      %v8938 = vadd.f32 0.0, %v8937
      %8939 = vmatmul.bf16.gmra.mxu0 %v8619
      %v8940 = vpop.f32.mrf.mxu0
      %v8941 = vadd.f32 0.0, %v8940
      %v8942 = vpop.f32.mrf.mxu0
      %v8943 = vadd.f32 0.0, %v8942
      %8944 = vmatmul.bf16.gmra.mxu0 %v8622
      %v8945 = vpop.f32.mrf.mxu0
      %v8946 = vadd.f32 0.0, %v8945
      %v8947 = vpop.f32.mrf.mxu0
      %v8948 = vadd.f32 0.0, %v8947
      %8949 = vmatmul.bf16.gmra.mxu0 %v8625
      %v8950 = vpop.f32.mrf.mxu0
      %v8951 = vadd.f32 0.0, %v8950
      %v8952 = vpop.f32.mrf.mxu0
      %v8953 = vadd.f32 0.0, %v8952
      %8954 = vmatmul.bf16.gmra.mxu0 %v8628
      %v8955 = vpop.f32.mrf.mxu0
      %v8956 = vadd.f32 0.0, %v8955
      %v8957 = vpop.f32.mrf.mxu0
      %v8958 = vadd.f32 0.0, %v8957
      %8959 = vmatmul.bf16.gmra.mxu0 %v8631
      %v8960 = vpop.f32.mrf.mxu0
      %v8961 = vadd.f32 0.0, %v8960
      %v8962 = vpop.f32.mrf.mxu0
      %v8963 = vadd.f32 0.0, %v8962
      %8964 = vmatmul.bf16.gmra.mxu0 %v8634
      %v8965 = vpop.f32.mrf.mxu0
      %v8966 = vadd.f32 0.0, %v8965
      %v8967 = vpop.f32.mrf.mxu0
      %v8968 = vadd.f32 0.0, %v8967
      %8969 = vmatmul.bf16.gmra.mxu0 %v8637
      %v8970 = vpop.f32.mrf.mxu0
      %v8971 = vadd.f32 0.0, %v8970
      %v8972 = vpop.f32.mrf.mxu0
      %v8973 = vadd.f32 0.0, %v8972
      %8974 = vmatmul.bf16.gmra.mxu0 %v8640
      %v8975 = vpop.f32.mrf.mxu0
      %v8976 = vadd.f32 0.0, %v8975
      %v8977 = vpop.f32.mrf.mxu0
      %v8978 = vadd.f32 0.0, %v8977
      %8979 = vmatmul.bf16.gmra.mxu0 %v8643
      %v8980 = vpop.f32.mrf.mxu0
      %v8981 = vadd.f32 0.0, %v8980
      %v8982 = vpop.f32.mrf.mxu0
      %v8983 = vadd.f32 0.0, %v8982
      %8984 = vmatmul.bf16.gmra.mxu0 %v8646
      %v8985 = vpop.f32.mrf.mxu0
      %v8986 = vadd.f32 0.0, %v8985
      %v8987 = vpop.f32.mrf.mxu0
      %v8988 = vadd.f32 0.0, %v8987
      %8989 = vmatmul.bf16.gmra.mxu0 %v8649
      %v8990 = vpop.f32.mrf.mxu0
      %v8991 = vadd.f32 0.0, %v8990
      %v8992 = vpop.f32.mrf.mxu0
      %v8993 = vadd.f32 0.0, %v8992
      %8994 = vmatmul.bf16.gmra.mxu0 %v8652
      %v8995 = vpop.f32.mrf.mxu0
      %v8996 = vadd.f32 0.0, %v8995
      %v8997 = vpop.f32.mrf.mxu0
      %v8998 = vadd.f32 0.0, %v8997
      %8999 = vdwg.mxu0
      %9000 = vmatpush.bf16.msra.mxu0 0
      %9001 = vmatpush.bf16.msra.mxu0 0
      %9002 = vmatpush.bf16.msra.mxu0 %v8866
      %9003 = vmatpush.bf16.msra.mxu0 %v8865
      %9004 = vmatpush.bf16.msra.mxu0 %v8864
      %9005 = vmatpush.bf16.msra.mxu0 %v8863
      %9006 = vmatpush.bf16.msra.mxu0 %v8862
      %9007 = vmatpush.bf16.msra.mxu0 %v8861
      %9008 = vmatmul.bf16.gmra.mxu0 %v8881
      %v9009 = vpop.f32.mrf.mxu0
      %v9010 = vadd.f32 %v8921, %v9009
      %v9011 = vpop.f32.mrf.mxu0
      %v9012 = vadd.f32 %v8923, %v9011
      %9013 = vmatmul.bf16.gmra.mxu0 %v8881
      %v9014 = vpop.f32.mrf.mxu0
      %v9015 = vadd.f32 %v8926, %v9014
      %v9016 = vpop.f32.mrf.mxu0
      %v9017 = vadd.f32 %v8928, %v9016
      %9018 = vmatmul.bf16.gmra.mxu0 %v8883
      %v9019 = vpop.f32.mrf.mxu0
      %v9020 = vadd.f32 %v8931, %v9019
      %v9021 = vpop.f32.mrf.mxu0
      %v9022 = vadd.f32 %v8933, %v9021
      %9023 = vmatmul.bf16.gmra.mxu0 %v8885
      %v9024 = vpop.f32.mrf.mxu0
      %v9025 = vadd.f32 %v8936, %v9024
      %v9026 = vpop.f32.mrf.mxu0
      %v9027 = vadd.f32 %v8938, %v9026
      %9028 = vmatmul.bf16.gmra.mxu0 %v8887
      %v9029 = vpop.f32.mrf.mxu0
      %v9030 = vadd.f32 %v8941, %v9029
      %v9031 = vpop.f32.mrf.mxu0
      %v9032 = vadd.f32 %v8943, %v9031
      %9033 = vmatmul.bf16.gmra.mxu0 %v8889
      %v9034 = vpop.f32.mrf.mxu0
      %v9035 = vadd.f32 %v8946, %v9034
      %v9036 = vpop.f32.mrf.mxu0
      %v9037 = vadd.f32 %v8948, %v9036
      %9038 = vmatmul.bf16.gmra.mxu0 %v8891
      %v9039 = vpop.f32.mrf.mxu0
      %v9040 = vadd.f32 %v8951, %v9039
      %v9041 = vpop.f32.mrf.mxu0
      %v9042 = vadd.f32 %v8953, %v9041
      %9043 = vmatmul.bf16.gmra.mxu0 %v8893
      %v9044 = vpop.f32.mrf.mxu0
      %v9045 = vadd.f32 %v8956, %v9044
      %v9046 = vpop.f32.mrf.mxu0
      %v9047 = vadd.f32 %v8958, %v9046
      %9048 = vmatmul.bf16.gmra.mxu0 %v8895
      %v9049 = vpop.f32.mrf.mxu0
      %v9050 = vadd.f32 %v8961, %v9049
      %v9051 = vpop.f32.mrf.mxu0
      %v9052 = vadd.f32 %v8963, %v9051
      %9053 = vmatmul.bf16.gmra.mxu0 %v8897
      %v9054 = vpop.f32.mrf.mxu0
      %v9055 = vadd.f32 %v8966, %v9054
      %v9056 = vpop.f32.mrf.mxu0
      %v9057 = vadd.f32 %v8968, %v9056
      %9058 = vmatmul.bf16.gmra.mxu0 %v8899
      %v9059 = vpop.f32.mrf.mxu0
      %v9060 = vadd.f32 %v8971, %v9059
      %v9061 = vpop.f32.mrf.mxu0
      %v9062 = vadd.f32 %v8973, %v9061
      %9063 = vmatmul.bf16.gmra.mxu0 %v8901
      %v9064 = vpop.f32.mrf.mxu0
      %v9065 = vadd.f32 %v8976, %v9064
      %v9066 = vpop.f32.mrf.mxu0
      %v9067 = vadd.f32 %v8978, %v9066
      %9068 = vmatmul.bf16.gmra.mxu0 %v8903
      %v9069 = vpop.f32.mrf.mxu0
      %v9070 = vadd.f32 %v8981, %v9069
      %v9071 = vpop.f32.mrf.mxu0
      %v9072 = vadd.f32 %v8983, %v9071
      %9073 = vmatmul.bf16.gmra.mxu0 %v8905
      %v9074 = vpop.f32.mrf.mxu0
      %v9075 = vadd.f32 %v8986, %v9074
      %v9076 = vpop.f32.mrf.mxu0
      %v9077 = vadd.f32 %v8988, %v9076
      %9078 = vmatmul.bf16.gmra.mxu0 %v8907
      %v9079 = vpop.f32.mrf.mxu0
      %v9080 = vadd.f32 %v8991, %v9079
      %v9081 = vpop.f32.mrf.mxu0
      %v9082 = vadd.f32 %v8993, %v9081
      %9083 = vmatmul.bf16.gmra.mxu0 %v8909
      %v9084 = vpop.f32.mrf.mxu0
      %v9085 = vadd.f32 %v8996, %v9084
      %v9086 = vpop.f32.mrf.mxu0
      %v9087 = vadd.f32 %v8998, %v9086
      %9088 = vdwg.mxu0
      %v9117 = vunpack.c.l.b16 %v8740
      %v9118 = vunpack.c.l.b16 %v8741
      %v9119 = vunpack.c.l.b16 %v8742
      %v9120 = vunpack.c.l.b16 %v8743
      %v9121 = vunpack.c.l.b16 %v8744
      %v9122 = vunpack.c.l.b16 %v8745
      %v9123 = vunpack.c.l.b16 %v8746
      %v9124 = vunpack.c.l.b16 %v8747
      %v9125 = vunpack.c.l.b16 %v8748
      %v9126 = vunpack.c.l.b16 %v8749
      %v9127 = vunpack.c.l.b16 %v8750
      %v9128 = vunpack.c.l.b16 %v8751
      %v9129 = vunpack.c.l.b16 %v8752
      %v9130 = vunpack.c.l.b16 %v8753
      %v9131 = vunpack.c.l.b16 %v8754
      %v9132 = vunpack.c.l.b16 %v8755
      %v9133 = vunpack.c.l.b16 %v8756
      %v9134 = vunpack.c.l.b16 %v8757
      %v9135 = vunpack.c.l.b16 %v8758
      %v9136 = vunpack.c.l.b16 %v8759
      %v9137 = vunpack.c.l.b16 %v8760
      %v9138 = vunpack.c.l.b16 %v8761
      %v9139 = vunpack.c.l.b16 %v8762
      %v9140 = vunpack.c.l.b16 %v8763
      %v9141 = vunpack.c.l.b16 %v8764
      %v9142 = vunpack.c.l.b16 %v8765
      %v9143 = vunpack.c.l.b16 %v8766
      %v9144 = vunpack.c.l.b16 %v8767
      %v9145 = vpack.c.b16 %v9118, %v9117
      %v9146 = vpack.c.b16 %v9120, %v9119
      %v9147 = vpack.c.b16 %v9122, %v9121
      %v9148 = vpack.c.b16 %v9124, %v9123
      %v9149 = vpack.c.b16 %v9126, %v9125
      %v9150 = vpack.c.b16 %v9128, %v9127
      %v9151 = vpack.c.b16 %v9130, %v9129
      %v9152 = vpack.c.b16 %v9132, %v9131
      %v9153 = vpack.c.b16 %v9134, %v9133
      %v9154 = vpack.c.b16 %v9136, %v9135
      %v9155 = vpack.c.b16 %v9138, %v9137
      %v9156 = vpack.c.b16 %v9140, %v9139
      %v9157 = vpack.c.b16 %v9142, %v9141
      %v9158 = vpack.c.b16 %v9144, %v9143
      %9173 = vmatpush.bf16.msra.mxu0 %v9152
      %9174 = vmatpush.bf16.msra.mxu0 %v9151
      %9175 = vmatpush.bf16.msra.mxu0 %v9150
      %9176 = vmatpush.bf16.msra.mxu0 %v9149
      %9177 = vmatpush.bf16.msra.mxu0 %v9148
      %9178 = vmatpush.bf16.msra.mxu0 %v9147
      %9179 = vmatpush.bf16.msra.mxu0 %v9146
      %9180 = vmatpush.bf16.msra.mxu0 %v9145
      %9181 = vmatmul.bf16.gmra.mxu0 0
      %v9182 = vpop.f32.mrf.mxu0
      %v9183 = vadd.f32 %v9010, %v9182
      %v9184 = vpop.f32.mrf.mxu0
      %v9185 = vadd.f32 %v9012, %v9184
      %9186 = vmatmul.bf16.gmra.mxu0 0
      %v9187 = vpop.f32.mrf.mxu0
      %v9188 = vadd.f32 %v9015, %v9187
      %v9189 = vpop.f32.mrf.mxu0
      %v9190 = vadd.f32 %v9017, %v9189
      %9191 = vmatmul.bf16.gmra.mxu0 0
      %v9192 = vpop.f32.mrf.mxu0
      %v9193 = vadd.f32 %v9020, %v9192
      %v9194 = vpop.f32.mrf.mxu0
      %v9195 = vadd.f32 %v9022, %v9194
      %9196 = vmatmul.bf16.gmra.mxu0 %v8613
      %v9197 = vpop.f32.mrf.mxu0
      %v9198 = vadd.f32 %v9025, %v9197
      %v9199 = vpop.f32.mrf.mxu0
      %v9200 = vadd.f32 %v9027, %v9199
      %9201 = vmatmul.bf16.gmra.mxu0 %v8616
      %v9202 = vpop.f32.mrf.mxu0
      %v9203 = vadd.f32 %v9030, %v9202
      %v9204 = vpop.f32.mrf.mxu0
      %v9205 = vadd.f32 %v9032, %v9204
      %9206 = vmatmul.bf16.gmra.mxu0 %v8619
      %v9207 = vpop.f32.mrf.mxu0
      %v9208 = vadd.f32 %v9035, %v9207
      %v9209 = vpop.f32.mrf.mxu0
      %v9210 = vadd.f32 %v9037, %v9209
      %9211 = vmatmul.bf16.gmra.mxu0 %v8622
      %v9212 = vpop.f32.mrf.mxu0
      %v9213 = vadd.f32 %v9040, %v9212
      %v9214 = vpop.f32.mrf.mxu0
      %v9215 = vadd.f32 %v9042, %v9214
      %9216 = vmatmul.bf16.gmra.mxu0 %v8625
      %v9217 = vpop.f32.mrf.mxu0
      %v9218 = vadd.f32 %v9045, %v9217
      %v9219 = vpop.f32.mrf.mxu0
      %v9220 = vadd.f32 %v9047, %v9219
      %9221 = vmatmul.bf16.gmra.mxu0 %v8628
      %v9222 = vpop.f32.mrf.mxu0
      %v9223 = vadd.f32 %v9050, %v9222
      %v9224 = vpop.f32.mrf.mxu0
      %v9225 = vadd.f32 %v9052, %v9224
      %9226 = vmatmul.bf16.gmra.mxu0 %v8631
      %v9227 = vpop.f32.mrf.mxu0
      %v9228 = vadd.f32 %v9055, %v9227
      %v9229 = vpop.f32.mrf.mxu0
      %v9230 = vadd.f32 %v9057, %v9229
      %9231 = vmatmul.bf16.gmra.mxu0 %v8634
      %v9232 = vpop.f32.mrf.mxu0
      %v9233 = vadd.f32 %v9060, %v9232
      %v9234 = vpop.f32.mrf.mxu0
      %v9235 = vadd.f32 %v9062, %v9234
      %9236 = vmatmul.bf16.gmra.mxu0 %v8637
      %v9237 = vpop.f32.mrf.mxu0
      %v9238 = vadd.f32 %v9065, %v9237
      %v9239 = vpop.f32.mrf.mxu0
      %v9240 = vadd.f32 %v9067, %v9239
      %9241 = vmatmul.bf16.gmra.mxu0 %v8640
      %v9242 = vpop.f32.mrf.mxu0
      %v9243 = vadd.f32 %v9070, %v9242
      %v9244 = vpop.f32.mrf.mxu0
      %v9245 = vadd.f32 %v9072, %v9244
      %9246 = vmatmul.bf16.gmra.mxu0 %v8643
      %v9247 = vpop.f32.mrf.mxu0
      %v9248 = vadd.f32 %v9075, %v9247
      %v9249 = vpop.f32.mrf.mxu0
      %v9250 = vadd.f32 %v9077, %v9249
      %9251 = vmatmul.bf16.gmra.mxu0 %v8646
      %v9252 = vpop.f32.mrf.mxu0
      %v9253 = vadd.f32 %v9080, %v9252
      %v9254 = vpop.f32.mrf.mxu0
      %v9255 = vadd.f32 %v9082, %v9254
      %9256 = vmatmul.bf16.gmra.mxu0 %v8649
      %v9257 = vpop.f32.mrf.mxu0
      %v9258 = vadd.f32 %v9085, %v9257
      %v9259 = vpop.f32.mrf.mxu0
      %v9260 = vadd.f32 %v9087, %v9259
      %9261 = vdwg.mxu0
      %9262 = vmatpush.bf16.msra.mxu0 0
      %9263 = vmatpush.bf16.msra.mxu0 0
      %9264 = vmatpush.bf16.msra.mxu0 %v9158
      %9265 = vmatpush.bf16.msra.mxu0 %v9157
      %9266 = vmatpush.bf16.msra.mxu0 %v9156
      %9267 = vmatpush.bf16.msra.mxu0 %v9155
      %9268 = vmatpush.bf16.msra.mxu0 %v9154
      %9269 = vmatpush.bf16.msra.mxu0 %v9153
      %9270 = vmatmul.bf16.gmra.mxu0 %v8881
      %v9271 = vpop.f32.mrf.mxu0
      %v9272 = vadd.f32 %v9183, %v9271
      %v9273 = vpop.f32.mrf.mxu0
      %v9274 = vadd.f32 %v9185, %v9273
      %9275 = vmatmul.bf16.gmra.mxu0 %v8881
      %v9276 = vpop.f32.mrf.mxu0
      %v9277 = vadd.f32 %v9188, %v9276
      %v9278 = vpop.f32.mrf.mxu0
      %v9279 = vadd.f32 %v9190, %v9278
      %9280 = vmatmul.bf16.gmra.mxu0 %v8881
      %v9281 = vpop.f32.mrf.mxu0
      %v9282 = vadd.f32 %v9193, %v9281
      %v9283 = vpop.f32.mrf.mxu0
      %v9284 = vadd.f32 %v9195, %v9283
      %9285 = vmatmul.bf16.gmra.mxu0 %v8883
      %v9286 = vpop.f32.mrf.mxu0
      %v9287 = vadd.f32 %v9198, %v9286
      %v9288 = vpop.f32.mrf.mxu0
      %v9289 = vadd.f32 %v9200, %v9288
      %9290 = vmatmul.bf16.gmra.mxu0 %v8885
      %v9291 = vpop.f32.mrf.mxu0
      %v9292 = vadd.f32 %v9203, %v9291
      %v9293 = vpop.f32.mrf.mxu0
      %v9294 = vadd.f32 %v9205, %v9293
      %9295 = vmatmul.bf16.gmra.mxu0 %v8887
      %v9296 = vpop.f32.mrf.mxu0
      %v9297 = vadd.f32 %v9208, %v9296
      %v9298 = vpop.f32.mrf.mxu0
      %v9299 = vadd.f32 %v9210, %v9298
      %9300 = vmatmul.bf16.gmra.mxu0 %v8889
      %v9301 = vpop.f32.mrf.mxu0
      %v9302 = vadd.f32 %v9213, %v9301
      %v9303 = vpop.f32.mrf.mxu0
      %v9304 = vadd.f32 %v9215, %v9303
      %9305 = vmatmul.bf16.gmra.mxu0 %v8891
      %v9306 = vpop.f32.mrf.mxu0
      %v9307 = vadd.f32 %v9218, %v9306
      %v9308 = vpop.f32.mrf.mxu0
      %v9309 = vadd.f32 %v9220, %v9308
      %9310 = vmatmul.bf16.gmra.mxu0 %v8893
      %v9311 = vpop.f32.mrf.mxu0
      %v9312 = vadd.f32 %v9223, %v9311
      %v9313 = vpop.f32.mrf.mxu0
      %v9314 = vadd.f32 %v9225, %v9313
      %9315 = vmatmul.bf16.gmra.mxu0 %v8895
      %v9316 = vpop.f32.mrf.mxu0
      %v9317 = vadd.f32 %v9228, %v9316
      %v9318 = vpop.f32.mrf.mxu0
      %v9319 = vadd.f32 %v9230, %v9318
      %9320 = vmatmul.bf16.gmra.mxu0 %v8897
      %v9321 = vpop.f32.mrf.mxu0
      %v9322 = vadd.f32 %v9233, %v9321
      %v9323 = vpop.f32.mrf.mxu0
      %v9324 = vadd.f32 %v9235, %v9323
      %9325 = vmatmul.bf16.gmra.mxu0 %v8899
      %v9326 = vpop.f32.mrf.mxu0
      %v9327 = vadd.f32 %v9238, %v9326
      %v9328 = vpop.f32.mrf.mxu0
      %v9329 = vadd.f32 %v9240, %v9328
      %9330 = vmatmul.bf16.gmra.mxu0 %v8901
      %v9331 = vpop.f32.mrf.mxu0
      %v9332 = vadd.f32 %v9243, %v9331
      %v9333 = vpop.f32.mrf.mxu0
      %v9334 = vadd.f32 %v9245, %v9333
      %9335 = vmatmul.bf16.gmra.mxu0 %v8903
      %v9336 = vpop.f32.mrf.mxu0
      %v9337 = vadd.f32 %v9248, %v9336
      %v9338 = vpop.f32.mrf.mxu0
      %v9339 = vadd.f32 %v9250, %v9338
      %9340 = vmatmul.bf16.gmra.mxu0 %v8905
      %v9341 = vpop.f32.mrf.mxu0
      %v9342 = vadd.f32 %v9253, %v9341
      %v9343 = vpop.f32.mrf.mxu0
      %v9344 = vadd.f32 %v9255, %v9343
      %9345 = vmatmul.bf16.gmra.mxu0 %v8907
      %v9346 = vpop.f32.mrf.mxu0
      %v9347 = vadd.f32 %v9258, %v9346
      %v9348 = vpop.f32.mrf.mxu0
      %v9349 = vadd.f32 %v9260, %v9348
      %9350 = vdwg.mxu0
      %s9351 = scalar_lea.vmem %s9, 224
      %v9352 = vld [vmem:[%s9351] sm:$0xf]
      %v9353 = vld [vmem:[%s9351 + $0x4] sm:$0xf]
      %v9354 = vld [vmem:[%s9351 + $0x8] sm:$0xf]
      %v9355 = vld [vmem:[%s9351 + $0xc] sm:$0xf]
      %v9356 = vld [vmem:[%s9351 + $0x10] sm:$0xf]
      %v9357 = vld [vmem:[%s9351 + $0x14] sm:$0xf]
      %v9358 = vld [vmem:[%s9351 + $0x18] sm:$0xf]
      %v9359 = vld [vmem:[%s9351 + $0x1c] sm:$0xf]
      %v9360 = vld [vmem:[%s9351 + $0x20] sm:$0xf]
      %v9361 = vld [vmem:[%s9351 + $0x24] sm:$0xf]
      %v9362 = vld [vmem:[%s9351 + $0x28] sm:$0xf]
      %v9363 = vld [vmem:[%s9351 + $0x2c] sm:$0xf]
      %v9364 = vld [vmem:[%s9351 + $0x30] sm:$0xf]
      %v9365 = vld [vmem:[%s9351 + $0x34] sm:$0xf]
      %v9366 = vld [vmem:[%s9351 + $0x38] sm:$0xf]
      %v9367 = vld [vmem:[%s9351 + $0x3c] sm:$0xf]
      %v9368 = vld [vmem:[%s9351 + $0x40] sm:$0xf]
      %v9369 = vld [vmem:[%s9351 + $0x44] sm:$0xf]
      %v9370 = vld [vmem:[%s9351 + $0x48] sm:$0xf]
      %v9371 = vld [vmem:[%s9351 + $0x4c] sm:$0xf]
      %v9372 = vld [vmem:[%s9351 + $0x50] sm:$0xf]
      %v9373 = vld [vmem:[%s9351 + $0x54] sm:$0xf]
      %v9374 = vld [vmem:[%s9351 + $0x58] sm:$0xf]
      %v9375 = vld [vmem:[%s9351 + $0x5c] sm:$0xf]
      %v9376 = vld [vmem:[%s9351 + $0x60] sm:$0xf]
      %v9377 = vld [vmem:[%s9351 + $0x64] sm:$0xf]
      %v9378 = vld [vmem:[%s9351 + $0x68] sm:$0xf]
      %v9379 = vld [vmem:[%s9351 + $0x6c] sm:$0xf]
      %v9408 = vunpack.c.l.b16 %v9352
      %v9409 = vunpack.c.l.b16 %v9353
      %v9410 = vunpack.c.l.b16 %v9354
      %v9411 = vunpack.c.l.b16 %v9355
      %v9412 = vunpack.c.l.b16 %v9356
      %v9413 = vunpack.c.l.b16 %v9357
      %v9414 = vunpack.c.l.b16 %v9358
      %v9415 = vunpack.c.l.b16 %v9359
      %v9416 = vunpack.c.l.b16 %v9360
      %v9417 = vunpack.c.l.b16 %v9361
      %v9418 = vunpack.c.l.b16 %v9362
      %v9419 = vunpack.c.l.b16 %v9363
      %v9420 = vunpack.c.l.b16 %v9364
      %v9421 = vunpack.c.l.b16 %v9365
      %v9422 = vunpack.c.l.b16 %v9366
      %v9423 = vunpack.c.l.b16 %v9367
      %v9424 = vunpack.c.l.b16 %v9368
      %v9425 = vunpack.c.l.b16 %v9369
      %v9426 = vunpack.c.l.b16 %v9370
      %v9427 = vunpack.c.l.b16 %v9371
      %v9428 = vunpack.c.l.b16 %v9372
      %v9429 = vunpack.c.l.b16 %v9373
      %v9430 = vunpack.c.l.b16 %v9374
      %v9431 = vunpack.c.l.b16 %v9375
      %v9432 = vunpack.c.l.b16 %v9376
      %v9433 = vunpack.c.l.b16 %v9377
      %v9434 = vunpack.c.l.b16 %v9378
      %v9435 = vunpack.c.l.b16 %v9379
      %v9436 = vpack.c.b16 %v9409, %v9408
      %v9437 = vpack.c.b16 %v9411, %v9410
      %v9438 = vpack.c.b16 %v9413, %v9412
      %v9439 = vpack.c.b16 %v9415, %v9414
      %v9440 = vpack.c.b16 %v9417, %v9416
      %v9441 = vpack.c.b16 %v9419, %v9418
      %v9442 = vpack.c.b16 %v9421, %v9420
      %v9443 = vpack.c.b16 %v9423, %v9422
      %v9444 = vpack.c.b16 %v9425, %v9424
      %v9445 = vpack.c.b16 %v9427, %v9426
      %v9446 = vpack.c.b16 %v9429, %v9428
      %v9447 = vpack.c.b16 %v9431, %v9430
      %v9448 = vpack.c.b16 %v9433, %v9432
      %v9449 = vpack.c.b16 %v9435, %v9434
      %v9464 = vsel %vm8611, %v8737, 0
      %9466 = vmatpush.bf16.msra.mxu0 %v9443
      %9467 = vmatpush.bf16.msra.mxu0 %v9442
      %9468 = vmatpush.bf16.msra.mxu0 %v9441
      %9469 = vmatpush.bf16.msra.mxu0 %v9440
      %9470 = vmatpush.bf16.msra.mxu0 %v9439
      %9471 = vmatpush.bf16.msra.mxu0 %v9438
      %9472 = vmatpush.bf16.msra.mxu0 %v9437
      %9473 = vmatpush.bf16.msra.mxu0 %v9436
      %9474 = vmatmul.bf16.gmra.mxu0 0
      %v9475 = vpop.f32.mrf.mxu0
      %v9476 = vadd.f32 0.0, %v9475
      %v9477 = vpop.f32.mrf.mxu0
      %v9478 = vadd.f32 0.0, %v9477
      %9479 = vmatmul.bf16.gmra.mxu0 %v8613
      %v9480 = vpop.f32.mrf.mxu0
      %v9481 = vadd.f32 0.0, %v9480
      %v9482 = vpop.f32.mrf.mxu0
      %v9483 = vadd.f32 0.0, %v9482
      %9484 = vmatmul.bf16.gmra.mxu0 %v8616
      %v9485 = vpop.f32.mrf.mxu0
      %v9486 = vadd.f32 0.0, %v9485
      %v9487 = vpop.f32.mrf.mxu0
      %v9488 = vadd.f32 0.0, %v9487
      %9489 = vmatmul.bf16.gmra.mxu0 %v8619
      %v9490 = vpop.f32.mrf.mxu0
      %v9491 = vadd.f32 0.0, %v9490
      %v9492 = vpop.f32.mrf.mxu0
      %v9493 = vadd.f32 0.0, %v9492
      %9494 = vmatmul.bf16.gmra.mxu0 %v8622
      %v9495 = vpop.f32.mrf.mxu0
      %v9496 = vadd.f32 0.0, %v9495
      %v9497 = vpop.f32.mrf.mxu0
      %v9498 = vadd.f32 0.0, %v9497
      %9499 = vmatmul.bf16.gmra.mxu0 %v8625
      %v9500 = vpop.f32.mrf.mxu0
      %v9501 = vadd.f32 0.0, %v9500
      %v9502 = vpop.f32.mrf.mxu0
      %v9503 = vadd.f32 0.0, %v9502
      %9504 = vmatmul.bf16.gmra.mxu0 %v8628
      %v9505 = vpop.f32.mrf.mxu0
      %v9506 = vadd.f32 0.0, %v9505
      %v9507 = vpop.f32.mrf.mxu0
      %v9508 = vadd.f32 0.0, %v9507
      %9509 = vmatmul.bf16.gmra.mxu0 %v8631
      %v9510 = vpop.f32.mrf.mxu0
      %v9511 = vadd.f32 0.0, %v9510
      %v9512 = vpop.f32.mrf.mxu0
      %v9513 = vadd.f32 0.0, %v9512
      %9514 = vmatmul.bf16.gmra.mxu0 %v8634
      %v9515 = vpop.f32.mrf.mxu0
      %v9516 = vadd.f32 0.0, %v9515
      %v9517 = vpop.f32.mrf.mxu0
      %v9518 = vadd.f32 0.0, %v9517
      %9519 = vmatmul.bf16.gmra.mxu0 %v8637
      %v9520 = vpop.f32.mrf.mxu0
      %v9521 = vadd.f32 0.0, %v9520
      %v9522 = vpop.f32.mrf.mxu0
      %v9523 = vadd.f32 0.0, %v9522
      %9524 = vmatmul.bf16.gmra.mxu0 %v8640
      %v9525 = vpop.f32.mrf.mxu0
      %v9526 = vadd.f32 0.0, %v9525
      %v9527 = vpop.f32.mrf.mxu0
      %v9528 = vadd.f32 0.0, %v9527
      %9529 = vmatmul.bf16.gmra.mxu0 %v8643
      %v9530 = vpop.f32.mrf.mxu0
      %v9531 = vadd.f32 0.0, %v9530
      %v9532 = vpop.f32.mrf.mxu0
      %v9533 = vadd.f32 0.0, %v9532
      %9534 = vmatmul.bf16.gmra.mxu0 %v8646
      %v9535 = vpop.f32.mrf.mxu0
      %v9536 = vadd.f32 0.0, %v9535
      %v9537 = vpop.f32.mrf.mxu0
      %v9538 = vadd.f32 0.0, %v9537
      %9539 = vmatmul.bf16.gmra.mxu0 %v8649
      %v9540 = vpop.f32.mrf.mxu0
      %v9541 = vadd.f32 0.0, %v9540
      %v9542 = vpop.f32.mrf.mxu0
      %v9543 = vadd.f32 0.0, %v9542
      %9544 = vmatmul.bf16.gmra.mxu0 %v8652
      %v9545 = vpop.f32.mrf.mxu0
      %v9546 = vadd.f32 0.0, %v9545
      %v9547 = vpop.f32.mrf.mxu0
      %v9548 = vadd.f32 0.0, %v9547
      %9549 = vmatmul.bf16.gmra.mxu0 %v8655
      %v9550 = vpop.f32.mrf.mxu0
      %v9551 = vadd.f32 0.0, %v9550
      %v9552 = vpop.f32.mrf.mxu0
      %v9553 = vadd.f32 0.0, %v9552
      %9554 = vdwg.mxu0
      %9555 = vmatpush.bf16.msra.mxu0 0
      %9556 = vmatpush.bf16.msra.mxu0 0
      %9557 = vmatpush.bf16.msra.mxu0 %v9449
      %9558 = vmatpush.bf16.msra.mxu0 %v9448
      %9559 = vmatpush.bf16.msra.mxu0 %v9447
      %9560 = vmatpush.bf16.msra.mxu0 %v9446
      %9561 = vmatpush.bf16.msra.mxu0 %v9445
      %9562 = vmatpush.bf16.msra.mxu0 %v9444
      %9563 = vmatmul.bf16.gmra.mxu0 %v8881
      %v9564 = vpop.f32.mrf.mxu0
      %v9565 = vadd.f32 %v9476, %v9564
      %v9566 = vpop.f32.mrf.mxu0
      %v9567 = vadd.f32 %v9478, %v9566
      %9568 = vmatmul.bf16.gmra.mxu0 %v8883
      %v9569 = vpop.f32.mrf.mxu0
      %v9570 = vadd.f32 %v9481, %v9569
      %v9571 = vpop.f32.mrf.mxu0
      %v9572 = vadd.f32 %v9483, %v9571
      %9573 = vmatmul.bf16.gmra.mxu0 %v8885
      %v9574 = vpop.f32.mrf.mxu0
      %v9575 = vadd.f32 %v9486, %v9574
      %v9576 = vpop.f32.mrf.mxu0
      %v9577 = vadd.f32 %v9488, %v9576
      %9578 = vmatmul.bf16.gmra.mxu0 %v8887
      %v9579 = vpop.f32.mrf.mxu0
      %v9580 = vadd.f32 %v9491, %v9579
      %v9581 = vpop.f32.mrf.mxu0
      %v9582 = vadd.f32 %v9493, %v9581
      %9583 = vmatmul.bf16.gmra.mxu0 %v8889
      %v9584 = vpop.f32.mrf.mxu0
      %v9585 = vadd.f32 %v9496, %v9584
      %v9586 = vpop.f32.mrf.mxu0
      %v9587 = vadd.f32 %v9498, %v9586
      %9588 = vmatmul.bf16.gmra.mxu0 %v8891
      %v9589 = vpop.f32.mrf.mxu0
      %v9590 = vadd.f32 %v9501, %v9589
      %v9591 = vpop.f32.mrf.mxu0
      %v9592 = vadd.f32 %v9503, %v9591
      %9593 = vmatmul.bf16.gmra.mxu0 %v8893
      %v9594 = vpop.f32.mrf.mxu0
      %v9595 = vadd.f32 %v9506, %v9594
      %v9596 = vpop.f32.mrf.mxu0
      %v9597 = vadd.f32 %v9508, %v9596
      %9598 = vmatmul.bf16.gmra.mxu0 %v8895
      %v9599 = vpop.f32.mrf.mxu0
      %v9600 = vadd.f32 %v9511, %v9599
      %v9601 = vpop.f32.mrf.mxu0
      %v9602 = vadd.f32 %v9513, %v9601
      %9603 = vmatmul.bf16.gmra.mxu0 %v8897
      %v9604 = vpop.f32.mrf.mxu0
      %v9605 = vadd.f32 %v9516, %v9604
      %v9606 = vpop.f32.mrf.mxu0
      %v9607 = vadd.f32 %v9518, %v9606
      %9608 = vmatmul.bf16.gmra.mxu0 %v8899
      %v9609 = vpop.f32.mrf.mxu0
      %v9610 = vadd.f32 %v9521, %v9609
      %v9611 = vpop.f32.mrf.mxu0
      %v9612 = vadd.f32 %v9523, %v9611
      %9613 = vmatmul.bf16.gmra.mxu0 %v8901
      %v9614 = vpop.f32.mrf.mxu0
      %v9615 = vadd.f32 %v9526, %v9614
      %v9616 = vpop.f32.mrf.mxu0
      %v9617 = vadd.f32 %v9528, %v9616
      %9618 = vmatmul.bf16.gmra.mxu0 %v8903
      %v9619 = vpop.f32.mrf.mxu0
      %v9620 = vadd.f32 %v9531, %v9619
      %v9621 = vpop.f32.mrf.mxu0
      %v9622 = vadd.f32 %v9533, %v9621
      %9623 = vmatmul.bf16.gmra.mxu0 %v8905
      %v9624 = vpop.f32.mrf.mxu0
      %v9625 = vadd.f32 %v9536, %v9624
      %v9626 = vpop.f32.mrf.mxu0
      %v9627 = vadd.f32 %v9538, %v9626
      %9628 = vmatmul.bf16.gmra.mxu0 %v8907
      %v9629 = vpop.f32.mrf.mxu0
      %v9630 = vadd.f32 %v9541, %v9629
      %v9631 = vpop.f32.mrf.mxu0
      %v9632 = vadd.f32 %v9543, %v9631
      %9633 = vmatmul.bf16.gmra.mxu0 %v8909
      %v9634 = vpop.f32.mrf.mxu0
      %v9635 = vadd.f32 %v9546, %v9634
      %v9636 = vpop.f32.mrf.mxu0
      %v9637 = vadd.f32 %v9548, %v9636
      %9638 = vmatmul.bf16.gmra.mxu0 %v9464
      %v9639 = vpop.f32.mrf.mxu0
      %v9640 = vadd.f32 %v9551, %v9639
      %v9641 = vpop.f32.mrf.mxu0
      %v9642 = vadd.f32 %v9553, %v9641
      %9643 = vdwg.mxu0
      %v9644 = vadd.f32 %v9272, %v9565
      %v9645 = vadd.f32 %v9274, %v9567
      %v9646 = vadd.f32 %v9277, %v9570
      %v9647 = vadd.f32 %v9279, %v9572
      %v9648 = vadd.f32 %v9282, %v9575
      %v9649 = vadd.f32 %v9284, %v9577
      %v9650 = vadd.f32 %v9287, %v9580
      %v9651 = vadd.f32 %v9289, %v9582
      %v9652 = vadd.f32 %v9292, %v9585
      %v9653 = vadd.f32 %v9294, %v9587
      %v9654 = vadd.f32 %v9297, %v9590
      %v9655 = vadd.f32 %v9299, %v9592
      %v9656 = vadd.f32 %v9302, %v9595
      %v9657 = vadd.f32 %v9304, %v9597
      %v9658 = vadd.f32 %v9307, %v9600
      %v9659 = vadd.f32 %v9309, %v9602
      %v9660 = vadd.f32 %v9312, %v9605
      %v9661 = vadd.f32 %v9314, %v9607
      %v9662 = vadd.f32 %v9317, %v9610
      %v9663 = vadd.f32 %v9319, %v9612
      %v9664 = vadd.f32 %v9322, %v9615
      %v9665 = vadd.f32 %v9324, %v9617
      %v9666 = vadd.f32 %v9327, %v9620
      %v9667 = vadd.f32 %v9329, %v9622
      %v9668 = vadd.f32 %v9332, %v9625
      %v9669 = vadd.f32 %v9334, %v9627
      %v9670 = vadd.f32 %v9337, %v9630
      %v9671 = vadd.f32 %v9339, %v9632
      %v9672 = vadd.f32 %v9342, %v9635
      %v9673 = vadd.f32 %v9344, %v9637
      %v9674 = vadd.f32 %v9347, %v9640
      %v9675 = vadd.f32 %v9349, %v9642
      %s9676 = scalar_lea.vmem %s9, 336
      %v9677 = vld [vmem:[%s9676] sm:$0xf]
      %v9678 = vld [vmem:[%s9676 + $0x4] sm:$0xf]
      %v9679 = vld [vmem:[%s9676 + $0x8] sm:$0xf]
      %v9680 = vld [vmem:[%s9676 + $0xc] sm:$0xf]
      %v9681 = vld [vmem:[%s9676 + $0x10] sm:$0xf]
      %v9682 = vld [vmem:[%s9676 + $0x14] sm:$0xf]
      %v9683 = vld [vmem:[%s9676 + $0x18] sm:$0xf]
      %v9684 = vld [vmem:[%s9676 + $0x1c] sm:$0xf]
      %v9685 = vld [vmem:[%s9676 + $0x20] sm:$0xf]
      %v9686 = vld [vmem:[%s9676 + $0x24] sm:$0xf]
      %v9687 = vld [vmem:[%s9676 + $0x28] sm:$0xf]
      %v9688 = vld [vmem:[%s9676 + $0x2c] sm:$0xf]
      %v9689 = vld [vmem:[%s9676 + $0x30] sm:$0xf]
      %v9690 = vld [vmem:[%s9676 + $0x34] sm:$0xf]
      %v9691 = vld [vmem:[%s9676 + $0x38] sm:$0xf]
      %v9692 = vld [vmem:[%s9676 + $0x3c] sm:$0xf]
      %v9693 = vld [vmem:[%s9676 + $0x40] sm:$0xf]
      %v9694 = vld [vmem:[%s9676 + $0x44] sm:$0xf]
      %v9695 = vld [vmem:[%s9676 + $0x48] sm:$0xf]
      %v9696 = vld [vmem:[%s9676 + $0x4c] sm:$0xf]
      %v9697 = vld [vmem:[%s9676 + $0x50] sm:$0xf]
      %v9698 = vld [vmem:[%s9676 + $0x54] sm:$0xf]
      %v9699 = vld [vmem:[%s9676 + $0x58] sm:$0xf]
      %v9700 = vld [vmem:[%s9676 + $0x5c] sm:$0xf]
      %v9701 = vld [vmem:[%s9676 + $0x60] sm:$0xf]
      %v9702 = vld [vmem:[%s9676 + $0x64] sm:$0xf]
      %v9703 = vld [vmem:[%s9676 + $0x68] sm:$0xf]
      %v9704 = vld [vmem:[%s9676 + $0x6c] sm:$0xf]
      %v9733 = vunpack.c.l.b16 %v9677
      %v9734 = vunpack.c.l.b16 %v9678
      %v9735 = vunpack.c.l.b16 %v9679
      %v9736 = vunpack.c.l.b16 %v9680
      %v9737 = vunpack.c.l.b16 %v9681
      %v9738 = vunpack.c.l.b16 %v9682
      %v9739 = vunpack.c.l.b16 %v9683
      %v9740 = vunpack.c.l.b16 %v9684
      %v9741 = vunpack.c.l.b16 %v9685
      %v9742 = vunpack.c.l.b16 %v9686
      %v9743 = vunpack.c.l.b16 %v9687
      %v9744 = vunpack.c.l.b16 %v9688
      %v9745 = vunpack.c.l.b16 %v9689
      %v9746 = vunpack.c.l.b16 %v9690
      %v9747 = vunpack.c.l.b16 %v9691
      %v9748 = vunpack.c.l.b16 %v9692
      %v9749 = vunpack.c.l.b16 %v9693
      %v9750 = vunpack.c.l.b16 %v9694
      %v9751 = vunpack.c.l.b16 %v9695
      %v9752 = vunpack.c.l.b16 %v9696
      %v9753 = vunpack.c.l.b16 %v9697
      %v9754 = vunpack.c.l.b16 %v9698
      %v9755 = vunpack.c.l.b16 %v9699
      %v9756 = vunpack.c.l.b16 %v9700
      %v9757 = vunpack.c.l.b16 %v9701
      %v9758 = vunpack.c.l.b16 %v9702
      %v9759 = vunpack.c.l.b16 %v9703
      %v9760 = vunpack.c.l.b16 %v9704
      %v9761 = vpack.c.b16 %v9734, %v9733
      %v9762 = vpack.c.b16 %v9736, %v9735
      %v9763 = vpack.c.b16 %v9738, %v9737
      %v9764 = vpack.c.b16 %v9740, %v9739
      %v9765 = vpack.c.b16 %v9742, %v9741
      %v9766 = vpack.c.b16 %v9744, %v9743
      %v9767 = vpack.c.b16 %v9746, %v9745
      %v9768 = vpack.c.b16 %v9748, %v9747
      %v9769 = vpack.c.b16 %v9750, %v9749
      %v9770 = vpack.c.b16 %v9752, %v9751
      %v9771 = vpack.c.b16 %v9754, %v9753
      %v9772 = vpack.c.b16 %v9756, %v9755
      %v9773 = vpack.c.b16 %v9758, %v9757
      %v9774 = vpack.c.b16 %v9760, %v9759
      %v9789 = vsel %vm8611, %v8739, 0
      %9791 = vmatpush.bf16.msra.mxu0 %v9768
      %9792 = vmatpush.bf16.msra.mxu0 %v9767
      %9793 = vmatpush.bf16.msra.mxu0 %v9766
      %9794 = vmatpush.bf16.msra.mxu0 %v9765
      %9795 = vmatpush.bf16.msra.mxu0 %v9764
      %9796 = vmatpush.bf16.msra.mxu0 %v9763
      %9797 = vmatpush.bf16.msra.mxu0 %v9762
      %9798 = vmatpush.bf16.msra.mxu0 %v9761
      %9799 = vmatmul.bf16.gmra.mxu0 %v8613
      %v9800 = vpop.f32.mrf.mxu0
      %v9801 = vadd.f32 0.0, %v9800
      %v9802 = vpop.f32.mrf.mxu0
      %v9803 = vadd.f32 0.0, %v9802
      %9804 = vmatmul.bf16.gmra.mxu0 %v8616
      %v9805 = vpop.f32.mrf.mxu0
      %v9806 = vadd.f32 0.0, %v9805
      %v9807 = vpop.f32.mrf.mxu0
      %v9808 = vadd.f32 0.0, %v9807
      %9809 = vmatmul.bf16.gmra.mxu0 %v8619
      %v9810 = vpop.f32.mrf.mxu0
      %v9811 = vadd.f32 0.0, %v9810
      %v9812 = vpop.f32.mrf.mxu0
      %v9813 = vadd.f32 0.0, %v9812
      %9814 = vmatmul.bf16.gmra.mxu0 %v8622
      %v9815 = vpop.f32.mrf.mxu0
      %v9816 = vadd.f32 0.0, %v9815
      %v9817 = vpop.f32.mrf.mxu0
      %v9818 = vadd.f32 0.0, %v9817
      %9819 = vmatmul.bf16.gmra.mxu0 %v8625
      %v9820 = vpop.f32.mrf.mxu0
      %v9821 = vadd.f32 0.0, %v9820
      %v9822 = vpop.f32.mrf.mxu0
      %v9823 = vadd.f32 0.0, %v9822
      %9824 = vmatmul.bf16.gmra.mxu0 %v8628
      %v9825 = vpop.f32.mrf.mxu0
      %v9826 = vadd.f32 0.0, %v9825
      %v9827 = vpop.f32.mrf.mxu0
      %v9828 = vadd.f32 0.0, %v9827
      %9829 = vmatmul.bf16.gmra.mxu0 %v8631
      %v9830 = vpop.f32.mrf.mxu0
      %v9831 = vadd.f32 0.0, %v9830
      %v9832 = vpop.f32.mrf.mxu0
      %v9833 = vadd.f32 0.0, %v9832
      %9834 = vmatmul.bf16.gmra.mxu0 %v8634
      %v9835 = vpop.f32.mrf.mxu0
      %v9836 = vadd.f32 0.0, %v9835
      %v9837 = vpop.f32.mrf.mxu0
      %v9838 = vadd.f32 0.0, %v9837
      %9839 = vmatmul.bf16.gmra.mxu0 %v8637
      %v9840 = vpop.f32.mrf.mxu0
      %v9841 = vadd.f32 0.0, %v9840
      %v9842 = vpop.f32.mrf.mxu0
      %v9843 = vadd.f32 0.0, %v9842
      %9844 = vmatmul.bf16.gmra.mxu0 %v8640
      %v9845 = vpop.f32.mrf.mxu0
      %v9846 = vadd.f32 0.0, %v9845
      %v9847 = vpop.f32.mrf.mxu0
      %v9848 = vadd.f32 0.0, %v9847
      %9849 = vmatmul.bf16.gmra.mxu0 %v8643
      %v9850 = vpop.f32.mrf.mxu0
      %v9851 = vadd.f32 0.0, %v9850
      %v9852 = vpop.f32.mrf.mxu0
      %v9853 = vadd.f32 0.0, %v9852
      %9854 = vmatmul.bf16.gmra.mxu0 %v8646
      %v9855 = vpop.f32.mrf.mxu0
      %v9856 = vadd.f32 0.0, %v9855
      %v9857 = vpop.f32.mrf.mxu0
      %v9858 = vadd.f32 0.0, %v9857
      %9859 = vmatmul.bf16.gmra.mxu0 %v8649
      %v9860 = vpop.f32.mrf.mxu0
      %v9861 = vadd.f32 0.0, %v9860
      %v9862 = vpop.f32.mrf.mxu0
      %v9863 = vadd.f32 0.0, %v9862
      %9864 = vmatmul.bf16.gmra.mxu0 %v8652
      %v9865 = vpop.f32.mrf.mxu0
      %v9866 = vadd.f32 0.0, %v9865
      %v9867 = vpop.f32.mrf.mxu0
      %v9868 = vadd.f32 0.0, %v9867
      %9869 = vmatmul.bf16.gmra.mxu0 %v8655
      %v9870 = vpop.f32.mrf.mxu0
      %v9871 = vadd.f32 0.0, %v9870
      %v9872 = vpop.f32.mrf.mxu0
      %v9873 = vadd.f32 0.0, %v9872
      %9874 = vmatmul.bf16.gmra.mxu0 %v8658
      %v9875 = vpop.f32.mrf.mxu0
      %v9876 = vadd.f32 0.0, %v9875
      %v9877 = vpop.f32.mrf.mxu0
      %v9878 = vadd.f32 0.0, %v9877
      %9879 = vdwg.mxu0
      %9880 = vmatpush.bf16.msra.mxu0 0
      %9881 = vmatpush.bf16.msra.mxu0 0
      %9882 = vmatpush.bf16.msra.mxu0 %v9774
      %9883 = vmatpush.bf16.msra.mxu0 %v9773
      %9884 = vmatpush.bf16.msra.mxu0 %v9772
      %9885 = vmatpush.bf16.msra.mxu0 %v9771
      %9886 = vmatpush.bf16.msra.mxu0 %v9770
      %9887 = vmatpush.bf16.msra.mxu0 %v9769
      %9888 = vmatmul.bf16.gmra.mxu0 %v8883
      %v9889 = vpop.f32.mrf.mxu0
      %v9890 = vadd.f32 %v9801, %v9889
      %v9891 = vpop.f32.mrf.mxu0
      %v9892 = vadd.f32 %v9803, %v9891
      %9893 = vmatmul.bf16.gmra.mxu0 %v8885
      %v9894 = vpop.f32.mrf.mxu0
      %v9895 = vadd.f32 %v9806, %v9894
      %v9896 = vpop.f32.mrf.mxu0
      %v9897 = vadd.f32 %v9808, %v9896
      %9898 = vmatmul.bf16.gmra.mxu0 %v8887
      %v9899 = vpop.f32.mrf.mxu0
      %v9900 = vadd.f32 %v9811, %v9899
      %v9901 = vpop.f32.mrf.mxu0
      %v9902 = vadd.f32 %v9813, %v9901
      %9903 = vmatmul.bf16.gmra.mxu0 %v8889
      %v9904 = vpop.f32.mrf.mxu0
      %v9905 = vadd.f32 %v9816, %v9904
      %v9906 = vpop.f32.mrf.mxu0
      %v9907 = vadd.f32 %v9818, %v9906
      %9908 = vmatmul.bf16.gmra.mxu0 %v8891
      %v9909 = vpop.f32.mrf.mxu0
      %v9910 = vadd.f32 %v9821, %v9909
      %v9911 = vpop.f32.mrf.mxu0
      %v9912 = vadd.f32 %v9823, %v9911
      %9913 = vmatmul.bf16.gmra.mxu0 %v8893
      %v9914 = vpop.f32.mrf.mxu0
      %v9915 = vadd.f32 %v9826, %v9914
      %v9916 = vpop.f32.mrf.mxu0
      %v9917 = vadd.f32 %v9828, %v9916
      %9918 = vmatmul.bf16.gmra.mxu0 %v8895
      %v9919 = vpop.f32.mrf.mxu0
      %v9920 = vadd.f32 %v9831, %v9919
      %v9921 = vpop.f32.mrf.mxu0
      %v9922 = vadd.f32 %v9833, %v9921
      %9923 = vmatmul.bf16.gmra.mxu0 %v8897
      %v9924 = vpop.f32.mrf.mxu0
      %v9925 = vadd.f32 %v9836, %v9924
      %v9926 = vpop.f32.mrf.mxu0
      %v9927 = vadd.f32 %v9838, %v9926
      %9928 = vmatmul.bf16.gmra.mxu0 %v8899
      %v9929 = vpop.f32.mrf.mxu0
      %v9930 = vadd.f32 %v9841, %v9929
      %v9931 = vpop.f32.mrf.mxu0
      %v9932 = vadd.f32 %v9843, %v9931
      %9933 = vmatmul.bf16.gmra.mxu0 %v8901
      %v9934 = vpop.f32.mrf.mxu0
      %v9935 = vadd.f32 %v9846, %v9934
      %v9936 = vpop.f32.mrf.mxu0
      %v9937 = vadd.f32 %v9848, %v9936
      %9938 = vmatmul.bf16.gmra.mxu0 %v8903
      %v9939 = vpop.f32.mrf.mxu0
      %v9940 = vadd.f32 %v9851, %v9939
      %v9941 = vpop.f32.mrf.mxu0
      %v9942 = vadd.f32 %v9853, %v9941
      %9943 = vmatmul.bf16.gmra.mxu0 %v8905
      %v9944 = vpop.f32.mrf.mxu0
      %v9945 = vadd.f32 %v9856, %v9944
      %v9946 = vpop.f32.mrf.mxu0
      %v9947 = vadd.f32 %v9858, %v9946
      %9948 = vmatmul.bf16.gmra.mxu0 %v8907
      %v9949 = vpop.f32.mrf.mxu0
      %v9950 = vadd.f32 %v9861, %v9949
      %v9951 = vpop.f32.mrf.mxu0
      %v9952 = vadd.f32 %v9863, %v9951
      %9953 = vmatmul.bf16.gmra.mxu0 %v8909
      %v9954 = vpop.f32.mrf.mxu0
      %v9955 = vadd.f32 %v9866, %v9954
      %v9956 = vpop.f32.mrf.mxu0
      %v9957 = vadd.f32 %v9868, %v9956
      %9958 = vmatmul.bf16.gmra.mxu0 %v9464
      %v9959 = vpop.f32.mrf.mxu0
      %v9960 = vadd.f32 %v9871, %v9959
      %v9961 = vpop.f32.mrf.mxu0
      %v9962 = vadd.f32 %v9873, %v9961
      %9963 = vmatmul.bf16.gmra.mxu0 %v9789
      %v9964 = vpop.f32.mrf.mxu0
      %v9965 = vadd.f32 %v9876, %v9964
      %v9966 = vpop.f32.mrf.mxu0
      %v9967 = vadd.f32 %v9878, %v9966
      %9968 = vdwg.mxu0
      %v9969 = vadd.f32 %v9644, %v9890
      %v9970 = vadd.f32 %v9645, %v9892
      %v9971 = vadd.f32 %v9646, %v9895
      %v9972 = vadd.f32 %v9647, %v9897
      %v9973 = vadd.f32 %v9648, %v9900
      %v9974 = vadd.f32 %v9649, %v9902
      %v9975 = vadd.f32 %v9650, %v9905
      %v9976 = vadd.f32 %v9651, %v9907
      %v9977 = vadd.f32 %v9652, %v9910
      %v9978 = vadd.f32 %v9653, %v9912
      %v9979 = vadd.f32 %v9654, %v9915
      %v9980 = vadd.f32 %v9655, %v9917
      %v9981 = vadd.f32 %v9656, %v9920
      %v9982 = vadd.f32 %v9657, %v9922
      %v9983 = vadd.f32 %v9658, %v9925
      %v9984 = vadd.f32 %v9659, %v9927
      %v9985 = vadd.f32 %v9660, %v9930
      %v9986 = vadd.f32 %v9661, %v9932
      %v9987 = vadd.f32 %v9662, %v9935
      %v9988 = vadd.f32 %v9663, %v9937
      %v9989 = vadd.f32 %v9664, %v9940
      %v9990 = vadd.f32 %v9665, %v9942
      %v9991 = vadd.f32 %v9666, %v9945
      %v9992 = vadd.f32 %v9667, %v9947
      %v9993 = vadd.f32 %v9668, %v9950
      %v9994 = vadd.f32 %v9669, %v9952
      %v9995 = vadd.f32 %v9670, %v9955
      %v9996 = vadd.f32 %v9671, %v9957
      %v9997 = vadd.f32 %v9672, %v9960
      %v9998 = vadd.f32 %v9673, %v9962
      %v9999 = vadd.f32 %v9674, %v9965
      %v10000 = vadd.f32 %v9675, %v9967
      %s10001 = scalar_lea.vmem %s9, 448
      %v10002 = vld [vmem:[%s10001] sm:$0xf]
      %v10003 = vld [vmem:[%s10001 + $0x4] sm:$0xf]
      %v10004 = vld [vmem:[%s10001 + $0x8] sm:$0xf]
      %v10005 = vld [vmem:[%s10001 + $0xc] sm:$0xf]
      %v10006 = vld [vmem:[%s10001 + $0x10] sm:$0xf]
      %v10007 = vld [vmem:[%s10001 + $0x14] sm:$0xf]
      %v10008 = vld [vmem:[%s10001 + $0x18] sm:$0xf]
      %v10009 = vld [vmem:[%s10001 + $0x1c] sm:$0xf]
      %v10010 = vld [vmem:[%s10001 + $0x20] sm:$0xf]
      %v10011 = vld [vmem:[%s10001 + $0x24] sm:$0xf]
      %v10012 = vld [vmem:[%s10001 + $0x28] sm:$0xf]
      %v10013 = vld [vmem:[%s10001 + $0x2c] sm:$0xf]
      %v10014 = vld [vmem:[%s10001 + $0x30] sm:$0xf]
      %v10015 = vld [vmem:[%s10001 + $0x34] sm:$0xf]
      %v10016 = vld [vmem:[%s10001 + $0x38] sm:$0xf]
      %v10017 = vld [vmem:[%s10001 + $0x3c] sm:$0xf]
      %v10018 = vld [vmem:[%s10001 + $0x40] sm:$0xf]
      %v10019 = vld [vmem:[%s10001 + $0x44] sm:$0xf]
      %v10020 = vld [vmem:[%s10001 + $0x48] sm:$0xf]
      %v10021 = vld [vmem:[%s10001 + $0x4c] sm:$0xf]
      %v10022 = vld [vmem:[%s10001 + $0x50] sm:$0xf]
      %v10023 = vld [vmem:[%s10001 + $0x54] sm:$0xf]
      %v10024 = vld [vmem:[%s10001 + $0x58] sm:$0xf]
      %v10025 = vld [vmem:[%s10001 + $0x5c] sm:$0xf]
      %v10026 = vld [vmem:[%s10001 + $0x60] sm:$0xf]
      %v10027 = vld [vmem:[%s10001 + $0x64] sm:$0xf]
      %v10028 = vld [vmem:[%s10001 + $0x68] sm:$0xf]
      %v10029 = vld [vmem:[%s10001 + $0x6c] sm:$0xf]
      %v10058 = vunpack.c.l.b16 %v10002
      %v10059 = vunpack.c.l.b16 %v10003
      %v10060 = vunpack.c.l.b16 %v10004
      %v10061 = vunpack.c.l.b16 %v10005
      %v10062 = vunpack.c.l.b16 %v10006
      %v10063 = vunpack.c.l.b16 %v10007
      %v10064 = vunpack.c.l.b16 %v10008
      %v10065 = vunpack.c.l.b16 %v10009
      %v10066 = vunpack.c.l.b16 %v10010
      %v10067 = vunpack.c.l.b16 %v10011
      %v10068 = vunpack.c.l.b16 %v10012
      %v10069 = vunpack.c.l.b16 %v10013
      %v10070 = vunpack.c.l.b16 %v10014
      %v10071 = vunpack.c.l.b16 %v10015
      %v10072 = vunpack.c.l.b16 %v10016
      %v10073 = vunpack.c.l.b16 %v10017
      %v10074 = vunpack.c.l.b16 %v10018
      %v10075 = vunpack.c.l.b16 %v10019
      %v10076 = vunpack.c.l.b16 %v10020
      %v10077 = vunpack.c.l.b16 %v10021
      %v10078 = vunpack.c.l.b16 %v10022
      %v10079 = vunpack.c.l.b16 %v10023
      %v10080 = vunpack.c.l.b16 %v10024
      %v10081 = vunpack.c.l.b16 %v10025
      %v10082 = vunpack.c.l.b16 %v10026
      %v10083 = vunpack.c.l.b16 %v10027
      %v10084 = vunpack.c.l.b16 %v10028
      %v10085 = vunpack.c.l.b16 %v10029
      %v10086 = vpack.c.b16 %v10059, %v10058
      %v10087 = vpack.c.b16 %v10061, %v10060
      %v10088 = vpack.c.b16 %v10063, %v10062
      %v10089 = vpack.c.b16 %v10065, %v10064
      %v10090 = vpack.c.b16 %v10067, %v10066
      %v10091 = vpack.c.b16 %v10069, %v10068
      %v10092 = vpack.c.b16 %v10071, %v10070
      %v10093 = vpack.c.b16 %v10073, %v10072
      %v10094 = vpack.c.b16 %v10075, %v10074
      %v10095 = vpack.c.b16 %v10077, %v10076
      %v10096 = vpack.c.b16 %v10079, %v10078
      %v10097 = vpack.c.b16 %v10081, %v10080
      %v10098 = vpack.c.b16 %v10083, %v10082
      %v10099 = vpack.c.b16 %v10085, %v10084
      %10114 = vmatpush.bf16.msra.mxu0 %v10093
      %10115 = vmatpush.bf16.msra.mxu0 %v10092
      %10116 = vmatpush.bf16.msra.mxu0 %v10091
      %10117 = vmatpush.bf16.msra.mxu0 %v10090
      %10118 = vmatpush.bf16.msra.mxu0 %v10089
      %10119 = vmatpush.bf16.msra.mxu0 %v10088
      %10120 = vmatpush.bf16.msra.mxu0 %v10087
      %10121 = vmatpush.bf16.msra.mxu0 %v10086
      %10122 = vmatmul.bf16.gmra.mxu0 %v8616
      %v10123 = vpop.f32.mrf.mxu0
      %v10124 = vadd.f32 0.0, %v10123
      %v10125 = vpop.f32.mrf.mxu0
      %v10126 = vadd.f32 0.0, %v10125
      %10127 = vmatmul.bf16.gmra.mxu0 %v8619
      %v10128 = vpop.f32.mrf.mxu0
      %v10129 = vadd.f32 0.0, %v10128
      %v10130 = vpop.f32.mrf.mxu0
      %v10131 = vadd.f32 0.0, %v10130
      %10132 = vmatmul.bf16.gmra.mxu0 %v8622
      %v10133 = vpop.f32.mrf.mxu0
      %v10134 = vadd.f32 0.0, %v10133
      %v10135 = vpop.f32.mrf.mxu0
      %v10136 = vadd.f32 0.0, %v10135
      %10137 = vmatmul.bf16.gmra.mxu0 %v8625
      %v10138 = vpop.f32.mrf.mxu0
      %v10139 = vadd.f32 0.0, %v10138
      %v10140 = vpop.f32.mrf.mxu0
      %v10141 = vadd.f32 0.0, %v10140
      %10142 = vmatmul.bf16.gmra.mxu0 %v8628
      %v10143 = vpop.f32.mrf.mxu0
      %v10144 = vadd.f32 0.0, %v10143
      %v10145 = vpop.f32.mrf.mxu0
      %v10146 = vadd.f32 0.0, %v10145
      %10147 = vmatmul.bf16.gmra.mxu0 %v8631
      %v10148 = vpop.f32.mrf.mxu0
      %v10149 = vadd.f32 0.0, %v10148
      %v10150 = vpop.f32.mrf.mxu0
      %v10151 = vadd.f32 0.0, %v10150
      %10152 = vmatmul.bf16.gmra.mxu0 %v8634
      %v10153 = vpop.f32.mrf.mxu0
      %v10154 = vadd.f32 0.0, %v10153
      %v10155 = vpop.f32.mrf.mxu0
      %v10156 = vadd.f32 0.0, %v10155
      %10157 = vmatmul.bf16.gmra.mxu0 %v8637
      %v10158 = vpop.f32.mrf.mxu0
      %v10159 = vadd.f32 0.0, %v10158
      %v10160 = vpop.f32.mrf.mxu0
      %v10161 = vadd.f32 0.0, %v10160
      %10162 = vmatmul.bf16.gmra.mxu0 %v8640
      %v10163 = vpop.f32.mrf.mxu0
      %v10164 = vadd.f32 0.0, %v10163
      %v10165 = vpop.f32.mrf.mxu0
      %v10166 = vadd.f32 0.0, %v10165
      %10167 = vmatmul.bf16.gmra.mxu0 %v8643
      %v10168 = vpop.f32.mrf.mxu0
      %v10169 = vadd.f32 0.0, %v10168
      %v10170 = vpop.f32.mrf.mxu0
      %v10171 = vadd.f32 0.0, %v10170
      %10172 = vmatmul.bf16.gmra.mxu0 %v8646
      %v10173 = vpop.f32.mrf.mxu0
      %v10174 = vadd.f32 0.0, %v10173
      %v10175 = vpop.f32.mrf.mxu0
      %v10176 = vadd.f32 0.0, %v10175
      %10177 = vmatmul.bf16.gmra.mxu0 %v8649
      %v10178 = vpop.f32.mrf.mxu0
      %v10179 = vadd.f32 0.0, %v10178
      %v10180 = vpop.f32.mrf.mxu0
      %v10181 = vadd.f32 0.0, %v10180
      %10182 = vmatmul.bf16.gmra.mxu0 %v8652
      %v10183 = vpop.f32.mrf.mxu0
      %v10184 = vadd.f32 0.0, %v10183
      %v10185 = vpop.f32.mrf.mxu0
      %v10186 = vadd.f32 0.0, %v10185
      %10187 = vmatmul.bf16.gmra.mxu0 %v8655
      %v10188 = vpop.f32.mrf.mxu0
      %v10189 = vadd.f32 0.0, %v10188
      %v10190 = vpop.f32.mrf.mxu0
      %v10191 = vadd.f32 0.0, %v10190
      %10192 = vmatmul.bf16.gmra.mxu0 %v8658
      %v10193 = vpop.f32.mrf.mxu0
      %v10194 = vadd.f32 0.0, %v10193
      %v10195 = vpop.f32.mrf.mxu0
      %v10196 = vadd.f32 0.0, %v10195
      %10197 = vmatmul.bf16.gmra.mxu0 0
      %v10198 = vpop.f32.mrf.mxu0
      %v10199 = vadd.f32 0.0, %v10198
      %v10200 = vpop.f32.mrf.mxu0
      %v10201 = vadd.f32 0.0, %v10200
      %10202 = vdwg.mxu0
      %10203 = vmatpush.bf16.msra.mxu0 0
      %10204 = vmatpush.bf16.msra.mxu0 0
      %10205 = vmatpush.bf16.msra.mxu0 %v10099
      %10206 = vmatpush.bf16.msra.mxu0 %v10098
      %10207 = vmatpush.bf16.msra.mxu0 %v10097
      %10208 = vmatpush.bf16.msra.mxu0 %v10096
      %10209 = vmatpush.bf16.msra.mxu0 %v10095
      %10210 = vmatpush.bf16.msra.mxu0 %v10094
      %10211 = vmatmul.bf16.gmra.mxu0 %v8885
      %v10212 = vpop.f32.mrf.mxu0
      %v10213 = vadd.f32 %v10124, %v10212
      %v10214 = vpop.f32.mrf.mxu0
      %v10215 = vadd.f32 %v10126, %v10214
      %10216 = vmatmul.bf16.gmra.mxu0 %v8887
      %v10217 = vpop.f32.mrf.mxu0
      %v10218 = vadd.f32 %v10129, %v10217
      %v10219 = vpop.f32.mrf.mxu0
      %v10220 = vadd.f32 %v10131, %v10219
      %10221 = vmatmul.bf16.gmra.mxu0 %v8889
      %v10222 = vpop.f32.mrf.mxu0
      %v10223 = vadd.f32 %v10134, %v10222
      %v10224 = vpop.f32.mrf.mxu0
      %v10225 = vadd.f32 %v10136, %v10224
      %10226 = vmatmul.bf16.gmra.mxu0 %v8891
      %v10227 = vpop.f32.mrf.mxu0
      %v10228 = vadd.f32 %v10139, %v10227
      %v10229 = vpop.f32.mrf.mxu0
      %v10230 = vadd.f32 %v10141, %v10229
      %10231 = vmatmul.bf16.gmra.mxu0 %v8893
      %v10232 = vpop.f32.mrf.mxu0
      %v10233 = vadd.f32 %v10144, %v10232
      %v10234 = vpop.f32.mrf.mxu0
      %v10235 = vadd.f32 %v10146, %v10234
      %10236 = vmatmul.bf16.gmra.mxu0 %v8895
      %v10237 = vpop.f32.mrf.mxu0
      %v10238 = vadd.f32 %v10149, %v10237
      %v10239 = vpop.f32.mrf.mxu0
      %v10240 = vadd.f32 %v10151, %v10239
      %10241 = vmatmul.bf16.gmra.mxu0 %v8897
      %v10242 = vpop.f32.mrf.mxu0
      %v10243 = vadd.f32 %v10154, %v10242
      %v10244 = vpop.f32.mrf.mxu0
      %v10245 = vadd.f32 %v10156, %v10244
      %10246 = vmatmul.bf16.gmra.mxu0 %v8899
      %v10247 = vpop.f32.mrf.mxu0
      %v10248 = vadd.f32 %v10159, %v10247
      %v10249 = vpop.f32.mrf.mxu0
      %v10250 = vadd.f32 %v10161, %v10249
      %10251 = vmatmul.bf16.gmra.mxu0 %v8901
      %v10252 = vpop.f32.mrf.mxu0
      %v10253 = vadd.f32 %v10164, %v10252
      %v10254 = vpop.f32.mrf.mxu0
      %v10255 = vadd.f32 %v10166, %v10254
      %10256 = vmatmul.bf16.gmra.mxu0 %v8903
      %v10257 = vpop.f32.mrf.mxu0
      %v10258 = vadd.f32 %v10169, %v10257
      %v10259 = vpop.f32.mrf.mxu0
      %v10260 = vadd.f32 %v10171, %v10259
      %10261 = vmatmul.bf16.gmra.mxu0 %v8905
      %v10262 = vpop.f32.mrf.mxu0
      %v10263 = vadd.f32 %v10174, %v10262
      %v10264 = vpop.f32.mrf.mxu0
      %v10265 = vadd.f32 %v10176, %v10264
      %10266 = vmatmul.bf16.gmra.mxu0 %v8907
      %v10267 = vpop.f32.mrf.mxu0
      %v10268 = vadd.f32 %v10179, %v10267
      %v10269 = vpop.f32.mrf.mxu0
      %v10270 = vadd.f32 %v10181, %v10269
      %10271 = vmatmul.bf16.gmra.mxu0 %v8909
      %v10272 = vpop.f32.mrf.mxu0
      %v10273 = vadd.f32 %v10184, %v10272
      %v10274 = vpop.f32.mrf.mxu0
      %v10275 = vadd.f32 %v10186, %v10274
      %10276 = vmatmul.bf16.gmra.mxu0 %v9464
      %v10277 = vpop.f32.mrf.mxu0
      %v10278 = vadd.f32 %v10189, %v10277
      %v10279 = vpop.f32.mrf.mxu0
      %v10280 = vadd.f32 %v10191, %v10279
      %10281 = vmatmul.bf16.gmra.mxu0 %v9789
      %v10282 = vpop.f32.mrf.mxu0
      %v10283 = vadd.f32 %v10194, %v10282
      %v10284 = vpop.f32.mrf.mxu0
      %v10285 = vadd.f32 %v10196, %v10284
      %10286 = vmatmul.bf16.gmra.mxu0 %v8881
      %v10287 = vpop.f32.mrf.mxu0
      %v10288 = vadd.f32 %v10199, %v10287
      %v10289 = vpop.f32.mrf.mxu0
      %v10290 = vadd.f32 %v10201, %v10289
      %10291 = vdwg.mxu0
      %v10292 = vadd.f32 %v9969, %v10213
      %v10293 = vadd.f32 %v9970, %v10215
      %v10294 = vadd.f32 %v9971, %v10218
      %v10295 = vadd.f32 %v9972, %v10220
      %v10296 = vadd.f32 %v9973, %v10223
      %v10297 = vadd.f32 %v9974, %v10225
      %v10298 = vadd.f32 %v9975, %v10228
      %v10299 = vadd.f32 %v9976, %v10230
      %v10300 = vadd.f32 %v9977, %v10233
      %v10301 = vadd.f32 %v9978, %v10235
      %v10302 = vadd.f32 %v9979, %v10238
      %v10303 = vadd.f32 %v9980, %v10240
      %v10304 = vadd.f32 %v9981, %v10243
      %v10305 = vadd.f32 %v9982, %v10245
      %v10306 = vadd.f32 %v9983, %v10248
      %v10307 = vadd.f32 %v9984, %v10250
      %v10308 = vadd.f32 %v9985, %v10253
      %v10309 = vadd.f32 %v9986, %v10255
      %v10310 = vadd.f32 %v9987, %v10258
      %v10311 = vadd.f32 %v9988, %v10260
      %v10312 = vadd.f32 %v9989, %v10263
      %v10313 = vadd.f32 %v9990, %v10265
      %v10314 = vadd.f32 %v9991, %v10268
      %v10315 = vadd.f32 %v9992, %v10270
      %v10316 = vadd.f32 %v9993, %v10273
      %v10317 = vadd.f32 %v9994, %v10275
      %v10318 = vadd.f32 %v9995, %v10278
      %v10319 = vadd.f32 %v9996, %v10280
      %v10320 = vadd.f32 %v9997, %v10283
      %v10321 = vadd.f32 %v9998, %v10285
      %v10322 = vadd.f32 %v9999, %v10288
      %v10323 = vadd.f32 %v10000, %v10290
      %s10324 = scalar_lea.vmem %s9, 560
      %v10325 = vld [vmem:[%s10324] sm:$0xf]
      %v10326 = vld [vmem:[%s10324 + $0x4] sm:$0xf]
      %v10327 = vld [vmem:[%s10324 + $0x8] sm:$0xf]
      %v10328 = vld [vmem:[%s10324 + $0xc] sm:$0xf]
      %v10329 = vld [vmem:[%s10324 + $0x10] sm:$0xf]
      %v10330 = vld [vmem:[%s10324 + $0x14] sm:$0xf]
      %v10331 = vld [vmem:[%s10324 + $0x18] sm:$0xf]
      %v10332 = vld [vmem:[%s10324 + $0x1c] sm:$0xf]
      %v10333 = vld [vmem:[%s10324 + $0x20] sm:$0xf]
      %v10334 = vld [vmem:[%s10324 + $0x24] sm:$0xf]
      %v10335 = vld [vmem:[%s10324 + $0x28] sm:$0xf]
      %v10336 = vld [vmem:[%s10324 + $0x2c] sm:$0xf]
      %v10337 = vld [vmem:[%s10324 + $0x30] sm:$0xf]
      %v10338 = vld [vmem:[%s10324 + $0x34] sm:$0xf]
      %v10339 = vld [vmem:[%s10324 + $0x38] sm:$0xf]
      %v10340 = vld [vmem:[%s10324 + $0x3c] sm:$0xf]
      %v10341 = vld [vmem:[%s10324 + $0x40] sm:$0xf]
      %v10342 = vld [vmem:[%s10324 + $0x44] sm:$0xf]
      %v10343 = vld [vmem:[%s10324 + $0x48] sm:$0xf]
      %v10344 = vld [vmem:[%s10324 + $0x4c] sm:$0xf]
      %v10345 = vld [vmem:[%s10324 + $0x50] sm:$0xf]
      %v10346 = vld [vmem:[%s10324 + $0x54] sm:$0xf]
      %v10347 = vld [vmem:[%s10324 + $0x58] sm:$0xf]
      %v10348 = vld [vmem:[%s10324 + $0x5c] sm:$0xf]
      %v10349 = vld [vmem:[%s10324 + $0x60] sm:$0xf]
      %v10350 = vld [vmem:[%s10324 + $0x64] sm:$0xf]
      %v10351 = vld [vmem:[%s10324 + $0x68] sm:$0xf]
      %v10352 = vld [vmem:[%s10324 + $0x6c] sm:$0xf]
      %v10381 = vunpack.c.l.b16 %v10325
      %v10382 = vunpack.c.l.b16 %v10326
      %v10383 = vunpack.c.l.b16 %v10327
      %v10384 = vunpack.c.l.b16 %v10328
      %v10385 = vunpack.c.l.b16 %v10329
      %v10386 = vunpack.c.l.b16 %v10330
      %v10387 = vunpack.c.l.b16 %v10331
      %v10388 = vunpack.c.l.b16 %v10332
      %v10389 = vunpack.c.l.b16 %v10333
      %v10390 = vunpack.c.l.b16 %v10334
      %v10391 = vunpack.c.l.b16 %v10335
      %v10392 = vunpack.c.l.b16 %v10336
      %v10393 = vunpack.c.l.b16 %v10337
      %v10394 = vunpack.c.l.b16 %v10338
      %v10395 = vunpack.c.l.b16 %v10339
      %v10396 = vunpack.c.l.b16 %v10340
      %v10397 = vunpack.c.l.b16 %v10341
      %v10398 = vunpack.c.l.b16 %v10342
      %v10399 = vunpack.c.l.b16 %v10343
      %v10400 = vunpack.c.l.b16 %v10344
      %v10401 = vunpack.c.l.b16 %v10345
      %v10402 = vunpack.c.l.b16 %v10346
      %v10403 = vunpack.c.l.b16 %v10347
      %v10404 = vunpack.c.l.b16 %v10348
      %v10405 = vunpack.c.l.b16 %v10349
      %v10406 = vunpack.c.l.b16 %v10350
      %v10407 = vunpack.c.l.b16 %v10351
      %v10408 = vunpack.c.l.b16 %v10352
      %v10409 = vpack.c.b16 %v10382, %v10381
      %v10410 = vpack.c.b16 %v10384, %v10383
      %v10411 = vpack.c.b16 %v10386, %v10385
      %v10412 = vpack.c.b16 %v10388, %v10387
      %v10413 = vpack.c.b16 %v10390, %v10389
      %v10414 = vpack.c.b16 %v10392, %v10391
      %v10415 = vpack.c.b16 %v10394, %v10393
      %v10416 = vpack.c.b16 %v10396, %v10395
      %v10417 = vpack.c.b16 %v10398, %v10397
      %v10418 = vpack.c.b16 %v10400, %v10399
      %v10419 = vpack.c.b16 %v10402, %v10401
      %v10420 = vpack.c.b16 %v10404, %v10403
      %v10421 = vpack.c.b16 %v10406, %v10405
      %v10422 = vpack.c.b16 %v10408, %v10407
      %10437 = vmatpush.bf16.msra.mxu0 %v10416
      %10438 = vmatpush.bf16.msra.mxu0 %v10415
      %10439 = vmatpush.bf16.msra.mxu0 %v10414
      %10440 = vmatpush.bf16.msra.mxu0 %v10413
      %10441 = vmatpush.bf16.msra.mxu0 %v10412
      %10442 = vmatpush.bf16.msra.mxu0 %v10411
      %10443 = vmatpush.bf16.msra.mxu0 %v10410
      %10444 = vmatpush.bf16.msra.mxu0 %v10409
      %10445 = vmatmul.bf16.gmra.mxu0 %v8619
      %v10446 = vpop.f32.mrf.mxu0
      %v10447 = vadd.f32 0.0, %v10446
      %v10448 = vpop.f32.mrf.mxu0
      %v10449 = vadd.f32 0.0, %v10448
      %10450 = vmatmul.bf16.gmra.mxu0 %v8622
      %v10451 = vpop.f32.mrf.mxu0
      %v10452 = vadd.f32 0.0, %v10451
      %v10453 = vpop.f32.mrf.mxu0
      %v10454 = vadd.f32 0.0, %v10453
      %10455 = vmatmul.bf16.gmra.mxu0 %v8625
      %v10456 = vpop.f32.mrf.mxu0
      %v10457 = vadd.f32 0.0, %v10456
      %v10458 = vpop.f32.mrf.mxu0
      %v10459 = vadd.f32 0.0, %v10458
      %10460 = vmatmul.bf16.gmra.mxu0 %v8628
      %v10461 = vpop.f32.mrf.mxu0
      %v10462 = vadd.f32 0.0, %v10461
      %v10463 = vpop.f32.mrf.mxu0
      %v10464 = vadd.f32 0.0, %v10463
      %10465 = vmatmul.bf16.gmra.mxu0 %v8631
      %v10466 = vpop.f32.mrf.mxu0
      %v10467 = vadd.f32 0.0, %v10466
      %v10468 = vpop.f32.mrf.mxu0
      %v10469 = vadd.f32 0.0, %v10468
      %10470 = vmatmul.bf16.gmra.mxu0 %v8634
      %v10471 = vpop.f32.mrf.mxu0
      %v10472 = vadd.f32 0.0, %v10471
      %v10473 = vpop.f32.mrf.mxu0
      %v10474 = vadd.f32 0.0, %v10473
      %10475 = vmatmul.bf16.gmra.mxu0 %v8637
      %v10476 = vpop.f32.mrf.mxu0
      %v10477 = vadd.f32 0.0, %v10476
      %v10478 = vpop.f32.mrf.mxu0
      %v10479 = vadd.f32 0.0, %v10478
      %10480 = vmatmul.bf16.gmra.mxu0 %v8640
      %v10481 = vpop.f32.mrf.mxu0
      %v10482 = vadd.f32 0.0, %v10481
      %v10483 = vpop.f32.mrf.mxu0
      %v10484 = vadd.f32 0.0, %v10483
      %10485 = vmatmul.bf16.gmra.mxu0 %v8643
      %v10486 = vpop.f32.mrf.mxu0
      %v10487 = vadd.f32 0.0, %v10486
      %v10488 = vpop.f32.mrf.mxu0
      %v10489 = vadd.f32 0.0, %v10488
      %10490 = vmatmul.bf16.gmra.mxu0 %v8646
      %v10491 = vpop.f32.mrf.mxu0
      %v10492 = vadd.f32 0.0, %v10491
      %v10493 = vpop.f32.mrf.mxu0
      %v10494 = vadd.f32 0.0, %v10493
      %10495 = vmatmul.bf16.gmra.mxu0 %v8649
      %v10496 = vpop.f32.mrf.mxu0
      %v10497 = vadd.f32 0.0, %v10496
      %v10498 = vpop.f32.mrf.mxu0
      %v10499 = vadd.f32 0.0, %v10498
      %10500 = vmatmul.bf16.gmra.mxu0 %v8652
      %v10501 = vpop.f32.mrf.mxu0
      %v10502 = vadd.f32 0.0, %v10501
      %v10503 = vpop.f32.mrf.mxu0
      %v10504 = vadd.f32 0.0, %v10503
      %10505 = vmatmul.bf16.gmra.mxu0 %v8655
      %v10506 = vpop.f32.mrf.mxu0
      %v10507 = vadd.f32 0.0, %v10506
      %v10508 = vpop.f32.mrf.mxu0
      %v10509 = vadd.f32 0.0, %v10508
      %10510 = vmatmul.bf16.gmra.mxu0 %v8658
      %v10511 = vpop.f32.mrf.mxu0
      %v10512 = vadd.f32 0.0, %v10511
      %v10513 = vpop.f32.mrf.mxu0
      %v10514 = vadd.f32 0.0, %v10513
      %10515 = vmatmul.bf16.gmra.mxu0 0
      %v10516 = vpop.f32.mrf.mxu0
      %v10517 = vadd.f32 0.0, %v10516
      %v10518 = vpop.f32.mrf.mxu0
      %v10519 = vadd.f32 0.0, %v10518
      %10520 = vmatmul.bf16.gmra.mxu0 0
      %v10521 = vpop.f32.mrf.mxu0
      %v10522 = vadd.f32 0.0, %v10521
      %v10523 = vpop.f32.mrf.mxu0
      %v10524 = vadd.f32 0.0, %v10523
      %10525 = vdwg.mxu0
      %10526 = vmatpush.bf16.msra.mxu0 0
      %10527 = vmatpush.bf16.msra.mxu0 0
      %10528 = vmatpush.bf16.msra.mxu0 %v10422
      %10529 = vmatpush.bf16.msra.mxu0 %v10421
      %10530 = vmatpush.bf16.msra.mxu0 %v10420
      %10531 = vmatpush.bf16.msra.mxu0 %v10419
      %10532 = vmatpush.bf16.msra.mxu0 %v10418
      %10533 = vmatpush.bf16.msra.mxu0 %v10417
      %10534 = vmatmul.bf16.gmra.mxu0 %v8887
      %v10535 = vpop.f32.mrf.mxu0
      %v10536 = vadd.f32 %v10447, %v10535
      %v10537 = vpop.f32.mrf.mxu0
      %v10538 = vadd.f32 %v10449, %v10537
      %10539 = vmatmul.bf16.gmra.mxu0 %v8889
      %v10540 = vpop.f32.mrf.mxu0
      %v10541 = vadd.f32 %v10452, %v10540
      %v10542 = vpop.f32.mrf.mxu0
      %v10543 = vadd.f32 %v10454, %v10542
      %10544 = vmatmul.bf16.gmra.mxu0 %v8891
      %v10545 = vpop.f32.mrf.mxu0
      %v10546 = vadd.f32 %v10457, %v10545
      %v10547 = vpop.f32.mrf.mxu0
      %v10548 = vadd.f32 %v10459, %v10547
      %10549 = vmatmul.bf16.gmra.mxu0 %v8893
      %v10550 = vpop.f32.mrf.mxu0
      %v10551 = vadd.f32 %v10462, %v10550
      %v10552 = vpop.f32.mrf.mxu0
      %v10553 = vadd.f32 %v10464, %v10552
      %10554 = vmatmul.bf16.gmra.mxu0 %v8895
      %v10555 = vpop.f32.mrf.mxu0
      %v10556 = vadd.f32 %v10467, %v10555
      %v10557 = vpop.f32.mrf.mxu0
      %v10558 = vadd.f32 %v10469, %v10557
      %10559 = vmatmul.bf16.gmra.mxu0 %v8897
      %v10560 = vpop.f32.mrf.mxu0
      %v10561 = vadd.f32 %v10472, %v10560
      %v10562 = vpop.f32.mrf.mxu0
      %v10563 = vadd.f32 %v10474, %v10562
      %10564 = vmatmul.bf16.gmra.mxu0 %v8899
      %v10565 = vpop.f32.mrf.mxu0
      %v10566 = vadd.f32 %v10477, %v10565
      %v10567 = vpop.f32.mrf.mxu0
      %v10568 = vadd.f32 %v10479, %v10567
      %10569 = vmatmul.bf16.gmra.mxu0 %v8901
      %v10570 = vpop.f32.mrf.mxu0
      %v10571 = vadd.f32 %v10482, %v10570
      %v10572 = vpop.f32.mrf.mxu0
      %v10573 = vadd.f32 %v10484, %v10572
      %10574 = vmatmul.bf16.gmra.mxu0 %v8903
      %v10575 = vpop.f32.mrf.mxu0
      %v10576 = vadd.f32 %v10487, %v10575
      %v10577 = vpop.f32.mrf.mxu0
      %v10578 = vadd.f32 %v10489, %v10577
      %10579 = vmatmul.bf16.gmra.mxu0 %v8905
      %v10580 = vpop.f32.mrf.mxu0
      %v10581 = vadd.f32 %v10492, %v10580
      %v10582 = vpop.f32.mrf.mxu0
      %v10583 = vadd.f32 %v10494, %v10582
      %10584 = vmatmul.bf16.gmra.mxu0 %v8907
      %v10585 = vpop.f32.mrf.mxu0
      %v10586 = vadd.f32 %v10497, %v10585
      %v10587 = vpop.f32.mrf.mxu0
      %v10588 = vadd.f32 %v10499, %v10587
      %10589 = vmatmul.bf16.gmra.mxu0 %v8909
      %v10590 = vpop.f32.mrf.mxu0
      %v10591 = vadd.f32 %v10502, %v10590
      %v10592 = vpop.f32.mrf.mxu0
      %v10593 = vadd.f32 %v10504, %v10592
      %10594 = vmatmul.bf16.gmra.mxu0 %v9464
      %v10595 = vpop.f32.mrf.mxu0
      %v10596 = vadd.f32 %v10507, %v10595
      %v10597 = vpop.f32.mrf.mxu0
      %v10598 = vadd.f32 %v10509, %v10597
      %10599 = vmatmul.bf16.gmra.mxu0 %v9789
      %v10600 = vpop.f32.mrf.mxu0
      %v10601 = vadd.f32 %v10512, %v10600
      %v10602 = vpop.f32.mrf.mxu0
      %v10603 = vadd.f32 %v10514, %v10602
      %10604 = vmatmul.bf16.gmra.mxu0 %v8881
      %v10605 = vpop.f32.mrf.mxu0
      %v10606 = vadd.f32 %v10517, %v10605
      %v10607 = vpop.f32.mrf.mxu0
      %v10608 = vadd.f32 %v10519, %v10607
      %10609 = vmatmul.bf16.gmra.mxu0 %v8881
      %v10610 = vpop.f32.mrf.mxu0
      %v10611 = vadd.f32 %v10522, %v10610
      %v10612 = vpop.f32.mrf.mxu0
      %v10613 = vadd.f32 %v10524, %v10612
      %10614 = vdwg.mxu0
      %v10615 = vadd.f32 %v10292, %v10536
      %v10616 = vadd.f32 %v10293, %v10538
      %v10617 = vadd.f32 %v10294, %v10541
      %v10618 = vadd.f32 %v10295, %v10543
      %v10619 = vadd.f32 %v10296, %v10546
      %v10620 = vadd.f32 %v10297, %v10548
      %v10621 = vadd.f32 %v10298, %v10551
      %v10622 = vadd.f32 %v10299, %v10553
      %v10623 = vadd.f32 %v10300, %v10556
      %v10624 = vadd.f32 %v10301, %v10558
      %v10625 = vadd.f32 %v10302, %v10561
      %v10626 = vadd.f32 %v10303, %v10563
      %v10627 = vadd.f32 %v10304, %v10566
      %v10628 = vadd.f32 %v10305, %v10568
      %v10629 = vadd.f32 %v10306, %v10571
      %v10630 = vadd.f32 %v10307, %v10573
      %v10631 = vadd.f32 %v10308, %v10576
      %v10632 = vadd.f32 %v10309, %v10578
      %v10633 = vadd.f32 %v10310, %v10581
      %v10634 = vadd.f32 %v10311, %v10583
      %v10635 = vadd.f32 %v10312, %v10586
      %v10636 = vadd.f32 %v10313, %v10588
      %v10637 = vadd.f32 %v10314, %v10591
      %v10638 = vadd.f32 %v10315, %v10593
      %v10639 = vadd.f32 %v10316, %v10596
      %v10640 = vadd.f32 %v10317, %v10598
      %v10641 = vadd.f32 %v10318, %v10601
      %v10642 = vadd.f32 %v10319, %v10603
      %v10643 = vadd.f32 %v10320, %v10606
      %v10644 = vadd.f32 %v10321, %v10608
      %v10645 = vadd.f32 %v10322, %v10611
      %v10646 = vadd.f32 %v10323, %v10613
      %s10647 = scalar_lea.vmem %s9, 672
      %v10648 = vld [vmem:[%s10647] sm:$0xf]
      %v10649 = vld [vmem:[%s10647 + $0x4] sm:$0xf]
      %v10650 = vld [vmem:[%s10647 + $0x8] sm:$0xf]
      %v10651 = vld [vmem:[%s10647 + $0xc] sm:$0xf]
      %v10652 = vld [vmem:[%s10647 + $0x10] sm:$0xf]
      %v10653 = vld [vmem:[%s10647 + $0x14] sm:$0xf]
      %v10654 = vld [vmem:[%s10647 + $0x18] sm:$0xf]
      %v10655 = vld [vmem:[%s10647 + $0x1c] sm:$0xf]
      %v10656 = vld [vmem:[%s10647 + $0x20] sm:$0xf]
      %v10657 = vld [vmem:[%s10647 + $0x24] sm:$0xf]
      %v10658 = vld [vmem:[%s10647 + $0x28] sm:$0xf]
      %v10659 = vld [vmem:[%s10647 + $0x2c] sm:$0xf]
      %v10660 = vld [vmem:[%s10647 + $0x30] sm:$0xf]
      %v10661 = vld [vmem:[%s10647 + $0x34] sm:$0xf]
      %v10662 = vld [vmem:[%s10647 + $0x38] sm:$0xf]
      %v10663 = vld [vmem:[%s10647 + $0x3c] sm:$0xf]
      %v10664 = vld [vmem:[%s10647 + $0x40] sm:$0xf]
      %v10665 = vld [vmem:[%s10647 + $0x44] sm:$0xf]
      %v10666 = vld [vmem:[%s10647 + $0x48] sm:$0xf]
      %v10667 = vld [vmem:[%s10647 + $0x4c] sm:$0xf]
      %v10668 = vld [vmem:[%s10647 + $0x50] sm:$0xf]
      %v10669 = vld [vmem:[%s10647 + $0x54] sm:$0xf]
      %v10670 = vld [vmem:[%s10647 + $0x58] sm:$0xf]
      %v10671 = vld [vmem:[%s10647 + $0x5c] sm:$0xf]
      %v10672 = vld [vmem:[%s10647 + $0x60] sm:$0xf]
      %v10673 = vld [vmem:[%s10647 + $0x64] sm:$0xf]
      %v10674 = vld [vmem:[%s10647 + $0x68] sm:$0xf]
      %v10675 = vld [vmem:[%s10647 + $0x6c] sm:$0xf]
      %v10704 = vunpack.c.l.b16 %v10648
      %v10705 = vunpack.c.l.b16 %v10649
      %v10706 = vunpack.c.l.b16 %v10650
      %v10707 = vunpack.c.l.b16 %v10651
      %v10708 = vunpack.c.l.b16 %v10652
      %v10709 = vunpack.c.l.b16 %v10653
      %v10710 = vunpack.c.l.b16 %v10654
      %v10711 = vunpack.c.l.b16 %v10655
      %v10712 = vunpack.c.l.b16 %v10656
      %v10713 = vunpack.c.l.b16 %v10657
      %v10714 = vunpack.c.l.b16 %v10658
      %v10715 = vunpack.c.l.b16 %v10659
      %v10716 = vunpack.c.l.b16 %v10660
      %v10717 = vunpack.c.l.b16 %v10661
      %v10718 = vunpack.c.l.b16 %v10662
      %v10719 = vunpack.c.l.b16 %v10663
      %v10720 = vunpack.c.l.b16 %v10664
      %v10721 = vunpack.c.l.b16 %v10665
      %v10722 = vunpack.c.l.b16 %v10666
      %v10723 = vunpack.c.l.b16 %v10667
      %v10724 = vunpack.c.l.b16 %v10668
      %v10725 = vunpack.c.l.b16 %v10669
      %v10726 = vunpack.c.l.b16 %v10670
      %v10727 = vunpack.c.l.b16 %v10671
      %v10728 = vunpack.c.l.b16 %v10672
      %v10729 = vunpack.c.l.b16 %v10673
      %v10730 = vunpack.c.l.b16 %v10674
      %v10731 = vunpack.c.l.b16 %v10675
      %v10732 = vpack.c.b16 %v10705, %v10704
      %v10733 = vpack.c.b16 %v10707, %v10706
      %v10734 = vpack.c.b16 %v10709, %v10708
      %v10735 = vpack.c.b16 %v10711, %v10710
      %v10736 = vpack.c.b16 %v10713, %v10712
      %v10737 = vpack.c.b16 %v10715, %v10714
      %v10738 = vpack.c.b16 %v10717, %v10716
      %v10739 = vpack.c.b16 %v10719, %v10718
      %v10740 = vpack.c.b16 %v10721, %v10720
      %v10741 = vpack.c.b16 %v10723, %v10722
      %v10742 = vpack.c.b16 %v10725, %v10724
      %v10743 = vpack.c.b16 %v10727, %v10726
      %v10744 = vpack.c.b16 %v10729, %v10728
      %v10745 = vpack.c.b16 %v10731, %v10730
      %10760 = vmatpush.bf16.msra.mxu0 %v10739
      %10761 = vmatpush.bf16.msra.mxu0 %v10738
      %10762 = vmatpush.bf16.msra.mxu0 %v10737
      %10763 = vmatpush.bf16.msra.mxu0 %v10736
      %10764 = vmatpush.bf16.msra.mxu0 %v10735
      %10765 = vmatpush.bf16.msra.mxu0 %v10734
      %10766 = vmatpush.bf16.msra.mxu0 %v10733
      %10767 = vmatpush.bf16.msra.mxu0 %v10732
      %10768 = vmatmul.bf16.gmra.mxu0 %v8622
      %v10769 = vpop.f32.mrf.mxu0
      %v10770 = vadd.f32 0.0, %v10769
      %v10771 = vpop.f32.mrf.mxu0
      %v10772 = vadd.f32 0.0, %v10771
      %10773 = vmatmul.bf16.gmra.mxu0 %v8625
      %v10774 = vpop.f32.mrf.mxu0
      %v10775 = vadd.f32 0.0, %v10774
      %v10776 = vpop.f32.mrf.mxu0
      %v10777 = vadd.f32 0.0, %v10776
      %10778 = vmatmul.bf16.gmra.mxu0 %v8628
      %v10779 = vpop.f32.mrf.mxu0
      %v10780 = vadd.f32 0.0, %v10779
      %v10781 = vpop.f32.mrf.mxu0
      %v10782 = vadd.f32 0.0, %v10781
      %10783 = vmatmul.bf16.gmra.mxu0 %v8631
      %v10784 = vpop.f32.mrf.mxu0
      %v10785 = vadd.f32 0.0, %v10784
      %v10786 = vpop.f32.mrf.mxu0
      %v10787 = vadd.f32 0.0, %v10786
      %10788 = vmatmul.bf16.gmra.mxu0 %v8634
      %v10789 = vpop.f32.mrf.mxu0
      %v10790 = vadd.f32 0.0, %v10789
      %v10791 = vpop.f32.mrf.mxu0
      %v10792 = vadd.f32 0.0, %v10791
      %10793 = vmatmul.bf16.gmra.mxu0 %v8637
      %v10794 = vpop.f32.mrf.mxu0
      %v10795 = vadd.f32 0.0, %v10794
      %v10796 = vpop.f32.mrf.mxu0
      %v10797 = vadd.f32 0.0, %v10796
      %10798 = vmatmul.bf16.gmra.mxu0 %v8640
      %v10799 = vpop.f32.mrf.mxu0
      %v10800 = vadd.f32 0.0, %v10799
      %v10801 = vpop.f32.mrf.mxu0
      %v10802 = vadd.f32 0.0, %v10801
      %10803 = vmatmul.bf16.gmra.mxu0 %v8643
      %v10804 = vpop.f32.mrf.mxu0
      %v10805 = vadd.f32 0.0, %v10804
      %v10806 = vpop.f32.mrf.mxu0
      %v10807 = vadd.f32 0.0, %v10806
      %10808 = vmatmul.bf16.gmra.mxu0 %v8646
      %v10809 = vpop.f32.mrf.mxu0
      %v10810 = vadd.f32 0.0, %v10809
      %v10811 = vpop.f32.mrf.mxu0
      %v10812 = vadd.f32 0.0, %v10811
      %10813 = vmatmul.bf16.gmra.mxu0 %v8649
      %v10814 = vpop.f32.mrf.mxu0
      %v10815 = vadd.f32 0.0, %v10814
      %v10816 = vpop.f32.mrf.mxu0
      %v10817 = vadd.f32 0.0, %v10816
      %10818 = vmatmul.bf16.gmra.mxu0 %v8652
      %v10819 = vpop.f32.mrf.mxu0
      %v10820 = vadd.f32 0.0, %v10819
      %v10821 = vpop.f32.mrf.mxu0
      %v10822 = vadd.f32 0.0, %v10821
      %10823 = vmatmul.bf16.gmra.mxu0 %v8655
      %v10824 = vpop.f32.mrf.mxu0
      %v10825 = vadd.f32 0.0, %v10824
      %v10826 = vpop.f32.mrf.mxu0
      %v10827 = vadd.f32 0.0, %v10826
      %10828 = vmatmul.bf16.gmra.mxu0 %v8658
      %v10829 = vpop.f32.mrf.mxu0
      %v10830 = vadd.f32 0.0, %v10829
      %v10831 = vpop.f32.mrf.mxu0
      %v10832 = vadd.f32 0.0, %v10831
      %10833 = vmatmul.bf16.gmra.mxu0 0
      %v10834 = vpop.f32.mrf.mxu0
      %v10835 = vadd.f32 0.0, %v10834
      %v10836 = vpop.f32.mrf.mxu0
      %v10837 = vadd.f32 0.0, %v10836
      %10838 = vmatmul.bf16.gmra.mxu0 0
      %v10839 = vpop.f32.mrf.mxu0
      %v10840 = vadd.f32 0.0, %v10839
      %v10841 = vpop.f32.mrf.mxu0
      %v10842 = vadd.f32 0.0, %v10841
      %10843 = vmatmul.bf16.gmra.mxu0 0
      %v10844 = vpop.f32.mrf.mxu0
      %v10845 = vadd.f32 0.0, %v10844
      %v10846 = vpop.f32.mrf.mxu0
      %v10847 = vadd.f32 0.0, %v10846
      %10848 = vdwg.mxu0
      %10849 = vmatpush.bf16.msra.mxu0 0
      %10850 = vmatpush.bf16.msra.mxu0 0
      %10851 = vmatpush.bf16.msra.mxu0 %v10745
      %10852 = vmatpush.bf16.msra.mxu0 %v10744
      %10853 = vmatpush.bf16.msra.mxu0 %v10743
      %10854 = vmatpush.bf16.msra.mxu0 %v10742
      %10855 = vmatpush.bf16.msra.mxu0 %v10741
      %10856 = vmatpush.bf16.msra.mxu0 %v10740
      %10857 = vmatmul.bf16.gmra.mxu0 %v8889
      %v10858 = vpop.f32.mrf.mxu0
      %v10859 = vadd.f32 %v10770, %v10858
      %v10860 = vpop.f32.mrf.mxu0
      %v10861 = vadd.f32 %v10772, %v10860
      %10862 = vmatmul.bf16.gmra.mxu0 %v8891
      %v10863 = vpop.f32.mrf.mxu0
      %v10864 = vadd.f32 %v10775, %v10863
      %v10865 = vpop.f32.mrf.mxu0
      %v10866 = vadd.f32 %v10777, %v10865
      %10867 = vmatmul.bf16.gmra.mxu0 %v8893
      %v10868 = vpop.f32.mrf.mxu0
      %v10869 = vadd.f32 %v10780, %v10868
      %v10870 = vpop.f32.mrf.mxu0
      %v10871 = vadd.f32 %v10782, %v10870
      %10872 = vmatmul.bf16.gmra.mxu0 %v8895
      %v10873 = vpop.f32.mrf.mxu0
      %v10874 = vadd.f32 %v10785, %v10873
      %v10875 = vpop.f32.mrf.mxu0
      %v10876 = vadd.f32 %v10787, %v10875
      %10877 = vmatmul.bf16.gmra.mxu0 %v8897
      %v10878 = vpop.f32.mrf.mxu0
      %v10879 = vadd.f32 %v10790, %v10878
      %v10880 = vpop.f32.mrf.mxu0
      %v10881 = vadd.f32 %v10792, %v10880
      %10882 = vmatmul.bf16.gmra.mxu0 %v8899
      %v10883 = vpop.f32.mrf.mxu0
      %v10884 = vadd.f32 %v10795, %v10883
      %v10885 = vpop.f32.mrf.mxu0
      %v10886 = vadd.f32 %v10797, %v10885
      %10887 = vmatmul.bf16.gmra.mxu0 %v8901
      %v10888 = vpop.f32.mrf.mxu0
      %v10889 = vadd.f32 %v10800, %v10888
      %v10890 = vpop.f32.mrf.mxu0
      %v10891 = vadd.f32 %v10802, %v10890
      %10892 = vmatmul.bf16.gmra.mxu0 %v8903
      %v10893 = vpop.f32.mrf.mxu0
      %v10894 = vadd.f32 %v10805, %v10893
      %v10895 = vpop.f32.mrf.mxu0
      %v10896 = vadd.f32 %v10807, %v10895
      %10897 = vmatmul.bf16.gmra.mxu0 %v8905
      %v10898 = vpop.f32.mrf.mxu0
      %v10899 = vadd.f32 %v10810, %v10898
      %v10900 = vpop.f32.mrf.mxu0
      %v10901 = vadd.f32 %v10812, %v10900
      %10902 = vmatmul.bf16.gmra.mxu0 %v8907
      %v10903 = vpop.f32.mrf.mxu0
      %v10904 = vadd.f32 %v10815, %v10903
      %v10905 = vpop.f32.mrf.mxu0
      %v10906 = vadd.f32 %v10817, %v10905
      %10907 = vmatmul.bf16.gmra.mxu0 %v8909
      %v10908 = vpop.f32.mrf.mxu0
      %v10909 = vadd.f32 %v10820, %v10908
      %v10910 = vpop.f32.mrf.mxu0
      %v10911 = vadd.f32 %v10822, %v10910
      %10912 = vmatmul.bf16.gmra.mxu0 %v9464
      %v10913 = vpop.f32.mrf.mxu0
      %v10914 = vadd.f32 %v10825, %v10913
      %v10915 = vpop.f32.mrf.mxu0
      %v10916 = vadd.f32 %v10827, %v10915
      %10917 = vmatmul.bf16.gmra.mxu0 %v9789
      %v10918 = vpop.f32.mrf.mxu0
      %v10919 = vadd.f32 %v10830, %v10918
      %v10920 = vpop.f32.mrf.mxu0
      %v10921 = vadd.f32 %v10832, %v10920
      %10922 = vmatmul.bf16.gmra.mxu0 %v8881
      %v10923 = vpop.f32.mrf.mxu0
      %v10924 = vadd.f32 %v10835, %v10923
      %v10925 = vpop.f32.mrf.mxu0
      %v10926 = vadd.f32 %v10837, %v10925
      %10927 = vmatmul.bf16.gmra.mxu0 %v8881
      %v10928 = vpop.f32.mrf.mxu0
      %v10929 = vadd.f32 %v10840, %v10928
      %v10930 = vpop.f32.mrf.mxu0
      %v10931 = vadd.f32 %v10842, %v10930
      %10932 = vmatmul.bf16.gmra.mxu0 %v8881
      %v10933 = vpop.f32.mrf.mxu0
      %v10934 = vadd.f32 %v10845, %v10933
      %v10935 = vpop.f32.mrf.mxu0
      %v10936 = vadd.f32 %v10847, %v10935
      %10937 = vdwg.mxu0
      %v10938 = vadd.f32 %v10615, %v10859
      %v10939 = vadd.f32 %v10616, %v10861
      %v10940 = vadd.f32 %v10617, %v10864
      %v10941 = vadd.f32 %v10618, %v10866
      %v10942 = vadd.f32 %v10619, %v10869
      %v10943 = vadd.f32 %v10620, %v10871
      %v10944 = vadd.f32 %v10621, %v10874
      %v10945 = vadd.f32 %v10622, %v10876
      %v10946 = vadd.f32 %v10623, %v10879
      %v10947 = vadd.f32 %v10624, %v10881
      %v10948 = vadd.f32 %v10625, %v10884
      %v10949 = vadd.f32 %v10626, %v10886
      %v10950 = vadd.f32 %v10627, %v10889
      %v10951 = vadd.f32 %v10628, %v10891
      %v10952 = vadd.f32 %v10629, %v10894
      %v10953 = vadd.f32 %v10630, %v10896
      %v10954 = vadd.f32 %v10631, %v10899
      %v10955 = vadd.f32 %v10632, %v10901
      %v10956 = vadd.f32 %v10633, %v10904
      %v10957 = vadd.f32 %v10634, %v10906
      %v10958 = vadd.f32 %v10635, %v10909
      %v10959 = vadd.f32 %v10636, %v10911
      %v10960 = vadd.f32 %v10637, %v10914
      %v10961 = vadd.f32 %v10638, %v10916
      %v10962 = vadd.f32 %v10639, %v10919
      %v10963 = vadd.f32 %v10640, %v10921
      %v10964 = vadd.f32 %v10641, %v10924
      %v10965 = vadd.f32 %v10642, %v10926
      %v10966 = vadd.f32 %v10643, %v10929
      %v10967 = vadd.f32 %v10644, %v10931
      %v10968 = vadd.f32 %v10645, %v10934
      %v10969 = vadd.f32 %v10646, %v10936
      %v10970 = vld [vmem:[%s10] sm:$0x1]
      %v10972 = vperm.slane %v10970, 0
      %v10974 = vadd.f32 %v10938, %v10972
      %v10975 = vadd.f32 %v10939, %v10972
      %v10976 = vadd.f32 %v10940, %v10972
      %v10977 = vadd.f32 %v10941, %v10972
      %v10978 = vadd.f32 %v10942, %v10972
      %v10979 = vadd.f32 %v10943, %v10972
      %v10980 = vadd.f32 %v10944, %v10972
      %v10981 = vadd.f32 %v10945, %v10972
      %v10982 = vadd.f32 %v10946, %v10972
      %v10983 = vadd.f32 %v10947, %v10972
      %v10984 = vadd.f32 %v10948, %v10972
      %v10985 = vadd.f32 %v10949, %v10972
      %v10986 = vadd.f32 %v10950, %v10972
      %v10987 = vadd.f32 %v10951, %v10972
      %v10988 = vadd.f32 %v10952, %v10972
      %v10989 = vadd.f32 %v10953, %v10972
      %v10990 = vadd.f32 %v10954, %v10972
      %v10991 = vadd.f32 %v10955, %v10972
      %v10992 = vadd.f32 %v10956, %v10972
      %v10993 = vadd.f32 %v10957, %v10972
      %v10994 = vadd.f32 %v10958, %v10972
      %v10995 = vadd.f32 %v10959, %v10972
      %v10996 = vadd.f32 %v10960, %v10972
      %v10997 = vadd.f32 %v10961, %v10972
      %v10998 = vadd.f32 %v10962, %v10972
      %v10999 = vadd.f32 %v10963, %v10972
      %v11000 = vadd.f32 %v10964, %v10972
      %v11001 = vadd.f32 %v10965, %v10972
      %v11002 = vadd.f32 %v10966, %v10972
      %v11003 = vadd.f32 %v10967, %v10972
      %v11004 = vadd.f32 %v10968, %v10972
      %v11005 = vadd.f32 %v10969, %v10972
      %11006 = vst [vmem:[%s406] sm:$0xff] %v10974
      %11007 = vst [vmem:[%s406 + $0x8] sm:$0xff] %v10975
      %11008 = vst [vmem:[%s406 + $0x10] sm:$0xff] %v10976
      %11009 = vst [vmem:[%s406 + $0x18] sm:$0xff] %v10977
      %11010 = vst [vmem:[%s406 + $0x20] sm:$0xff] %v10978
      %11011 = vst [vmem:[%s406 + $0x28] sm:$0xff] %v10979
      %11012 = vst [vmem:[%s406 + $0x30] sm:$0xff] %v10980
      %11013 = vst [vmem:[%s406 + $0x38] sm:$0xff] %v10981
      %11014 = vst [vmem:[%s406 + $0x40] sm:$0xff] %v10982
      %11015 = vst [vmem:[%s406 + $0x48] sm:$0xff] %v10983
      %11016 = vst [vmem:[%s406 + $0x50] sm:$0xff] %v10984
      %11017 = vst [vmem:[%s406 + $0x58] sm:$0xff] %v10985
      %11018 = vst [vmem:[%s406 + $0x60] sm:$0xff] %v10986
      %11019 = vst [vmem:[%s406 + $0x68] sm:$0xff] %v10987
      %11020 = vst [vmem:[%s406 + $0x70] sm:$0xff] %v10988
      %11021 = vst [vmem:[%s406 + $0x78] sm:$0xff] %v10989
      %11022 = vst [vmem:[%s406 + $0x80] sm:$0xff] %v10990
      %11023 = vst [vmem:[%s406 + $0x88] sm:$0xff] %v10991
      %11024 = vst [vmem:[%s406 + $0x90] sm:$0xff] %v10992
      %11025 = vst [vmem:[%s406 + $0x98] sm:$0xff] %v10993
      %11026 = vst [vmem:[%s406 + $0xa0] sm:$0xff] %v10994
      %11027 = vst [vmem:[%s406 + $0xa8] sm:$0xff] %v10995
      %11028 = vst [vmem:[%s406 + $0xb0] sm:$0xff] %v10996
      %11029 = vst [vmem:[%s406 + $0xb8] sm:$0xff] %v10997
      %11030 = vst [vmem:[%s406 + $0xc0] sm:$0xff] %v10998
      %11031 = vst [vmem:[%s406 + $0xc8] sm:$0xff] %v10999
      %11032 = vst [vmem:[%s406 + $0xd0] sm:$0xff] %v11000
      %11033 = vst [vmem:[%s406 + $0xd8] sm:$0xff] %v11001
      %11034 = vst [vmem:[%s406 + $0xe0] sm:$0xff] %v11002
      %11035 = vst [vmem:[%s406 + $0xe8] sm:$0xff] %v11003
      %11036 = vst [vmem:[%s406 + $0xf0] sm:$0xff] %v11004
      %11037 = vst [vmem:[%s406 + $0xf8] sm:$0xff] %v11005
      %p11038 = scmp.lt.s32.totalorder %s22, 1
      %s11039 = scalar_select %p11038, %s22, 1
      %s11040 = smul.addr %s11039, 32
      %s11041 = smul.addr %s11040, 8
      %s11042 = scalar_lea.vmem %s11, %s11041
      // Predicated region
      $region65: #{subpixel_forward.3} parent=63 // pred_check
        %p11043 = pneg %p281
      $region66: #{subpixel_forward.3} parent=63 // pred_check_branch
        %11045 = sbr.rel (%p11043) target = $region68
      $region67: #{subpixel_forward.3} parent=63 // pred_region
        _
      $region68: #{subpixel_forward.3} parent=63 // pred_fallthru
        _
    $region64: #{subpixel_forward.3} parent=5 // pred_fallthru
      _
    %p11046 = scmp.le.s32.totalorder 2, %s17
    // Predicated region
    $region69: #{subpixel_forward.3} parent=5 // pred_check
      %p11047 = pneg %p11046
    $region70: #{subpixel_forward.3} parent=5 // pred_check_branch
      %11049 = sbr.rel (%p11047) target = $region72
    $region71: #{subpixel_forward.3} parent=5 // pred_region
      %s11050 = ssub.s32 %s17, 2
      // Predicated region
      $region73: #{subpixel_forward.3} parent=71 // pred_check
        %p11051 = pneg %p287
      $region74: #{subpixel_forward.3} parent=71 // pred_check_branch
        %11053 = sbr.rel (%p11051) target = $region76
      $region75: #{subpixel_forward.3} parent=71 // pred_region
        %p11054 = scmp.lt.s32.totalorder %s23, 1
        %s11055 = scalar_select %p11054, %s23, 1
        %s11056 = smul.addr %s11055, 32
        %s11057 = smul.addr %s11056, 8
        %s11058 = scalar_lea.vmem %s11, %s11057
      $region76: #{subpixel_forward.3} parent=71 // pred_fallthru
        _
    $region72: #{subpixel_forward.3} parent=5 // pred_fallthru
      _
  $region6: #{subpixel_forward.3} parent=0 // loop_footer
    %s21 = sadd.s32 1, %s17
  $region7: #{subpixel_forward.3} parent=0 // loop_footer_branch
    %16 = sbr.rel target = $region3
  $region8: #{subpixel_forward.3} parent=0 // loop_exit
    _

</llo_original>
